<compile_context>
chip_gen: v7x
topology: tpu7x:2x2x1
jax: 0.10.0
libtpu: 0.0.40
codegen_flags: <defaults>
</compile_context>

<pallas_src>
import jax
import jax.numpy as jnp
from jax import lax
from jax.experimental import pallas as pl
from jax.experimental.pallas import tpu as pltpu

_LANES = 128


def _round_up(x, m):
    return (x + m - 1) // m * m


def _make_basic_block_kernel(H, W, Ho, Wo, Hp, Wp, Cip, Cmp, Cop, stride, has_sc):
    s = stride
    K1 = 3 * Cip      # conv1 contraction dim (kw packed into K)
    K2 = 3 * Cmp      # conv2 contraction dim

    def _sub_w(v):    # even/odd-style W subsample (no strided slices)
        return v if s == 1 else v.reshape(v.shape[0], Wo, s, v.shape[-1])[:, :, 0, :]

    def _sub_h(v):    # even/odd-style H subsample
        return v if s == 1 else v.reshape(Ho, s, Wo, v.shape[-1])[:, 0, :, :]

    def body(x_ref, w1_ref, b1_ref, w2_ref, b2_ref, wsc_ref, bsc_ref, out_ref,
             xpad, bpk1, apad, bpk2, acc1, acc2):
        # ---- stage the input: zero only the 1-px halo, copy the interior ----
        xpad[0:1, :, :] = jnp.zeros((1, Wp, Cip), jnp.float32)
        xpad[H + 1:Hp, :, :] = jnp.zeros((Hp - H - 1, Wp, Cip), jnp.float32)
        xpad[:, 0:1, :] = jnp.zeros((Hp, 1, Cip), jnp.float32)
        xpad[:, W + 1:Wp, :] = jnp.zeros((Hp, Wp - W - 1, Cip), jnp.float32)
        xpad[1:H + 1, 1:W + 1, :] = x_ref[0]

        # ---- conv1 (3x3 / stride s) + folded BN1 + ReLU ---------------------
        # pack kw taps into the contraction dim: bpk1[h, wo, kw*Cip + c]
        #   == x_pad[h, s*wo + kw, c]   (lane-aligned stores, offsets k*128)
        for kw in range(3):
            if s == 1:
                col = xpad[:, kw:kw + Wo, :]
            else:
                # TODO(synk): the stride>1 subsample path is only exercised in
                # interpret mode below; validate Mosaic lowering on hardware.
                col = _sub_w(xpad[:, kw:kw + Wo * s, :])
            bpk1[:, :, kw * Cip:(kw + 1) * Cip] = col

        acc1[...] = jnp.zeros_like(acc1)
        for kh in range(3):
            if s == 1:
                patch = bpk1[kh:kh + Ho, :, :]
            else:
                patch = _sub_h(bpk1[kh:kh + Ho * s, :, :])
            acc1[...] += jnp.dot(
                patch.reshape(Ho * Wo, K1).astype(jnp.bfloat16),
                w1_ref[kh],
                preferred_element_type=jnp.float32)
        a1 = jnp.maximum(acc1[...] + b1_ref[...], 0.0)          # (Ho*Wo, Cmp) f32

        # ---- conv2 (3x3 / stride 1) + folded BN2 ----------------------------
        apad[0:1, :, :] = jnp.zeros((1, Wo + 2, Cmp), jnp.float32)
        apad[Ho + 1:Ho + 2, :, :] = jnp.zeros((1, Wo + 2, Cmp), jnp.float32)
        apad[:, 0:1, :] = jnp.zeros((Ho + 2, 1, Cmp), jnp.float32)
        apad[:, Wo + 1:Wo + 2, :] = jnp.zeros((Ho + 2, 1, Cmp), jnp.float32)
        apad[1:Ho + 1, 1:Wo + 1, :] = a1.reshape(Ho, Wo, Cmp)

        for kw in range(3):
            bpk2[:, :, kw * Cmp:(kw + 1) * Cmp] = apad[:, kw:kw + Wo, :]

        acc2[...] = jnp.zeros_like(acc2)
        for kh in range(3):
            patch = bpk2[kh:kh + Ho, :, :]
            acc2[...] += jnp.dot(
                patch.reshape(Ho * Wo, K2).astype(jnp.bfloat16),
                w2_ref[kh],
                preferred_element_type=jnp.float32)
        o2 = acc2[...] + b2_ref[...]                            # (Ho*Wo, Cop) f32

        # ---- shortcut --------------------------------------------------------
        if has_sc:
            # x subsampled at stride s == centre-kw slab of bpk1 (lane-aligned)
            if s == 1:
                xs = bpk1[1:1 + Ho, :, Cip:2 * Cip]
            else:
                xs = _sub_h(bpk1[1:1 + Ho * s, :, Cip:2 * Cip])
            sc = jnp.dot(
                xs.reshape(Ho * Wo, Cip).astype(jnp.bfloat16),
                wsc_ref[...],
                preferred_element_type=jnp.float32) + bsc_ref[...]
        else:
            sc = x_ref[0].reshape(Ho * Wo, Cop)                 # identity, f32

        out_ref[...] = jnp.maximum(o2 + sc, 0.0).reshape(1, Ho, Wo, Cop)

    if has_sc:
        return body

    def body_no_sc(x_ref, w1_ref, b1_ref, w2_ref, b2_ref, out_ref,
                   xpad, bpk1, apad, bpk2, acc1, acc2):
        return body(x_ref, w1_ref, b1_ref, w2_ref, b2_ref, None, None, out_ref,
                    xpad, bpk1, apad, bpk2, acc1, acc2)

    return body_no_sc


def _fold_bn(gamma, beta, mean, var, eps=1e-5):
    scale = gamma / jnp.sqrt(var + eps)
    return scale, beta - mean * scale


def basic_block_forward(x_nchw, params, *, stride=1, interpret=False):
    """BasicBlock forward. x_nchw: (N, Cin, H, W) f32 -> (N, Cout, Ho, Wo) f32."""
    N, Cin, H, W = x_nchw.shape
    Cmid = params["w1"].shape[0]
    Cout = params["w2"].shape[0]
    has_sc = (stride != 1) or (Cin != Cout)
    Cip, Cmp, Cop = (_round_up(c, _LANES) for c in (Cin, Cmid, Cout))

    # Fold eval-mode BatchNorm into the conv weights (scale) + per-channel bias.
    s1, b1 = _fold_bn(params["bn1_gamma"], params["bn1_beta"],
                      params["bn1_mean"], params["bn1_var"])
    s2, b2 = _fold_bn(params["bn2_gamma"], params["bn2_beta"],
                      params["bn2_mean"], params["bn2_var"])
    w1 = jnp.transpose(params["w1"], (2, 3, 1, 0)) * s1          # OIHW -> HWIO
    w2 = jnp.transpose(params["w2"], (2, 3, 1, 0)) * s2

    # Zero-pad channels to lane multiples, pack kw into the contraction dim,
    # and cast weights to bf16 for the MXU.
    w1p = jnp.zeros((3, 3, Cip, Cmp), jnp.float32).at[:, :, :Cin, :Cmid].set(w1)
    w2p = jnp.zeros((3, 3, Cmp, Cop), jnp.float32).at[:, :, :Cmid, :Cout].set(w2)
    w1p = w1p.reshape(3, 3 * Cip, Cmp).astype(jnp.bfloat16)
    w2p = w2p.reshape(3, 3 * Cmp, Cop).astype(jnp.bfloat16)
    b1p = jnp.zeros((1, Cmp), jnp.float32).at[0, :Cmid].set(b1)
    b2p = jnp.zeros((1, Cop), jnp.float32).at[0, :Cout].set(b2)

    x_nhwc = jnp.transpose(x_nchw, (0, 2, 3, 1)).astype(jnp.float32)
    xp = jnp.zeros((N, H, W, Cip), jnp.float32).at[..., :Cin].set(x_nhwc)

    args = [xp, w1p, b1p, w2p, b2p]
    in_specs = [
        pl.BlockSpec((1, H, W, Cip), lambda n: (n, 0, 0, 0)),
        pl.BlockSpec((3, 3 * Cip, Cmp), lambda n: (0, 0, 0)),
        pl.BlockSpec((1, Cmp), lambda n: (0, 0)),
        pl.BlockSpec((3, 3 * Cmp, Cop), lambda n: (0, 0, 0)),
        pl.BlockSpec((1, Cop), lambda n: (0, 0)),
    ]
    if has_sc:   # only pass / DMA the projection weights when they exist
        ssc, bsc = _fold_bn(params["bnsc_gamma"], params["bnsc_beta"],
                            params["bnsc_mean"], params["bnsc_var"])
        wsc = params["wsc"][:, :, 0, 0].T * ssc                  # (Cin, Cout)
        wscp = (jnp.zeros((Cip, Cop), jnp.float32)
                .at[:Cin, :Cout].set(wsc).astype(jnp.bfloat16))
        bscp = jnp.zeros((1, Cop), jnp.float32).at[0, :Cout].set(bsc)
        args += [wscp, bscp]
        in_specs += [pl.BlockSpec((Cip, Cop), lambda n: (0, 0)),
                     pl.BlockSpec((1, Cop), lambda n: (0, 0))]

    Ho = (H - 1) // stride + 1
    Wo = (W - 1) // stride + 1
    Hp = max(H + 2, 2 + Ho * stride)   # extra zero rows so stride-s subsample
    Wp = max(W + 2, 2 + Wo * stride)   # via reshape stays in bounds

    kernel = _make_basic_block_kernel(H, W, Ho, Wo, Hp, Wp, Cip, Cmp, Cop,
                                      stride, has_sc)

    extra = {}
    if not interpret:
        flops = 2 * N * Ho * Wo * (9 * Cip * Cmp + 9 * Cmp * Cop)
        if has_sc:
            flops += 2 * N * Ho * Wo * Cip * Cop
        bytes_accessed = (4 * (int(xp.size) + N * Ho * Wo * Cop)
                          + 2 * (int(w1p.size) + int(w2p.size)))
        extra = dict(
            compiler_params=pltpu.CompilerParams(
                dimension_semantics=("parallel",),   # shard batch across TCs
                vmem_limit_bytes=32 * 1024 * 1024),
            cost_estimate=pl.CostEstimate(flops=flops, transcendentals=0,
                                          bytes_accessed=bytes_accessed),
        )

    out = pl.pallas_call(
        kernel,
        out_shape=jax.ShapeDtypeStruct((N, Ho, Wo, Cop), jnp.float32),
        grid=(N,),
        in_specs=in_specs,
        out_specs=pl.BlockSpec((1, Ho, Wo, Cop), lambda n: (n, 0, 0, 0)),
        scratch_shapes=[
            pltpu.VMEM((Hp, Wp, Cip), jnp.float32),          # padded input
            pltpu.VMEM((Hp, Wo, 3 * Cip), jnp.float32),      # kw-packed conv1 in
            pltpu.VMEM((Ho + 2, Wo + 2, Cmp), jnp.float32),  # padded relu(bn1)
            pltpu.VMEM((Ho + 2, Wo, 3 * Cmp), jnp.float32),  # kw-packed conv2 in
            pltpu.VMEM((Ho * Wo, Cmp), jnp.float32),         # conv1 f32 acc
            pltpu.VMEM((Ho * Wo, Cop), jnp.float32),         # conv2 f32 acc
        ],
        interpret=interpret,
        **extra,
    )(*args)

    out = out[..., :Cout]                                    # drop lane padding
    return jnp.transpose(out, (0, 3, 1, 2))                  # NHWC -> NCHW


def basic_block_reference(x, p, *, stride=1, eps=1e-5):
    """Pure-JAX NCHW reference matching PyTorch BasicBlock.forward (eval mode)."""
    def bn(y, prefix):
        g, b, m, v = (p[f"{prefix}_{n}"].reshape(1, -1, 1, 1)
                      for n in ("gamma", "beta", "mean", "var"))
        return (y - m) / jnp.sqrt(v + eps) * g + b

    dn = ("NCHW", "OIHW", "NCHW")
    o = lax.conv_general_dilated(x, p["w1"], (stride, stride), [(1, 1), (1, 1)],
                                 dimension_numbers=dn)
    o = jnp.maximum(bn(o, "bn1"), 0.0)
    o = lax.conv_general_dilated(o, p["w2"], (1, 1), [(1, 1), (1, 1)],
                                 dimension_numbers=dn)
    o = bn(o, "bn2")
    if stride != 1 or x.shape[1] != p["w2"].shape[0]:
        s = lax.conv_general_dilated(x, p["wsc"], (stride, stride),
                                     [(0, 0), (0, 0)], dimension_numbers=dn)
        s = bn(s, "bnsc")
    else:
        s = x
    return jnp.maximum(o + s, 0.0)


def init_params(key, in_planes, planes, *, stride=1):
    """Synthetic BasicBlock params in PyTorch layout (OIHW weights, BN stats)."""
    ks = jax.random.split(key, 6)

    def conv_w(k, co, ci, kh, kw):
        return jax.random.normal(k, (co, ci, kh, kw), jnp.float32) / jnp.sqrt(ci * kh * kw)

    def bn_stats(k, c):
        k1, k2, k3, k4 = jax.random.split(k, 4)
        return dict(gamma=jax.random.uniform(k1, (c,), jnp.float32, 0.5, 1.5),
                    beta=0.1 * jax.random.normal(k2, (c,), jnp.float32),
                    mean=0.1 * jax.random.normal(k3, (c,), jnp.float32),
                    var=jax.random.uniform(k4, (c,), jnp.float32, 0.5, 1.5))

    p = {"w1": conv_w(ks[0], planes, in_planes, 3, 3),
         "w2": conv_w(ks[2], planes, planes, 3, 3)}
    for name, stats in (("bn1", bn_stats(ks[1], planes)),
                        ("bn2", bn_stats(ks[3], planes))):
        for stat, v in stats.items():
            p[f"{name}_{stat}"] = v
    if stride != 1 or in_planes != planes:
        p["wsc"] = conv_w(ks[4], planes, in_planes, 1, 1)
        for stat, v in bn_stats(ks[5], planes).items():
            p[f"bnsc_{stat}"] = v
    return p


def _check(name, x, p, stride, interpret=False):
    out = basic_block_forward(x, p, stride=stride, interpret=interpret)
    out = jax.block_until_ready(out)
    ref = basic_block_reference(x, p, stride=stride)
    assert out.shape == ref.shape, (name, out.shape, ref.shape)
    err = float(jnp.max(jnp.abs(out - ref)))
    tol = 2e-2 + 2e-2 * float(jnp.max(jnp.abs(ref)))   # bf16-MXU error budget
    assert err < tol, (name, err, tol)


if __name__ == "__main__":
    key = jax.random.PRNGKey(0)
    kx1, kp1, kx2, kp2, kx3, kp3 = jax.random.split(key, 6)

    # (a) projection shortcut (Cin != Cout), stride 1  -- runs on the TPU.
    x = jax.random.normal(kx1, (2, 4, 16, 16), jnp.float32)
    p = init_params(kp1, 4, 8, stride=1)
    _check("proj_s1", x, p, stride=1)

    # (b) identity shortcut (Cin == Cout, stride 1)    -- runs on the TPU.
    x = jax.random.normal(kx2, (2, 8, 16, 16), jnp.float32)
    p = init_params(kp2, 8, 8, stride=1)
    _check("identity_s1", x, p, stride=1)

    # (c) strided block (stride 2, projection shortcut): numerics of the
    #     reshape-based even/odd subsample path validated in interpret mode.
    x = jax.random.normal(kx3, (2, 4, 9, 9), jnp.float32)
    p = init_params(kp3, 4, 8, stride=2)
    _check("proj_s2_interpret", x, p, stride=2, interpret=True)

    print("KERNEL_OK")
</pallas_src>

<mosaic_0001>
module attributes {stable_mosaic.version = 11 : i64} {
  func.func @body(%arg0: i32, %arg1: memref<1x16x16x128xf32, #tpu.memory_space<vmem>>, %arg2: memref<3x384x128xbf16, #tpu.memory_space<vmem>>, %arg3: memref<1x128xf32, #tpu.memory_space<vmem>>, %arg4: memref<3x384x128xbf16, #tpu.memory_space<vmem>>, %arg5: memref<1x128xf32, #tpu.memory_space<vmem>>, %arg6: memref<128x128xbf16, #tpu.memory_space<vmem>>, %arg7: memref<1x128xf32, #tpu.memory_space<vmem>>, %arg8: memref<1x16x16x128xf32, #tpu.memory_space<vmem>>, %arg9: memref<18x18x128xf32, #tpu.memory_space<vmem>>, %arg10: memref<18x16x384xf32, #tpu.memory_space<vmem>>, %arg11: memref<18x18x128xf32, #tpu.memory_space<vmem>>, %arg12: memref<18x16x384xf32, #tpu.memory_space<vmem>>, %arg13: memref<256x128xf32, #tpu.memory_space<vmem>>, %arg14: memref<256x128xf32, #tpu.memory_space<vmem>>) attributes {dimension_semantics = [#tpu.dimension_semantics<parallel>], iteration_bounds = array<i64: 2>, scalar_prefetch = 0 : i64, scratch_operands = 6 : i64, tpu.core_type = #tpu.core_type<tc>, window_params = [{transform_indices = @transform_0, window_bounds = array<i64: 1, 16, 16, 128>}, {pipeline_mode = #tpu.pipeline_mode<synchronous>, transform_indices = @transform_1, window_bounds = array<i64: 3, 384, 128>}, {pipeline_mode = #tpu.pipeline_mode<synchronous>, transform_indices = @transform_2, window_bounds = array<i64: 1, 128>}, {pipeline_mode = #tpu.pipeline_mode<synchronous>, transform_indices = @transform_3, window_bounds = array<i64: 3, 384, 128>}, {pipeline_mode = #tpu.pipeline_mode<synchronous>, transform_indices = @transform_4, window_bounds = array<i64: 1, 128>}, {pipeline_mode = #tpu.pipeline_mode<synchronous>, transform_indices = @transform_5, window_bounds = array<i64: 128, 128>}, {pipeline_mode = #tpu.pipeline_mode<synchronous>, transform_indices = @transform_6, window_bounds = array<i64: 1, 128>}, {transform_indices = @transform_7, window_bounds = array<i64: 1, 16, 16, 128>}]} {
    %cst = arith.constant 0.000000e+00 : f32
    %0 = vector.broadcast %cst : f32 to vector<1x18x128xf32>
    %c0 = arith.constant 0 : index
    %c0_0 = arith.constant 0 : index
    %c0_1 = arith.constant 0 : index
    %1 = vector.load %arg9[%c0, %c0_0, %c0_1] : memref<18x18x128xf32, #tpu.memory_space<vmem>>, vector<1x18x128xf32>
    tpu.vector_store %arg9[%c0, %c0_0, %c0_1], %0 {strides = array<i32>} : memref<18x18x128xf32, #tpu.memory_space<vmem>>, vector<1x18x128xf32>,
    %cst_2 = arith.constant 0.000000e+00 : f32
    %2 = vector.broadcast %cst_2 : f32 to vector<1x18x128xf32>
    %c17 = arith.constant 17 : index
    %c0_3 = arith.constant 0 : index
    %c0_4 = arith.constant 0 : index
    %3 = vector.load %arg9[%c17, %c0_3, %c0_4] : memref<18x18x128xf32, #tpu.memory_space<vmem>>, vector<1x18x128xf32>
    tpu.vector_store %arg9[%c17, %c0_3, %c0_4], %2 {strides = array<i32>} : memref<18x18x128xf32, #tpu.memory_space<vmem>>, vector<1x18x128xf32>,
    %cst_5 = arith.constant 0.000000e+00 : f32
    %4 = vector.broadcast %cst_5 : f32 to vector<18x1x128xf32>
    %c0_6 = arith.constant 0 : index
    %c0_7 = arith.constant 0 : index
    %c0_8 = arith.constant 0 : index
    %5 = vector.load %arg9[%c0_6, %c0_7, %c0_8] : memref<18x18x128xf32, #tpu.memory_space<vmem>>, vector<18x1x128xf32>
    tpu.vector_store %arg9[%c0_6, %c0_7, %c0_8], %4 {strides = array<i32>} : memref<18x18x128xf32, #tpu.memory_space<vmem>>, vector<18x1x128xf32>,
    %cst_9 = arith.constant 0.000000e+00 : f32
    %6 = vector.broadcast %cst_9 : f32 to vector<18x1x128xf32>
    %c0_10 = arith.constant 0 : index
    %c17_11 = arith.constant 17 : index
    %c0_12 = arith.constant 0 : index
    %7 = vector.load %arg9[%c0_10, %c17_11, %c0_12] : memref<18x18x128xf32, #tpu.memory_space<vmem>>, vector<18x1x128xf32>
    tpu.vector_store %arg9[%c0_10, %c17_11, %c0_12], %6 {strides = array<i32>} : memref<18x18x128xf32, #tpu.memory_space<vmem>>, vector<18x1x128xf32>,
    %c0_13 = arith.constant 0 : index
    %c0_14 = arith.constant 0 : index
    %c0_15 = arith.constant 0 : index
    %c0_16 = arith.constant 0 : index
    %8 = vector.load %arg1[%c0_13, %c0_14, %c0_15, %c0_16] : memref<1x16x16x128xf32, #tpu.memory_space<vmem>>, vector<1x16x16x128xf32>
    %9 = vector.shape_cast %8 : vector<1x16x16x128xf32> to vector<16x16x128xf32>
    %c1 = arith.constant 1 : index
    %c1_17 = arith.constant 1 : index
    %c0_18 = arith.constant 0 : index
    %10 = vector.load %arg9[%c1, %c1_17, %c0_18] : memref<18x18x128xf32, #tpu.memory_space<vmem>>, vector<16x16x128xf32>
    tpu.vector_store %arg9[%c1, %c1_17, %c0_18], %9 {strides = array<i32>} : memref<18x18x128xf32, #tpu.memory_space<vmem>>, vector<16x16x128xf32>,
    %c0_19 = arith.constant 0 : index
    %c0_20 = arith.constant 0 : index
    %c0_21 = arith.constant 0 : index
    %11 = vector.load %arg9[%c0_19, %c0_20, %c0_21] : memref<18x18x128xf32, #tpu.memory_space<vmem>>, vector<18x16x128xf32>
    %c0_22 = arith.constant 0 : index
    %c0_23 = arith.constant 0 : index
    %c0_24 = arith.constant 0 : index
    %12 = vector.load %arg10[%c0_22, %c0_23, %c0_24] : memref<18x16x384xf32, #tpu.memory_space<vmem>>, vector<18x16x128xf32>
    tpu.vector_store %arg10[%c0_22, %c0_23, %c0_24], %11 {strides = array<i32>} : memref<18x16x384xf32, #tpu.memory_space<vmem>>, vector<18x16x128xf32>,
    %c0_25 = arith.constant 0 : index
    %c1_26 = arith.constant 1 : index
    %c0_27 = arith.constant 0 : index
    %13 = vector.load %arg9[%c0_25, %c1_26, %c0_27] : memref<18x18x128xf32, #tpu.memory_space<vmem>>, vector<18x16x128xf32>
    %c0_28 = arith.constant 0 : index
    %c0_29 = arith.constant 0 : index
    %c128 = arith.constant 128 : index
    %14 = vector.load %arg10[%c0_28, %c0_29, %c128] : memref<18x16x384xf32, #tpu.memory_space<vmem>>, vector<18x16x128xf32>
    tpu.vector_store %arg10[%c0_28, %c0_29, %c128], %13 {strides = array<i32>} : memref<18x16x384xf32, #tpu.memory_space<vmem>>, vector<18x16x128xf32>,
    %c0_30 = arith.constant 0 : index
    %c2 = arith.constant 2 : index
    %c0_31 = arith.constant 0 : index
    %15 = vector.load %arg9[%c0_30, %c2, %c0_31] : memref<18x18x128xf32, #tpu.memory_space<vmem>>, vector<18x16x128xf32>
    %c0_32 = arith.constant 0 : index
    %c0_33 = arith.constant 0 : index
    %c256 = arith.constant 256 : index
    %16 = vector.load %arg10[%c0_32, %c0_33, %c256] : memref<18x16x384xf32, #tpu.memory_space<vmem>>, vector<18x16x128xf32>
    tpu.vector_store %arg10[%c0_32, %c0_33, %c256], %15 {strides = array<i32>} : memref<18x16x384xf32, #tpu.memory_space<vmem>>, vector<18x16x128xf32>,
    %cst_34 = arith.constant 0.000000e+00 : f32
    %17 = vector.broadcast %cst_34 : f32 to vector<256x128xf32>
    %c0_35 = arith.constant 0 : index
    %c0_36 = arith.constant 0 : index
    %18 = vector.load %arg13[%c0_35, %c0_36] : memref<256x128xf32, #tpu.memory_space<vmem>>, vector<256x128xf32>
    tpu.vector_store %arg13[%c0_35, %c0_36], %17 {strides = array<i32>} : memref<256x128xf32, #tpu.memory_space<vmem>>, vector<256x128xf32>,
    %c0_37 = arith.constant 0 : index
    %c0_38 = arith.constant 0 : index
    %c0_39 = arith.constant 0 : index
    %19 = vector.load %arg10[%c0_37, %c0_38, %c0_39] : memref<18x16x384xf32, #tpu.memory_space<vmem>>, vector<16x16x384xf32>
    %c0_40 = arith.constant 0 : index
    %c0_41 = arith.constant 0 : index
    %20 = vector.load %arg13[%c0_40, %c0_41] : memref<256x128xf32, #tpu.memory_space<vmem>>, vector<256x128xf32>
    %21 = vector.shape_cast %19 : vector<16x16x384xf32> to vector<256x384xf32>
    %22 = arith.truncf %21 : vector<256x384xf32> to vector<256x384xbf16>
    %c0_42 = arith.constant 0 : index
    %c0_43 = arith.constant 0 : index
    %c0_44 = arith.constant 0 : index
    %23 = vector.load %arg2[%c0_42, %c0_43, %c0_44] : memref<3x384x128xbf16, #tpu.memory_space<vmem>>, vector<1x384x128xbf16>
    %24 = vector.shape_cast %23 : vector<1x384x128xbf16> to vector<384x128xbf16>
    %cst_45 = arith.constant dense<0.000000e+00> : vector<256x128xf32>
    %25 = tpu.matmul %22, %24, %cst_45 {dimension_numbers = #tpu.dot_dimension_numbers<[1], [0], [0], [1], [0, 0, 1, 1], [], []>} : vector<256x384xbf16>, vector<384x128xbf16>, vector<256x128xf32> -> vector<256x128xf32>
    %26 = arith.addf %20, %25 : vector<256x128xf32>
    %c0_46 = arith.constant 0 : index
    %c0_47 = arith.constant 0 : index
    %27 = vector.load %arg13[%c0_46, %c0_47] : memref<256x128xf32, #tpu.memory_space<vmem>>, vector<256x128xf32>
    tpu.vector_store %arg13[%c0_46, %c0_47], %26 {strides = array<i32>} : memref<256x128xf32, #tpu.memory_space<vmem>>, vector<256x128xf32>,
    %c1_48 = arith.constant 1 : index
    %c0_49 = arith.constant 0 : index
    %c0_50 = arith.constant 0 : index
    %28 = vector.load %arg10[%c1_48, %c0_49, %c0_50] : memref<18x16x384xf32, #tpu.memory_space<vmem>>, vector<16x16x384xf32>
    %c0_51 = arith.constant 0 : index
    %c0_52 = arith.constant 0 : index
    %29 = vector.load %arg13[%c0_51, %c0_52] : memref<256x128xf32, #tpu.memory_space<vmem>>, vector<256x128xf32>
    %30 = vector.shape_cast %28 : vector<16x16x384xf32> to vector<256x384xf32>
    %31 = arith.truncf %30 : vector<256x384xf32> to vector<256x384xbf16>
    %c1_53 = arith.constant 1 : index
    %c0_54 = arith.constant 0 : index
    %c0_55 = arith.constant 0 : index
    %32 = vector.load %arg2[%c1_53, %c0_54, %c0_55] : memref<3x384x128xbf16, #tpu.memory_space<vmem>>, vector<1x384x128xbf16>
    %33 = vector.shape_cast %32 : vector<1x384x128xbf16> to vector<384x128xbf16>
    %cst_56 = arith.constant dense<0.000000e+00> : vector<256x128xf32>
    %34 = tpu.matmul %31, %33, %cst_56 {dimension_numbers = #tpu.dot_dimension_numbers<[1], [0], [0], [1], [0, 0, 1, 1], [], []>} : vector<256x384xbf16>, vector<384x128xbf16>, vector<256x128xf32> -> vector<256x128xf32>
    %35 = arith.addf %29, %34 : vector<256x128xf32>
    %c0_57 = arith.constant 0 : index
    %c0_58 = arith.constant 0 : index
    %36 = vector.load %arg13[%c0_57, %c0_58] : memref<256x128xf32, #tpu.memory_space<vmem>>, vector<256x128xf32>
    tpu.vector_store %arg13[%c0_57, %c0_58], %35 {strides = array<i32>} : memref<256x128xf32, #tpu.memory_space<vmem>>, vector<256x128xf32>,
    %c2_59 = arith.constant 2 : index
    %c0_60 = arith.constant 0 : index
    %c0_61 = arith.constant 0 : index
    %37 = vector.load %arg10[%c2_59, %c0_60, %c0_61] : memref<18x16x384xf32, #tpu.memory_space<vmem>>, vector<16x16x384xf32>
    %c0_62 = arith.constant 0 : index
    %c0_63 = arith.constant 0 : index
    %38 = vector.load %arg13[%c0_62, %c0_63] : memref<256x128xf32, #tpu.memory_space<vmem>>, vector<256x128xf32>
    %39 = vector.shape_cast %37 : vector<16x16x384xf32> to vector<256x384xf32>
    %40 = arith.truncf %39 : vector<256x384xf32> to vector<256x384xbf16>
    %c2_64 = arith.constant 2 : index
    %c0_65 = arith.constant 0 : index
    %c0_66 = arith.constant 0 : index
    %41 = vector.load %arg2[%c2_64, %c0_65, %c0_66] : memref<3x384x128xbf16, #tpu.memory_space<vmem>>, vector<1x384x128xbf16>
    %42 = vector.shape_cast %41 : vector<1x384x128xbf16> to vector<384x128xbf16>
    %cst_67 = arith.constant dense<0.000000e+00> : vector<256x128xf32>
    %43 = tpu.matmul %40, %42, %cst_67 {dimension_numbers = #tpu.dot_dimension_numbers<[1], [0], [0], [1], [0, 0, 1, 1], [], []>} : vector<256x384xbf16>, vector<384x128xbf16>, vector<256x128xf32> -> vector<256x128xf32>
    %44 = arith.addf %38, %43 : vector<256x128xf32>
    %c0_68 = arith.constant 0 : index
    %c0_69 = arith.constant 0 : index
    %45 = vector.load %arg13[%c0_68, %c0_69] : memref<256x128xf32, #tpu.memory_space<vmem>>, vector<256x128xf32>
    tpu.vector_store %arg13[%c0_68, %c0_69], %44 {strides = array<i32>} : memref<256x128xf32, #tpu.memory_space<vmem>>, vector<256x128xf32>,
    %c0_70 = arith.constant 0 : index
    %c0_71 = arith.constant 0 : index
    %46 = vector.load %arg13[%c0_70, %c0_71] : memref<256x128xf32, #tpu.memory_space<vmem>>, vector<256x128xf32>
    %c0_72 = arith.constant 0 : index
    %c0_73 = arith.constant 0 : index
    %47 = vector.load %arg3[%c0_72, %c0_73] : memref<1x128xf32, #tpu.memory_space<vmem>>, vector<1x128xf32>
    %48 = vector.broadcast %47 : vector<1x128xf32> to vector<256x128xf32>
    %49 = arith.addf %46, %48 : vector<256x128xf32>
    %cst_74 = arith.constant 0.000000e+00 : f32
    %50 = vector.broadcast %cst_74 : f32 to vector<256x128xf32>
    %51 = arith.maximumf %49, %50 : vector<256x128xf32>
    %cst_75 = arith.constant 0.000000e+00 : f32
    %52 = vector.broadcast %cst_75 : f32 to vector<1x18x128xf32>
    %c0_76 = arith.constant 0 : index
    %c0_77 = arith.constant 0 : index
    %c0_78 = arith.constant 0 : index
    %53 = vector.load %arg11[%c0_76, %c0_77, %c0_78] : memref<18x18x128xf32, #tpu.memory_space<vmem>>, vector<1x18x128xf32>
    tpu.vector_store %arg11[%c0_76, %c0_77, %c0_78], %52 {strides = array<i32>} : memref<18x18x128xf32, #tpu.memory_space<vmem>>, vector<1x18x128xf32>,
    %cst_79 = arith.constant 0.000000e+00 : f32
    %54 = vector.broadcast %cst_79 : f32 to vector<1x18x128xf32>
    %c17_80 = arith.constant 17 : index
    %c0_81 = arith.constant 0 : index
    %c0_82 = arith.constant 0 : index
    %55 = vector.load %arg11[%c17_80, %c0_81, %c0_82] : memref<18x18x128xf32, #tpu.memory_space<vmem>>, vector<1x18x128xf32>
    tpu.vector_store %arg11[%c17_80, %c0_81, %c0_82], %54 {strides = array<i32>} : memref<18x18x128xf32, #tpu.memory_space<vmem>>, vector<1x18x128xf32>,
    %cst_83 = arith.constant 0.000000e+00 : f32
    %56 = vector.broadcast %cst_83 : f32 to vector<18x1x128xf32>
    %c0_84 = arith.constant 0 : index
    %c0_85 = arith.constant 0 : index
    %c0_86 = arith.constant 0 : index
    %57 = vector.load %arg11[%c0_84, %c0_85, %c0_86] : memref<18x18x128xf32, #tpu.memory_space<vmem>>, vector<18x1x128xf32>
    tpu.vector_store %arg11[%c0_84, %c0_85, %c0_86], %56 {strides = array<i32>} : memref<18x18x128xf32, #tpu.memory_space<vmem>>, vector<18x1x128xf32>,
    %cst_87 = arith.constant 0.000000e+00 : f32
    %58 = vector.broadcast %cst_87 : f32 to vector<18x1x128xf32>
    %c0_88 = arith.constant 0 : index
    %c17_89 = arith.constant 17 : index
    %c0_90 = arith.constant 0 : index
    %59 = vector.load %arg11[%c0_88, %c17_89, %c0_90] : memref<18x18x128xf32, #tpu.memory_space<vmem>>, vector<18x1x128xf32>
    tpu.vector_store %arg11[%c0_88, %c17_89, %c0_90], %58 {strides = array<i32>} : memref<18x18x128xf32, #tpu.memory_space<vmem>>, vector<18x1x128xf32>,
    %60 = vector.shape_cast %51 : vector<256x128xf32> to vector<16x16x128xf32>
    %c1_91 = arith.constant 1 : index
    %c1_92 = arith.constant 1 : index
    %c0_93 = arith.constant 0 : index
    %61 = vector.load %arg11[%c1_91, %c1_92, %c0_93] : memref<18x18x128xf32, #tpu.memory_space<vmem>>, vector<16x16x128xf32>
    tpu.vector_store %arg11[%c1_91, %c1_92, %c0_93], %60 {strides = array<i32>} : memref<18x18x128xf32, #tpu.memory_space<vmem>>, vector<16x16x128xf32>,
    %c0_94 = arith.constant 0 : index
    %c0_95 = arith.constant 0 : index
    %c0_96 = arith.constant 0 : index
    %62 = vector.load %arg11[%c0_94, %c0_95, %c0_96] : memref<18x18x128xf32, #tpu.memory_space<vmem>>, vector<18x16x128xf32>
    %c0_97 = arith.constant 0 : index
    %c0_98 = arith.constant 0 : index
    %c0_99 = arith.constant 0 : index
    %63 = vector.load %arg12[%c0_97, %c0_98, %c0_99] : memref<18x16x384xf32, #tpu.memory_space<vmem>>, vector<18x16x128xf32>
    tpu.vector_store %arg12[%c0_97, %c0_98, %c0_99], %62 {strides = array<i32>} : memref<18x16x384xf32, #tpu.memory_space<vmem>>, vector<18x16x128xf32>,
    %c0_100 = arith.constant 0 : index
    %c1_101 = arith.constant 1 : index
    %c0_102 = arith.constant 0 : index
    %64 = vector.load %arg11[%c0_100, %c1_101, %c0_102] : memref<18x18x128xf32, #tpu.memory_space<vmem>>, vector<18x16x128xf32>
    %c0_103 = arith.constant 0 : index
    %c0_104 = arith.constant 0 : index
    %c128_105 = arith.constant 128 : index
    %65 = vector.load %arg12[%c0_103, %c0_104, %c128_105] : memref<18x16x384xf32, #tpu.memory_space<vmem>>, vector<18x16x128xf32>
    tpu.vector_store %arg12[%c0_103, %c0_104, %c128_105], %64 {strides = array<i32>} : memref<18x16x384xf32, #tpu.memory_space<vmem>>, vector<18x16x128xf32>,
    %c0_106 = arith.constant 0 : index
    %c2_107 = arith.constant 2 : index
    %c0_108 = arith.constant 0 : index
    %66 = vector.load %arg11[%c0_106, %c2_107, %c0_108] : memref<18x18x128xf32, #tpu.memory_space<vmem>>, vector<18x16x128xf32>
    %c0_109 = arith.constant 0 : index
    %c0_110 = arith.constant 0 : index
    %c256_111 = arith.constant 256 : index
    %67 = vector.load %arg12[%c0_109, %c0_110, %c256_111] : memref<18x16x384xf32, #tpu.memory_space<vmem>>, vector<18x16x128xf32>
    tpu.vector_store %arg12[%c0_109, %c0_110, %c256_111], %66 {strides = array<i32>} : memref<18x16x384xf32, #tpu.memory_space<vmem>>, vector<18x16x128xf32>,
    %cst_112 = arith.constant 0.000000e+00 : f32
    %68 = vector.broadcast %cst_112 : f32 to vector<256x128xf32>
    %c0_113 = arith.constant 0 : index
    %c0_114 = arith.constant 0 : index
    %69 = vector.load %arg14[%c0_113, %c0_114] : memref<256x128xf32, #tpu.memory_space<vmem>>, vector<256x128xf32>
    tpu.vector_store %arg14[%c0_113, %c0_114], %68 {strides = array<i32>} : memref<256x128xf32, #tpu.memory_space<vmem>>, vector<256x128xf32>,
    %c0_115 = arith.constant 0 : index
    %c0_116 = arith.constant 0 : index
    %c0_117 = arith.constant 0 : index
    %70 = vector.load %arg12[%c0_115, %c0_116, %c0_117] : memref<18x16x384xf32, #tpu.memory_space<vmem>>, vector<16x16x384xf32>
    %c0_118 = arith.constant 0 : index
    %c0_119 = arith.constant 0 : index
    %71 = vector.load %arg14[%c0_118, %c0_119] : memref<256x128xf32, #tpu.memory_space<vmem>>, vector<256x128xf32>
    %72 = vector.shape_cast %70 : vector<16x16x384xf32> to vector<256x384xf32>
    %73 = arith.truncf %72 : vector<256x384xf32> to vector<256x384xbf16>
    %c0_120 = arith.constant 0 : index
    %c0_121 = arith.constant 0 : index
    %c0_122 = arith.constant 0 : index
    %74 = vector.load %arg4[%c0_120, %c0_121, %c0_122] : memref<3x384x128xbf16, #tpu.memory_space<vmem>>, vector<1x384x128xbf16>
    %75 = vector.shape_cast %74 : vector<1x384x128xbf16> to vector<384x128xbf16>
    %cst_123 = arith.constant dense<0.000000e+00> : vector<256x128xf32>
    %76 = tpu.matmul %73, %75, %cst_123 {dimension_numbers = #tpu.dot_dimension_numbers<[1], [0], [0], [1], [0, 0, 1, 1], [], []>} : vector<256x384xbf16>, vector<384x128xbf16>, vector<256x128xf32> -> vector<256x128xf32>
    %77 = arith.addf %71, %76 : vector<256x128xf32>
    %c0_124 = arith.constant 0 : index
    %c0_125 = arith.constant 0 : index
    %78 = vector.load %arg14[%c0_124, %c0_125] : memref<256x128xf32, #tpu.memory_space<vmem>>, vector<256x128xf32>
    tpu.vector_store %arg14[%c0_124, %c0_125], %77 {strides = array<i32>} : memref<256x128xf32, #tpu.memory_space<vmem>>, vector<256x128xf32>,
    %c1_126 = arith.constant 1 : index
    %c0_127 = arith.constant 0 : index
    %c0_128 = arith.constant 0 : index
    %79 = vector.load %arg12[%c1_126, %c0_127, %c0_128] : memref<18x16x384xf32, #tpu.memory_space<vmem>>, vector<16x16x384xf32>
    %c0_129 = arith.constant 0 : index
    %c0_130 = arith.constant 0 : index
    %80 = vector.load %arg14[%c0_129, %c0_130] : memref<256x128xf32, #tpu.memory_space<vmem>>, vector<256x128xf32>
    %81 = vector.shape_cast %79 : vector<16x16x384xf32> to vector<256x384xf32>
    %82 = arith.truncf %81 : vector<256x384xf32> to vector<256x384xbf16>
    %c1_131 = arith.constant 1 : index
    %c0_132 = arith.constant 0 : index
    %c0_133 = arith.constant 0 : index
    %83 = vector.load %arg4[%c1_131, %c0_132, %c0_133] : memref<3x384x128xbf16, #tpu.memory_space<vmem>>, vector<1x384x128xbf16>
    %84 = vector.shape_cast %83 : vector<1x384x128xbf16> to vector<384x128xbf16>
    %cst_134 = arith.constant dense<0.000000e+00> : vector<256x128xf32>
    %85 = tpu.matmul %82, %84, %cst_134 {dimension_numbers = #tpu.dot_dimension_numbers<[1], [0], [0], [1], [0, 0, 1, 1], [], []>} : vector<256x384xbf16>, vector<384x128xbf16>, vector<256x128xf32> -> vector<256x128xf32>
    %86 = arith.addf %80, %85 : vector<256x128xf32>
    %c0_135 = arith.constant 0 : index
    %c0_136 = arith.constant 0 : index
    %87 = vector.load %arg14[%c0_135, %c0_136] : memref<256x128xf32, #tpu.memory_space<vmem>>, vector<256x128xf32>
    tpu.vector_store %arg14[%c0_135, %c0_136], %86 {strides = array<i32>} : memref<256x128xf32, #tpu.memory_space<vmem>>, vector<256x128xf32>,
    %c2_137 = arith.constant 2 : index
    %c0_138 = arith.constant 0 : index
    %c0_139 = arith.constant 0 : index
    %88 = vector.load %arg12[%c2_137, %c0_138, %c0_139] : memref<18x16x384xf32, #tpu.memory_space<vmem>>, vector<16x16x384xf32>
    %c0_140 = arith.constant 0 : index
    %c0_141 = arith.constant 0 : index
    %89 = vector.load %arg14[%c0_140, %c0_141] : memref<256x128xf32, #tpu.memory_space<vmem>>, vector<256x128xf32>
    %90 = vector.shape_cast %88 : vector<16x16x384xf32> to vector<256x384xf32>
    %91 = arith.truncf %90 : vector<256x384xf32> to vector<256x384xbf16>
    %c2_142 = arith.constant 2 : index
    %c0_143 = arith.constant 0 : index
    %c0_144 = arith.constant 0 : index
    %92 = vector.load %arg4[%c2_142, %c0_143, %c0_144] : memref<3x384x128xbf16, #tpu.memory_space<vmem>>, vector<1x384x128xbf16>
    %93 = vector.shape_cast %92 : vector<1x384x128xbf16> to vector<384x128xbf16>
    %cst_145 = arith.constant dense<0.000000e+00> : vector<256x128xf32>
    %94 = tpu.matmul %91, %93, %cst_145 {dimension_numbers = #tpu.dot_dimension_numbers<[1], [0], [0], [1], [0, 0, 1, 1], [], []>} : vector<256x384xbf16>, vector<384x128xbf16>, vector<256x128xf32> -> vector<256x128xf32>
    %95 = arith.addf %89, %94 : vector<256x128xf32>
    %c0_146 = arith.constant 0 : index
    %c0_147 = arith.constant 0 : index
    %96 = vector.load %arg14[%c0_146, %c0_147] : memref<256x128xf32, #tpu.memory_space<vmem>>, vector<256x128xf32>
    tpu.vector_store %arg14[%c0_146, %c0_147], %95 {strides = array<i32>} : memref<256x128xf32, #tpu.memory_space<vmem>>, vector<256x128xf32>,
    %c0_148 = arith.constant 0 : index
    %c0_149 = arith.constant 0 : index
    %97 = vector.load %arg14[%c0_148, %c0_149] : memref<256x128xf32, #tpu.memory_space<vmem>>, vector<256x128xf32>
    %c0_150 = arith.constant 0 : index
    %c0_151 = arith.constant 0 : index
    %98 = vector.load %arg5[%c0_150, %c0_151] : memref<1x128xf32, #tpu.memory_space<vmem>>, vector<1x128xf32>
    %99 = vector.broadcast %98 : vector<1x128xf32> to vector<256x128xf32>
    %100 = arith.addf %97, %99 : vector<256x128xf32>
    %c1_152 = arith.constant 1 : index
    %c0_153 = arith.constant 0 : index
    %c128_154 = arith.constant 128 : index
    %101 = vector.load %arg10[%c1_152, %c0_153, %c128_154] : memref<18x16x384xf32, #tpu.memory_space<vmem>>, vector<16x16x128xf32>
    %102 = vector.shape_cast %101 : vector<16x16x128xf32> to vector<256x128xf32>
    %103 = arith.truncf %102 : vector<256x128xf32> to vector<256x128xbf16>
    %c0_155 = arith.constant 0 : index
    %c0_156 = arith.constant 0 : index
    %104 = vector.load %arg6[%c0_155, %c0_156] : memref<128x128xbf16, #tpu.memory_space<vmem>>, vector<128x128xbf16>
    %cst_157 = arith.constant dense<0.000000e+00> : vector<256x128xf32>
    %105 = tpu.matmul %103, %104, %cst_157 {dimension_numbers = #tpu.dot_dimension_numbers<[1], [0], [0], [1], [0, 0, 1, 1], [], []>} : vector<256x128xbf16>, vector<128x128xbf16>, vector<256x128xf32> -> vector<256x128xf32>
    %c0_158 = arith.constant 0 : index
    %c0_159 = arith.constant 0 : index
    %106 = vector.load %arg7[%c0_158, %c0_159] : memref<1x128xf32, #tpu.memory_space<vmem>>, vector<1x128xf32>
    %107 = vector.broadcast %106 : vector<1x128xf32> to vector<256x128xf32>
    %108 = arith.addf %105, %107 : vector<256x128xf32>
    %109 = arith.addf %100, %108 : vector<256x128xf32>
    %cst_160 = arith.constant 0.000000e+00 : f32
    %110 = vector.broadcast %cst_160 : f32 to vector<256x128xf32>
    %111 = arith.maximumf %109, %110 : vector<256x128xf32>
    %112 = vector.shape_cast %111 : vector<256x128xf32> to vector<1x16x16x128xf32>
    %c0_161 = arith.constant 0 : index
    %c0_162 = arith.constant 0 : index
    %c0_163 = arith.constant 0 : index
    %c0_164 = arith.constant 0 : index
    %113 = vector.load %arg8[%c0_161, %c0_162, %c0_163, %c0_164] : memref<1x16x16x128xf32, #tpu.memory_space<vmem>>, vector<1x16x16x128xf32>
    tpu.vector_store %arg8[%c0_161, %c0_162, %c0_163, %c0_164], %112 {strides = array<i32>} : memref<1x16x16x128xf32, #tpu.memory_space<vmem>>, vector<1x16x16x128xf32>,
    return
  }
  func.func @transform_0(%arg0: i32) -> (i32, i32, i32, i32) {
    %c0_i32 = arith.constant 0 : i32
    %c0_i32_0 = arith.constant 0 : i32
    %c0_i32_1 = arith.constant 0 : i32
    %c0_i32_2 = arith.constant 0 : i32
    return %arg0, %c0_i32, %c0_i32_0, %c0_i32_1 : i32, i32, i32, i32
  }
  func.func @transform_1(%arg0: i32) -> (i32, i32, i32) {
    %c0_i32 = arith.constant 0 : i32
    %c0_i32_0 = arith.constant 0 : i32
    %c0_i32_1 = arith.constant 0 : i32
    %c0_i32_2 = arith.constant 0 : i32
    return %c0_i32, %c0_i32_0, %c0_i32_1 : i32, i32, i32
  }
  func.func @transform_2(%arg0: i32) -> (i32, i32) {
    %c0_i32 = arith.constant 0 : i32
    %c0_i32_0 = arith.constant 0 : i32
    %c0_i32_1 = arith.constant 0 : i32
    return %c0_i32, %c0_i32_0 : i32, i32
  }
  func.func @transform_3(%arg0: i32) -> (i32, i32, i32) {
    %c0_i32 = arith.constant 0 : i32
    %c0_i32_0 = arith.constant 0 : i32
    %c0_i32_1 = arith.constant 0 : i32
    %c0_i32_2 = arith.constant 0 : i32
    return %c0_i32, %c0_i32_0, %c0_i32_1 : i32, i32, i32
  }
  func.func @transform_4(%arg0: i32) -> (i32, i32) {
    %c0_i32 = arith.constant 0 : i32
    %c0_i32_0 = arith.constant 0 : i32
    %c0_i32_1 = arith.constant 0 : i32
    return %c0_i32, %c0_i32_0 : i32, i32
  }
  func.func @transform_5(%arg0: i32) -> (i32, i32) {
    %c0_i32 = arith.constant 0 : i32
    %c0_i32_0 = arith.constant 0 : i32
    %c0_i32_1 = arith.constant 0 : i32
    return %c0_i32, %c0_i32_0 : i32, i32
  }
  func.func @transform_6(%arg0: i32) -> (i32, i32) {
    %c0_i32 = arith.constant 0 : i32
    %c0_i32_0 = arith.constant 0 : i32
    %c0_i32_1 = arith.constant 0 : i32
    return %c0_i32, %c0_i32_0 : i32, i32
  }
  func.func @transform_7(%arg0: i32) -> (i32, i32, i32, i32) {
    %c0_i32 = arith.constant 0 : i32
    %c0_i32_0 = arith.constant 0 : i32
    %c0_i32_1 = arith.constant 0 : i32
    %c0_i32_2 = arith.constant 0 : i32
    return %arg0, %c0_i32, %c0_i32_0, %c0_i32_1 : i32, i32, i32, i32
  }
}

</mosaic_0001>

<llo_original>
// kernel: tpu_custom_call.1
$region0: #{tpu_custom_call.1}
  #allocation0 [shape = 'u32[]', space=smem, size = 0x4, offset = 0x4, fixed_abs, tag = 'smem constant byte address 0x4 - core index']
  #allocation1 [shape = 'u32[144,128]{1,0:T(1,128)}', space=vmem, size = 0x12000, scoped, tag = 'internal scratch']
  #allocation2 [shape = 'f32[18,18,128]{2,1,0:T(8,128)}', space=vmem, size = 0x36000, scoped, tag = 'scratch operand']
  #allocation3 [shape = 'f32[18,16,384]{2,1,0:T(8,128)}', space=vmem, size = 0x6c000, scoped, tag = 'scratch operand']
  #allocation4 [shape = 'f32[18,18,128]{2,1,0:T(8,128)}', space=vmem, size = 0x36000, scoped, tag = 'scratch operand']
  #allocation5 [shape = 'f32[18,16,384]{2,1,0:T(8,128)}', space=vmem, size = 0x6c000, scoped, tag = 'scratch operand']
  #allocation6 [shape = 'f32[256,128]{1,0:T(8,128)}', space=vmem, size = 0x20000, scoped, tag = 'scratch operand']
  #allocation7 [shape = 'f32[256,128]{1,0:T(8,128)}', space=vmem, size = 0x20000, scoped, tag = 'scratch operand']
  %s0 = inlined_call_operand.hbm [shape: f32[2,16,16,128], index: 0, kind: input, shape index: {}]
  %s1 = inlined_call_operand.hbm [shape: bf16[3,384,128], index: 1, kind: input, shape index: {}]
  %s2 = inlined_call_operand.vmem [shape: f32[1,128], index: 2, kind: input, shape index: {}]
  %s3 = inlined_call_operand.hbm [shape: bf16[3,384,128], index: 3, kind: input, shape index: {}]
  %s4 = inlined_call_operand.vmem [shape: f32[1,128], index: 4, kind: input, shape index: {}]
  %s5 = inlined_call_operand.hbm [shape: bf16[128,128], index: 5, kind: input, shape index: {}]
  %s6 = inlined_call_operand.vmem [shape: f32[1,128], index: 6, kind: input, shape index: {}]
  %s7 = inlined_call_operand.hbm [shape: f32[2,16,16,128], index: 7, kind: output, shape index: {}]
  %s8 = sld [smem:[#allocation0]]
  $region77: #{tpu_custom_call.1} parent=0
    _
  %s10 = ssub.s32 1, %s8
  %s11 = scalar_select 0, %s10, %s8
  $region1: #{tpu_custom_call.1} parent=0
    #allocation8 [shape = 'u8[262144]{0}', space=vmem, size = 0x40000, scoped, tag = 'input window, operand 0']
    #allocation9 [shape = 's32[2]{0}', space=sflag, size = 0x8, scoped, tag = 'scoped memory for tpu_custom_call.1']
    #allocation10 [shape = 's32[2]{0}', space=sflag, size = 0x8, scoped, tag = 'scoped memory for tpu_custom_call.1']
    #allocation11 [shape = 'u8[294912]{0}', space=vmem, size = 0x48000, scoped, tag = 'input window, operand 1, single buffered']
    #allocation12 [shape = 's32[1]{0}', space=sflag, size = 0x4, scoped, tag = 'scoped memory for tpu_custom_call.1']
    #allocation13 [shape = 'u8[294912]{0}', space=vmem, size = 0x48000, scoped, tag = 'input window, operand 3, single buffered']
    #allocation14 [shape = 'u8[32768]{0}', space=vmem, size = 0x8000, scoped, tag = 'input window, operand 5, single buffered']
    #allocation15 [shape = 's32[1]{0}', space=sflag, size = 0x4, scoped, tag = 'scoped memory for tpu_custom_call.1']
    #allocation16 [shape = 'u8[262144]{0}', space=vmem, size = 0x40000, scoped, tag = 'output window, operand 0']
    %12 = vsyncpa [#allocation9], 0
    %s13 = scalar_lea.sflag [#allocation9], 1
    %14 = vsyncpa %s13, 0
    %15 = vsyncpa [#allocation12], 0
    %16 = vsyncpa [#allocation15], 0
    %17 = vsyncpa [#allocation10], 0
    %s18 = scalar_lea.sflag [#allocation10], 1
    %19 = vsyncpa %s18, 0
    loop: start=0, step=1, limit=4
    $region2: #{tpu_custom_call.1} parent=1 // loop_pre_header
      _
    $region3: #{tpu_custom_call.1} parent=1 // loop_header
      %s21 = sphi 0, %s25
      %p22 = scmp.ge.s32.totalorder %s21, 4
      %s31 = sphi 0, %s33
      %s34 = sphi 0, %s31
      %s35 = sphi 0, %s34
      %s51 = sphi 0, %s35
      %s55 = sphi 0, %s55
      %s57 = sphi 0, %s55
      %s58 = sphi 0, %s57
      %s72 = sphi 0, %s58
      %s76 = sphi 0, %s76
      %s78 = sphi 0, %s76
      %s79 = sphi 0, %s78
      %s93 = sphi 0, %s79
      %s97 = sphi 0, %s97
      %s99 = sphi 0, %s97
      %s100 = sphi 0, %s99
      %s114 = sphi 0, %s100
      %s118 = sphi 0, %s118
      %s120 = sphi 0, %s118
      %s121 = sphi 0, %s120
      %s135 = sphi 0, %s121
      %s139 = sphi 0, %s139
      %s141 = sphi 0, %s139
      %s142 = sphi 0, %s141
      %s156 = sphi 0, %s142
      %s160 = sphi 0, %s160
      %s162 = sphi 0, %s160
      %s163 = sphi 0, %s162
      %s177 = sphi 0, %s163
      %s183 = sphi 0, %s185
      %s186 = sphi 0, %s183
      %s187 = sphi 0, %s186
      %s203 = sphi 0, %s187
    $region4: #{tpu_custom_call.1} parent=1 // loop_header_branch
      %24 = sbr.rel (%p22) target = $region8
    $region5: #{tpu_custom_call.1} parent=1 // loop_body
      %s26 = ssub.s32 %s21, 1
      %s27 = ssub.s32 %s21, 2
      %s28 = sadd.s32 %s21, 1
      %s29 = ssub.s32 %s21, %s28
      %p30 = scmp.eq.s32.totalorder %s29, 0
      %s32 = sadd.s32 %s31, 1
      %s33 = scalar_select %p30, %s31, %s32
      %p36 = pneg %p30
      %p37 = scmp.eq.s32.totalorder %s21, 1
      %p38 = por %p36, %p37
      %p39 = scmp.ne.s32.totalorder %s31, %s34
      %p40 = scmp.eq.s32.totalorder %s21, 0
      %p41 = por %p39, %p40
      %p42 = scmp.ne.s32.totalorder %s31, %s34
      %p43 = scmp.eq.s32.totalorder %s26, 1
      %p44 = por %p42, %p43
      %p45 = scmp.ne.s32.totalorder %s34, %s35
      %p46 = scmp.eq.s32.totalorder %s26, 0
      %p47 = por %p45, %p46
      %p48 = scmp.ne.s32.totalorder %s34, %s35
      %p49 = scmp.eq.s32.totalorder %s27, 1
      %p50 = por %p48, %p49
      %p52 = scmp.ne.s32.totalorder %s35, %s51
      %p53 = scmp.eq.s32.totalorder %s27, 0
      %p54 = por %p52, %p53
      %s56 = sadd.s32 %s55, 1
      %p59 = scmp.eq.s32.totalorder %s21, 1
      %p60 = scmp.ne.s32.totalorder %s55, %s57
      %p61 = scmp.eq.s32.totalorder %s21, 0
      %p62 = por %p60, %p61
      %p63 = scmp.ne.s32.totalorder %s55, %s57
      %p64 = scmp.eq.s32.totalorder %s26, 1
      %p65 = por %p63, %p64
      %p66 = scmp.ne.s32.totalorder %s57, %s58
      %p67 = scmp.eq.s32.totalorder %s26, 0
      %p68 = por %p66, %p67
      %p69 = scmp.ne.s32.totalorder %s57, %s58
      %p70 = scmp.eq.s32.totalorder %s27, 1
      %p71 = por %p69, %p70
      %p73 = scmp.ne.s32.totalorder %s58, %s72
      %p74 = scmp.eq.s32.totalorder %s27, 0
      %p75 = por %p73, %p74
      %s77 = sadd.s32 %s76, 1
      %p80 = scmp.eq.s32.totalorder %s21, 1
      %p81 = scmp.ne.s32.totalorder %s76, %s78
      %p82 = scmp.eq.s32.totalorder %s21, 0
      %p83 = por %p81, %p82
      %p84 = scmp.ne.s32.totalorder %s76, %s78
      %p85 = scmp.eq.s32.totalorder %s26, 1
      %p86 = por %p84, %p85
      %p87 = scmp.ne.s32.totalorder %s78, %s79
      %p88 = scmp.eq.s32.totalorder %s26, 0
      %p89 = por %p87, %p88
      %p90 = scmp.ne.s32.totalorder %s78, %s79
      %p91 = scmp.eq.s32.totalorder %s27, 1
      %p92 = por %p90, %p91
      %p94 = scmp.ne.s32.totalorder %s79, %s93
      %p95 = scmp.eq.s32.totalorder %s27, 0
      %p96 = por %p94, %p95
      %s98 = sadd.s32 %s97, 1
      %p101 = scmp.eq.s32.totalorder %s21, 1
      %p102 = scmp.ne.s32.totalorder %s97, %s99
      %p103 = scmp.eq.s32.totalorder %s21, 0
      %p104 = por %p102, %p103
      %p105 = scmp.ne.s32.totalorder %s97, %s99
      %p106 = scmp.eq.s32.totalorder %s26, 1
      %p107 = por %p105, %p106
      %p108 = scmp.ne.s32.totalorder %s99, %s100
      %p109 = scmp.eq.s32.totalorder %s26, 0
      %p110 = por %p108, %p109
      %p111 = scmp.ne.s32.totalorder %s99, %s100
      %p112 = scmp.eq.s32.totalorder %s27, 1
      %p113 = por %p111, %p112
      %p115 = scmp.ne.s32.totalorder %s100, %s114
      %p116 = scmp.eq.s32.totalorder %s27, 0
      %p117 = por %p115, %p116
      %s119 = sadd.s32 %s118, 1
      %p122 = scmp.eq.s32.totalorder %s21, 1
      %p123 = scmp.ne.s32.totalorder %s118, %s120
      %p124 = scmp.eq.s32.totalorder %s21, 0
      %p125 = por %p123, %p124
      %p126 = scmp.ne.s32.totalorder %s118, %s120
      %p127 = scmp.eq.s32.totalorder %s26, 1
      %p128 = por %p126, %p127
      %p129 = scmp.ne.s32.totalorder %s120, %s121
      %p130 = scmp.eq.s32.totalorder %s26, 0
      %p131 = por %p129, %p130
      %p132 = scmp.ne.s32.totalorder %s120, %s121
      %p133 = scmp.eq.s32.totalorder %s27, 1
      %p134 = por %p132, %p133
      %p136 = scmp.ne.s32.totalorder %s121, %s135
      %p137 = scmp.eq.s32.totalorder %s27, 0
      %p138 = por %p136, %p137
      %s140 = sadd.s32 %s139, 1
      %p143 = scmp.eq.s32.totalorder %s21, 1
      %p144 = scmp.ne.s32.totalorder %s139, %s141
      %p145 = scmp.eq.s32.totalorder %s21, 0
      %p146 = por %p144, %p145
      %p147 = scmp.ne.s32.totalorder %s139, %s141
      %p148 = scmp.eq.s32.totalorder %s26, 1
      %p149 = por %p147, %p148
      %p150 = scmp.ne.s32.totalorder %s141, %s142
      %p151 = scmp.eq.s32.totalorder %s26, 0
      %p152 = por %p150, %p151
      %p153 = scmp.ne.s32.totalorder %s141, %s142
      %p154 = scmp.eq.s32.totalorder %s27, 1
      %p155 = por %p153, %p154
      %p157 = scmp.ne.s32.totalorder %s142, %s156
      %p158 = scmp.eq.s32.totalorder %s27, 0
      %p159 = por %p157, %p158
      %s161 = sadd.s32 %s160, 1
      %p164 = scmp.eq.s32.totalorder %s21, 1
      %p165 = scmp.ne.s32.totalorder %s160, %s162
      %p166 = scmp.eq.s32.totalorder %s21, 0
      %p167 = por %p165, %p166
      %p168 = scmp.ne.s32.totalorder %s160, %s162
      %p169 = scmp.eq.s32.totalorder %s26, 1
      %p170 = por %p168, %p169
      %p171 = scmp.ne.s32.totalorder %s162, %s163
      %p172 = scmp.eq.s32.totalorder %s26, 0
      %p173 = por %p171, %p172
      %p174 = scmp.ne.s32.totalorder %s162, %s163
      %p175 = scmp.eq.s32.totalorder %s27, 1
      %p176 = por %p174, %p175
      %p178 = scmp.ne.s32.totalorder %s163, %s177
      %p179 = scmp.eq.s32.totalorder %s27, 0
      %p180 = por %p178, %p179
      %s181 = ssub.s32 %s21, %s28
      %p182 = scmp.eq.s32.totalorder %s181, 0
      %s184 = sadd.s32 %s183, 1
      %s185 = scalar_select %p182, %s183, %s184
      %p188 = pneg %p182
      %p189 = scmp.eq.s32.totalorder %s21, 1
      %p190 = por %p188, %p189
      %p191 = scmp.ne.s32.totalorder %s183, %s186
      %p192 = scmp.eq.s32.totalorder %s21, 0
      %p193 = por %p191, %p192
      %p194 = scmp.ne.s32.totalorder %s183, %s186
      %p195 = scmp.eq.s32.totalorder %s26, 1
      %p196 = por %p194, %p195
      %p197 = scmp.ne.s32.totalorder %s186, %s187
      %p198 = scmp.eq.s32.totalorder %s26, 0
      %p199 = por %p197, %p198
      %p200 = scmp.ne.s32.totalorder %s186, %s187
      %p201 = scmp.eq.s32.totalorder %s27, 1
      %p202 = por %p200, %p201
      %p204 = scmp.ne.s32.totalorder %s187, %s203
      %p205 = scmp.eq.s32.totalorder %s27, 0
      %p206 = por %p204, %p205
      %p207 = scmp.le.s32.totalorder 1, %s21
      %p208 = scmp.lt.s32.totalorder %s21, 3
      %p209 = pnand %p207, %p208
      %p210 = pneg %p209
      // Predicated region
      $region9: #{tpu_custom_call.1} parent=5 // pred_check
        _
      $region10: #{tpu_custom_call.1} parent=5 // pred_check_branch
        %212 = sbr.rel (%p209) target = $region12
      $region11: #{tpu_custom_call.1} parent=5 // pred_region
        %s213 = ssub.s32 %s21, 1
        // Predicated region
        $region13: #{tpu_custom_call.1} parent=11 // pred_check
          %p214 = pneg %p68
        $region14: #{tpu_custom_call.1} parent=11 // pred_check_branch
          %216 = sbr.rel (%p214) target = $region16
        $region15: #{tpu_custom_call.1} parent=11 // pred_region
          %s218 = ssub.s32 9216, 9216
          %219 = vsyncadd [#allocation12], %s218
          %s220 = sshll.u32 [#allocation11], 4
          %s221 = int_to_ptr.vmem [resolvable:$true] %s220
          %226 = dma.hbm_to_vmem [thread:$0]  %s1, 9216, %s221, [#allocation12], 64, 64, 4
        $region16: #{tpu_custom_call.1} parent=11 // pred_fallthru
          _
        // Predicated region
        $region17: #{tpu_custom_call.1} parent=11 // pred_check
          %p227 = pneg %p89
        $region18: #{tpu_custom_call.1} parent=11 // pred_check_branch
          %229 = sbr.rel (%p227) target = $region20
        $region19: #{tpu_custom_call.1} parent=11 // pred_region
          _
        $region20: #{tpu_custom_call.1} parent=11 // pred_fallthru
          _
        // Predicated region
        $region21: #{tpu_custom_call.1} parent=11 // pred_check
          %p230 = pneg %p110
        $region22: #{tpu_custom_call.1} parent=11 // pred_check_branch
          %232 = sbr.rel (%p230) target = $region24
        $region23: #{tpu_custom_call.1} parent=11 // pred_region
          %s234 = ssub.s32 9216, 9216
          %235 = vsyncadd [#allocation12], %s234
          %s236 = sshll.u32 [#allocation13], 4
          %s237 = int_to_ptr.vmem [resolvable:$true] %s236
          %242 = dma.hbm_to_vmem [thread:$0]  %s3, 9216, %s237, [#allocation12], 64, 64, 4
        $region24: #{tpu_custom_call.1} parent=11 // pred_fallthru
          _
        // Predicated region
        $region25: #{tpu_custom_call.1} parent=11 // pred_check
          %p243 = pneg %p131
        $region26: #{tpu_custom_call.1} parent=11 // pred_check_branch
          %245 = sbr.rel (%p243) target = $region28
        $region27: #{tpu_custom_call.1} parent=11 // pred_region
          _
        $region28: #{tpu_custom_call.1} parent=11 // pred_fallthru
          _
        // Predicated region
        $region29: #{tpu_custom_call.1} parent=11 // pred_check
          %p246 = pneg %p152
        $region30: #{tpu_custom_call.1} parent=11 // pred_check_branch
          %248 = sbr.rel (%p246) target = $region32
        $region31: #{tpu_custom_call.1} parent=11 // pred_region
          %s250 = ssub.s32 1024, 1024
          %251 = vsyncadd [#allocation15], %s250
          %s252 = sshll.u32 [#allocation14], 4
          %s253 = int_to_ptr.vmem [resolvable:$true] %s252
          %258 = dma.hbm_to_vmem [thread:$0]  %s5, 1024, %s253, [#allocation15], 64, 64, 4
        $region32: #{tpu_custom_call.1} parent=11 // pred_fallthru
          _
        // Predicated region
        $region33: #{tpu_custom_call.1} parent=11 // pred_check
          %p259 = pneg %p173
        $region34: #{tpu_custom_call.1} parent=11 // pred_check_branch
          %261 = sbr.rel (%p259) target = $region36
        $region35: #{tpu_custom_call.1} parent=11 // pred_region
          _
        $region36: #{tpu_custom_call.1} parent=11 // pred_fallthru
          _
      $region12: #{tpu_custom_call.1} parent=5 // pred_fallthru
        _
      %p262 = scmp.lt.s32.totalorder %s21, 2
      // Predicated region
      $region37: #{tpu_custom_call.1} parent=5 // pred_check
        %p263 = pneg %p262
      $region38: #{tpu_custom_call.1} parent=5 // pred_check_branch
        %265 = sbr.rel (%p263) target = $region40
      $region39: #{tpu_custom_call.1} parent=5 // pred_region
        // Predicated region
        $region41: #{tpu_custom_call.1} parent=39 // pred_check
          %p266 = pneg %p41
        $region42: #{tpu_custom_call.1} parent=39 // pred_check_branch
          %268 = sbr.rel (%p266) target = $region44
        $region43: #{tpu_custom_call.1} parent=39 // pred_region
          %s269 = sand.u32 %s31, 1
          %s270 = scalar_lea.sflag [#allocation9], %s269
          %s271 = sand.u32 %s31, 1
          %s272 = smul.addr %s271, 256
          %s273 = scalar_lea.vmem [#allocation8], %s272
          %s275 = ssub.s32 4096, 4096
          %276 = vsyncadd %s270, %s275
          %s277 = smul.addr %s21, 32
          %s278 = smul.addr %s277, 128
          %s279 = scalar_lea.hbm %s0, %s278
          %s280 = sshll.u32 %s273, 4
          %s281 = int_to_ptr.vmem [resolvable:$true] %s280
          %286 = dma.hbm_to_vmem [thread:$0]  %s279, 4096, %s281, %s270, 128, 128, 8
        $region44: #{tpu_custom_call.1} parent=39 // pred_fallthru
          _
      $region40: #{tpu_custom_call.1} parent=5 // pred_fallthru
        _
      %p287 = scmp.le.s32.totalorder 1, %s21
      %p288 = scmp.lt.s32.totalorder %s21, 3
      %p289 = pnand %p287, %p288
      %p290 = pneg %p289
      // Predicated region
      $region45: #{tpu_custom_call.1} parent=5 // pred_check
        _
      $region46: #{tpu_custom_call.1} parent=5 // pred_check_branch
        %292 = sbr.rel (%p289) target = $region48
      $region47: #{tpu_custom_call.1} parent=5 // pred_region
        %s293 = ssub.s32 %s21, 1
        %s294 = sand.u32 %s34, 1
        %s295 = scalar_lea.sflag [#allocation9], %s294
        %s296 = sand.u32 %s34, 1
        %s297 = smul.addr %s296, 256
        %s298 = scalar_lea.vmem [#allocation8], %s297
        // Predicated region
        $region49: #{tpu_custom_call.1} parent=47 // pred_check
          %p299 = pneg %p47
        $region50: #{tpu_custom_call.1} parent=47 // pred_check_branch
          %301 = sbr.rel (%p299) target = $region52
        $region51: #{tpu_custom_call.1} parent=47 // pred_region
          %302 = dma.done %s295, 4096
        $region52: #{tpu_custom_call.1} parent=47 // pred_fallthru
          _
        // Predicated region
        $region53: #{tpu_custom_call.1} parent=47 // pred_check
          %p303 = pneg %p68
        $region54: #{tpu_custom_call.1} parent=47 // pred_check_branch
          %305 = sbr.rel (%p303) target = $region56
        $region55: #{tpu_custom_call.1} parent=47 // pred_region
          %306 = dma.done [#allocation12], 9216
        $region56: #{tpu_custom_call.1} parent=47 // pred_fallthru
          _
        // Predicated region
        $region57: #{tpu_custom_call.1} parent=47 // pred_check
          %p307 = pneg %p110
        $region58: #{tpu_custom_call.1} parent=47 // pred_check_branch
          %309 = sbr.rel (%p307) target = $region60
        $region59: #{tpu_custom_call.1} parent=47 // pred_region
          %310 = dma.done [#allocation12], 9216
        $region60: #{tpu_custom_call.1} parent=47 // pred_fallthru
          _
        // Predicated region
        $region61: #{tpu_custom_call.1} parent=47 // pred_check
          %p311 = pneg %p152
        $region62: #{tpu_custom_call.1} parent=47 // pred_check_branch
          %313 = sbr.rel (%p311) target = $region64
        $region63: #{tpu_custom_call.1} parent=47 // pred_region
          %314 = dma.done [#allocation15], 1024
        $region64: #{tpu_custom_call.1} parent=47 // pred_fallthru
          _
        %s315 = sand.u32 %s34, 1
        %s316 = scalar_lea.sflag [#allocation9], %s315
        %s317 = sand.u32 %s34, 1
        %s318 = smul.addr %s317, 256
        %s319 = scalar_lea.vmem [#allocation8], %s318
        %p320 = pneg %p47
        %p321 = pneg %p44
        %p322 = pneg %p68
        %p323 = pneg %p65
        %p324 = pneg %p89
        %p325 = pneg %p86
        %p326 = pneg %p110
        %p327 = pneg %p107
        %p328 = pneg %p131
        %p329 = pneg %p128
        %p330 = pneg %p152
        %p331 = pneg %p149
        %p332 = pneg %p173
        %p333 = pneg %p170
        %p334 = pneg %p199
        %p335 = pneg %p196
        %s336 = sand.u32 %s186, 1
        %s337 = scalar_lea.sflag [#allocation10], %s336
        %s338 = sand.u32 %s186, 1
        %s339 = smul.addr %s338, 256
        %s340 = scalar_lea.vmem [#allocation16], %s339
        %342 = vst [vmem:[#allocation2] sm:$0xff] 0.0
        %343 = vst [vmem:[#allocation2 + $0x8] sm:$0xff] 0.0
        %344 = vst [vmem:[#allocation2 + $0x10] sm:$0x3] 0.0
        %s345 = scalar_lea.vmem [#allocation2], 408
        %346 = vst [vmem:[%s345] sm:$0xff] 0.0
        %347 = vst [vmem:[%s345 + $0x8] sm:$0xff] 0.0
        %348 = vst [vmem:[%s345 + $0x10] sm:$0x3] 0.0
        %349 = vst [vmem:[#allocation2] sm:$0x1] 0.0
        %350 = vst [vmem:[#allocation2 + $0x18] sm:$0x1] 0.0
        %351 = vst [vmem:[#allocation2 + $0x30] sm:$0x1] 0.0
        %352 = vst [vmem:[#allocation2 + $0x48] sm:$0x1] 0.0
        %353 = vst [vmem:[#allocation2 + $0x60] sm:$0x1] 0.0
        %354 = vst [vmem:[#allocation2 + $0x78] sm:$0x1] 0.0
        %355 = vst [vmem:[#allocation2 + $0x90] sm:$0x1] 0.0
        %356 = vst [vmem:[#allocation2 + $0xa8] sm:$0x1] 0.0
        %357 = vst [vmem:[#allocation2 + $0xc0] sm:$0x1] 0.0
        %358 = vst [vmem:[#allocation2 + $0xd8] sm:$0x1] 0.0
        %359 = vst [vmem:[#allocation2 + $0xf0] sm:$0x1] 0.0
        %360 = vst [vmem:[#allocation2 + $0x108] sm:$0x1] 0.0
        %361 = vst [vmem:[#allocation2 + $0x120] sm:$0x1] 0.0
        %362 = vst [vmem:[#allocation2 + $0x138] sm:$0x1] 0.0
        %363 = vst [vmem:[#allocation2 + $0x150] sm:$0x1] 0.0
        %364 = vst [vmem:[#allocation2 + $0x168] sm:$0x1] 0.0
        %365 = vst [vmem:[#allocation2 + $0x180] sm:$0x1] 0.0
        %366 = vst [vmem:[#allocation2 + $0x198] sm:$0x1] 0.0
        %367 = vst [vmem:[#allocation2 + $0x11] sm:$0x1] 0.0
        %368 = vst [vmem:[#allocation2 + $0x29] sm:$0x1] 0.0
        %369 = vst [vmem:[#allocation2 + $0x41] sm:$0x1] 0.0
        %370 = vst [vmem:[#allocation2 + $0x59] sm:$0x1] 0.0
        %371 = vst [vmem:[#allocation2 + $0x71] sm:$0x1] 0.0
        %372 = vst [vmem:[#allocation2 + $0x89] sm:$0x1] 0.0
        %373 = vst [vmem:[#allocation2 + $0xa1] sm:$0x1] 0.0
        %374 = vst [vmem:[#allocation2 + $0xb9] sm:$0x1] 0.0
        %375 = vst [vmem:[#allocation2 + $0xd1] sm:$0x1] 0.0
        %376 = vst [vmem:[#allocation2 + $0xe9] sm:$0x1] 0.0
        %377 = vst [vmem:[#allocation2 + $0x101] sm:$0x1] 0.0
        %378 = vst [vmem:[#allocation2 + $0x119] sm:$0x1] 0.0
        %379 = vst [vmem:[#allocation2 + $0x131] sm:$0x1] 0.0
        %380 = vst [vmem:[#allocation2 + $0x149] sm:$0x1] 0.0
        %381 = vst [vmem:[#allocation2 + $0x161] sm:$0x1] 0.0
        %382 = vst [vmem:[#allocation2 + $0x179] sm:$0x1] 0.0
        %383 = vst [vmem:[#allocation2 + $0x191] sm:$0x1] 0.0
        %384 = vst [vmem:[#allocation2 + $0x1a9] sm:$0x1] 0.0
        %v385 = vld [vmem:[%s298] sm:$0xff]
        %v386 = vld [vmem:[%s298 + $0x8] sm:$0xff]
        %v387 = vld [vmem:[%s298 + $0x10] sm:$0xff]
        %v388 = vld [vmem:[%s298 + $0x18] sm:$0xff]
        %v389 = vld [vmem:[%s298 + $0x20] sm:$0xff]
        %v390 = vld [vmem:[%s298 + $0x28] sm:$0xff]
        %v391 = vld [vmem:[%s298 + $0x30] sm:$0xff]
        %v392 = vld [vmem:[%s298 + $0x38] sm:$0xff]
        %v393 = vld [vmem:[%s298 + $0x40] sm:$0xff]
        %v394 = vld [vmem:[%s298 + $0x48] sm:$0xff]
        %v395 = vld [vmem:[%s298 + $0x50] sm:$0xff]
        %v396 = vld [vmem:[%s298 + $0x58] sm:$0xff]
        %v397 = vld [vmem:[%s298 + $0x60] sm:$0xff]
        %v398 = vld [vmem:[%s298 + $0x68] sm:$0xff]
        %v399 = vld [vmem:[%s298 + $0x70] sm:$0xff]
        %v400 = vld [vmem:[%s298 + $0x78] sm:$0xff]
        %v401 = vld [vmem:[%s298 + $0x80] sm:$0xff]
        %v402 = vld [vmem:[%s298 + $0x88] sm:$0xff]
        %v403 = vld [vmem:[%s298 + $0x90] sm:$0xff]
        %v404 = vld [vmem:[%s298 + $0x98] sm:$0xff]
        %v405 = vld [vmem:[%s298 + $0xa0] sm:$0xff]
        %v406 = vld [vmem:[%s298 + $0xa8] sm:$0xff]
        %v407 = vld [vmem:[%s298 + $0xb0] sm:$0xff]
        %v408 = vld [vmem:[%s298 + $0xb8] sm:$0xff]
        %v409 = vld [vmem:[%s298 + $0xc0] sm:$0xff]
        %v410 = vld [vmem:[%s298 + $0xc8] sm:$0xff]
        %v411 = vld [vmem:[%s298 + $0xd0] sm:$0xff]
        %v412 = vld [vmem:[%s298 + $0xd8] sm:$0xff]
        %v413 = vld [vmem:[%s298 + $0xe0] sm:$0xff]
        %v414 = vld [vmem:[%s298 + $0xe8] sm:$0xff]
        %v415 = vld [vmem:[%s298 + $0xf0] sm:$0xff]
        %v416 = vld [vmem:[%s298 + $0xf8] sm:$0xff]
        %s417 = scalar_lea.vmem [#allocation2], 24
        %418 = vst [vmem:[%s417 + $0x1] sm:$0xff] %v385
        %419 = vst [vmem:[%s417 + $0x9] sm:$0xff] %v386
        %420 = vst [vmem:[%s417 + $0x19] sm:$0xff] %v387
        %421 = vst [vmem:[%s417 + $0x21] sm:$0xff] %v388
        %422 = vst [vmem:[%s417 + $0x31] sm:$0xff] %v389
        %423 = vst [vmem:[%s417 + $0x39] sm:$0xff] %v390
        %424 = vst [vmem:[%s417 + $0x49] sm:$0xff] %v391
        %425 = vst [vmem:[%s417 + $0x51] sm:$0xff] %v392
        %426 = vst [vmem:[%s417 + $0x61] sm:$0xff] %v393
        %427 = vst [vmem:[%s417 + $0x69] sm:$0xff] %v394
        %428 = vst [vmem:[%s417 + $0x79] sm:$0xff] %v395
        %429 = vst [vmem:[%s417 + $0x81] sm:$0xff] %v396
        %430 = vst [vmem:[%s417 + $0x91] sm:$0xff] %v397
        %431 = vst [vmem:[%s417 + $0x99] sm:$0xff] %v398
        %432 = vst [vmem:[%s417 + $0xa9] sm:$0xff] %v399
        %433 = vst [vmem:[%s417 + $0xb1] sm:$0xff] %v400
        %434 = vst [vmem:[%s417 + $0xc1] sm:$0xff] %v401
        %435 = vst [vmem:[%s417 + $0xc9] sm:$0xff] %v402
        %436 = vst [vmem:[%s417 + $0xd9] sm:$0xff] %v403
        %437 = vst [vmem:[%s417 + $0xe1] sm:$0xff] %v404
        %438 = vst [vmem:[%s417 + $0xf1] sm:$0xff] %v405
        %439 = vst [vmem:[%s417 + $0xf9] sm:$0xff] %v406
        %440 = vst [vmem:[%s417 + $0x109] sm:$0xff] %v407
        %441 = vst [vmem:[%s417 + $0x111] sm:$0xff] %v408
        %442 = vst [vmem:[%s417 + $0x121] sm:$0xff] %v409
        %443 = vst [vmem:[%s417 + $0x129] sm:$0xff] %v410
        %444 = vst [vmem:[%s417 + $0x139] sm:$0xff] %v411
        %445 = vst [vmem:[%s417 + $0x141] sm:$0xff] %v412
        %446 = vst [vmem:[%s417 + $0x151] sm:$0xff] %v413
        %447 = vst [vmem:[%s417 + $0x159] sm:$0xff] %v414
        %448 = vst [vmem:[%s417 + $0x169] sm:$0xff] %v415
        %449 = vst [vmem:[%s417 + $0x171] sm:$0xff] %v416
        %v450 = vld [vmem:[#allocation2] sm:$0xff]
        %v451 = vld [vmem:[#allocation2 + $0x8] sm:$0xff]
        %v452 = vld [vmem:[#allocation2 + $0x18] sm:$0xff]
        %v453 = vld [vmem:[#allocation2 + $0x20] sm:$0xff]
        %v454 = vld [vmem:[#allocation2 + $0x30] sm:$0xff]
        %v455 = vld [vmem:[#allocation2 + $0x38] sm:$0xff]
        %v456 = vld [vmem:[#allocation2 + $0x48] sm:$0xff]
        %v457 = vld [vmem:[#allocation2 + $0x50] sm:$0xff]
        %v458 = vld [vmem:[#allocation2 + $0x60] sm:$0xff]
        %v459 = vld [vmem:[#allocation2 + $0x68] sm:$0xff]
        %v460 = vld [vmem:[#allocation2 + $0x78] sm:$0xff]
        %v461 = vld [vmem:[#allocation2 + $0x80] sm:$0xff]
        %v462 = vld [vmem:[#allocation2 + $0x90] sm:$0xff]
        %v463 = vld [vmem:[#allocation2 + $0x98] sm:$0xff]
        %v464 = vld [vmem:[#allocation2 + $0xa8] sm:$0xff]
        %v465 = vld [vmem:[#allocation2 + $0xb0] sm:$0xff]
        %v466 = vld [vmem:[#allocation2 + $0xc0] sm:$0xff]
        %v467 = vld [vmem:[#allocation2 + $0xc8] sm:$0xff]
        %v468 = vld [vmem:[#allocation2 + $0xd8] sm:$0xff]
        %v469 = vld [vmem:[#allocation2 + $0xe0] sm:$0xff]
        %v470 = vld [vmem:[#allocation2 + $0xf0] sm:$0xff]
        %v471 = vld [vmem:[#allocation2 + $0xf8] sm:$0xff]
        %v472 = vld [vmem:[#allocation2 + $0x108] sm:$0xff]
        %v473 = vld [vmem:[#allocation2 + $0x110] sm:$0xff]
        %v474 = vld [vmem:[#allocation2 + $0x120] sm:$0xff]
        %v475 = vld [vmem:[#allocation2 + $0x128] sm:$0xff]
        %v476 = vld [vmem:[#allocation2 + $0x138] sm:$0xff]
        %v477 = vld [vmem:[#allocation2 + $0x140] sm:$0xff]
        %v478 = vld [vmem:[#allocation2 + $0x150] sm:$0xff]
        %v479 = vld [vmem:[#allocation2 + $0x158] sm:$0xff]
        %v480 = vld [vmem:[#allocation2 + $0x168] sm:$0xff]
        %v481 = vld [vmem:[#allocation2 + $0x170] sm:$0xff]
        %v482 = vld [vmem:[#allocation2 + $0x180] sm:$0xff]
        %v483 = vld [vmem:[#allocation2 + $0x188] sm:$0xff]
        %v484 = vld [vmem:[#allocation2 + $0x198] sm:$0xff]
        %v485 = vld [vmem:[#allocation2 + $0x1a0] sm:$0xff]
        %486 = vst [vmem:[#allocation3] sm:$0xff] %v450
        %487 = vst [vmem:[#allocation3 + $0x18] sm:$0xff] %v451
        %488 = vst [vmem:[#allocation3 + $0x30] sm:$0xff] %v452
        %489 = vst [vmem:[#allocation3 + $0x48] sm:$0xff] %v453
        %490 = vst [vmem:[#allocation3 + $0x60] sm:$0xff] %v454
        %491 = vst [vmem:[#allocation3 + $0x78] sm:$0xff] %v455
        %492 = vst [vmem:[#allocation3 + $0x90] sm:$0xff] %v456
        %493 = vst [vmem:[#allocation3 + $0xa8] sm:$0xff] %v457
        %494 = vst [vmem:[#allocation3 + $0xc0] sm:$0xff] %v458
        %495 = vst [vmem:[#allocation3 + $0xd8] sm:$0xff] %v459
        %496 = vst [vmem:[#allocation3 + $0xf0] sm:$0xff] %v460
        %497 = vst [vmem:[#allocation3 + $0x108] sm:$0xff] %v461
        %498 = vst [vmem:[#allocation3 + $0x120] sm:$0xff] %v462
        %499 = vst [vmem:[#allocation3 + $0x138] sm:$0xff] %v463
        %500 = vst [vmem:[#allocation3 + $0x150] sm:$0xff] %v464
        %501 = vst [vmem:[#allocation3 + $0x168] sm:$0xff] %v465
        %502 = vst [vmem:[#allocation3 + $0x180] sm:$0xff] %v466
        %503 = vst [vmem:[#allocation3 + $0x198] sm:$0xff] %v467
        %504 = vst [vmem:[#allocation3 + $0x1b0] sm:$0xff] %v468
        %505 = vst [vmem:[#allocation3 + $0x1c8] sm:$0xff] %v469
        %506 = vst [vmem:[#allocation3 + $0x1e0] sm:$0xff] %v470
        %507 = vst [vmem:[#allocation3 + $0x1f8] sm:$0xff] %v471
        %508 = vst [vmem:[#allocation3 + $0x210] sm:$0xff] %v472
        %509 = vst [vmem:[#allocation3 + $0x228] sm:$0xff] %v473
        %510 = vst [vmem:[#allocation3 + $0x240] sm:$0xff] %v474
        %511 = vst [vmem:[#allocation3 + $0x258] sm:$0xff] %v475
        %512 = vst [vmem:[#allocation3 + $0x270] sm:$0xff] %v476
        %513 = vst [vmem:[#allocation3 + $0x288] sm:$0xff] %v477
        %514 = vst [vmem:[#allocation3 + $0x2a0] sm:$0xff] %v478
        %515 = vst [vmem:[#allocation3 + $0x2b8] sm:$0xff] %v479
        %516 = vst [vmem:[#allocation3 + $0x2d0] sm:$0xff] %v480
        %517 = vst [vmem:[#allocation3 + $0x2e8] sm:$0xff] %v481
        %518 = vst [vmem:[#allocation3 + $0x300] sm:$0xff] %v482
        %519 = vst [vmem:[#allocation3 + $0x318] sm:$0xff] %v483
        %520 = vst [vmem:[#allocation3 + $0x330] sm:$0xff] %v484
        %521 = vst [vmem:[#allocation3 + $0x348] sm:$0xff] %v485
        %v522 = vld [vmem:[#allocation2 + $0x1] sm:$0xff]
        %v523 = vld [vmem:[#allocation2 + $0x9] sm:$0xff]
        %v524 = vld [vmem:[#allocation2 + $0x19] sm:$0xff]
        %v525 = vld [vmem:[#allocation2 + $0x21] sm:$0xff]
        %v526 = vld [vmem:[#allocation2 + $0x31] sm:$0xff]
        %v527 = vld [vmem:[#allocation2 + $0x39] sm:$0xff]
        %v528 = vld [vmem:[#allocation2 + $0x49] sm:$0xff]
        %v529 = vld [vmem:[#allocation2 + $0x51] sm:$0xff]
        %v530 = vld [vmem:[#allocation2 + $0x61] sm:$0xff]
        %v531 = vld [vmem:[#allocation2 + $0x69] sm:$0xff]
        %v532 = vld [vmem:[#allocation2 + $0x79] sm:$0xff]
        %v533 = vld [vmem:[#allocation2 + $0x81] sm:$0xff]
        %v534 = vld [vmem:[#allocation2 + $0x91] sm:$0xff]
        %v535 = vld [vmem:[#allocation2 + $0x99] sm:$0xff]
        %v536 = vld [vmem:[#allocation2 + $0xa9] sm:$0xff]
        %v537 = vld [vmem:[#allocation2 + $0xb1] sm:$0xff]
        %v538 = vld [vmem:[#allocation2 + $0xc1] sm:$0xff]
        %v539 = vld [vmem:[#allocation2 + $0xc9] sm:$0xff]
        %v540 = vld [vmem:[#allocation2 + $0xd9] sm:$0xff]
        %v541 = vld [vmem:[#allocation2 + $0xe1] sm:$0xff]
        %v542 = vld [vmem:[#allocation2 + $0xf1] sm:$0xff]
        %v543 = vld [vmem:[#allocation2 + $0xf9] sm:$0xff]
        %v544 = vld [vmem:[#allocation2 + $0x109] sm:$0xff]
        %v545 = vld [vmem:[#allocation2 + $0x111] sm:$0xff]
        %v546 = vld [vmem:[#allocation2 + $0x121] sm:$0xff]
        %v547 = vld [vmem:[#allocation2 + $0x129] sm:$0xff]
        %v548 = vld [vmem:[#allocation2 + $0x139] sm:$0xff]
        %v549 = vld [vmem:[#allocation2 + $0x141] sm:$0xff]
        %v550 = vld [vmem:[#allocation2 + $0x151] sm:$0xff]
        %v551 = vld [vmem:[#allocation2 + $0x159] sm:$0xff]
        %v552 = vld [vmem:[#allocation2 + $0x169] sm:$0xff]
        %v553 = vld [vmem:[#allocation2 + $0x171] sm:$0xff]
        %v554 = vld [vmem:[#allocation2 + $0x181] sm:$0xff]
        %v555 = vld [vmem:[#allocation2 + $0x189] sm:$0xff]
        %v556 = vld [vmem:[#allocation2 + $0x199] sm:$0xff]
        %v557 = vld [vmem:[#allocation2 + $0x1a1] sm:$0xff]
        %558 = vst [vmem:[#allocation3 + $0x8] sm:$0xff] %v522
        %559 = vst [vmem:[#allocation3 + $0x20] sm:$0xff] %v523
        %560 = vst [vmem:[#allocation3 + $0x38] sm:$0xff] %v524
        %561 = vst [vmem:[#allocation3 + $0x50] sm:$0xff] %v525
        %562 = vst [vmem:[#allocation3 + $0x68] sm:$0xff] %v526
        %563 = vst [vmem:[#allocation3 + $0x80] sm:$0xff] %v527
        %564 = vst [vmem:[#allocation3 + $0x98] sm:$0xff] %v528
        %565 = vst [vmem:[#allocation3 + $0xb0] sm:$0xff] %v529
        %566 = vst [vmem:[#allocation3 + $0xc8] sm:$0xff] %v530
        %567 = vst [vmem:[#allocation3 + $0xe0] sm:$0xff] %v531
        %568 = vst [vmem:[#allocation3 + $0xf8] sm:$0xff] %v532
        %569 = vst [vmem:[#allocation3 + $0x110] sm:$0xff] %v533
        %570 = vst [vmem:[#allocation3 + $0x128] sm:$0xff] %v534
        %571 = vst [vmem:[#allocation3 + $0x140] sm:$0xff] %v535
        %572 = vst [vmem:[#allocation3 + $0x158] sm:$0xff] %v536
        %573 = vst [vmem:[#allocation3 + $0x170] sm:$0xff] %v537
        %574 = vst [vmem:[#allocation3 + $0x188] sm:$0xff] %v538
        %575 = vst [vmem:[#allocation3 + $0x1a0] sm:$0xff] %v539
        %576 = vst [vmem:[#allocation3 + $0x1b8] sm:$0xff] %v540
        %577 = vst [vmem:[#allocation3 + $0x1d0] sm:$0xff] %v541
        %578 = vst [vmem:[#allocation3 + $0x1e8] sm:$0xff] %v542
        %579 = vst [vmem:[#allocation3 + $0x200] sm:$0xff] %v543
        %580 = vst [vmem:[#allocation3 + $0x218] sm:$0xff] %v544
        %581 = vst [vmem:[#allocation3 + $0x230] sm:$0xff] %v545
        %582 = vst [vmem:[#allocation3 + $0x248] sm:$0xff] %v546
        %583 = vst [vmem:[#allocation3 + $0x260] sm:$0xff] %v547
        %584 = vst [vmem:[#allocation3 + $0x278] sm:$0xff] %v548
        %585 = vst [vmem:[#allocation3 + $0x290] sm:$0xff] %v549
        %586 = vst [vmem:[#allocation3 + $0x2a8] sm:$0xff] %v550
        %587 = vst [vmem:[#allocation3 + $0x2c0] sm:$0xff] %v551
        %588 = vst [vmem:[#allocation3 + $0x2d8] sm:$0xff] %v552
        %589 = vst [vmem:[#allocation3 + $0x2f0] sm:$0xff] %v553
        %590 = vst [vmem:[#allocation3 + $0x308] sm:$0xff] %v554
        %591 = vst [vmem:[#allocation3 + $0x320] sm:$0xff] %v555
        %592 = vst [vmem:[#allocation3 + $0x338] sm:$0xff] %v556
        %593 = vst [vmem:[#allocation3 + $0x350] sm:$0xff] %v557
        %v594 = vld [vmem:[#allocation2 + $0x2] sm:$0xff]
        %v595 = vld [vmem:[#allocation2 + $0xa] sm:$0xff]
        %v596 = vld [vmem:[#allocation2 + $0x1a] sm:$0xff]
        %v597 = vld [vmem:[#allocation2 + $0x22] sm:$0xff]
        %v598 = vld [vmem:[#allocation2 + $0x32] sm:$0xff]
        %v599 = vld [vmem:[#allocation2 + $0x3a] sm:$0xff]
        %v600 = vld [vmem:[#allocation2 + $0x4a] sm:$0xff]
        %v601 = vld [vmem:[#allocation2 + $0x52] sm:$0xff]
        %v602 = vld [vmem:[#allocation2 + $0x62] sm:$0xff]
        %v603 = vld [vmem:[#allocation2 + $0x6a] sm:$0xff]
        %v604 = vld [vmem:[#allocation2 + $0x7a] sm:$0xff]
        %v605 = vld [vmem:[#allocation2 + $0x82] sm:$0xff]
        %v606 = vld [vmem:[#allocation2 + $0x92] sm:$0xff]
        %v607 = vld [vmem:[#allocation2 + $0x9a] sm:$0xff]
        %v608 = vld [vmem:[#allocation2 + $0xaa] sm:$0xff]
        %v609 = vld [vmem:[#allocation2 + $0xb2] sm:$0xff]
        %v610 = vld [vmem:[#allocation2 + $0xc2] sm:$0xff]
        %v611 = vld [vmem:[#allocation2 + $0xca] sm:$0xff]
        %v612 = vld [vmem:[#allocation2 + $0xda] sm:$0xff]
        %v613 = vld [vmem:[#allocation2 + $0xe2] sm:$0xff]
        %v614 = vld [vmem:[#allocation2 + $0xf2] sm:$0xff]
        %v615 = vld [vmem:[#allocation2 + $0xfa] sm:$0xff]
        %v616 = vld [vmem:[#allocation2 + $0x10a] sm:$0xff]
        %v617 = vld [vmem:[#allocation2 + $0x112] sm:$0xff]
        %v618 = vld [vmem:[#allocation2 + $0x122] sm:$0xff]
        %v619 = vld [vmem:[#allocation2 + $0x12a] sm:$0xff]
        %v620 = vld [vmem:[#allocation2 + $0x13a] sm:$0xff]
        %v621 = vld [vmem:[#allocation2 + $0x142] sm:$0xff]
        %v622 = vld [vmem:[#allocation2 + $0x152] sm:$0xff]
        %v623 = vld [vmem:[#allocation2 + $0x15a] sm:$0xff]
        %v624 = vld [vmem:[#allocation2 + $0x16a] sm:$0xff]
        %v625 = vld [vmem:[#allocation2 + $0x172] sm:$0xff]
        %v626 = vld [vmem:[#allocation2 + $0x182] sm:$0xff]
        %v627 = vld [vmem:[#allocation2 + $0x18a] sm:$0xff]
        %v628 = vld [vmem:[#allocation2 + $0x19a] sm:$0xff]
        %v629 = vld [vmem:[#allocation2 + $0x1a2] sm:$0xff]
        %630 = vst [vmem:[#allocation3 + $0x10] sm:$0xff] %v594
        %631 = vst [vmem:[#allocation3 + $0x28] sm:$0xff] %v595
        %632 = vst [vmem:[#allocation3 + $0x40] sm:$0xff] %v596
        %633 = vst [vmem:[#allocation3 + $0x58] sm:$0xff] %v597
        %634 = vst [vmem:[#allocation3 + $0x70] sm:$0xff] %v598
        %635 = vst [vmem:[#allocation3 + $0x88] sm:$0xff] %v599
        %636 = vst [vmem:[#allocation3 + $0xa0] sm:$0xff] %v600
        %637 = vst [vmem:[#allocation3 + $0xb8] sm:$0xff] %v601
        %638 = vst [vmem:[#allocation3 + $0xd0] sm:$0xff] %v602
        %639 = vst [vmem:[#allocation3 + $0xe8] sm:$0xff] %v603
        %640 = vst [vmem:[#allocation3 + $0x100] sm:$0xff] %v604
        %641 = vst [vmem:[#allocation3 + $0x118] sm:$0xff] %v605
        %642 = vst [vmem:[#allocation3 + $0x130] sm:$0xff] %v606
        %643 = vst [vmem:[#allocation3 + $0x148] sm:$0xff] %v607
        %644 = vst [vmem:[#allocation3 + $0x160] sm:$0xff] %v608
        %645 = vst [vmem:[#allocation3 + $0x178] sm:$0xff] %v609
        %646 = vst [vmem:[#allocation3 + $0x190] sm:$0xff] %v610
        %647 = vst [vmem:[#allocation3 + $0x1a8] sm:$0xff] %v611
        %648 = vst [vmem:[#allocation3 + $0x1c0] sm:$0xff] %v612
        %649 = vst [vmem:[#allocation3 + $0x1d8] sm:$0xff] %v613
        %650 = vst [vmem:[#allocation3 + $0x1f0] sm:$0xff] %v614
        %651 = vst [vmem:[#allocation3 + $0x208] sm:$0xff] %v615
        %652 = vst [vmem:[#allocation3 + $0x220] sm:$0xff] %v616
        %653 = vst [vmem:[#allocation3 + $0x238] sm:$0xff] %v617
        %654 = vst [vmem:[#allocation3 + $0x250] sm:$0xff] %v618
        %655 = vst [vmem:[#allocation3 + $0x268] sm:$0xff] %v619
        %656 = vst [vmem:[#allocation3 + $0x280] sm:$0xff] %v620
        %657 = vst [vmem:[#allocation3 + $0x298] sm:$0xff] %v621
        %658 = vst [vmem:[#allocation3 + $0x2b0] sm:$0xff] %v622
        %659 = vst [vmem:[#allocation3 + $0x2c8] sm:$0xff] %v623
        %660 = vst [vmem:[#allocation3 + $0x2e0] sm:$0xff] %v624
        %661 = vst [vmem:[#allocation3 + $0x2f8] sm:$0xff] %v625
        %662 = vst [vmem:[#allocation3 + $0x310] sm:$0xff] %v626
        %663 = vst [vmem:[#allocation3 + $0x328] sm:$0xff] %v627
        %664 = vst [vmem:[#allocation3 + $0x340] sm:$0xff] %v628
        %665 = vst [vmem:[#allocation3 + $0x358] sm:$0xff] %v629
        %666 = vst [vmem:[#allocation6] sm:$0xff] 0.0
        %667 = vst [vmem:[#allocation6 + $0x8] sm:$0xff] 0.0
        %668 = vst [vmem:[#allocation6 + $0x10] sm:$0xff] 0.0
        %669 = vst [vmem:[#allocation6 + $0x18] sm:$0xff] 0.0
        %670 = vst [vmem:[#allocation6 + $0x20] sm:$0xff] 0.0
        %671 = vst [vmem:[#allocation6 + $0x28] sm:$0xff] 0.0
        %672 = vst [vmem:[#allocation6 + $0x30] sm:$0xff] 0.0
        %673 = vst [vmem:[#allocation6 + $0x38] sm:$0xff] 0.0
        %674 = vst [vmem:[#allocation6 + $0x40] sm:$0xff] 0.0
        %675 = vst [vmem:[#allocation6 + $0x48] sm:$0xff] 0.0
        %676 = vst [vmem:[#allocation6 + $0x50] sm:$0xff] 0.0
        %677 = vst [vmem:[#allocation6 + $0x58] sm:$0xff] 0.0
        %678 = vst [vmem:[#allocation6 + $0x60] sm:$0xff] 0.0
        %679 = vst [vmem:[#allocation6 + $0x68] sm:$0xff] 0.0
        %680 = vst [vmem:[#allocation6 + $0x70] sm:$0xff] 0.0
        %681 = vst [vmem:[#allocation6 + $0x78] sm:$0xff] 0.0
        %682 = vst [vmem:[#allocation6 + $0x80] sm:$0xff] 0.0
        %683 = vst [vmem:[#allocation6 + $0x88] sm:$0xff] 0.0
        %684 = vst [vmem:[#allocation6 + $0x90] sm:$0xff] 0.0
        %685 = vst [vmem:[#allocation6 + $0x98] sm:$0xff] 0.0
        %686 = vst [vmem:[#allocation6 + $0xa0] sm:$0xff] 0.0
        %687 = vst [vmem:[#allocation6 + $0xa8] sm:$0xff] 0.0
        %688 = vst [vmem:[#allocation6 + $0xb0] sm:$0xff] 0.0
        %689 = vst [vmem:[#allocation6 + $0xb8] sm:$0xff] 0.0
        %690 = vst [vmem:[#allocation6 + $0xc0] sm:$0xff] 0.0
        %691 = vst [vmem:[#allocation6 + $0xc8] sm:$0xff] 0.0
        %692 = vst [vmem:[#allocation6 + $0xd0] sm:$0xff] 0.0
        %693 = vst [vmem:[#allocation6 + $0xd8] sm:$0xff] 0.0
        %694 = vst [vmem:[#allocation6 + $0xe0] sm:$0xff] 0.0
        %695 = vst [vmem:[#allocation6 + $0xe8] sm:$0xff] 0.0
        %696 = vst [vmem:[#allocation6 + $0xf0] sm:$0xff] 0.0
        %697 = vst [vmem:[#allocation6 + $0xf8] sm:$0xff] 0.0
        %v698 = vld [vmem:[#allocation3] sm:$0xff]
        %v699 = vld [vmem:[#allocation3 + $0x8] sm:$0xff]
        %v700 = vld [vmem:[#allocation3 + $0x10] sm:$0xff]
        %v701 = vld [vmem:[#allocation3 + $0x18] sm:$0xff]
        %v702 = vld [vmem:[#allocation3 + $0x20] sm:$0xff]
        %v703 = vld [vmem:[#allocation3 + $0x28] sm:$0xff]
        %v704 = vld [vmem:[#allocation3 + $0x30] sm:$0xff]
        %v705 = vld [vmem:[#allocation3 + $0x38] sm:$0xff]
        %v706 = vld [vmem:[#allocation3 + $0x40] sm:$0xff]
        %v707 = vld [vmem:[#allocation3 + $0x48] sm:$0xff]
        %v708 = vld [vmem:[#allocation3 + $0x50] sm:$0xff]
        %v709 = vld [vmem:[#allocation3 + $0x58] sm:$0xff]
        %v710 = vld [vmem:[#allocation3 + $0x60] sm:$0xff]
        %v711 = vld [vmem:[#allocation3 + $0x68] sm:$0xff]
        %v712 = vld [vmem:[#allocation3 + $0x70] sm:$0xff]
        %v713 = vld [vmem:[#allocation3 + $0x78] sm:$0xff]
        %v714 = vld [vmem:[#allocation3 + $0x80] sm:$0xff]
        %v715 = vld [vmem:[#allocation3 + $0x88] sm:$0xff]
        %v716 = vld [vmem:[#allocation3 + $0x90] sm:$0xff]
        %v717 = vld [vmem:[#allocation3 + $0x98] sm:$0xff]
        %v718 = vld [vmem:[#allocation3 + $0xa0] sm:$0xff]
        %v719 = vld [vmem:[#allocation3 + $0xa8] sm:$0xff]
        %v720 = vld [vmem:[#allocation3 + $0xb0] sm:$0xff]
        %v721 = vld [vmem:[#allocation3 + $0xb8] sm:$0xff]
        %v722 = vld [vmem:[#allocation3 + $0xc0] sm:$0xff]
        %v723 = vld [vmem:[#allocation3 + $0xc8] sm:$0xff]
        %v724 = vld [vmem:[#allocation3 + $0xd0] sm:$0xff]
        %v725 = vld [vmem:[#allocation3 + $0xd8] sm:$0xff]
        %v726 = vld [vmem:[#allocation3 + $0xe0] sm:$0xff]
        %v727 = vld [vmem:[#allocation3 + $0xe8] sm:$0xff]
        %v728 = vld [vmem:[#allocation3 + $0xf0] sm:$0xff]
        %v729 = vld [vmem:[#allocation3 + $0xf8] sm:$0xff]
        %v730 = vld [vmem:[#allocation3 + $0x100] sm:$0xff]
        %v731 = vld [vmem:[#allocation3 + $0x108] sm:$0xff]
        %v732 = vld [vmem:[#allocation3 + $0x110] sm:$0xff]
        %v733 = vld [vmem:[#allocation3 + $0x118] sm:$0xff]
        %v734 = vld [vmem:[#allocation3 + $0x120] sm:$0xff]
        %v735 = vld [vmem:[#allocation3 + $0x128] sm:$0xff]
        %v736 = vld [vmem:[#allocation3 + $0x130] sm:$0xff]
        %v737 = vld [vmem:[#allocation3 + $0x138] sm:$0xff]
        %v738 = vld [vmem:[#allocation3 + $0x140] sm:$0xff]
        %v739 = vld [vmem:[#allocation3 + $0x148] sm:$0xff]
        %v740 = vld [vmem:[#allocation3 + $0x150] sm:$0xff]
        %v741 = vld [vmem:[#allocation3 + $0x158] sm:$0xff]
        %v742 = vld [vmem:[#allocation3 + $0x160] sm:$0xff]
        %v743 = vld [vmem:[#allocation3 + $0x168] sm:$0xff]
        %v744 = vld [vmem:[#allocation3 + $0x170] sm:$0xff]
        %v745 = vld [vmem:[#allocation3 + $0x178] sm:$0xff]
        %v746 = vld [vmem:[#allocation3 + $0x180] sm:$0xff]
        %v747 = vld [vmem:[#allocation3 + $0x188] sm:$0xff]
        %v748 = vld [vmem:[#allocation3 + $0x190] sm:$0xff]
        %v749 = vld [vmem:[#allocation3 + $0x198] sm:$0xff]
        %v750 = vld [vmem:[#allocation3 + $0x1a0] sm:$0xff]
        %v751 = vld [vmem:[#allocation3 + $0x1a8] sm:$0xff]
        %v752 = vld [vmem:[#allocation3 + $0x1b0] sm:$0xff]
        %v753 = vld [vmem:[#allocation3 + $0x1b8] sm:$0xff]
        %v754 = vld [vmem:[#allocation3 + $0x1c0] sm:$0xff]
        %v755 = vld [vmem:[#allocation3 + $0x1c8] sm:$0xff]
        %v756 = vld [vmem:[#allocation3 + $0x1d0] sm:$0xff]
        %v757 = vld [vmem:[#allocation3 + $0x1d8] sm:$0xff]
        %v758 = vld [vmem:[#allocation3 + $0x1e0] sm:$0xff]
        %v759 = vld [vmem:[#allocation3 + $0x1e8] sm:$0xff]
        %v760 = vld [vmem:[#allocation3 + $0x1f0] sm:$0xff]
        %v761 = vld [vmem:[#allocation3 + $0x1f8] sm:$0xff]
        %v762 = vld [vmem:[#allocation3 + $0x200] sm:$0xff]
        %v763 = vld [vmem:[#allocation3 + $0x208] sm:$0xff]
        %v764 = vld [vmem:[#allocation3 + $0x210] sm:$0xff]
        %v765 = vld [vmem:[#allocation3 + $0x218] sm:$0xff]
        %v766 = vld [vmem:[#allocation3 + $0x220] sm:$0xff]
        %v767 = vld [vmem:[#allocation3 + $0x228] sm:$0xff]
        %v768 = vld [vmem:[#allocation3 + $0x230] sm:$0xff]
        %v769 = vld [vmem:[#allocation3 + $0x238] sm:$0xff]
        %v770 = vld [vmem:[#allocation3 + $0x240] sm:$0xff]
        %v771 = vld [vmem:[#allocation3 + $0x248] sm:$0xff]
        %v772 = vld [vmem:[#allocation3 + $0x250] sm:$0xff]
        %v773 = vld [vmem:[#allocation3 + $0x258] sm:$0xff]
        %v774 = vld [vmem:[#allocation3 + $0x260] sm:$0xff]
        %v775 = vld [vmem:[#allocation3 + $0x268] sm:$0xff]
        %v776 = vld [vmem:[#allocation3 + $0x270] sm:$0xff]
        %v777 = vld [vmem:[#allocation3 + $0x278] sm:$0xff]
        %v778 = vld [vmem:[#allocation3 + $0x280] sm:$0xff]
        %v779 = vld [vmem:[#allocation3 + $0x288] sm:$0xff]
        %v780 = vld [vmem:[#allocation3 + $0x290] sm:$0xff]
        %v781 = vld [vmem:[#allocation3 + $0x298] sm:$0xff]
        %v782 = vld [vmem:[#allocation3 + $0x2a0] sm:$0xff]
        %v783 = vld [vmem:[#allocation3 + $0x2a8] sm:$0xff]
        %v784 = vld [vmem:[#allocation3 + $0x2b0] sm:$0xff]
        %v785 = vld [vmem:[#allocation3 + $0x2b8] sm:$0xff]
        %v786 = vld [vmem:[#allocation3 + $0x2c0] sm:$0xff]
        %v787 = vld [vmem:[#allocation3 + $0x2c8] sm:$0xff]
        %v788 = vld [vmem:[#allocation3 + $0x2d0] sm:$0xff]
        %v789 = vld [vmem:[#allocation3 + $0x2d8] sm:$0xff]
        %v790 = vld [vmem:[#allocation3 + $0x2e0] sm:$0xff]
        %v791 = vld [vmem:[#allocation3 + $0x2e8] sm:$0xff]
        %v792 = vld [vmem:[#allocation3 + $0x2f0] sm:$0xff]
        %v793 = vld [vmem:[#allocation3 + $0x2f8] sm:$0xff]
        %v794 = vld [vmem:[#allocation6] sm:$0xff]
        %v795 = vld [vmem:[#allocation6 + $0x8] sm:$0xff]
        %v796 = vld [vmem:[#allocation6 + $0x10] sm:$0xff]
        %v797 = vld [vmem:[#allocation6 + $0x18] sm:$0xff]
        %v798 = vld [vmem:[#allocation6 + $0x20] sm:$0xff]
        %v799 = vld [vmem:[#allocation6 + $0x28] sm:$0xff]
        %v800 = vld [vmem:[#allocation6 + $0x30] sm:$0xff]
        %v801 = vld [vmem:[#allocation6 + $0x38] sm:$0xff]
        %v802 = vld [vmem:[#allocation6 + $0x40] sm:$0xff]
        %v803 = vld [vmem:[#allocation6 + $0x48] sm:$0xff]
        %v804 = vld [vmem:[#allocation6 + $0x50] sm:$0xff]
        %v805 = vld [vmem:[#allocation6 + $0x58] sm:$0xff]
        %v806 = vld [vmem:[#allocation6 + $0x60] sm:$0xff]
        %v807 = vld [vmem:[#allocation6 + $0x68] sm:$0xff]
        %v808 = vld [vmem:[#allocation6 + $0x70] sm:$0xff]
        %v809 = vld [vmem:[#allocation6 + $0x78] sm:$0xff]
        %v810 = vld [vmem:[#allocation6 + $0x80] sm:$0xff]
        %v811 = vld [vmem:[#allocation6 + $0x88] sm:$0xff]
        %v812 = vld [vmem:[#allocation6 + $0x90] sm:$0xff]
        %v813 = vld [vmem:[#allocation6 + $0x98] sm:$0xff]
        %v814 = vld [vmem:[#allocation6 + $0xa0] sm:$0xff]
        %v815 = vld [vmem:[#allocation6 + $0xa8] sm:$0xff]
        %v816 = vld [vmem:[#allocation6 + $0xb0] sm:$0xff]
        %v817 = vld [vmem:[#allocation6 + $0xb8] sm:$0xff]
        %v818 = vld [vmem:[#allocation6 + $0xc0] sm:$0xff]
        %v819 = vld [vmem:[#allocation6 + $0xc8] sm:$0xff]
        %v820 = vld [vmem:[#allocation6 + $0xd0] sm:$0xff]
        %v821 = vld [vmem:[#allocation6 + $0xd8] sm:$0xff]
        %v822 = vld [vmem:[#allocation6 + $0xe0] sm:$0xff]
        %v823 = vld [vmem:[#allocation6 + $0xe8] sm:$0xff]
        %v824 = vld [vmem:[#allocation6 + $0xf0] sm:$0xff]
        %v825 = vld [vmem:[#allocation6 + $0xf8] sm:$0xff]
        %v826 = vpack.c.bf16 %v701, %v698
        %v827 = vpack.c.bf16 %v702, %v699
        %v828 = vpack.c.bf16 %v703, %v700
        %v829 = vpack.c.bf16 %v707, %v704
        %v830 = vpack.c.bf16 %v708, %v705
        %v831 = vpack.c.bf16 %v709, %v706
        %v832 = vpack.c.bf16 %v713, %v710
        %v833 = vpack.c.bf16 %v714, %v711
        %v834 = vpack.c.bf16 %v715, %v712
        %v835 = vpack.c.bf16 %v719, %v716
        %v836 = vpack.c.bf16 %v720, %v717
        %v837 = vpack.c.bf16 %v721, %v718
        %v838 = vpack.c.bf16 %v725, %v722
        %v839 = vpack.c.bf16 %v726, %v723
        %v840 = vpack.c.bf16 %v727, %v724
        %v841 = vpack.c.bf16 %v731, %v728
        %v842 = vpack.c.bf16 %v732, %v729
        %v843 = vpack.c.bf16 %v733, %v730
        %v844 = vpack.c.bf16 %v737, %v734
        %v845 = vpack.c.bf16 %v738, %v735
        %v846 = vpack.c.bf16 %v739, %v736
        %v847 = vpack.c.bf16 %v743, %v740
        %v848 = vpack.c.bf16 %v744, %v741
        %v849 = vpack.c.bf16 %v745, %v742
        %v850 = vpack.c.bf16 %v749, %v746
        %v851 = vpack.c.bf16 %v750, %v747
        %v852 = vpack.c.bf16 %v751, %v748
        %v853 = vpack.c.bf16 %v755, %v752
        %v854 = vpack.c.bf16 %v756, %v753
        %v855 = vpack.c.bf16 %v757, %v754
        %v856 = vpack.c.bf16 %v761, %v758
        %v857 = vpack.c.bf16 %v762, %v759
        %v858 = vpack.c.bf16 %v763, %v760
        %v859 = vpack.c.bf16 %v767, %v764
        %v860 = vpack.c.bf16 %v768, %v765
        %v861 = vpack.c.bf16 %v769, %v766
        %v862 = vpack.c.bf16 %v773, %v770
        %v863 = vpack.c.bf16 %v774, %v771
        %v864 = vpack.c.bf16 %v775, %v772
        %v865 = vpack.c.bf16 %v779, %v776
        %v866 = vpack.c.bf16 %v780, %v777
        %v867 = vpack.c.bf16 %v781, %v778
        %v868 = vpack.c.bf16 %v785, %v782
        %v869 = vpack.c.bf16 %v786, %v783
        %v870 = vpack.c.bf16 %v787, %v784
        %v871 = vpack.c.bf16 %v791, %v788
        %v872 = vpack.c.bf16 %v792, %v789
        %v873 = vpack.c.bf16 %v793, %v790
        %v874 = vld [vmem:[#allocation11] sm:$0xf]
        %v875 = vld [vmem:[#allocation11 + $0x4] sm:$0xf]
        %v876 = vld [vmem:[#allocation11 + $0x8] sm:$0xf]
        %v877 = vld [vmem:[#allocation11 + $0xc] sm:$0xf]
        %v878 = vld [vmem:[#allocation11 + $0x10] sm:$0xf]
        %v879 = vld [vmem:[#allocation11 + $0x14] sm:$0xf]
        %v880 = vld [vmem:[#allocation11 + $0x18] sm:$0xf]
        %v881 = vld [vmem:[#allocation11 + $0x1c] sm:$0xf]
        %v882 = vld [vmem:[#allocation11 + $0x20] sm:$0xf]
        %v883 = vld [vmem:[#allocation11 + $0x24] sm:$0xf]
        %v884 = vld [vmem:[#allocation11 + $0x28] sm:$0xf]
        %v885 = vld [vmem:[#allocation11 + $0x2c] sm:$0xf]
        %v886 = vld [vmem:[#allocation11 + $0x30] sm:$0xf]
        %v887 = vld [vmem:[#allocation11 + $0x34] sm:$0xf]
        %v888 = vld [vmem:[#allocation11 + $0x38] sm:$0xf]
        %v889 = vld [vmem:[#allocation11 + $0x3c] sm:$0xf]
        %v890 = vld [vmem:[#allocation11 + $0x40] sm:$0xf]
        %v891 = vld [vmem:[#allocation11 + $0x44] sm:$0xf]
        %v892 = vld [vmem:[#allocation11 + $0x48] sm:$0xf]
        %v893 = vld [vmem:[#allocation11 + $0x4c] sm:$0xf]
        %v894 = vld [vmem:[#allocation11 + $0x50] sm:$0xf]
        %v895 = vld [vmem:[#allocation11 + $0x54] sm:$0xf]
        %v896 = vld [vmem:[#allocation11 + $0x58] sm:$0xf]
        %v897 = vld [vmem:[#allocation11 + $0x5c] sm:$0xf]
        %v898 = vld [vmem:[#allocation11 + $0x60] sm:$0xf]
        %v899 = vld [vmem:[#allocation11 + $0x64] sm:$0xf]
        %v900 = vld [vmem:[#allocation11 + $0x68] sm:$0xf]
        %v901 = vld [vmem:[#allocation11 + $0x6c] sm:$0xf]
        %v902 = vld [vmem:[#allocation11 + $0x70] sm:$0xf]
        %v903 = vld [vmem:[#allocation11 + $0x74] sm:$0xf]
        %v904 = vld [vmem:[#allocation11 + $0x78] sm:$0xf]
        %v905 = vld [vmem:[#allocation11 + $0x7c] sm:$0xf]
        %v906 = vld [vmem:[#allocation11 + $0x80] sm:$0xf]
        %v907 = vld [vmem:[#allocation11 + $0x84] sm:$0xf]
        %v908 = vld [vmem:[#allocation11 + $0x88] sm:$0xf]
        %v909 = vld [vmem:[#allocation11 + $0x8c] sm:$0xf]
        %v910 = vld [vmem:[#allocation11 + $0x90] sm:$0xf]
        %v911 = vld [vmem:[#allocation11 + $0x94] sm:$0xf]
        %v912 = vld [vmem:[#allocation11 + $0x98] sm:$0xf]
        %v913 = vld [vmem:[#allocation11 + $0x9c] sm:$0xf]
        %v914 = vld [vmem:[#allocation11 + $0xa0] sm:$0xf]
        %v915 = vld [vmem:[#allocation11 + $0xa4] sm:$0xf]
        %v916 = vld [vmem:[#allocation11 + $0xa8] sm:$0xf]
        %v917 = vld [vmem:[#allocation11 + $0xac] sm:$0xf]
        %v918 = vld [vmem:[#allocation11 + $0xb0] sm:$0xf]
        %v919 = vld [vmem:[#allocation11 + $0xb4] sm:$0xf]
        %v920 = vld [vmem:[#allocation11 + $0xb8] sm:$0xf]
        %v921 = vld [vmem:[#allocation11 + $0xbc] sm:$0xf]
        %v970 = vunpack.c.l.b16 %v874
        %v971 = vunpack.c.l.b16 %v875
        %v972 = vunpack.c.l.b16 %v876
        %v973 = vunpack.c.l.b16 %v877
        %v974 = vunpack.c.l.b16 %v878
        %v975 = vunpack.c.l.b16 %v879
        %v976 = vunpack.c.l.b16 %v880
        %v977 = vunpack.c.l.b16 %v881
        %v978 = vunpack.c.l.b16 %v882
        %v979 = vunpack.c.l.b16 %v883
        %v980 = vunpack.c.l.b16 %v884
        %v981 = vunpack.c.l.b16 %v885
        %v982 = vunpack.c.l.b16 %v886
        %v983 = vunpack.c.l.b16 %v887
        %v984 = vunpack.c.l.b16 %v888
        %v985 = vunpack.c.l.b16 %v889
        %v986 = vunpack.c.l.b16 %v890
        %v987 = vunpack.c.l.b16 %v891
        %v988 = vunpack.c.l.b16 %v892
        %v989 = vunpack.c.l.b16 %v893
        %v990 = vunpack.c.l.b16 %v894
        %v991 = vunpack.c.l.b16 %v895
        %v992 = vunpack.c.l.b16 %v896
        %v993 = vunpack.c.l.b16 %v897
        %v994 = vunpack.c.l.b16 %v898
        %v995 = vunpack.c.l.b16 %v899
        %v996 = vunpack.c.l.b16 %v900
        %v997 = vunpack.c.l.b16 %v901
        %v998 = vunpack.c.l.b16 %v902
        %v999 = vunpack.c.l.b16 %v903
        %v1000 = vunpack.c.l.b16 %v904
        %v1001 = vunpack.c.l.b16 %v905
        %v1002 = vunpack.c.l.b16 %v906
        %v1003 = vunpack.c.l.b16 %v907
        %v1004 = vunpack.c.l.b16 %v908
        %v1005 = vunpack.c.l.b16 %v909
        %v1006 = vunpack.c.l.b16 %v910
        %v1007 = vunpack.c.l.b16 %v911
        %v1008 = vunpack.c.l.b16 %v912
        %v1009 = vunpack.c.l.b16 %v913
        %v1010 = vunpack.c.l.b16 %v914
        %v1011 = vunpack.c.l.b16 %v915
        %v1012 = vunpack.c.l.b16 %v916
        %v1013 = vunpack.c.l.b16 %v917
        %v1014 = vunpack.c.l.b16 %v918
        %v1015 = vunpack.c.l.b16 %v919
        %v1016 = vunpack.c.l.b16 %v920
        %v1017 = vunpack.c.l.b16 %v921
        %v1018 = vpack.c.b16 %v971, %v970
        %v1019 = vpack.c.b16 %v973, %v972
        %v1020 = vpack.c.b16 %v975, %v974
        %v1021 = vpack.c.b16 %v977, %v976
        %v1022 = vpack.c.b16 %v979, %v978
        %v1023 = vpack.c.b16 %v981, %v980
        %v1024 = vpack.c.b16 %v983, %v982
        %v1025 = vpack.c.b16 %v985, %v984
        %v1026 = vpack.c.b16 %v987, %v986
        %v1027 = vpack.c.b16 %v989, %v988
        %v1028 = vpack.c.b16 %v991, %v990
        %v1029 = vpack.c.b16 %v993, %v992
        %v1030 = vpack.c.b16 %v995, %v994
        %v1031 = vpack.c.b16 %v997, %v996
        %v1032 = vpack.c.b16 %v999, %v998
        %v1033 = vpack.c.b16 %v1001, %v1000
        %v1034 = vpack.c.b16 %v1003, %v1002
        %v1035 = vpack.c.b16 %v1005, %v1004
        %v1036 = vpack.c.b16 %v1007, %v1006
        %v1037 = vpack.c.b16 %v1009, %v1008
        %v1038 = vpack.c.b16 %v1011, %v1010
        %v1039 = vpack.c.b16 %v1013, %v1012
        %v1040 = vpack.c.b16 %v1015, %v1014
        %v1041 = vpack.c.b16 %v1017, %v1016
        %1066 = vmatprep.subr.bf16.mxu0 0
        %1067 = vmatpush1.bf16.msra.mxu0 %v1018
        %1068 = vmatprep.subr.bf16.mxu0 0
        %1069 = vmatpush1.bf16.msra.mxu0 %v1019
        %1070 = vmatprep.subr.bf16.mxu0 0
        %1071 = vmatpush1.bf16.msra.mxu0 %v1020
        %1072 = vmatprep.subr.bf16.mxu0 0
        %1073 = vmatpush1.bf16.msra.mxu0 %v1021
        %1074 = vmatprep.subr.bf16.mxu0 0
        %1075 = vmatpush1.bf16.msra.mxu0 %v1022
        %1076 = vmatprep.subr.bf16.mxu0 0
        %1077 = vmatpush1.bf16.msra.mxu0 %v1023
        %1078 = vmatprep.subr.bf16.mxu0 0
        %1079 = vmatpush1.bf16.msra.mxu0 %v1024
        %1080 = vmatprep.subr.bf16.mxu0 0
        %1081 = vmatpush1.bf16.msra.mxu0 %v1025
        %1082 = vmatprep.subr.bf16.mxu0 0
        %1083 = vmatpush1.bf16.msra.mxu0 %v1026
        %1084 = vmatprep.subr.bf16.mxu0 0
        %1085 = vmatpush1.bf16.msra.mxu0 %v1027
        %1086 = vmatprep.subr.bf16.mxu0 0
        %1087 = vmatpush1.bf16.msra.mxu0 %v1028
        %1088 = vmatprep.subr.bf16.mxu0 0
        %1089 = vmatpush1.bf16.msra.mxu0 %v1029
        %1090 = vmatprep.subr.bf16.mxu0 0
        %1091 = vmatpush1.bf16.msra.mxu0 %v1030
        %1092 = vmatprep.subr.bf16.mxu0 0
        %1093 = vmatpush1.bf16.msra.mxu0 %v1031
        %1094 = vmatprep.subr.bf16.mxu0 0
        %1095 = vmatpush1.bf16.msra.mxu0 %v1032
        %1096 = vmatprep.subr.bf16.mxu0 0
        %1097 = vmatpush1.bf16.msra.mxu0 %v1033
        %1098 = vmatprep.mubr.bf16.mxu0 %v827
        %1099 = vmatmul.mubr.bf16.gmra.mrb[0].mxu0 %v826
        %v1100 = vpop.f32.mrb[0].mxu0
        %v1101 = vadd.f32 0.0, %v1100
        %v1102 = vpop.f32.mrb[0].mxu0
        %v1103 = vpop.f32.mrb[0].mxu0
        %v1104 = vadd.f32 0.0, %v1103
        %v1105 = vpop.f32.mrb[0].mxu0
        %1106 = vmatprep.mubr.bf16.mxu0 %v830
        %1107 = vmatmul.mubr.bf16.gmra.mrb[0].mxu0 %v829
        %v1108 = vpop.f32.mrb[0].mxu0
        %v1109 = vadd.f32 0.0, %v1108
        %v1110 = vpop.f32.mrb[0].mxu0
        %v1111 = vpop.f32.mrb[0].mxu0
        %v1112 = vadd.f32 0.0, %v1111
        %v1113 = vpop.f32.mrb[0].mxu0
        %1114 = vmatprep.mubr.bf16.mxu0 %v833
        %1115 = vmatmul.mubr.bf16.gmra.mrb[0].mxu0 %v832
        %v1116 = vpop.f32.mrb[0].mxu0
        %v1117 = vadd.f32 0.0, %v1116
        %v1118 = vpop.f32.mrb[0].mxu0
        %v1119 = vpop.f32.mrb[0].mxu0
        %v1120 = vadd.f32 0.0, %v1119
        %v1121 = vpop.f32.mrb[0].mxu0
        %1122 = vmatprep.mubr.bf16.mxu0 %v836
        %1123 = vmatmul.mubr.bf16.gmra.mrb[0].mxu0 %v835
        %v1124 = vpop.f32.mrb[0].mxu0
        %v1125 = vadd.f32 0.0, %v1124
        %v1126 = vpop.f32.mrb[0].mxu0
        %v1127 = vpop.f32.mrb[0].mxu0
        %v1128 = vadd.f32 0.0, %v1127
        %v1129 = vpop.f32.mrb[0].mxu0
        %1130 = vmatprep.mubr.bf16.mxu0 %v839
        %1131 = vmatmul.mubr.bf16.gmra.mrb[0].mxu0 %v838
        %v1132 = vpop.f32.mrb[0].mxu0
        %v1133 = vadd.f32 0.0, %v1132
        %v1134 = vpop.f32.mrb[0].mxu0
        %v1135 = vpop.f32.mrb[0].mxu0
        %v1136 = vadd.f32 0.0, %v1135
        %v1137 = vpop.f32.mrb[0].mxu0
        %1138 = vmatprep.mubr.bf16.mxu0 %v842
        %1139 = vmatmul.mubr.bf16.gmra.mrb[0].mxu0 %v841
        %v1140 = vpop.f32.mrb[0].mxu0
        %v1141 = vadd.f32 0.0, %v1140
        %v1142 = vpop.f32.mrb[0].mxu0
        %v1143 = vpop.f32.mrb[0].mxu0
        %v1144 = vadd.f32 0.0, %v1143
        %v1145 = vpop.f32.mrb[0].mxu0
        %1146 = vmatprep.mubr.bf16.mxu0 %v845
        %1147 = vmatmul.mubr.bf16.gmra.mrb[0].mxu0 %v844
        %v1148 = vpop.f32.mrb[0].mxu0
        %v1149 = vadd.f32 0.0, %v1148
        %v1150 = vpop.f32.mrb[0].mxu0
        %v1151 = vpop.f32.mrb[0].mxu0
        %v1152 = vadd.f32 0.0, %v1151
        %v1153 = vpop.f32.mrb[0].mxu0
        %1154 = vmatprep.mubr.bf16.mxu0 %v848
        %1155 = vmatmul.mubr.bf16.gmra.mrb[0].mxu0 %v847
        %v1156 = vpop.f32.mrb[0].mxu0
        %v1157 = vadd.f32 0.0, %v1156
        %v1158 = vpop.f32.mrb[0].mxu0
        %v1159 = vpop.f32.mrb[0].mxu0
        %v1160 = vadd.f32 0.0, %v1159
        %v1161 = vpop.f32.mrb[0].mxu0
        %1162 = vmatprep.mubr.bf16.mxu0 %v851
        %1163 = vmatmul.mubr.bf16.gmra.mrb[0].mxu0 %v850
        %v1164 = vpop.f32.mrb[0].mxu0
        %v1165 = vadd.f32 0.0, %v1164
        %v1166 = vpop.f32.mrb[0].mxu0
        %v1167 = vpop.f32.mrb[0].mxu0
        %v1168 = vadd.f32 0.0, %v1167
        %v1169 = vpop.f32.mrb[0].mxu0
        %1170 = vmatprep.mubr.bf16.mxu0 %v854
        %1171 = vmatmul.mubr.bf16.gmra.mrb[0].mxu0 %v853
        %v1172 = vpop.f32.mrb[0].mxu0
        %v1173 = vadd.f32 0.0, %v1172
        %v1174 = vpop.f32.mrb[0].mxu0
        %v1175 = vpop.f32.mrb[0].mxu0
        %v1176 = vadd.f32 0.0, %v1175
        %v1177 = vpop.f32.mrb[0].mxu0
        %1178 = vmatprep.mubr.bf16.mxu0 %v857
        %1179 = vmatmul.mubr.bf16.gmra.mrb[0].mxu0 %v856
        %v1180 = vpop.f32.mrb[0].mxu0
        %v1181 = vadd.f32 0.0, %v1180
        %v1182 = vpop.f32.mrb[0].mxu0
        %v1183 = vpop.f32.mrb[0].mxu0
        %v1184 = vadd.f32 0.0, %v1183
        %v1185 = vpop.f32.mrb[0].mxu0
        %1186 = vmatprep.mubr.bf16.mxu0 %v860
        %1187 = vmatmul.mubr.bf16.gmra.mrb[0].mxu0 %v859
        %v1188 = vpop.f32.mrb[0].mxu0
        %v1189 = vadd.f32 0.0, %v1188
        %v1190 = vpop.f32.mrb[0].mxu0
        %v1191 = vpop.f32.mrb[0].mxu0
        %v1192 = vadd.f32 0.0, %v1191
        %v1193 = vpop.f32.mrb[0].mxu0
        %1194 = vmatprep.mubr.bf16.mxu0 %v863
        %1195 = vmatmul.mubr.bf16.gmra.mrb[0].mxu0 %v862
        %v1196 = vpop.f32.mrb[0].mxu0
        %v1197 = vadd.f32 0.0, %v1196
        %v1198 = vpop.f32.mrb[0].mxu0
        %v1199 = vpop.f32.mrb[0].mxu0
        %v1200 = vadd.f32 0.0, %v1199
        %v1201 = vpop.f32.mrb[0].mxu0
        %1202 = vmatprep.mubr.bf16.mxu0 %v866
        %1203 = vmatmul.mubr.bf16.gmra.mrb[0].mxu0 %v865
        %v1204 = vpop.f32.mrb[0].mxu0
        %v1205 = vadd.f32 0.0, %v1204
        %v1206 = vpop.f32.mrb[0].mxu0
        %v1207 = vpop.f32.mrb[0].mxu0
        %v1208 = vadd.f32 0.0, %v1207
        %v1209 = vpop.f32.mrb[0].mxu0
        %1210 = vmatprep.mubr.bf16.mxu0 %v869
        %1211 = vmatmul.mubr.bf16.gmra.mrb[0].mxu0 %v868
        %v1212 = vpop.f32.mrb[0].mxu0
        %v1213 = vadd.f32 0.0, %v1212
        %v1214 = vpop.f32.mrb[0].mxu0
        %v1215 = vpop.f32.mrb[0].mxu0
        %v1216 = vadd.f32 0.0, %v1215
        %v1217 = vpop.f32.mrb[0].mxu0
        %1218 = vmatprep.mubr.bf16.mxu0 %v872
        %1219 = vmatmul.mubr.bf16.gmra.mrb[0].mxu0 %v871
        %v1220 = vpop.f32.mrb[0].mxu0
        %v1221 = vadd.f32 0.0, %v1220
        %v1222 = vpop.f32.mrb[0].mxu0
        %v1223 = vpop.f32.mrb[0].mxu0
        %v1224 = vadd.f32 0.0, %v1223
        %v1225 = vpop.f32.mrb[0].mxu0
        %1226 = vdwg.mxu0
        %1227 = vmatprep.subr.bf16.mxu0 0
        %1228 = vmatpush1.bf16.msra.mxu0 %v1034
        %1229 = vmatprep.subr.bf16.mxu0 0
        %1230 = vmatpush1.bf16.msra.mxu0 %v1035
        %1231 = vmatprep.subr.bf16.mxu0 0
        %1232 = vmatpush1.bf16.msra.mxu0 %v1036
        %1233 = vmatprep.subr.bf16.mxu0 0
        %1234 = vmatpush1.bf16.msra.mxu0 %v1037
        %1235 = vmatprep.subr.bf16.mxu0 0
        %1236 = vmatpush1.bf16.msra.mxu0 %v1038
        %1237 = vmatprep.subr.bf16.mxu0 0
        %1238 = vmatpush1.bf16.msra.mxu0 %v1039
        %1239 = vmatprep.subr.bf16.mxu0 0
        %1240 = vmatpush1.bf16.msra.mxu0 %v1040
        %1241 = vmatprep.subr.bf16.mxu0 0
        %1242 = vmatpush1.bf16.msra.mxu0 %v1041
        %1243 = vmatprep.subr.bf16.mxu0 0
        %1244 = vmatpush1.bf16.msra.mxu0 0
        %1245 = vmatprep.subr.bf16.mxu0 0
        %1246 = vmatpush1.bf16.msra.mxu0 0
        %1247 = vmatprep.subr.bf16.mxu0 0
        %1248 = vmatpush1.bf16.msra.mxu0 0
        %1249 = vmatprep.subr.bf16.mxu0 0
        %1250 = vmatpush1.bf16.msra.mxu0 0
        %1251 = vmatprep.subr.bf16.mxu0 0
        %1252 = vmatpush1.bf16.msra.mxu0 0
        %1253 = vmatprep.subr.bf16.mxu0 0
        %1254 = vmatpush1.bf16.msra.mxu0 0
        %1255 = vmatprep.subr.bf16.mxu0 0
        %1256 = vmatpush1.bf16.msra.mxu0 0
        %1257 = vmatprep.subr.bf16.mxu0 0
        %1258 = vmatpush1.bf16.msra.mxu0 0
        %1259 = vmatprep.mubr.bf16.mxu0 0
        %1260 = vmatmul.mubr.bf16.gmra.mrb[0].mxu0 %v828
        %v1261 = vpop.f32.mrb[0].mxu0
        %v1262 = vadd.f32 %v1101, %v1261
        %v1263 = vpop.f32.mrb[0].mxu0
        %v1264 = vpop.f32.mrb[0].mxu0
        %v1265 = vadd.f32 %v1104, %v1264
        %v1266 = vpop.f32.mrb[0].mxu0
        %1267 = vmatprep.mubr.bf16.mxu0 0
        %1268 = vmatmul.mubr.bf16.gmra.mrb[0].mxu0 %v831
        %v1269 = vpop.f32.mrb[0].mxu0
        %v1270 = vadd.f32 %v1109, %v1269
        %v1271 = vpop.f32.mrb[0].mxu0
        %v1272 = vpop.f32.mrb[0].mxu0
        %v1273 = vadd.f32 %v1112, %v1272
        %v1274 = vpop.f32.mrb[0].mxu0
        %1275 = vmatprep.mubr.bf16.mxu0 0
        %1276 = vmatmul.mubr.bf16.gmra.mrb[0].mxu0 %v834
        %v1277 = vpop.f32.mrb[0].mxu0
        %v1278 = vadd.f32 %v1117, %v1277
        %v1279 = vpop.f32.mrb[0].mxu0
        %v1280 = vpop.f32.mrb[0].mxu0
        %v1281 = vadd.f32 %v1120, %v1280
        %v1282 = vpop.f32.mrb[0].mxu0
        %1283 = vmatprep.mubr.bf16.mxu0 0
        %1284 = vmatmul.mubr.bf16.gmra.mrb[0].mxu0 %v837
        %v1285 = vpop.f32.mrb[0].mxu0
        %v1286 = vadd.f32 %v1125, %v1285
        %v1287 = vpop.f32.mrb[0].mxu0
        %v1288 = vpop.f32.mrb[0].mxu0
        %v1289 = vadd.f32 %v1128, %v1288
        %v1290 = vpop.f32.mrb[0].mxu0
        %1291 = vmatprep.mubr.bf16.mxu0 0
        %1292 = vmatmul.mubr.bf16.gmra.mrb[0].mxu0 %v840
        %v1293 = vpop.f32.mrb[0].mxu0
        %v1294 = vadd.f32 %v1133, %v1293
        %v1295 = vpop.f32.mrb[0].mxu0
        %v1296 = vpop.f32.mrb[0].mxu0
        %v1297 = vadd.f32 %v1136, %v1296
        %v1298 = vpop.f32.mrb[0].mxu0
        %1299 = vmatprep.mubr.bf16.mxu0 0
        %1300 = vmatmul.mubr.bf16.gmra.mrb[0].mxu0 %v843
        %v1301 = vpop.f32.mrb[0].mxu0
        %v1302 = vadd.f32 %v1141, %v1301
        %v1303 = vpop.f32.mrb[0].mxu0
        %v1304 = vpop.f32.mrb[0].mxu0
        %v1305 = vadd.f32 %v1144, %v1304
        %v1306 = vpop.f32.mrb[0].mxu0
        %1307 = vmatprep.mubr.bf16.mxu0 0
        %1308 = vmatmul.mubr.bf16.gmra.mrb[0].mxu0 %v846
        %v1309 = vpop.f32.mrb[0].mxu0
        %v1310 = vadd.f32 %v1149, %v1309
        %v1311 = vpop.f32.mrb[0].mxu0
        %v1312 = vpop.f32.mrb[0].mxu0
        %v1313 = vadd.f32 %v1152, %v1312
        %v1314 = vpop.f32.mrb[0].mxu0
        %1315 = vmatprep.mubr.bf16.mxu0 0
        %1316 = vmatmul.mubr.bf16.gmra.mrb[0].mxu0 %v849
        %v1317 = vpop.f32.mrb[0].mxu0
        %v1318 = vadd.f32 %v1157, %v1317
        %v1319 = vpop.f32.mrb[0].mxu0
        %v1320 = vpop.f32.mrb[0].mxu0
        %v1321 = vadd.f32 %v1160, %v1320
        %v1322 = vpop.f32.mrb[0].mxu0
        %1323 = vmatprep.mubr.bf16.mxu0 0
        %1324 = vmatmul.mubr.bf16.gmra.mrb[0].mxu0 %v852
        %v1325 = vpop.f32.mrb[0].mxu0
        %v1326 = vadd.f32 %v1165, %v1325
        %v1327 = vpop.f32.mrb[0].mxu0
        %v1328 = vpop.f32.mrb[0].mxu0
        %v1329 = vadd.f32 %v1168, %v1328
        %v1330 = vpop.f32.mrb[0].mxu0
        %1331 = vmatprep.mubr.bf16.mxu0 0
        %1332 = vmatmul.mubr.bf16.gmra.mrb[0].mxu0 %v855
        %v1333 = vpop.f32.mrb[0].mxu0
        %v1334 = vadd.f32 %v1173, %v1333
        %v1335 = vpop.f32.mrb[0].mxu0
        %v1336 = vpop.f32.mrb[0].mxu0
        %v1337 = vadd.f32 %v1176, %v1336
        %v1338 = vpop.f32.mrb[0].mxu0
        %1339 = vmatprep.mubr.bf16.mxu0 0
        %1340 = vmatmul.mubr.bf16.gmra.mrb[0].mxu0 %v858
        %v1341 = vpop.f32.mrb[0].mxu0
        %v1342 = vadd.f32 %v1181, %v1341
        %v1343 = vpop.f32.mrb[0].mxu0
        %v1344 = vpop.f32.mrb[0].mxu0
        %v1345 = vadd.f32 %v1184, %v1344
        %v1346 = vpop.f32.mrb[0].mxu0
        %1347 = vmatprep.mubr.bf16.mxu0 0
        %1348 = vmatmul.mubr.bf16.gmra.mrb[0].mxu0 %v861
        %v1349 = vpop.f32.mrb[0].mxu0
        %v1350 = vadd.f32 %v1189, %v1349
        %v1351 = vpop.f32.mrb[0].mxu0
        %v1352 = vpop.f32.mrb[0].mxu0
        %v1353 = vadd.f32 %v1192, %v1352
        %v1354 = vpop.f32.mrb[0].mxu0
        %1355 = vmatprep.mubr.bf16.mxu0 0
        %1356 = vmatmul.mubr.bf16.gmra.mrb[0].mxu0 %v864
        %v1357 = vpop.f32.mrb[0].mxu0
        %v1358 = vadd.f32 %v1197, %v1357
        %v1359 = vpop.f32.mrb[0].mxu0
        %v1360 = vpop.f32.mrb[0].mxu0
        %v1361 = vadd.f32 %v1200, %v1360
        %v1362 = vpop.f32.mrb[0].mxu0
        %1363 = vmatprep.mubr.bf16.mxu0 0
        %1364 = vmatmul.mubr.bf16.gmra.mrb[0].mxu0 %v867
        %v1365 = vpop.f32.mrb[0].mxu0
        %v1366 = vadd.f32 %v1205, %v1365
        %v1367 = vpop.f32.mrb[0].mxu0
        %v1368 = vpop.f32.mrb[0].mxu0
        %v1369 = vadd.f32 %v1208, %v1368
        %v1370 = vpop.f32.mrb[0].mxu0
        %1371 = vmatprep.mubr.bf16.mxu0 0
        %1372 = vmatmul.mubr.bf16.gmra.mrb[0].mxu0 %v870
        %v1373 = vpop.f32.mrb[0].mxu0
        %v1374 = vadd.f32 %v1213, %v1373
        %v1375 = vpop.f32.mrb[0].mxu0
        %v1376 = vpop.f32.mrb[0].mxu0
        %v1377 = vadd.f32 %v1216, %v1376
        %v1378 = vpop.f32.mrb[0].mxu0
        %1379 = vmatprep.mubr.bf16.mxu0 0
        %1380 = vmatmul.mubr.bf16.gmra.mrb[0].mxu0 %v873
        %v1381 = vpop.f32.mrb[0].mxu0
        %v1382 = vadd.f32 %v1221, %v1381
        %v1383 = vpop.f32.mrb[0].mxu0
        %v1384 = vpop.f32.mrb[0].mxu0
        %v1385 = vadd.f32 %v1224, %v1384
        %v1386 = vpop.f32.mrb[0].mxu0
        %1387 = vdwg.mxu0
        %v1388 = vadd.f32 %v794, %v1262
        %v1389 = vadd.f32 %v795, %v1265
        %v1390 = vadd.f32 %v796, %v1270
        %v1391 = vadd.f32 %v797, %v1273
        %v1392 = vadd.f32 %v798, %v1278
        %v1393 = vadd.f32 %v799, %v1281
        %v1394 = vadd.f32 %v800, %v1286
        %v1395 = vadd.f32 %v801, %v1289
        %v1396 = vadd.f32 %v802, %v1294
        %v1397 = vadd.f32 %v803, %v1297
        %v1398 = vadd.f32 %v804, %v1302
        %v1399 = vadd.f32 %v805, %v1305
        %v1400 = vadd.f32 %v806, %v1310
        %v1401 = vadd.f32 %v807, %v1313
        %v1402 = vadd.f32 %v808, %v1318
        %v1403 = vadd.f32 %v809, %v1321
        %v1404 = vadd.f32 %v810, %v1326
        %v1405 = vadd.f32 %v811, %v1329
        %v1406 = vadd.f32 %v812, %v1334
        %v1407 = vadd.f32 %v813, %v1337
        %v1408 = vadd.f32 %v814, %v1342
        %v1409 = vadd.f32 %v815, %v1345
        %v1410 = vadd.f32 %v816, %v1350
        %v1411 = vadd.f32 %v817, %v1353
        %v1412 = vadd.f32 %v818, %v1358
        %v1413 = vadd.f32 %v819, %v1361
        %v1414 = vadd.f32 %v820, %v1366
        %v1415 = vadd.f32 %v821, %v1369
        %v1416 = vadd.f32 %v822, %v1374
        %v1417 = vadd.f32 %v823, %v1377
        %v1418 = vadd.f32 %v824, %v1382
        %v1419 = vadd.f32 %v825, %v1385
        %1420 = vst [vmem:[#allocation6] sm:$0xff] %v1388
        %1421 = vst [vmem:[#allocation6 + $0x8] sm:$0xff] %v1389
        %1422 = vst [vmem:[#allocation6 + $0x10] sm:$0xff] %v1390
        %1423 = vst [vmem:[#allocation6 + $0x18] sm:$0xff] %v1391
        %1424 = vst [vmem:[#allocation6 + $0x20] sm:$0xff] %v1392
        %1425 = vst [vmem:[#allocation6 + $0x28] sm:$0xff] %v1393
        %1426 = vst [vmem:[#allocation6 + $0x30] sm:$0xff] %v1394
        %1427 = vst [vmem:[#allocation6 + $0x38] sm:$0xff] %v1395
        %1428 = vst [vmem:[#allocation6 + $0x40] sm:$0xff] %v1396
        %1429 = vst [vmem:[#allocation6 + $0x48] sm:$0xff] %v1397
        %1430 = vst [vmem:[#allocation6 + $0x50] sm:$0xff] %v1398
        %1431 = vst [vmem:[#allocation6 + $0x58] sm:$0xff] %v1399
        %1432 = vst [vmem:[#allocation6 + $0x60] sm:$0xff] %v1400
        %1433 = vst [vmem:[#allocation6 + $0x68] sm:$0xff] %v1401
        %1434 = vst [vmem:[#allocation6 + $0x70] sm:$0xff] %v1402
        %1435 = vst [vmem:[#allocation6 + $0x78] sm:$0xff] %v1403
        %1436 = vst [vmem:[#allocation6 + $0x80] sm:$0xff] %v1404
        %1437 = vst [vmem:[#allocation6 + $0x88] sm:$0xff] %v1405
        %1438 = vst [vmem:[#allocation6 + $0x90] sm:$0xff] %v1406
        %1439 = vst [vmem:[#allocation6 + $0x98] sm:$0xff] %v1407
        %1440 = vst [vmem:[#allocation6 + $0xa0] sm:$0xff] %v1408
        %1441 = vst [vmem:[#allocation6 + $0xa8] sm:$0xff] %v1409
        %1442 = vst [vmem:[#allocation6 + $0xb0] sm:$0xff] %v1410
        %1443 = vst [vmem:[#allocation6 + $0xb8] sm:$0xff] %v1411
        %1444 = vst [vmem:[#allocation6 + $0xc0] sm:$0xff] %v1412
        %1445 = vst [vmem:[#allocation6 + $0xc8] sm:$0xff] %v1413
        %1446 = vst [vmem:[#allocation6 + $0xd0] sm:$0xff] %v1414
        %1447 = vst [vmem:[#allocation6 + $0xd8] sm:$0xff] %v1415
        %1448 = vst [vmem:[#allocation6 + $0xe0] sm:$0xff] %v1416
        %1449 = vst [vmem:[#allocation6 + $0xe8] sm:$0xff] %v1417
        %1450 = vst [vmem:[#allocation6 + $0xf0] sm:$0xff] %v1418
        %1451 = vst [vmem:[#allocation6 + $0xf8] sm:$0xff] %v1419
        %s1452 = scalar_lea.vmem [#allocation3], 48
        %v1453 = vld [vmem:[%s1452] sm:$0xff]
        %v1454 = vld [vmem:[%s1452 + $0x8] sm:$0xff]
        %v1455 = vld [vmem:[%s1452 + $0x10] sm:$0xff]
        %v1456 = vld [vmem:[%s1452 + $0x18] sm:$0xff]
        %v1457 = vld [vmem:[%s1452 + $0x20] sm:$0xff]
        %v1458 = vld [vmem:[%s1452 + $0x28] sm:$0xff]
        %v1459 = vld [vmem:[%s1452 + $0x30] sm:$0xff]
        %v1460 = vld [vmem:[%s1452 + $0x38] sm:$0xff]
        %v1461 = vld [vmem:[%s1452 + $0x40] sm:$0xff]
        %v1462 = vld [vmem:[%s1452 + $0x48] sm:$0xff]
        %v1463 = vld [vmem:[%s1452 + $0x50] sm:$0xff]
        %v1464 = vld [vmem:[%s1452 + $0x58] sm:$0xff]
        %v1465 = vld [vmem:[%s1452 + $0x60] sm:$0xff]
        %v1466 = vld [vmem:[%s1452 + $0x68] sm:$0xff]
        %v1467 = vld [vmem:[%s1452 + $0x70] sm:$0xff]
        %v1468 = vld [vmem:[%s1452 + $0x78] sm:$0xff]
        %v1469 = vld [vmem:[%s1452 + $0x80] sm:$0xff]
        %v1470 = vld [vmem:[%s1452 + $0x88] sm:$0xff]
        %v1471 = vld [vmem:[%s1452 + $0x90] sm:$0xff]
        %v1472 = vld [vmem:[%s1452 + $0x98] sm:$0xff]
        %v1473 = vld [vmem:[%s1452 + $0xa0] sm:$0xff]
        %v1474 = vld [vmem:[%s1452 + $0xa8] sm:$0xff]
        %v1475 = vld [vmem:[%s1452 + $0xb0] sm:$0xff]
        %v1476 = vld [vmem:[%s1452 + $0xb8] sm:$0xff]
        %v1477 = vld [vmem:[%s1452 + $0xc0] sm:$0xff]
        %v1478 = vld [vmem:[%s1452 + $0xc8] sm:$0xff]
        %v1479 = vld [vmem:[%s1452 + $0xd0] sm:$0xff]
        %v1480 = vld [vmem:[%s1452 + $0xd8] sm:$0xff]
        %v1481 = vld [vmem:[%s1452 + $0xe0] sm:$0xff]
        %v1482 = vld [vmem:[%s1452 + $0xe8] sm:$0xff]
        %v1483 = vld [vmem:[%s1452 + $0xf0] sm:$0xff]
        %v1484 = vld [vmem:[%s1452 + $0xf8] sm:$0xff]
        %v1485 = vld [vmem:[%s1452 + $0x100] sm:$0xff]
        %v1486 = vld [vmem:[%s1452 + $0x108] sm:$0xff]
        %v1487 = vld [vmem:[%s1452 + $0x110] sm:$0xff]
        %v1488 = vld [vmem:[%s1452 + $0x118] sm:$0xff]
        %v1489 = vld [vmem:[%s1452 + $0x120] sm:$0xff]
        %v1490 = vld [vmem:[%s1452 + $0x128] sm:$0xff]
        %v1491 = vld [vmem:[%s1452 + $0x130] sm:$0xff]
        %v1492 = vld [vmem:[%s1452 + $0x138] sm:$0xff]
        %v1493 = vld [vmem:[%s1452 + $0x140] sm:$0xff]
        %v1494 = vld [vmem:[%s1452 + $0x148] sm:$0xff]
        %v1495 = vld [vmem:[%s1452 + $0x150] sm:$0xff]
        %v1496 = vld [vmem:[%s1452 + $0x158] sm:$0xff]
        %v1497 = vld [vmem:[%s1452 + $0x160] sm:$0xff]
        %v1498 = vld [vmem:[%s1452 + $0x168] sm:$0xff]
        %v1499 = vld [vmem:[%s1452 + $0x170] sm:$0xff]
        %v1500 = vld [vmem:[%s1452 + $0x178] sm:$0xff]
        %v1501 = vld [vmem:[%s1452 + $0x180] sm:$0xff]
        %v1502 = vld [vmem:[%s1452 + $0x188] sm:$0xff]
        %v1503 = vld [vmem:[%s1452 + $0x190] sm:$0xff]
        %v1504 = vld [vmem:[%s1452 + $0x198] sm:$0xff]
        %v1505 = vld [vmem:[%s1452 + $0x1a0] sm:$0xff]
        %v1506 = vld [vmem:[%s1452 + $0x1a8] sm:$0xff]
        %v1507 = vld [vmem:[%s1452 + $0x1b0] sm:$0xff]
        %v1508 = vld [vmem:[%s1452 + $0x1b8] sm:$0xff]
        %v1509 = vld [vmem:[%s1452 + $0x1c0] sm:$0xff]
        %v1510 = vld [vmem:[%s1452 + $0x1c8] sm:$0xff]
        %v1511 = vld [vmem:[%s1452 + $0x1d0] sm:$0xff]
        %v1512 = vld [vmem:[%s1452 + $0x1d8] sm:$0xff]
        %v1513 = vld [vmem:[%s1452 + $0x1e0] sm:$0xff]
        %v1514 = vld [vmem:[%s1452 + $0x1e8] sm:$0xff]
        %v1515 = vld [vmem:[%s1452 + $0x1f0] sm:$0xff]
        %v1516 = vld [vmem:[%s1452 + $0x1f8] sm:$0xff]
        %v1517 = vld [vmem:[%s1452 + $0x200] sm:$0xff]
        %v1518 = vld [vmem:[%s1452 + $0x208] sm:$0xff]
        %v1519 = vld [vmem:[%s1452 + $0x210] sm:$0xff]
        %v1520 = vld [vmem:[%s1452 + $0x218] sm:$0xff]
        %v1521 = vld [vmem:[%s1452 + $0x220] sm:$0xff]
        %v1522 = vld [vmem:[%s1452 + $0x228] sm:$0xff]
        %v1523 = vld [vmem:[%s1452 + $0x230] sm:$0xff]
        %v1524 = vld [vmem:[%s1452 + $0x238] sm:$0xff]
        %v1525 = vld [vmem:[%s1452 + $0x240] sm:$0xff]
        %v1526 = vld [vmem:[%s1452 + $0x248] sm:$0xff]
        %v1527 = vld [vmem:[%s1452 + $0x250] sm:$0xff]
        %v1528 = vld [vmem:[%s1452 + $0x258] sm:$0xff]
        %v1529 = vld [vmem:[%s1452 + $0x260] sm:$0xff]
        %v1530 = vld [vmem:[%s1452 + $0x268] sm:$0xff]
        %v1531 = vld [vmem:[%s1452 + $0x270] sm:$0xff]
        %v1532 = vld [vmem:[%s1452 + $0x278] sm:$0xff]
        %v1533 = vld [vmem:[%s1452 + $0x280] sm:$0xff]
        %v1534 = vld [vmem:[%s1452 + $0x288] sm:$0xff]
        %v1535 = vld [vmem:[%s1452 + $0x290] sm:$0xff]
        %v1536 = vld [vmem:[%s1452 + $0x298] sm:$0xff]
        %v1537 = vld [vmem:[%s1452 + $0x2a0] sm:$0xff]
        %v1538 = vld [vmem:[%s1452 + $0x2a8] sm:$0xff]
        %v1539 = vld [vmem:[%s1452 + $0x2b0] sm:$0xff]
        %v1540 = vld [vmem:[%s1452 + $0x2b8] sm:$0xff]
        %v1541 = vld [vmem:[%s1452 + $0x2c0] sm:$0xff]
        %v1542 = vld [vmem:[%s1452 + $0x2c8] sm:$0xff]
        %v1543 = vld [vmem:[%s1452 + $0x2d0] sm:$0xff]
        %v1544 = vld [vmem:[%s1452 + $0x2d8] sm:$0xff]
        %v1545 = vld [vmem:[%s1452 + $0x2e0] sm:$0xff]
        %v1546 = vld [vmem:[%s1452 + $0x2e8] sm:$0xff]
        %v1547 = vld [vmem:[%s1452 + $0x2f0] sm:$0xff]
        %v1548 = vld [vmem:[%s1452 + $0x2f8] sm:$0xff]
        %v1549 = vld [vmem:[#allocation6] sm:$0xff]
        %v1550 = vld [vmem:[#allocation6 + $0x8] sm:$0xff]
        %v1551 = vld [vmem:[#allocation6 + $0x10] sm:$0xff]
        %v1552 = vld [vmem:[#allocation6 + $0x18] sm:$0xff]
        %v1553 = vld [vmem:[#allocation6 + $0x20] sm:$0xff]
        %v1554 = vld [vmem:[#allocation6 + $0x28] sm:$0xff]
        %v1555 = vld [vmem:[#allocation6 + $0x30] sm:$0xff]
        %v1556 = vld [vmem:[#allocation6 + $0x38] sm:$0xff]
        %v1557 = vld [vmem:[#allocation6 + $0x40] sm:$0xff]
        %v1558 = vld [vmem:[#allocation6 + $0x48] sm:$0xff]
        %v1559 = vld [vmem:[#allocation6 + $0x50] sm:$0xff]
        %v1560 = vld [vmem:[#allocation6 + $0x58] sm:$0xff]
        %v1561 = vld [vmem:[#allocation6 + $0x60] sm:$0xff]
        %v1562 = vld [vmem:[#allocation6 + $0x68] sm:$0xff]
        %v1563 = vld [vmem:[#allocation6 + $0x70] sm:$0xff]
        %v1564 = vld [vmem:[#allocation6 + $0x78] sm:$0xff]
        %v1565 = vld [vmem:[#allocation6 + $0x80] sm:$0xff]
        %v1566 = vld [vmem:[#allocation6 + $0x88] sm:$0xff]
        %v1567 = vld [vmem:[#allocation6 + $0x90] sm:$0xff]
        %v1568 = vld [vmem:[#allocation6 + $0x98] sm:$0xff]
        %v1569 = vld [vmem:[#allocation6 + $0xa0] sm:$0xff]
        %v1570 = vld [vmem:[#allocation6 + $0xa8] sm:$0xff]
        %v1571 = vld [vmem:[#allocation6 + $0xb0] sm:$0xff]
        %v1572 = vld [vmem:[#allocation6 + $0xb8] sm:$0xff]
        %v1573 = vld [vmem:[#allocation6 + $0xc0] sm:$0xff]
        %v1574 = vld [vmem:[#allocation6 + $0xc8] sm:$0xff]
        %v1575 = vld [vmem:[#allocation6 + $0xd0] sm:$0xff]
        %v1576 = vld [vmem:[#allocation6 + $0xd8] sm:$0xff]
        %v1577 = vld [vmem:[#allocation6 + $0xe0] sm:$0xff]
        %v1578 = vld [vmem:[#allocation6 + $0xe8] sm:$0xff]
        %v1579 = vld [vmem:[#allocation6 + $0xf0] sm:$0xff]
        %v1580 = vld [vmem:[#allocation6 + $0xf8] sm:$0xff]
        %v1581 = vpack.c.bf16 %v1456, %v1453
        %v1582 = vpack.c.bf16 %v1457, %v1454
        %v1583 = vpack.c.bf16 %v1458, %v1455
        %v1584 = vpack.c.bf16 %v1462, %v1459
        %v1585 = vpack.c.bf16 %v1463, %v1460
        %v1586 = vpack.c.bf16 %v1464, %v1461
        %v1587 = vpack.c.bf16 %v1468, %v1465
        %v1588 = vpack.c.bf16 %v1469, %v1466
        %v1589 = vpack.c.bf16 %v1470, %v1467
        %v1590 = vpack.c.bf16 %v1474, %v1471
        %v1591 = vpack.c.bf16 %v1475, %v1472
        %v1592 = vpack.c.bf16 %v1476, %v1473
        %v1593 = vpack.c.bf16 %v1480, %v1477
        %v1594 = vpack.c.bf16 %v1481, %v1478
        %v1595 = vpack.c.bf16 %v1482, %v1479
        %v1596 = vpack.c.bf16 %v1486, %v1483
        %v1597 = vpack.c.bf16 %v1487, %v1484
        %v1598 = vpack.c.bf16 %v1488, %v1485
        %v1599 = vpack.c.bf16 %v1492, %v1489
        %v1600 = vpack.c.bf16 %v1493, %v1490
        %v1601 = vpack.c.bf16 %v1494, %v1491
        %v1602 = vpack.c.bf16 %v1498, %v1495
        %v1603 = vpack.c.bf16 %v1499, %v1496
        %v1604 = vpack.c.bf16 %v1500, %v1497
        %v1605 = vpack.c.bf16 %v1504, %v1501
        %v1606 = vpack.c.bf16 %v1505, %v1502
        %v1607 = vpack.c.bf16 %v1506, %v1503
        %v1608 = vpack.c.bf16 %v1510, %v1507
        %v1609 = vpack.c.bf16 %v1511, %v1508
        %v1610 = vpack.c.bf16 %v1512, %v1509
        %v1611 = vpack.c.bf16 %v1516, %v1513
        %v1612 = vpack.c.bf16 %v1517, %v1514
        %v1613 = vpack.c.bf16 %v1518, %v1515
        %v1614 = vpack.c.bf16 %v1522, %v1519
        %v1615 = vpack.c.bf16 %v1523, %v1520
        %v1616 = vpack.c.bf16 %v1524, %v1521
        %v1617 = vpack.c.bf16 %v1528, %v1525
        %v1618 = vpack.c.bf16 %v1529, %v1526
        %v1619 = vpack.c.bf16 %v1530, %v1527
        %v1620 = vpack.c.bf16 %v1534, %v1531
        %v1621 = vpack.c.bf16 %v1535, %v1532
        %v1622 = vpack.c.bf16 %v1536, %v1533
        %v1623 = vpack.c.bf16 %v1540, %v1537
        %v1624 = vpack.c.bf16 %v1541, %v1538
        %v1625 = vpack.c.bf16 %v1542, %v1539
        %v1626 = vpack.c.bf16 %v1546, %v1543
        %v1627 = vpack.c.bf16 %v1547, %v1544
        %v1628 = vpack.c.bf16 %v1548, %v1545
        %s1629 = scalar_lea.vmem [#allocation11], 192
        %v1630 = vld [vmem:[%s1629] sm:$0xf]
        %v1631 = vld [vmem:[%s1629 + $0x4] sm:$0xf]
        %v1632 = vld [vmem:[%s1629 + $0x8] sm:$0xf]
        %v1633 = vld [vmem:[%s1629 + $0xc] sm:$0xf]
        %v1634 = vld [vmem:[%s1629 + $0x10] sm:$0xf]
        %v1635 = vld [vmem:[%s1629 + $0x14] sm:$0xf]
        %v1636 = vld [vmem:[%s1629 + $0x18] sm:$0xf]
        %v1637 = vld [vmem:[%s1629 + $0x1c] sm:$0xf]
        %v1638 = vld [vmem:[%s1629 + $0x20] sm:$0xf]
        %v1639 = vld [vmem:[%s1629 + $0x24] sm:$0xf]
        %v1640 = vld [vmem:[%s1629 + $0x28] sm:$0xf]
        %v1641 = vld [vmem:[%s1629 + $0x2c] sm:$0xf]
        %v1642 = vld [vmem:[%s1629 + $0x30] sm:$0xf]
        %v1643 = vld [vmem:[%s1629 + $0x34] sm:$0xf]
        %v1644 = vld [vmem:[%s1629 + $0x38] sm:$0xf]
        %v1645 = vld [vmem:[%s1629 + $0x3c] sm:$0xf]
        %v1646 = vld [vmem:[%s1629 + $0x40] sm:$0xf]
        %v1647 = vld [vmem:[%s1629 + $0x44] sm:$0xf]
        %v1648 = vld [vmem:[%s1629 + $0x48] sm:$0xf]
        %v1649 = vld [vmem:[%s1629 + $0x4c] sm:$0xf]
        %v1650 = vld [vmem:[%s1629 + $0x50] sm:$0xf]
        %v1651 = vld [vmem:[%s1629 + $0x54] sm:$0xf]
        %v1652 = vld [vmem:[%s1629 + $0x58] sm:$0xf]
        %v1653 = vld [vmem:[%s1629 + $0x5c] sm:$0xf]
        %v1654 = vld [vmem:[%s1629 + $0x60] sm:$0xf]
        %v1655 = vld [vmem:[%s1629 + $0x64] sm:$0xf]
        %v1656 = vld [vmem:[%s1629 + $0x68] sm:$0xf]
        %v1657 = vld [vmem:[%s1629 + $0x6c] sm:$0xf]
        %v1658 = vld [vmem:[%s1629 + $0x70] sm:$0xf]
        %v1659 = vld [vmem:[%s1629 + $0x74] sm:$0xf]
        %v1660 = vld [vmem:[%s1629 + $0x78] sm:$0xf]
        %v1661 = vld [vmem:[%s1629 + $0x7c] sm:$0xf]
        %v1662 = vld [vmem:[%s1629 + $0x80] sm:$0xf]
        %v1663 = vld [vmem:[%s1629 + $0x84] sm:$0xf]
        %v1664 = vld [vmem:[%s1629 + $0x88] sm:$0xf]
        %v1665 = vld [vmem:[%s1629 + $0x8c] sm:$0xf]
        %v1666 = vld [vmem:[%s1629 + $0x90] sm:$0xf]
        %v1667 = vld [vmem:[%s1629 + $0x94] sm:$0xf]
        %v1668 = vld [vmem:[%s1629 + $0x98] sm:$0xf]
        %v1669 = vld [vmem:[%s1629 + $0x9c] sm:$0xf]
        %v1670 = vld [vmem:[%s1629 + $0xa0] sm:$0xf]
        %v1671 = vld [vmem:[%s1629 + $0xa4] sm:$0xf]
        %v1672 = vld [vmem:[%s1629 + $0xa8] sm:$0xf]
        %v1673 = vld [vmem:[%s1629 + $0xac] sm:$0xf]
        %v1674 = vld [vmem:[%s1629 + $0xb0] sm:$0xf]
        %v1675 = vld [vmem:[%s1629 + $0xb4] sm:$0xf]
        %v1676 = vld [vmem:[%s1629 + $0xb8] sm:$0xf]
        %v1677 = vld [vmem:[%s1629 + $0xbc] sm:$0xf]
        %v1726 = vunpack.c.l.b16 %v1630
        %v1727 = vunpack.c.l.b16 %v1631
        %v1728 = vunpack.c.l.b16 %v1632
        %v1729 = vunpack.c.l.b16 %v1633
        %v1730 = vunpack.c.l.b16 %v1634
        %v1731 = vunpack.c.l.b16 %v1635
        %v1732 = vunpack.c.l.b16 %v1636
        %v1733 = vunpack.c.l.b16 %v1637
        %v1734 = vunpack.c.l.b16 %v1638
        %v1735 = vunpack.c.l.b16 %v1639
        %v1736 = vunpack.c.l.b16 %v1640
        %v1737 = vunpack.c.l.b16 %v1641
        %v1738 = vunpack.c.l.b16 %v1642
        %v1739 = vunpack.c.l.b16 %v1643
        %v1740 = vunpack.c.l.b16 %v1644
        %v1741 = vunpack.c.l.b16 %v1645
        %v1742 = vunpack.c.l.b16 %v1646
        %v1743 = vunpack.c.l.b16 %v1647
        %v1744 = vunpack.c.l.b16 %v1648
        %v1745 = vunpack.c.l.b16 %v1649
        %v1746 = vunpack.c.l.b16 %v1650
        %v1747 = vunpack.c.l.b16 %v1651
        %v1748 = vunpack.c.l.b16 %v1652
        %v1749 = vunpack.c.l.b16 %v1653
        %v1750 = vunpack.c.l.b16 %v1654
        %v1751 = vunpack.c.l.b16 %v1655
        %v1752 = vunpack.c.l.b16 %v1656
        %v1753 = vunpack.c.l.b16 %v1657
        %v1754 = vunpack.c.l.b16 %v1658
        %v1755 = vunpack.c.l.b16 %v1659
        %v1756 = vunpack.c.l.b16 %v1660
        %v1757 = vunpack.c.l.b16 %v1661
        %v1758 = vunpack.c.l.b16 %v1662
        %v1759 = vunpack.c.l.b16 %v1663
        %v1760 = vunpack.c.l.b16 %v1664
        %v1761 = vunpack.c.l.b16 %v1665
        %v1762 = vunpack.c.l.b16 %v1666
        %v1763 = vunpack.c.l.b16 %v1667
        %v1764 = vunpack.c.l.b16 %v1668
        %v1765 = vunpack.c.l.b16 %v1669
        %v1766 = vunpack.c.l.b16 %v1670
        %v1767 = vunpack.c.l.b16 %v1671
        %v1768 = vunpack.c.l.b16 %v1672
        %v1769 = vunpack.c.l.b16 %v1673
        %v1770 = vunpack.c.l.b16 %v1674
        %v1771 = vunpack.c.l.b16 %v1675
        %v1772 = vunpack.c.l.b16 %v1676
        %v1773 = vunpack.c.l.b16 %v1677
        %v1774 = vpack.c.b16 %v1727, %v1726
        %v1775 = vpack.c.b16 %v1729, %v1728
        %v1776 = vpack.c.b16 %v1731, %v1730
        %v1777 = vpack.c.b16 %v1733, %v1732
        %v1778 = vpack.c.b16 %v1735, %v1734
        %v1779 = vpack.c.b16 %v1737, %v1736
        %v1780 = vpack.c.b16 %v1739, %v1738
        %v1781 = vpack.c.b16 %v1741, %v1740
        %v1782 = vpack.c.b16 %v1743, %v1742
        %v1783 = vpack.c.b16 %v1745, %v1744
        %v1784 = vpack.c.b16 %v1747, %v1746
        %v1785 = vpack.c.b16 %v1749, %v1748
        %v1786 = vpack.c.b16 %v1751, %v1750
        %v1787 = vpack.c.b16 %v1753, %v1752
        %v1788 = vpack.c.b16 %v1755, %v1754
        %v1789 = vpack.c.b16 %v1757, %v1756
        %v1790 = vpack.c.b16 %v1759, %v1758
        %v1791 = vpack.c.b16 %v1761, %v1760
        %v1792 = vpack.c.b16 %v1763, %v1762
        %v1793 = vpack.c.b16 %v1765, %v1764
        %v1794 = vpack.c.b16 %v1767, %v1766
        %v1795 = vpack.c.b16 %v1769, %v1768
        %v1796 = vpack.c.b16 %v1771, %v1770
        %v1797 = vpack.c.b16 %v1773, %v1772
        %1822 = vmatprep.subr.bf16.mxu0 0
        %1823 = vmatpush1.bf16.msra.mxu0 %v1774
        %1824 = vmatprep.subr.bf16.mxu0 0
        %1825 = vmatpush1.bf16.msra.mxu0 %v1775
        %1826 = vmatprep.subr.bf16.mxu0 0
        %1827 = vmatpush1.bf16.msra.mxu0 %v1776
        %1828 = vmatprep.subr.bf16.mxu0 0
        %1829 = vmatpush1.bf16.msra.mxu0 %v1777
        %1830 = vmatprep.subr.bf16.mxu0 0
        %1831 = vmatpush1.bf16.msra.mxu0 %v1778
        %1832 = vmatprep.subr.bf16.mxu0 0
        %1833 = vmatpush1.bf16.msra.mxu0 %v1779
        %1834 = vmatprep.subr.bf16.mxu0 0
        %1835 = vmatpush1.bf16.msra.mxu0 %v1780
        %1836 = vmatprep.subr.bf16.mxu0 0
        %1837 = vmatpush1.bf16.msra.mxu0 %v1781
        %1838 = vmatprep.subr.bf16.mxu0 0
        %1839 = vmatpush1.bf16.msra.mxu0 %v1782
        %1840 = vmatprep.subr.bf16.mxu0 0
        %1841 = vmatpush1.bf16.msra.mxu0 %v1783
        %1842 = vmatprep.subr.bf16.mxu0 0
        %1843 = vmatpush1.bf16.msra.mxu0 %v1784
        %1844 = vmatprep.subr.bf16.mxu0 0
        %1845 = vmatpush1.bf16.msra.mxu0 %v1785
        %1846 = vmatprep.subr.bf16.mxu0 0
        %1847 = vmatpush1.bf16.msra.mxu0 %v1786
        %1848 = vmatprep.subr.bf16.mxu0 0
        %1849 = vmatpush1.bf16.msra.mxu0 %v1787
        %1850 = vmatprep.subr.bf16.mxu0 0
        %1851 = vmatpush1.bf16.msra.mxu0 %v1788
        %1852 = vmatprep.subr.bf16.mxu0 0
        %1853 = vmatpush1.bf16.msra.mxu0 %v1789
        %1854 = vmatprep.mubr.bf16.mxu0 %v1582
        %1855 = vmatmul.mubr.bf16.gmra.mrb[0].mxu0 %v1581
        %v1856 = vpop.f32.mrb[0].mxu0
        %v1857 = vadd.f32 0.0, %v1856
        %v1858 = vpop.f32.mrb[0].mxu0
        %v1859 = vpop.f32.mrb[0].mxu0
        %v1860 = vadd.f32 0.0, %v1859
        %v1861 = vpop.f32.mrb[0].mxu0
        %1862 = vmatprep.mubr.bf16.mxu0 %v1585
        %1863 = vmatmul.mubr.bf16.gmra.mrb[0].mxu0 %v1584
        %v1864 = vpop.f32.mrb[0].mxu0
        %v1865 = vadd.f32 0.0, %v1864
        %v1866 = vpop.f32.mrb[0].mxu0
        %v1867 = vpop.f32.mrb[0].mxu0
        %v1868 = vadd.f32 0.0, %v1867
        %v1869 = vpop.f32.mrb[0].mxu0
        %1870 = vmatprep.mubr.bf16.mxu0 %v1588
        %1871 = vmatmul.mubr.bf16.gmra.mrb[0].mxu0 %v1587
        %v1872 = vpop.f32.mrb[0].mxu0
        %v1873 = vadd.f32 0.0, %v1872
        %v1874 = vpop.f32.mrb[0].mxu0
        %v1875 = vpop.f32.mrb[0].mxu0
        %v1876 = vadd.f32 0.0, %v1875
        %v1877 = vpop.f32.mrb[0].mxu0
        %1878 = vmatprep.mubr.bf16.mxu0 %v1591
        %1879 = vmatmul.mubr.bf16.gmra.mrb[0].mxu0 %v1590
        %v1880 = vpop.f32.mrb[0].mxu0
        %v1881 = vadd.f32 0.0, %v1880
        %v1882 = vpop.f32.mrb[0].mxu0
        %v1883 = vpop.f32.mrb[0].mxu0
        %v1884 = vadd.f32 0.0, %v1883
        %v1885 = vpop.f32.mrb[0].mxu0
        %1886 = vmatprep.mubr.bf16.mxu0 %v1594
        %1887 = vmatmul.mubr.bf16.gmra.mrb[0].mxu0 %v1593
        %v1888 = vpop.f32.mrb[0].mxu0
        %v1889 = vadd.f32 0.0, %v1888
        %v1890 = vpop.f32.mrb[0].mxu0
        %v1891 = vpop.f32.mrb[0].mxu0
        %v1892 = vadd.f32 0.0, %v1891
        %v1893 = vpop.f32.mrb[0].mxu0
        %1894 = vmatprep.mubr.bf16.mxu0 %v1597
        %1895 = vmatmul.mubr.bf16.gmra.mrb[0].mxu0 %v1596
        %v1896 = vpop.f32.mrb[0].mxu0
        %v1897 = vadd.f32 0.0, %v1896
        %v1898 = vpop.f32.mrb[0].mxu0
        %v1899 = vpop.f32.mrb[0].mxu0
        %v1900 = vadd.f32 0.0, %v1899
        %v1901 = vpop.f32.mrb[0].mxu0
        %1902 = vmatprep.mubr.bf16.mxu0 %v1600
        %1903 = vmatmul.mubr.bf16.gmra.mrb[0].mxu0 %v1599
        %v1904 = vpop.f32.mrb[0].mxu0
        %v1905 = vadd.f32 0.0, %v1904
        %v1906 = vpop.f32.mrb[0].mxu0
        %v1907 = vpop.f32.mrb[0].mxu0
        %v1908 = vadd.f32 0.0, %v1907
        %v1909 = vpop.f32.mrb[0].mxu0
        %1910 = vmatprep.mubr.bf16.mxu0 %v1603
        %1911 = vmatmul.mubr.bf16.gmra.mrb[0].mxu0 %v1602
        %v1912 = vpop.f32.mrb[0].mxu0
        %v1913 = vadd.f32 0.0, %v1912
        %v1914 = vpop.f32.mrb[0].mxu0
        %v1915 = vpop.f32.mrb[0].mxu0
        %v1916 = vadd.f32 0.0, %v1915
        %v1917 = vpop.f32.mrb[0].mxu0
        %1918 = vmatprep.mubr.bf16.mxu0 %v1606
        %1919 = vmatmul.mubr.bf16.gmra.mrb[0].mxu0 %v1605
        %v1920 = vpop.f32.mrb[0].mxu0
        %v1921 = vadd.f32 0.0, %v1920
        %v1922 = vpop.f32.mrb[0].mxu0
        %v1923 = vpop.f32.mrb[0].mxu0
        %v1924 = vadd.f32 0.0, %v1923
        %v1925 = vpop.f32.mrb[0].mxu0
        %1926 = vmatprep.mubr.bf16.mxu0 %v1609
        %1927 = vmatmul.mubr.bf16.gmra.mrb[0].mxu0 %v1608
        %v1928 = vpop.f32.mrb[0].mxu0
        %v1929 = vadd.f32 0.0, %v1928
        %v1930 = vpop.f32.mrb[0].mxu0
        %v1931 = vpop.f32.mrb[0].mxu0
        %v1932 = vadd.f32 0.0, %v1931
        %v1933 = vpop.f32.mrb[0].mxu0
        %1934 = vmatprep.mubr.bf16.mxu0 %v1612
        %1935 = vmatmul.mubr.bf16.gmra.mrb[0].mxu0 %v1611
        %v1936 = vpop.f32.mrb[0].mxu0
        %v1937 = vadd.f32 0.0, %v1936
        %v1938 = vpop.f32.mrb[0].mxu0
        %v1939 = vpop.f32.mrb[0].mxu0
        %v1940 = vadd.f32 0.0, %v1939
        %v1941 = vpop.f32.mrb[0].mxu0
        %1942 = vmatprep.mubr.bf16.mxu0 %v1615
        %1943 = vmatmul.mubr.bf16.gmra.mrb[0].mxu0 %v1614
        %v1944 = vpop.f32.mrb[0].mxu0
        %v1945 = vadd.f32 0.0, %v1944
        %v1946 = vpop.f32.mrb[0].mxu0
        %v1947 = vpop.f32.mrb[0].mxu0
        %v1948 = vadd.f32 0.0, %v1947
        %v1949 = vpop.f32.mrb[0].mxu0
        %1950 = vmatprep.mubr.bf16.mxu0 %v1618
        %1951 = vmatmul.mubr.bf16.gmra.mrb[0].mxu0 %v1617
        %v1952 = vpop.f32.mrb[0].mxu0
        %v1953 = vadd.f32 0.0, %v1952
        %v1954 = vpop.f32.mrb[0].mxu0
        %v1955 = vpop.f32.mrb[0].mxu0
        %v1956 = vadd.f32 0.0, %v1955
        %v1957 = vpop.f32.mrb[0].mxu0
        %1958 = vmatprep.mubr.bf16.mxu0 %v1621
        %1959 = vmatmul.mubr.bf16.gmra.mrb[0].mxu0 %v1620
        %v1960 = vpop.f32.mrb[0].mxu0
        %v1961 = vadd.f32 0.0, %v1960
        %v1962 = vpop.f32.mrb[0].mxu0
        %v1963 = vpop.f32.mrb[0].mxu0
        %v1964 = vadd.f32 0.0, %v1963
        %v1965 = vpop.f32.mrb[0].mxu0
        %1966 = vmatprep.mubr.bf16.mxu0 %v1624
        %1967 = vmatmul.mubr.bf16.gmra.mrb[0].mxu0 %v1623
        %v1968 = vpop.f32.mrb[0].mxu0
        %v1969 = vadd.f32 0.0, %v1968
        %v1970 = vpop.f32.mrb[0].mxu0
        %v1971 = vpop.f32.mrb[0].mxu0
        %v1972 = vadd.f32 0.0, %v1971
        %v1973 = vpop.f32.mrb[0].mxu0
        %1974 = vmatprep.mubr.bf16.mxu0 %v1627
        %1975 = vmatmul.mubr.bf16.gmra.mrb[0].mxu0 %v1626
        %v1976 = vpop.f32.mrb[0].mxu0
        %v1977 = vadd.f32 0.0, %v1976
        %v1978 = vpop.f32.mrb[0].mxu0
        %v1979 = vpop.f32.mrb[0].mxu0
        %v1980 = vadd.f32 0.0, %v1979
        %v1981 = vpop.f32.mrb[0].mxu0
        %1982 = vdwg.mxu0
        %1983 = vmatprep.subr.bf16.mxu0 0
        %1984 = vmatpush1.bf16.msra.mxu0 %v1790
        %1985 = vmatprep.subr.bf16.mxu0 0
        %1986 = vmatpush1.bf16.msra.mxu0 %v1791
        %1987 = vmatprep.subr.bf16.mxu0 0
        %1988 = vmatpush1.bf16.msra.mxu0 %v1792
        %1989 = vmatprep.subr.bf16.mxu0 0
        %1990 = vmatpush1.bf16.msra.mxu0 %v1793
        %1991 = vmatprep.subr.bf16.mxu0 0
        %1992 = vmatpush1.bf16.msra.mxu0 %v1794
        %1993 = vmatprep.subr.bf16.mxu0 0
        %1994 = vmatpush1.bf16.msra.mxu0 %v1795
        %1995 = vmatprep.subr.bf16.mxu0 0
        %1996 = vmatpush1.bf16.msra.mxu0 %v1796
        %1997 = vmatprep.subr.bf16.mxu0 0
        %1998 = vmatpush1.bf16.msra.mxu0 %v1797
        %1999 = vmatprep.subr.bf16.mxu0 0
        %2000 = vmatpush1.bf16.msra.mxu0 0
        %2001 = vmatprep.subr.bf16.mxu0 0
        %2002 = vmatpush1.bf16.msra.mxu0 0
        %2003 = vmatprep.subr.bf16.mxu0 0
        %2004 = vmatpush1.bf16.msra.mxu0 0
        %2005 = vmatprep.subr.bf16.mxu0 0
        %2006 = vmatpush1.bf16.msra.mxu0 0
        %2007 = vmatprep.subr.bf16.mxu0 0
        %2008 = vmatpush1.bf16.msra.mxu0 0
        %2009 = vmatprep.subr.bf16.mxu0 0
        %2010 = vmatpush1.bf16.msra.mxu0 0
        %2011 = vmatprep.subr.bf16.mxu0 0
        %2012 = vmatpush1.bf16.msra.mxu0 0
        %2013 = vmatprep.subr.bf16.mxu0 0
        %2014 = vmatpush1.bf16.msra.mxu0 0
        %2015 = vmatprep.mubr.bf16.mxu0 0
        %2016 = vmatmul.mubr.bf16.gmra.mrb[0].mxu0 %v1583
        %v2017 = vpop.f32.mrb[0].mxu0
        %v2018 = vadd.f32 %v1857, %v2017
        %v2019 = vpop.f32.mrb[0].mxu0
        %v2020 = vpop.f32.mrb[0].mxu0
        %v2021 = vadd.f32 %v1860, %v2020
        %v2022 = vpop.f32.mrb[0].mxu0
        %2023 = vmatprep.mubr.bf16.mxu0 0
        %2024 = vmatmul.mubr.bf16.gmra.mrb[0].mxu0 %v1586
        %v2025 = vpop.f32.mrb[0].mxu0
        %v2026 = vadd.f32 %v1865, %v2025
        %v2027 = vpop.f32.mrb[0].mxu0
        %v2028 = vpop.f32.mrb[0].mxu0
        %v2029 = vadd.f32 %v1868, %v2028
        %v2030 = vpop.f32.mrb[0].mxu0
        %2031 = vmatprep.mubr.bf16.mxu0 0
        %2032 = vmatmul.mubr.bf16.gmra.mrb[0].mxu0 %v1589
        %v2033 = vpop.f32.mrb[0].mxu0
        %v2034 = vadd.f32 %v1873, %v2033
        %v2035 = vpop.f32.mrb[0].mxu0
        %v2036 = vpop.f32.mrb[0].mxu0
        %v2037 = vadd.f32 %v1876, %v2036
        %v2038 = vpop.f32.mrb[0].mxu0
        %2039 = vmatprep.mubr.bf16.mxu0 0
        %2040 = vmatmul.mubr.bf16.gmra.mrb[0].mxu0 %v1592
        %v2041 = vpop.f32.mrb[0].mxu0
        %v2042 = vadd.f32 %v1881, %v2041
        %v2043 = vpop.f32.mrb[0].mxu0
        %v2044 = vpop.f32.mrb[0].mxu0
        %v2045 = vadd.f32 %v1884, %v2044
        %v2046 = vpop.f32.mrb[0].mxu0
        %2047 = vmatprep.mubr.bf16.mxu0 0
        %2048 = vmatmul.mubr.bf16.gmra.mrb[0].mxu0 %v1595
        %v2049 = vpop.f32.mrb[0].mxu0
        %v2050 = vadd.f32 %v1889, %v2049
        %v2051 = vpop.f32.mrb[0].mxu0
        %v2052 = vpop.f32.mrb[0].mxu0
        %v2053 = vadd.f32 %v1892, %v2052
        %v2054 = vpop.f32.mrb[0].mxu0
        %2055 = vmatprep.mubr.bf16.mxu0 0
        %2056 = vmatmul.mubr.bf16.gmra.mrb[0].mxu0 %v1598
        %v2057 = vpop.f32.mrb[0].mxu0
        %v2058 = vadd.f32 %v1897, %v2057
        %v2059 = vpop.f32.mrb[0].mxu0
        %v2060 = vpop.f32.mrb[0].mxu0
        %v2061 = vadd.f32 %v1900, %v2060
        %v2062 = vpop.f32.mrb[0].mxu0
        %2063 = vmatprep.mubr.bf16.mxu0 0
        %2064 = vmatmul.mubr.bf16.gmra.mrb[0].mxu0 %v1601
        %v2065 = vpop.f32.mrb[0].mxu0
        %v2066 = vadd.f32 %v1905, %v2065
        %v2067 = vpop.f32.mrb[0].mxu0
        %v2068 = vpop.f32.mrb[0].mxu0
        %v2069 = vadd.f32 %v1908, %v2068
        %v2070 = vpop.f32.mrb[0].mxu0
        %2071 = vmatprep.mubr.bf16.mxu0 0
        %2072 = vmatmul.mubr.bf16.gmra.mrb[0].mxu0 %v1604
        %v2073 = vpop.f32.mrb[0].mxu0
        %v2074 = vadd.f32 %v1913, %v2073
        %v2075 = vpop.f32.mrb[0].mxu0
        %v2076 = vpop.f32.mrb[0].mxu0
        %v2077 = vadd.f32 %v1916, %v2076
        %v2078 = vpop.f32.mrb[0].mxu0
        %2079 = vmatprep.mubr.bf16.mxu0 0
        %2080 = vmatmul.mubr.bf16.gmra.mrb[0].mxu0 %v1607
        %v2081 = vpop.f32.mrb[0].mxu0
        %v2082 = vadd.f32 %v1921, %v2081
        %v2083 = vpop.f32.mrb[0].mxu0
        %v2084 = vpop.f32.mrb[0].mxu0
        %v2085 = vadd.f32 %v1924, %v2084
        %v2086 = vpop.f32.mrb[0].mxu0
        %2087 = vmatprep.mubr.bf16.mxu0 0
        %2088 = vmatmul.mubr.bf16.gmra.mrb[0].mxu0 %v1610
        %v2089 = vpop.f32.mrb[0].mxu0
        %v2090 = vadd.f32 %v1929, %v2089
        %v2091 = vpop.f32.mrb[0].mxu0
        %v2092 = vpop.f32.mrb[0].mxu0
        %v2093 = vadd.f32 %v1932, %v2092
        %v2094 = vpop.f32.mrb[0].mxu0
        %2095 = vmatprep.mubr.bf16.mxu0 0
        %2096 = vmatmul.mubr.bf16.gmra.mrb[0].mxu0 %v1613
        %v2097 = vpop.f32.mrb[0].mxu0
        %v2098 = vadd.f32 %v1937, %v2097
        %v2099 = vpop.f32.mrb[0].mxu0
        %v2100 = vpop.f32.mrb[0].mxu0
        %v2101 = vadd.f32 %v1940, %v2100
        %v2102 = vpop.f32.mrb[0].mxu0
        %2103 = vmatprep.mubr.bf16.mxu0 0
        %2104 = vmatmul.mubr.bf16.gmra.mrb[0].mxu0 %v1616
        %v2105 = vpop.f32.mrb[0].mxu0
        %v2106 = vadd.f32 %v1945, %v2105
        %v2107 = vpop.f32.mrb[0].mxu0
        %v2108 = vpop.f32.mrb[0].mxu0
        %v2109 = vadd.f32 %v1948, %v2108
        %v2110 = vpop.f32.mrb[0].mxu0
        %2111 = vmatprep.mubr.bf16.mxu0 0
        %2112 = vmatmul.mubr.bf16.gmra.mrb[0].mxu0 %v1619
        %v2113 = vpop.f32.mrb[0].mxu0
        %v2114 = vadd.f32 %v1953, %v2113
        %v2115 = vpop.f32.mrb[0].mxu0
        %v2116 = vpop.f32.mrb[0].mxu0
        %v2117 = vadd.f32 %v1956, %v2116
        %v2118 = vpop.f32.mrb[0].mxu0
        %2119 = vmatprep.mubr.bf16.mxu0 0
        %2120 = vmatmul.mubr.bf16.gmra.mrb[0].mxu0 %v1622
        %v2121 = vpop.f32.mrb[0].mxu0
        %v2122 = vadd.f32 %v1961, %v2121
        %v2123 = vpop.f32.mrb[0].mxu0
        %v2124 = vpop.f32.mrb[0].mxu0
        %v2125 = vadd.f32 %v1964, %v2124
        %v2126 = vpop.f32.mrb[0].mxu0
        %2127 = vmatprep.mubr.bf16.mxu0 0
        %2128 = vmatmul.mubr.bf16.gmra.mrb[0].mxu0 %v1625
        %v2129 = vpop.f32.mrb[0].mxu0
        %v2130 = vadd.f32 %v1969, %v2129
        %v2131 = vpop.f32.mrb[0].mxu0
        %v2132 = vpop.f32.mrb[0].mxu0
        %v2133 = vadd.f32 %v1972, %v2132
        %v2134 = vpop.f32.mrb[0].mxu0
        %2135 = vmatprep.mubr.bf16.mxu0 0
        %2136 = vmatmul.mubr.bf16.gmra.mrb[0].mxu0 %v1628
        %v2137 = vpop.f32.mrb[0].mxu0
        %v2138 = vadd.f32 %v1977, %v2137
        %v2139 = vpop.f32.mrb[0].mxu0
        %v2140 = vpop.f32.mrb[0].mxu0
        %v2141 = vadd.f32 %v1980, %v2140
        %v2142 = vpop.f32.mrb[0].mxu0
        %2143 = vdwg.mxu0
        %v2144 = vadd.f32 %v1549, %v2018
        %v2145 = vadd.f32 %v1550, %v2021
        %v2146 = vadd.f32 %v1551, %v2026
        %v2147 = vadd.f32 %v1552, %v2029
        %v2148 = vadd.f32 %v1553, %v2034
        %v2149 = vadd.f32 %v1554, %v2037
        %v2150 = vadd.f32 %v1555, %v2042
        %v2151 = vadd.f32 %v1556, %v2045
        %v2152 = vadd.f32 %v1557, %v2050
        %v2153 = vadd.f32 %v1558, %v2053
        %v2154 = vadd.f32 %v1559, %v2058
        %v2155 = vadd.f32 %v1560, %v2061
        %v2156 = vadd.f32 %v1561, %v2066
        %v2157 = vadd.f32 %v1562, %v2069
        %v2158 = vadd.f32 %v1563, %v2074
        %v2159 = vadd.f32 %v1564, %v2077
        %v2160 = vadd.f32 %v1565, %v2082
        %v2161 = vadd.f32 %v1566, %v2085
        %v2162 = vadd.f32 %v1567, %v2090
        %v2163 = vadd.f32 %v1568, %v2093
        %v2164 = vadd.f32 %v1569, %v2098
        %v2165 = vadd.f32 %v1570, %v2101
        %v2166 = vadd.f32 %v1571, %v2106
        %v2167 = vadd.f32 %v1572, %v2109
        %v2168 = vadd.f32 %v1573, %v2114
        %v2169 = vadd.f32 %v1574, %v2117
        %v2170 = vadd.f32 %v1575, %v2122
        %v2171 = vadd.f32 %v1576, %v2125
        %v2172 = vadd.f32 %v1577, %v2130
        %v2173 = vadd.f32 %v1578, %v2133
        %v2174 = vadd.f32 %v1579, %v2138
        %v2175 = vadd.f32 %v1580, %v2141
        %2176 = vst [vmem:[#allocation6] sm:$0xff] %v2144
        %2177 = vst [vmem:[#allocation6 + $0x8] sm:$0xff] %v2145
        %2178 = vst [vmem:[#allocation6 + $0x10] sm:$0xff] %v2146
        %2179 = vst [vmem:[#allocation6 + $0x18] sm:$0xff] %v2147
        %2180 = vst [vmem:[#allocation6 + $0x20] sm:$0xff] %v2148
        %2181 = vst [vmem:[#allocation6 + $0x28] sm:$0xff] %v2149
        %2182 = vst [vmem:[#allocation6 + $0x30] sm:$0xff] %v2150
        %2183 = vst [vmem:[#allocation6 + $0x38] sm:$0xff] %v2151
        %2184 = vst [vmem:[#allocation6 + $0x40] sm:$0xff] %v2152
        %2185 = vst [vmem:[#allocation6 + $0x48] sm:$0xff] %v2153
        %2186 = vst [vmem:[#allocation6 + $0x50] sm:$0xff] %v2154
        %2187 = vst [vmem:[#allocation6 + $0x58] sm:$0xff] %v2155
        %2188 = vst [vmem:[#allocation6 + $0x60] sm:$0xff] %v2156
        %2189 = vst [vmem:[#allocation6 + $0x68] sm:$0xff] %v2157
        %2190 = vst [vmem:[#allocation6 + $0x70] sm:$0xff] %v2158
        %2191 = vst [vmem:[#allocation6 + $0x78] sm:$0xff] %v2159
        %2192 = vst [vmem:[#allocation6 + $0x80] sm:$0xff] %v2160
        %2193 = vst [vmem:[#allocation6 + $0x88] sm:$0xff] %v2161
        %2194 = vst [vmem:[#allocation6 + $0x90] sm:$0xff] %v2162
        %2195 = vst [vmem:[#allocation6 + $0x98] sm:$0xff] %v2163
        %2196 = vst [vmem:[#allocation6 + $0xa0] sm:$0xff] %v2164
        %2197 = vst [vmem:[#allocation6 + $0xa8] sm:$0xff] %v2165
        %2198 = vst [vmem:[#allocation6 + $0xb0] sm:$0xff] %v2166
        %2199 = vst [vmem:[#allocation6 + $0xb8] sm:$0xff] %v2167
        %2200 = vst [vmem:[#allocation6 + $0xc0] sm:$0xff] %v2168
        %2201 = vst [vmem:[#allocation6 + $0xc8] sm:$0xff] %v2169
        %2202 = vst [vmem:[#allocation6 + $0xd0] sm:$0xff] %v2170
        %2203 = vst [vmem:[#allocation6 + $0xd8] sm:$0xff] %v2171
        %2204 = vst [vmem:[#allocation6 + $0xe0] sm:$0xff] %v2172
        %2205 = vst [vmem:[#allocation6 + $0xe8] sm:$0xff] %v2173
        %2206 = vst [vmem:[#allocation6 + $0xf0] sm:$0xff] %v2174
        %2207 = vst [vmem:[#allocation6 + $0xf8] sm:$0xff] %v2175
        %s2208 = scalar_lea.vmem [#allocation3], 96
        %v2209 = vld [vmem:[%s2208] sm:$0xff]
        %v2210 = vld [vmem:[%s2208 + $0x8] sm:$0xff]
        %v2211 = vld [vmem:[%s2208 + $0x10] sm:$0xff]
        %v2212 = vld [vmem:[%s2208 + $0x18] sm:$0xff]
        %v2213 = vld [vmem:[%s2208 + $0x20] sm:$0xff]
        %v2214 = vld [vmem:[%s2208 + $0x28] sm:$0xff]
        %v2215 = vld [vmem:[%s2208 + $0x30] sm:$0xff]
        %v2216 = vld [vmem:[%s2208 + $0x38] sm:$0xff]
        %v2217 = vld [vmem:[%s2208 + $0x40] sm:$0xff]
        %v2218 = vld [vmem:[%s2208 + $0x48] sm:$0xff]
        %v2219 = vld [vmem:[%s2208 + $0x50] sm:$0xff]
        %v2220 = vld [vmem:[%s2208 + $0x58] sm:$0xff]
        %v2221 = vld [vmem:[%s2208 + $0x60] sm:$0xff]
        %v2222 = vld [vmem:[%s2208 + $0x68] sm:$0xff]
        %v2223 = vld [vmem:[%s2208 + $0x70] sm:$0xff]
        %v2224 = vld [vmem:[%s2208 + $0x78] sm:$0xff]
        %v2225 = vld [vmem:[%s2208 + $0x80] sm:$0xff]
        %v2226 = vld [vmem:[%s2208 + $0x88] sm:$0xff]
        %v2227 = vld [vmem:[%s2208 + $0x90] sm:$0xff]
        %v2228 = vld [vmem:[%s2208 + $0x98] sm:$0xff]
        %v2229 = vld [vmem:[%s2208 + $0xa0] sm:$0xff]
        %v2230 = vld [vmem:[%s2208 + $0xa8] sm:$0xff]
        %v2231 = vld [vmem:[%s2208 + $0xb0] sm:$0xff]
        %v2232 = vld [vmem:[%s2208 + $0xb8] sm:$0xff]
        %v2233 = vld [vmem:[%s2208 + $0xc0] sm:$0xff]
        %v2234 = vld [vmem:[%s2208 + $0xc8] sm:$0xff]
        %v2235 = vld [vmem:[%s2208 + $0xd0] sm:$0xff]
        %v2236 = vld [vmem:[%s2208 + $0xd8] sm:$0xff]
        %v2237 = vld [vmem:[%s2208 + $0xe0] sm:$0xff]
        %v2238 = vld [vmem:[%s2208 + $0xe8] sm:$0xff]
        %v2239 = vld [vmem:[%s2208 + $0xf0] sm:$0xff]
        %v2240 = vld [vmem:[%s2208 + $0xf8] sm:$0xff]
        %v2241 = vld [vmem:[%s2208 + $0x100] sm:$0xff]
        %v2242 = vld [vmem:[%s2208 + $0x108] sm:$0xff]
        %v2243 = vld [vmem:[%s2208 + $0x110] sm:$0xff]
        %v2244 = vld [vmem:[%s2208 + $0x118] sm:$0xff]
        %v2245 = vld [vmem:[%s2208 + $0x120] sm:$0xff]
        %v2246 = vld [vmem:[%s2208 + $0x128] sm:$0xff]
        %v2247 = vld [vmem:[%s2208 + $0x130] sm:$0xff]
        %v2248 = vld [vmem:[%s2208 + $0x138] sm:$0xff]
        %v2249 = vld [vmem:[%s2208 + $0x140] sm:$0xff]
        %v2250 = vld [vmem:[%s2208 + $0x148] sm:$0xff]
        %v2251 = vld [vmem:[%s2208 + $0x150] sm:$0xff]
        %v2252 = vld [vmem:[%s2208 + $0x158] sm:$0xff]
        %v2253 = vld [vmem:[%s2208 + $0x160] sm:$0xff]
        %v2254 = vld [vmem:[%s2208 + $0x168] sm:$0xff]
        %v2255 = vld [vmem:[%s2208 + $0x170] sm:$0xff]
        %v2256 = vld [vmem:[%s2208 + $0x178] sm:$0xff]
        %v2257 = vld [vmem:[%s2208 + $0x180] sm:$0xff]
        %v2258 = vld [vmem:[%s2208 + $0x188] sm:$0xff]
        %v2259 = vld [vmem:[%s2208 + $0x190] sm:$0xff]
        %v2260 = vld [vmem:[%s2208 + $0x198] sm:$0xff]
        %v2261 = vld [vmem:[%s2208 + $0x1a0] sm:$0xff]
        %v2262 = vld [vmem:[%s2208 + $0x1a8] sm:$0xff]
        %v2263 = vld [vmem:[%s2208 + $0x1b0] sm:$0xff]
        %v2264 = vld [vmem:[%s2208 + $0x1b8] sm:$0xff]
        %v2265 = vld [vmem:[%s2208 + $0x1c0] sm:$0xff]
        %v2266 = vld [vmem:[%s2208 + $0x1c8] sm:$0xff]
        %v2267 = vld [vmem:[%s2208 + $0x1d0] sm:$0xff]
        %v2268 = vld [vmem:[%s2208 + $0x1d8] sm:$0xff]
        %v2269 = vld [vmem:[%s2208 + $0x1e0] sm:$0xff]
        %v2270 = vld [vmem:[%s2208 + $0x1e8] sm:$0xff]
        %v2271 = vld [vmem:[%s2208 + $0x1f0] sm:$0xff]
        %v2272 = vld [vmem:[%s2208 + $0x1f8] sm:$0xff]
        %v2273 = vld [vmem:[%s2208 + $0x200] sm:$0xff]
        %v2274 = vld [vmem:[%s2208 + $0x208] sm:$0xff]
        %v2275 = vld [vmem:[%s2208 + $0x210] sm:$0xff]
        %v2276 = vld [vmem:[%s2208 + $0x218] sm:$0xff]
        %v2277 = vld [vmem:[%s2208 + $0x220] sm:$0xff]
        %v2278 = vld [vmem:[%s2208 + $0x228] sm:$0xff]
        %v2279 = vld [vmem:[%s2208 + $0x230] sm:$0xff]
        %v2280 = vld [vmem:[%s2208 + $0x238] sm:$0xff]
        %v2281 = vld [vmem:[%s2208 + $0x240] sm:$0xff]
        %v2282 = vld [vmem:[%s2208 + $0x248] sm:$0xff]
        %v2283 = vld [vmem:[%s2208 + $0x250] sm:$0xff]
        %v2284 = vld [vmem:[%s2208 + $0x258] sm:$0xff]
        %v2285 = vld [vmem:[%s2208 + $0x260] sm:$0xff]
        %v2286 = vld [vmem:[%s2208 + $0x268] sm:$0xff]
        %v2287 = vld [vmem:[%s2208 + $0x270] sm:$0xff]
        %v2288 = vld [vmem:[%s2208 + $0x278] sm:$0xff]
        %v2289 = vld [vmem:[%s2208 + $0x280] sm:$0xff]
        %v2290 = vld [vmem:[%s2208 + $0x288] sm:$0xff]
        %v2291 = vld [vmem:[%s2208 + $0x290] sm:$0xff]
        %v2292 = vld [vmem:[%s2208 + $0x298] sm:$0xff]
        %v2293 = vld [vmem:[%s2208 + $0x2a0] sm:$0xff]
        %v2294 = vld [vmem:[%s2208 + $0x2a8] sm:$0xff]
        %v2295 = vld [vmem:[%s2208 + $0x2b0] sm:$0xff]
        %v2296 = vld [vmem:[%s2208 + $0x2b8] sm:$0xff]
        %v2297 = vld [vmem:[%s2208 + $0x2c0] sm:$0xff]
        %v2298 = vld [vmem:[%s2208 + $0x2c8] sm:$0xff]
        %v2299 = vld [vmem:[%s2208 + $0x2d0] sm:$0xff]
        %v2300 = vld [vmem:[%s2208 + $0x2d8] sm:$0xff]
        %v2301 = vld [vmem:[%s2208 + $0x2e0] sm:$0xff]
        %v2302 = vld [vmem:[%s2208 + $0x2e8] sm:$0xff]
        %v2303 = vld [vmem:[%s2208 + $0x2f0] sm:$0xff]
        %v2304 = vld [vmem:[%s2208 + $0x2f8] sm:$0xff]
        %v2305 = vld [vmem:[#allocation6] sm:$0xff]
        %v2306 = vld [vmem:[#allocation6 + $0x8] sm:$0xff]
        %v2307 = vld [vmem:[#allocation6 + $0x10] sm:$0xff]
        %v2308 = vld [vmem:[#allocation6 + $0x18] sm:$0xff]
        %v2309 = vld [vmem:[#allocation6 + $0x20] sm:$0xff]
        %v2310 = vld [vmem:[#allocation6 + $0x28] sm:$0xff]
        %v2311 = vld [vmem:[#allocation6 + $0x30] sm:$0xff]
        %v2312 = vld [vmem:[#allocation6 + $0x38] sm:$0xff]
        %v2313 = vld [vmem:[#allocation6 + $0x40] sm:$0xff]
        %v2314 = vld [vmem:[#allocation6 + $0x48] sm:$0xff]
        %v2315 = vld [vmem:[#allocation6 + $0x50] sm:$0xff]
        %v2316 = vld [vmem:[#allocation6 + $0x58] sm:$0xff]
        %v2317 = vld [vmem:[#allocation6 + $0x60] sm:$0xff]
        %v2318 = vld [vmem:[#allocation6 + $0x68] sm:$0xff]
        %v2319 = vld [vmem:[#allocation6 + $0x70] sm:$0xff]
        %v2320 = vld [vmem:[#allocation6 + $0x78] sm:$0xff]
        %v2321 = vld [vmem:[#allocation6 + $0x80] sm:$0xff]
        %v2322 = vld [vmem:[#allocation6 + $0x88] sm:$0xff]
        %v2323 = vld [vmem:[#allocation6 + $0x90] sm:$0xff]
        %v2324 = vld [vmem:[#allocation6 + $0x98] sm:$0xff]
        %v2325 = vld [vmem:[#allocation6 + $0xa0] sm:$0xff]
        %v2326 = vld [vmem:[#allocation6 + $0xa8] sm:$0xff]
        %v2327 = vld [vmem:[#allocation6 + $0xb0] sm:$0xff]
        %v2328 = vld [vmem:[#allocation6 + $0xb8] sm:$0xff]
        %v2329 = vld [vmem:[#allocation6 + $0xc0] sm:$0xff]
        %v2330 = vld [vmem:[#allocation6 + $0xc8] sm:$0xff]
        %v2331 = vld [vmem:[#allocation6 + $0xd0] sm:$0xff]
        %v2332 = vld [vmem:[#allocation6 + $0xd8] sm:$0xff]
        %v2333 = vld [vmem:[#allocation6 + $0xe0] sm:$0xff]
        %v2334 = vld [vmem:[#allocation6 + $0xe8] sm:$0xff]
        %v2335 = vld [vmem:[#allocation6 + $0xf0] sm:$0xff]
        %v2336 = vld [vmem:[#allocation6 + $0xf8] sm:$0xff]
        %v2337 = vpack.c.bf16 %v2212, %v2209
        %v2338 = vpack.c.bf16 %v2213, %v2210
        %v2339 = vpack.c.bf16 %v2214, %v2211
        %v2340 = vpack.c.bf16 %v2218, %v2215
        %v2341 = vpack.c.bf16 %v2219, %v2216
        %v2342 = vpack.c.bf16 %v2220, %v2217
        %v2343 = vpack.c.bf16 %v2224, %v2221
        %v2344 = vpack.c.bf16 %v2225, %v2222
        %v2345 = vpack.c.bf16 %v2226, %v2223
        %v2346 = vpack.c.bf16 %v2230, %v2227
        %v2347 = vpack.c.bf16 %v2231, %v2228
        %v2348 = vpack.c.bf16 %v2232, %v2229
        %v2349 = vpack.c.bf16 %v2236, %v2233
        %v2350 = vpack.c.bf16 %v2237, %v2234
        %v2351 = vpack.c.bf16 %v2238, %v2235
        %v2352 = vpack.c.bf16 %v2242, %v2239
        %v2353 = vpack.c.bf16 %v2243, %v2240
        %v2354 = vpack.c.bf16 %v2244, %v2241
        %v2355 = vpack.c.bf16 %v2248, %v2245
        %v2356 = vpack.c.bf16 %v2249, %v2246
        %v2357 = vpack.c.bf16 %v2250, %v2247
        %v2358 = vpack.c.bf16 %v2254, %v2251
        %v2359 = vpack.c.bf16 %v2255, %v2252
        %v2360 = vpack.c.bf16 %v2256, %v2253
        %v2361 = vpack.c.bf16 %v2260, %v2257
        %v2362 = vpack.c.bf16 %v2261, %v2258
        %v2363 = vpack.c.bf16 %v2262, %v2259
        %v2364 = vpack.c.bf16 %v2266, %v2263
        %v2365 = vpack.c.bf16 %v2267, %v2264
        %v2366 = vpack.c.bf16 %v2268, %v2265
        %v2367 = vpack.c.bf16 %v2272, %v2269
        %v2368 = vpack.c.bf16 %v2273, %v2270
        %v2369 = vpack.c.bf16 %v2274, %v2271
        %v2370 = vpack.c.bf16 %v2278, %v2275
        %v2371 = vpack.c.bf16 %v2279, %v2276
        %v2372 = vpack.c.bf16 %v2280, %v2277
        %v2373 = vpack.c.bf16 %v2284, %v2281
        %v2374 = vpack.c.bf16 %v2285, %v2282
        %v2375 = vpack.c.bf16 %v2286, %v2283
        %v2376 = vpack.c.bf16 %v2290, %v2287
        %v2377 = vpack.c.bf16 %v2291, %v2288
        %v2378 = vpack.c.bf16 %v2292, %v2289
        %v2379 = vpack.c.bf16 %v2296, %v2293
        %v2380 = vpack.c.bf16 %v2297, %v2294
        %v2381 = vpack.c.bf16 %v2298, %v2295
        %v2382 = vpack.c.bf16 %v2302, %v2299
        %v2383 = vpack.c.bf16 %v2303, %v2300
        %v2384 = vpack.c.bf16 %v2304, %v2301
        %s2385 = scalar_lea.vmem [#allocation11], 384
        %v2386 = vld [vmem:[%s2385] sm:$0xf]
        %v2387 = vld [vmem:[%s2385 + $0x4] sm:$0xf]
        %v2388 = vld [vmem:[%s2385 + $0x8] sm:$0xf]
        %v2389 = vld [vmem:[%s2385 + $0xc] sm:$0xf]
        %v2390 = vld [vmem:[%s2385 + $0x10] sm:$0xf]
        %v2391 = vld [vmem:[%s2385 + $0x14] sm:$0xf]
        %v2392 = vld [vmem:[%s2385 + $0x18] sm:$0xf]
        %v2393 = vld [vmem:[%s2385 + $0x1c] sm:$0xf]
        %v2394 = vld [vmem:[%s2385 + $0x20] sm:$0xf]
        %v2395 = vld [vmem:[%s2385 + $0x24] sm:$0xf]
        %v2396 = vld [vmem:[%s2385 + $0x28] sm:$0xf]
        %v2397 = vld [vmem:[%s2385 + $0x2c] sm:$0xf]
        %v2398 = vld [vmem:[%s2385 + $0x30] sm:$0xf]
        %v2399 = vld [vmem:[%s2385 + $0x34] sm:$0xf]
        %v2400 = vld [vmem:[%s2385 + $0x38] sm:$0xf]
        %v2401 = vld [vmem:[%s2385 + $0x3c] sm:$0xf]
        %v2402 = vld [vmem:[%s2385 + $0x40] sm:$0xf]
        %v2403 = vld [vmem:[%s2385 + $0x44] sm:$0xf]
        %v2404 = vld [vmem:[%s2385 + $0x48] sm:$0xf]
        %v2405 = vld [vmem:[%s2385 + $0x4c] sm:$0xf]
        %v2406 = vld [vmem:[%s2385 + $0x50] sm:$0xf]
        %v2407 = vld [vmem:[%s2385 + $0x54] sm:$0xf]
        %v2408 = vld [vmem:[%s2385 + $0x58] sm:$0xf]
        %v2409 = vld [vmem:[%s2385 + $0x5c] sm:$0xf]
        %v2410 = vld [vmem:[%s2385 + $0x60] sm:$0xf]
        %v2411 = vld [vmem:[%s2385 + $0x64] sm:$0xf]
        %v2412 = vld [vmem:[%s2385 + $0x68] sm:$0xf]
        %v2413 = vld [vmem:[%s2385 + $0x6c] sm:$0xf]
        %v2414 = vld [vmem:[%s2385 + $0x70] sm:$0xf]
        %v2415 = vld [vmem:[%s2385 + $0x74] sm:$0xf]
        %v2416 = vld [vmem:[%s2385 + $0x78] sm:$0xf]
        %v2417 = vld [vmem:[%s2385 + $0x7c] sm:$0xf]
        %v2418 = vld [vmem:[%s2385 + $0x80] sm:$0xf]
        %v2419 = vld [vmem:[%s2385 + $0x84] sm:$0xf]
        %v2420 = vld [vmem:[%s2385 + $0x88] sm:$0xf]
        %v2421 = vld [vmem:[%s2385 + $0x8c] sm:$0xf]
        %v2422 = vld [vmem:[%s2385 + $0x90] sm:$0xf]
        %v2423 = vld [vmem:[%s2385 + $0x94] sm:$0xf]
        %v2424 = vld [vmem:[%s2385 + $0x98] sm:$0xf]
        %v2425 = vld [vmem:[%s2385 + $0x9c] sm:$0xf]
        %v2426 = vld [vmem:[%s2385 + $0xa0] sm:$0xf]
        %v2427 = vld [vmem:[%s2385 + $0xa4] sm:$0xf]
        %v2428 = vld [vmem:[%s2385 + $0xa8] sm:$0xf]
        %v2429 = vld [vmem:[%s2385 + $0xac] sm:$0xf]
        %v2430 = vld [vmem:[%s2385 + $0xb0] sm:$0xf]
        %v2431 = vld [vmem:[%s2385 + $0xb4] sm:$0xf]
        %v2432 = vld [vmem:[%s2385 + $0xb8] sm:$0xf]
        %v2433 = vld [vmem:[%s2385 + $0xbc] sm:$0xf]
        %v2482 = vunpack.c.l.b16 %v2386
        %v2483 = vunpack.c.l.b16 %v2387
        %v2484 = vunpack.c.l.b16 %v2388
        %v2485 = vunpack.c.l.b16 %v2389
        %v2486 = vunpack.c.l.b16 %v2390
        %v2487 = vunpack.c.l.b16 %v2391
        %v2488 = vunpack.c.l.b16 %v2392
        %v2489 = vunpack.c.l.b16 %v2393
        %v2490 = vunpack.c.l.b16 %v2394
        %v2491 = vunpack.c.l.b16 %v2395
        %v2492 = vunpack.c.l.b16 %v2396
        %v2493 = vunpack.c.l.b16 %v2397
        %v2494 = vunpack.c.l.b16 %v2398
        %v2495 = vunpack.c.l.b16 %v2399
        %v2496 = vunpack.c.l.b16 %v2400
        %v2497 = vunpack.c.l.b16 %v2401
        %v2498 = vunpack.c.l.b16 %v2402
        %v2499 = vunpack.c.l.b16 %v2403
        %v2500 = vunpack.c.l.b16 %v2404
        %v2501 = vunpack.c.l.b16 %v2405
        %v2502 = vunpack.c.l.b16 %v2406
        %v2503 = vunpack.c.l.b16 %v2407
        %v2504 = vunpack.c.l.b16 %v2408
        %v2505 = vunpack.c.l.b16 %v2409
        %v2506 = vunpack.c.l.b16 %v2410
        %v2507 = vunpack.c.l.b16 %v2411
        %v2508 = vunpack.c.l.b16 %v2412
        %v2509 = vunpack.c.l.b16 %v2413
        %v2510 = vunpack.c.l.b16 %v2414
        %v2511 = vunpack.c.l.b16 %v2415
        %v2512 = vunpack.c.l.b16 %v2416
        %v2513 = vunpack.c.l.b16 %v2417
        %v2514 = vunpack.c.l.b16 %v2418
        %v2515 = vunpack.c.l.b16 %v2419
        %v2516 = vunpack.c.l.b16 %v2420
        %v2517 = vunpack.c.l.b16 %v2421
        %v2518 = vunpack.c.l.b16 %v2422
        %v2519 = vunpack.c.l.b16 %v2423
        %v2520 = vunpack.c.l.b16 %v2424
        %v2521 = vunpack.c.l.b16 %v2425
        %v2522 = vunpack.c.l.b16 %v2426
        %v2523 = vunpack.c.l.b16 %v2427
        %v2524 = vunpack.c.l.b16 %v2428
        %v2525 = vunpack.c.l.b16 %v2429
        %v2526 = vunpack.c.l.b16 %v2430
        %v2527 = vunpack.c.l.b16 %v2431
        %v2528 = vunpack.c.l.b16 %v2432
        %v2529 = vunpack.c.l.b16 %v2433
        %v2530 = vpack.c.b16 %v2483, %v2482
        %v2531 = vpack.c.b16 %v2485, %v2484
        %v2532 = vpack.c.b16 %v2487, %v2486
        %v2533 = vpack.c.b16 %v2489, %v2488
        %v2534 = vpack.c.b16 %v2491, %v2490
        %v2535 = vpack.c.b16 %v2493, %v2492
        %v2536 = vpack.c.b16 %v2495, %v2494
        %v2537 = vpack.c.b16 %v2497, %v2496
        %v2538 = vpack.c.b16 %v2499, %v2498
        %v2539 = vpack.c.b16 %v2501, %v2500
        %v2540 = vpack.c.b16 %v2503, %v2502
        %v2541 = vpack.c.b16 %v2505, %v2504
        %v2542 = vpack.c.b16 %v2507, %v2506
        %v2543 = vpack.c.b16 %v2509, %v2508
        %v2544 = vpack.c.b16 %v2511, %v2510
        %v2545 = vpack.c.b16 %v2513, %v2512
        %v2546 = vpack.c.b16 %v2515, %v2514
        %v2547 = vpack.c.b16 %v2517, %v2516
        %v2548 = vpack.c.b16 %v2519, %v2518
        %v2549 = vpack.c.b16 %v2521, %v2520
        %v2550 = vpack.c.b16 %v2523, %v2522
        %v2551 = vpack.c.b16 %v2525, %v2524
        %v2552 = vpack.c.b16 %v2527, %v2526
        %v2553 = vpack.c.b16 %v2529, %v2528
        %2578 = vmatprep.subr.bf16.mxu0 0
        %2579 = vmatpush1.bf16.msra.mxu0 %v2530
        %2580 = vmatprep.subr.bf16.mxu0 0
        %2581 = vmatpush1.bf16.msra.mxu0 %v2531
        %2582 = vmatprep.subr.bf16.mxu0 0
        %2583 = vmatpush1.bf16.msra.mxu0 %v2532
        %2584 = vmatprep.subr.bf16.mxu0 0
        %2585 = vmatpush1.bf16.msra.mxu0 %v2533
        %2586 = vmatprep.subr.bf16.mxu0 0
        %2587 = vmatpush1.bf16.msra.mxu0 %v2534
        %2588 = vmatprep.subr.bf16.mxu0 0
        %2589 = vmatpush1.bf16.msra.mxu0 %v2535
        %2590 = vmatprep.subr.bf16.mxu0 0
        %2591 = vmatpush1.bf16.msra.mxu0 %v2536
        %2592 = vmatprep.subr.bf16.mxu0 0
        %2593 = vmatpush1.bf16.msra.mxu0 %v2537
        %2594 = vmatprep.subr.bf16.mxu0 0
        %2595 = vmatpush1.bf16.msra.mxu0 %v2538
        %2596 = vmatprep.subr.bf16.mxu0 0
        %2597 = vmatpush1.bf16.msra.mxu0 %v2539
        %2598 = vmatprep.subr.bf16.mxu0 0
        %2599 = vmatpush1.bf16.msra.mxu0 %v2540
        %2600 = vmatprep.subr.bf16.mxu0 0
        %2601 = vmatpush1.bf16.msra.mxu0 %v2541
        %2602 = vmatprep.subr.bf16.mxu0 0
        %2603 = vmatpush1.bf16.msra.mxu0 %v2542
        %2604 = vmatprep.subr.bf16.mxu0 0
        %2605 = vmatpush1.bf16.msra.mxu0 %v2543
        %2606 = vmatprep.subr.bf16.mxu0 0
        %2607 = vmatpush1.bf16.msra.mxu0 %v2544
        %2608 = vmatprep.subr.bf16.mxu0 0
        %2609 = vmatpush1.bf16.msra.mxu0 %v2545
        %2610 = vmatprep.mubr.bf16.mxu0 %v2338
        %2611 = vmatmul.mubr.bf16.gmra.mrb[0].mxu0 %v2337
        %v2612 = vpop.f32.mrb[0].mxu0
        %v2613 = vadd.f32 0.0, %v2612
        %v2614 = vpop.f32.mrb[0].mxu0
        %v2615 = vpop.f32.mrb[0].mxu0
        %v2616 = vadd.f32 0.0, %v2615
        %v2617 = vpop.f32.mrb[0].mxu0
        %2618 = vmatprep.mubr.bf16.mxu0 %v2341
        %2619 = vmatmul.mubr.bf16.gmra.mrb[0].mxu0 %v2340
        %v2620 = vpop.f32.mrb[0].mxu0
        %v2621 = vadd.f32 0.0, %v2620
        %v2622 = vpop.f32.mrb[0].mxu0
        %v2623 = vpop.f32.mrb[0].mxu0
        %v2624 = vadd.f32 0.0, %v2623
        %v2625 = vpop.f32.mrb[0].mxu0
        %2626 = vmatprep.mubr.bf16.mxu0 %v2344
        %2627 = vmatmul.mubr.bf16.gmra.mrb[0].mxu0 %v2343
        %v2628 = vpop.f32.mrb[0].mxu0
        %v2629 = vadd.f32 0.0, %v2628
        %v2630 = vpop.f32.mrb[0].mxu0
        %v2631 = vpop.f32.mrb[0].mxu0
        %v2632 = vadd.f32 0.0, %v2631
        %v2633 = vpop.f32.mrb[0].mxu0
        %2634 = vmatprep.mubr.bf16.mxu0 %v2347
        %2635 = vmatmul.mubr.bf16.gmra.mrb[0].mxu0 %v2346
        %v2636 = vpop.f32.mrb[0].mxu0
        %v2637 = vadd.f32 0.0, %v2636
        %v2638 = vpop.f32.mrb[0].mxu0
        %v2639 = vpop.f32.mrb[0].mxu0
        %v2640 = vadd.f32 0.0, %v2639
        %v2641 = vpop.f32.mrb[0].mxu0
        %2642 = vmatprep.mubr.bf16.mxu0 %v2350
        %2643 = vmatmul.mubr.bf16.gmra.mrb[0].mxu0 %v2349
        %v2644 = vpop.f32.mrb[0].mxu0
        %v2645 = vadd.f32 0.0, %v2644
        %v2646 = vpop.f32.mrb[0].mxu0
        %v2647 = vpop.f32.mrb[0].mxu0
        %v2648 = vadd.f32 0.0, %v2647
        %v2649 = vpop.f32.mrb[0].mxu0
        %2650 = vmatprep.mubr.bf16.mxu0 %v2353
        %2651 = vmatmul.mubr.bf16.gmra.mrb[0].mxu0 %v2352
        %v2652 = vpop.f32.mrb[0].mxu0
        %v2653 = vadd.f32 0.0, %v2652
        %v2654 = vpop.f32.mrb[0].mxu0
        %v2655 = vpop.f32.mrb[0].mxu0
        %v2656 = vadd.f32 0.0, %v2655
        %v2657 = vpop.f32.mrb[0].mxu0
        %2658 = vmatprep.mubr.bf16.mxu0 %v2356
        %2659 = vmatmul.mubr.bf16.gmra.mrb[0].mxu0 %v2355
        %v2660 = vpop.f32.mrb[0].mxu0
        %v2661 = vadd.f32 0.0, %v2660
        %v2662 = vpop.f32.mrb[0].mxu0
        %v2663 = vpop.f32.mrb[0].mxu0
        %v2664 = vadd.f32 0.0, %v2663
        %v2665 = vpop.f32.mrb[0].mxu0
        %2666 = vmatprep.mubr.bf16.mxu0 %v2359
        %2667 = vmatmul.mubr.bf16.gmra.mrb[0].mxu0 %v2358
        %v2668 = vpop.f32.mrb[0].mxu0
        %v2669 = vadd.f32 0.0, %v2668
        %v2670 = vpop.f32.mrb[0].mxu0
        %v2671 = vpop.f32.mrb[0].mxu0
        %v2672 = vadd.f32 0.0, %v2671
        %v2673 = vpop.f32.mrb[0].mxu0
        %2674 = vmatprep.mubr.bf16.mxu0 %v2362
        %2675 = vmatmul.mubr.bf16.gmra.mrb[0].mxu0 %v2361
        %v2676 = vpop.f32.mrb[0].mxu0
        %v2677 = vadd.f32 0.0, %v2676
        %v2678 = vpop.f32.mrb[0].mxu0
        %v2679 = vpop.f32.mrb[0].mxu0
        %v2680 = vadd.f32 0.0, %v2679
        %v2681 = vpop.f32.mrb[0].mxu0
        %2682 = vmatprep.mubr.bf16.mxu0 %v2365
        %2683 = vmatmul.mubr.bf16.gmra.mrb[0].mxu0 %v2364
        %v2684 = vpop.f32.mrb[0].mxu0
        %v2685 = vadd.f32 0.0, %v2684
        %v2686 = vpop.f32.mrb[0].mxu0
        %v2687 = vpop.f32.mrb[0].mxu0
        %v2688 = vadd.f32 0.0, %v2687
        %v2689 = vpop.f32.mrb[0].mxu0
        %2690 = vmatprep.mubr.bf16.mxu0 %v2368
        %2691 = vmatmul.mubr.bf16.gmra.mrb[0].mxu0 %v2367
        %v2692 = vpop.f32.mrb[0].mxu0
        %v2693 = vadd.f32 0.0, %v2692
        %v2694 = vpop.f32.mrb[0].mxu0
        %v2695 = vpop.f32.mrb[0].mxu0
        %v2696 = vadd.f32 0.0, %v2695
        %v2697 = vpop.f32.mrb[0].mxu0
        %2698 = vmatprep.mubr.bf16.mxu0 %v2371
        %2699 = vmatmul.mubr.bf16.gmra.mrb[0].mxu0 %v2370
        %v2700 = vpop.f32.mrb[0].mxu0
        %v2701 = vadd.f32 0.0, %v2700
        %v2702 = vpop.f32.mrb[0].mxu0
        %v2703 = vpop.f32.mrb[0].mxu0
        %v2704 = vadd.f32 0.0, %v2703
        %v2705 = vpop.f32.mrb[0].mxu0
        %2706 = vmatprep.mubr.bf16.mxu0 %v2374
        %2707 = vmatmul.mubr.bf16.gmra.mrb[0].mxu0 %v2373
        %v2708 = vpop.f32.mrb[0].mxu0
        %v2709 = vadd.f32 0.0, %v2708
        %v2710 = vpop.f32.mrb[0].mxu0
        %v2711 = vpop.f32.mrb[0].mxu0
        %v2712 = vadd.f32 0.0, %v2711
        %v2713 = vpop.f32.mrb[0].mxu0
        %2714 = vmatprep.mubr.bf16.mxu0 %v2377
        %2715 = vmatmul.mubr.bf16.gmra.mrb[0].mxu0 %v2376
        %v2716 = vpop.f32.mrb[0].mxu0
        %v2717 = vadd.f32 0.0, %v2716
        %v2718 = vpop.f32.mrb[0].mxu0
        %v2719 = vpop.f32.mrb[0].mxu0
        %v2720 = vadd.f32 0.0, %v2719
        %v2721 = vpop.f32.mrb[0].mxu0
        %2722 = vmatprep.mubr.bf16.mxu0 %v2380
        %2723 = vmatmul.mubr.bf16.gmra.mrb[0].mxu0 %v2379
        %v2724 = vpop.f32.mrb[0].mxu0
        %v2725 = vadd.f32 0.0, %v2724
        %v2726 = vpop.f32.mrb[0].mxu0
        %v2727 = vpop.f32.mrb[0].mxu0
        %v2728 = vadd.f32 0.0, %v2727
        %v2729 = vpop.f32.mrb[0].mxu0
        %2730 = vmatprep.mubr.bf16.mxu0 %v2383
        %2731 = vmatmul.mubr.bf16.gmra.mrb[0].mxu0 %v2382
        %v2732 = vpop.f32.mrb[0].mxu0
        %v2733 = vadd.f32 0.0, %v2732
        %v2734 = vpop.f32.mrb[0].mxu0
        %v2735 = vpop.f32.mrb[0].mxu0
        %v2736 = vadd.f32 0.0, %v2735
        %v2737 = vpop.f32.mrb[0].mxu0
        %2738 = vdwg.mxu0
        %2739 = vmatprep.subr.bf16.mxu0 0
        %2740 = vmatpush1.bf16.msra.mxu0 %v2546
        %2741 = vmatprep.subr.bf16.mxu0 0
        %2742 = vmatpush1.bf16.msra.mxu0 %v2547
        %2743 = vmatprep.subr.bf16.mxu0 0
        %2744 = vmatpush1.bf16.msra.mxu0 %v2548
        %2745 = vmatprep.subr.bf16.mxu0 0
        %2746 = vmatpush1.bf16.msra.mxu0 %v2549
        %2747 = vmatprep.subr.bf16.mxu0 0
        %2748 = vmatpush1.bf16.msra.mxu0 %v2550
        %2749 = vmatprep.subr.bf16.mxu0 0
        %2750 = vmatpush1.bf16.msra.mxu0 %v2551
        %2751 = vmatprep.subr.bf16.mxu0 0
        %2752 = vmatpush1.bf16.msra.mxu0 %v2552
        %2753 = vmatprep.subr.bf16.mxu0 0
        %2754 = vmatpush1.bf16.msra.mxu0 %v2553
        %2755 = vmatprep.subr.bf16.mxu0 0
        %2756 = vmatpush1.bf16.msra.mxu0 0
        %2757 = vmatprep.subr.bf16.mxu0 0
        %2758 = vmatpush1.bf16.msra.mxu0 0
        %2759 = vmatprep.subr.bf16.mxu0 0
        %2760 = vmatpush1.bf16.msra.mxu0 0
        %2761 = vmatprep.subr.bf16.mxu0 0
        %2762 = vmatpush1.bf16.msra.mxu0 0
        %2763 = vmatprep.subr.bf16.mxu0 0
        %2764 = vmatpush1.bf16.msra.mxu0 0
        %2765 = vmatprep.subr.bf16.mxu0 0
        %2766 = vmatpush1.bf16.msra.mxu0 0
        %2767 = vmatprep.subr.bf16.mxu0 0
        %2768 = vmatpush1.bf16.msra.mxu0 0
        %2769 = vmatprep.subr.bf16.mxu0 0
        %2770 = vmatpush1.bf16.msra.mxu0 0
        %2771 = vmatprep.mubr.bf16.mxu0 0
        %2772 = vmatmul.mubr.bf16.gmra.mrb[0].mxu0 %v2339
        %v2773 = vpop.f32.mrb[0].mxu0
        %v2774 = vadd.f32 %v2613, %v2773
        %v2775 = vpop.f32.mrb[0].mxu0
        %v2776 = vpop.f32.mrb[0].mxu0
        %v2777 = vadd.f32 %v2616, %v2776
        %v2778 = vpop.f32.mrb[0].mxu0
        %2779 = vmatprep.mubr.bf16.mxu0 0
        %2780 = vmatmul.mubr.bf16.gmra.mrb[0].mxu0 %v2342
        %v2781 = vpop.f32.mrb[0].mxu0
        %v2782 = vadd.f32 %v2621, %v2781
        %v2783 = vpop.f32.mrb[0].mxu0
        %v2784 = vpop.f32.mrb[0].mxu0
        %v2785 = vadd.f32 %v2624, %v2784
        %v2786 = vpop.f32.mrb[0].mxu0
        %2787 = vmatprep.mubr.bf16.mxu0 0
        %2788 = vmatmul.mubr.bf16.gmra.mrb[0].mxu0 %v2345
        %v2789 = vpop.f32.mrb[0].mxu0
        %v2790 = vadd.f32 %v2629, %v2789
        %v2791 = vpop.f32.mrb[0].mxu0
        %v2792 = vpop.f32.mrb[0].mxu0
        %v2793 = vadd.f32 %v2632, %v2792
        %v2794 = vpop.f32.mrb[0].mxu0
        %2795 = vmatprep.mubr.bf16.mxu0 0
        %2796 = vmatmul.mubr.bf16.gmra.mrb[0].mxu0 %v2348
        %v2797 = vpop.f32.mrb[0].mxu0
        %v2798 = vadd.f32 %v2637, %v2797
        %v2799 = vpop.f32.mrb[0].mxu0
        %v2800 = vpop.f32.mrb[0].mxu0
        %v2801 = vadd.f32 %v2640, %v2800
        %v2802 = vpop.f32.mrb[0].mxu0
        %2803 = vmatprep.mubr.bf16.mxu0 0
        %2804 = vmatmul.mubr.bf16.gmra.mrb[0].mxu0 %v2351
        %v2805 = vpop.f32.mrb[0].mxu0
        %v2806 = vadd.f32 %v2645, %v2805
        %v2807 = vpop.f32.mrb[0].mxu0
        %v2808 = vpop.f32.mrb[0].mxu0
        %v2809 = vadd.f32 %v2648, %v2808
        %v2810 = vpop.f32.mrb[0].mxu0
        %2811 = vmatprep.mubr.bf16.mxu0 0
        %2812 = vmatmul.mubr.bf16.gmra.mrb[0].mxu0 %v2354
        %v2813 = vpop.f32.mrb[0].mxu0
        %v2814 = vadd.f32 %v2653, %v2813
        %v2815 = vpop.f32.mrb[0].mxu0
        %v2816 = vpop.f32.mrb[0].mxu0
        %v2817 = vadd.f32 %v2656, %v2816
        %v2818 = vpop.f32.mrb[0].mxu0
        %2819 = vmatprep.mubr.bf16.mxu0 0
        %2820 = vmatmul.mubr.bf16.gmra.mrb[0].mxu0 %v2357
        %v2821 = vpop.f32.mrb[0].mxu0
        %v2822 = vadd.f32 %v2661, %v2821
        %v2823 = vpop.f32.mrb[0].mxu0
        %v2824 = vpop.f32.mrb[0].mxu0
        %v2825 = vadd.f32 %v2664, %v2824
        %v2826 = vpop.f32.mrb[0].mxu0
        %2827 = vmatprep.mubr.bf16.mxu0 0
        %2828 = vmatmul.mubr.bf16.gmra.mrb[0].mxu0 %v2360
        %v2829 = vpop.f32.mrb[0].mxu0
        %v2830 = vadd.f32 %v2669, %v2829
        %v2831 = vpop.f32.mrb[0].mxu0
        %v2832 = vpop.f32.mrb[0].mxu0
        %v2833 = vadd.f32 %v2672, %v2832
        %v2834 = vpop.f32.mrb[0].mxu0
        %2835 = vmatprep.mubr.bf16.mxu0 0
        %2836 = vmatmul.mubr.bf16.gmra.mrb[0].mxu0 %v2363
        %v2837 = vpop.f32.mrb[0].mxu0
        %v2838 = vadd.f32 %v2677, %v2837
        %v2839 = vpop.f32.mrb[0].mxu0
        %v2840 = vpop.f32.mrb[0].mxu0
        %v2841 = vadd.f32 %v2680, %v2840
        %v2842 = vpop.f32.mrb[0].mxu0
        %2843 = vmatprep.mubr.bf16.mxu0 0
        %2844 = vmatmul.mubr.bf16.gmra.mrb[0].mxu0 %v2366
        %v2845 = vpop.f32.mrb[0].mxu0
        %v2846 = vadd.f32 %v2685, %v2845
        %v2847 = vpop.f32.mrb[0].mxu0
        %v2848 = vpop.f32.mrb[0].mxu0
        %v2849 = vadd.f32 %v2688, %v2848
        %v2850 = vpop.f32.mrb[0].mxu0
        %2851 = vmatprep.mubr.bf16.mxu0 0
        %2852 = vmatmul.mubr.bf16.gmra.mrb[0].mxu0 %v2369
        %v2853 = vpop.f32.mrb[0].mxu0
        %v2854 = vadd.f32 %v2693, %v2853
        %v2855 = vpop.f32.mrb[0].mxu0
        %v2856 = vpop.f32.mrb[0].mxu0
        %v2857 = vadd.f32 %v2696, %v2856
        %v2858 = vpop.f32.mrb[0].mxu0
        %2859 = vmatprep.mubr.bf16.mxu0 0
        %2860 = vmatmul.mubr.bf16.gmra.mrb[0].mxu0 %v2372
        %v2861 = vpop.f32.mrb[0].mxu0
        %v2862 = vadd.f32 %v2701, %v2861
        %v2863 = vpop.f32.mrb[0].mxu0
        %v2864 = vpop.f32.mrb[0].mxu0
        %v2865 = vadd.f32 %v2704, %v2864
        %v2866 = vpop.f32.mrb[0].mxu0
        %2867 = vmatprep.mubr.bf16.mxu0 0
        %2868 = vmatmul.mubr.bf16.gmra.mrb[0].mxu0 %v2375
        %v2869 = vpop.f32.mrb[0].mxu0
        %v2870 = vadd.f32 %v2709, %v2869
        %v2871 = vpop.f32.mrb[0].mxu0
        %v2872 = vpop.f32.mrb[0].mxu0
        %v2873 = vadd.f32 %v2712, %v2872
        %v2874 = vpop.f32.mrb[0].mxu0
        %2875 = vmatprep.mubr.bf16.mxu0 0
        %2876 = vmatmul.mubr.bf16.gmra.mrb[0].mxu0 %v2378
        %v2877 = vpop.f32.mrb[0].mxu0
        %v2878 = vadd.f32 %v2717, %v2877
        %v2879 = vpop.f32.mrb[0].mxu0
        %v2880 = vpop.f32.mrb[0].mxu0
        %v2881 = vadd.f32 %v2720, %v2880
        %v2882 = vpop.f32.mrb[0].mxu0
        %2883 = vmatprep.mubr.bf16.mxu0 0
        %2884 = vmatmul.mubr.bf16.gmra.mrb[0].mxu0 %v2381
        %v2885 = vpop.f32.mrb[0].mxu0
        %v2886 = vadd.f32 %v2725, %v2885
        %v2887 = vpop.f32.mrb[0].mxu0
        %v2888 = vpop.f32.mrb[0].mxu0
        %v2889 = vadd.f32 %v2728, %v2888
        %v2890 = vpop.f32.mrb[0].mxu0
        %2891 = vmatprep.mubr.bf16.mxu0 0
        %2892 = vmatmul.mubr.bf16.gmra.mrb[0].mxu0 %v2384
        %v2893 = vpop.f32.mrb[0].mxu0
        %v2894 = vadd.f32 %v2733, %v2893
        %v2895 = vpop.f32.mrb[0].mxu0
        %v2896 = vpop.f32.mrb[0].mxu0
        %v2897 = vadd.f32 %v2736, %v2896
        %v2898 = vpop.f32.mrb[0].mxu0
        %2899 = vdwg.mxu0
        %v2900 = vadd.f32 %v2305, %v2774
        %v2901 = vadd.f32 %v2306, %v2777
        %v2902 = vadd.f32 %v2307, %v2782
        %v2903 = vadd.f32 %v2308, %v2785
        %v2904 = vadd.f32 %v2309, %v2790
        %v2905 = vadd.f32 %v2310, %v2793
        %v2906 = vadd.f32 %v2311, %v2798
        %v2907 = vadd.f32 %v2312, %v2801
        %v2908 = vadd.f32 %v2313, %v2806
        %v2909 = vadd.f32 %v2314, %v2809
        %v2910 = vadd.f32 %v2315, %v2814
        %v2911 = vadd.f32 %v2316, %v2817
        %v2912 = vadd.f32 %v2317, %v2822
        %v2913 = vadd.f32 %v2318, %v2825
        %v2914 = vadd.f32 %v2319, %v2830
        %v2915 = vadd.f32 %v2320, %v2833
        %v2916 = vadd.f32 %v2321, %v2838
        %v2917 = vadd.f32 %v2322, %v2841
        %v2918 = vadd.f32 %v2323, %v2846
        %v2919 = vadd.f32 %v2324, %v2849
        %v2920 = vadd.f32 %v2325, %v2854
        %v2921 = vadd.f32 %v2326, %v2857
        %v2922 = vadd.f32 %v2327, %v2862
        %v2923 = vadd.f32 %v2328, %v2865
        %v2924 = vadd.f32 %v2329, %v2870
        %v2925 = vadd.f32 %v2330, %v2873
        %v2926 = vadd.f32 %v2331, %v2878
        %v2927 = vadd.f32 %v2332, %v2881
        %v2928 = vadd.f32 %v2333, %v2886
        %v2929 = vadd.f32 %v2334, %v2889
        %v2930 = vadd.f32 %v2335, %v2894
        %v2931 = vadd.f32 %v2336, %v2897
        %2932 = vst [vmem:[#allocation6] sm:$0xff] %v2900
        %2933 = vst [vmem:[#allocation6 + $0x8] sm:$0xff] %v2901
        %2934 = vst [vmem:[#allocation6 + $0x10] sm:$0xff] %v2902
        %2935 = vst [vmem:[#allocation6 + $0x18] sm:$0xff] %v2903
        %2936 = vst [vmem:[#allocation6 + $0x20] sm:$0xff] %v2904
        %2937 = vst [vmem:[#allocation6 + $0x28] sm:$0xff] %v2905
        %2938 = vst [vmem:[#allocation6 + $0x30] sm:$0xff] %v2906
        %2939 = vst [vmem:[#allocation6 + $0x38] sm:$0xff] %v2907
        %2940 = vst [vmem:[#allocation6 + $0x40] sm:$0xff] %v2908
        %2941 = vst [vmem:[#allocation6 + $0x48] sm:$0xff] %v2909
        %2942 = vst [vmem:[#allocation6 + $0x50] sm:$0xff] %v2910
        %2943 = vst [vmem:[#allocation6 + $0x58] sm:$0xff] %v2911
        %2944 = vst [vmem:[#allocation6 + $0x60] sm:$0xff] %v2912
        %2945 = vst [vmem:[#allocation6 + $0x68] sm:$0xff] %v2913
        %2946 = vst [vmem:[#allocation6 + $0x70] sm:$0xff] %v2914
        %2947 = vst [vmem:[#allocation6 + $0x78] sm:$0xff] %v2915
        %2948 = vst [vmem:[#allocation6 + $0x80] sm:$0xff] %v2916
        %2949 = vst [vmem:[#allocation6 + $0x88] sm:$0xff] %v2917
        %2950 = vst [vmem:[#allocation6 + $0x90] sm:$0xff] %v2918
        %2951 = vst [vmem:[#allocation6 + $0x98] sm:$0xff] %v2919
        %2952 = vst [vmem:[#allocation6 + $0xa0] sm:$0xff] %v2920
        %2953 = vst [vmem:[#allocation6 + $0xa8] sm:$0xff] %v2921
        %2954 = vst [vmem:[#allocation6 + $0xb0] sm:$0xff] %v2922
        %2955 = vst [vmem:[#allocation6 + $0xb8] sm:$0xff] %v2923
        %2956 = vst [vmem:[#allocation6 + $0xc0] sm:$0xff] %v2924
        %2957 = vst [vmem:[#allocation6 + $0xc8] sm:$0xff] %v2925
        %2958 = vst [vmem:[#allocation6 + $0xd0] sm:$0xff] %v2926
        %2959 = vst [vmem:[#allocation6 + $0xd8] sm:$0xff] %v2927
        %2960 = vst [vmem:[#allocation6 + $0xe0] sm:$0xff] %v2928
        %2961 = vst [vmem:[#allocation6 + $0xe8] sm:$0xff] %v2929
        %2962 = vst [vmem:[#allocation6 + $0xf0] sm:$0xff] %v2930
        %2963 = vst [vmem:[#allocation6 + $0xf8] sm:$0xff] %v2931
        %v2964 = vld [vmem:[#allocation6] sm:$0xff]
        %v2965 = vld [vmem:[#allocation6 + $0x8] sm:$0xff]
        %v2966 = vld [vmem:[#allocation6 + $0x10] sm:$0xff]
        %v2967 = vld [vmem:[#allocation6 + $0x18] sm:$0xff]
        %v2968 = vld [vmem:[#allocation6 + $0x20] sm:$0xff]
        %v2969 = vld [vmem:[#allocation6 + $0x28] sm:$0xff]
        %v2970 = vld [vmem:[#allocation6 + $0x30] sm:$0xff]
        %v2971 = vld [vmem:[#allocation6 + $0x38] sm:$0xff]
        %v2972 = vld [vmem:[#allocation6 + $0x40] sm:$0xff]
        %v2973 = vld [vmem:[#allocation6 + $0x48] sm:$0xff]
        %v2974 = vld [vmem:[#allocation6 + $0x50] sm:$0xff]
        %v2975 = vld [vmem:[#allocation6 + $0x58] sm:$0xff]
        %v2976 = vld [vmem:[#allocation6 + $0x60] sm:$0xff]
        %v2977 = vld [vmem:[#allocation6 + $0x68] sm:$0xff]
        %v2978 = vld [vmem:[#allocation6 + $0x70] sm:$0xff]
        %v2979 = vld [vmem:[#allocation6 + $0x78] sm:$0xff]
        %v2980 = vld [vmem:[#allocation6 + $0x80] sm:$0xff]
        %v2981 = vld [vmem:[#allocation6 + $0x88] sm:$0xff]
        %v2982 = vld [vmem:[#allocation6 + $0x90] sm:$0xff]
        %v2983 = vld [vmem:[#allocation6 + $0x98] sm:$0xff]
        %v2984 = vld [vmem:[#allocation6 + $0xa0] sm:$0xff]
        %v2985 = vld [vmem:[#allocation6 + $0xa8] sm:$0xff]
        %v2986 = vld [vmem:[#allocation6 + $0xb0] sm:$0xff]
        %v2987 = vld [vmem:[#allocation6 + $0xb8] sm:$0xff]
        %v2988 = vld [vmem:[#allocation6 + $0xc0] sm:$0xff]
        %v2989 = vld [vmem:[#allocation6 + $0xc8] sm:$0xff]
        %v2990 = vld [vmem:[#allocation6 + $0xd0] sm:$0xff]
        %v2991 = vld [vmem:[#allocation6 + $0xd8] sm:$0xff]
        %v2992 = vld [vmem:[#allocation6 + $0xe0] sm:$0xff]
        %v2993 = vld [vmem:[#allocation6 + $0xe8] sm:$0xff]
        %v2994 = vld [vmem:[#allocation6 + $0xf0] sm:$0xff]
        %v2995 = vld [vmem:[#allocation6 + $0xf8] sm:$0xff]
        %v2996 = vld [vmem:[%s2] sm:$0x1]
        %v2998 = vlaneseq
        %v2999 = vshrl.u32 %v2998, 7
        %v3000 = vsub.s32 0, %v2999
        %v3001 = vrot.slane %v2996, %v3000
        %v3003 = vadd.f32 %v2964, %v3001
        %v3004 = vadd.f32 %v2965, %v3001
        %v3005 = vadd.f32 %v2966, %v3001
        %v3006 = vadd.f32 %v2967, %v3001
        %v3007 = vadd.f32 %v2968, %v3001
        %v3008 = vadd.f32 %v2969, %v3001
        %v3009 = vadd.f32 %v2970, %v3001
        %v3010 = vadd.f32 %v2971, %v3001
        %v3011 = vadd.f32 %v2972, %v3001
        %v3012 = vadd.f32 %v2973, %v3001
        %v3013 = vadd.f32 %v2974, %v3001
        %v3014 = vadd.f32 %v2975, %v3001
        %v3015 = vadd.f32 %v2976, %v3001
        %v3016 = vadd.f32 %v2977, %v3001
        %v3017 = vadd.f32 %v2978, %v3001
        %v3018 = vadd.f32 %v2979, %v3001
        %v3019 = vadd.f32 %v2980, %v3001
        %v3020 = vadd.f32 %v2981, %v3001
        %v3021 = vadd.f32 %v2982, %v3001
        %v3022 = vadd.f32 %v2983, %v3001
        %v3023 = vadd.f32 %v2984, %v3001
        %v3024 = vadd.f32 %v2985, %v3001
        %v3025 = vadd.f32 %v2986, %v3001
        %v3026 = vadd.f32 %v2987, %v3001
        %v3027 = vadd.f32 %v2988, %v3001
        %v3028 = vadd.f32 %v2989, %v3001
        %v3029 = vadd.f32 %v2990, %v3001
        %v3030 = vadd.f32 %v2991, %v3001
        %v3031 = vadd.f32 %v2992, %v3001
        %v3032 = vadd.f32 %v2993, %v3001
        %v3033 = vadd.f32 %v2994, %v3001
        %v3034 = vadd.f32 %v2995, %v3001
        %v3035 = vmax.f32 %v3003, 0.0
        %v3036 = vmax.f32 %v3004, 0.0
        %v3037 = vmax.f32 %v3005, 0.0
        %v3038 = vmax.f32 %v3006, 0.0
        %v3039 = vmax.f32 %v3007, 0.0
        %v3040 = vmax.f32 %v3008, 0.0
        %v3041 = vmax.f32 %v3009, 0.0
        %v3042 = vmax.f32 %v3010, 0.0
        %v3043 = vmax.f32 %v3011, 0.0
        %v3044 = vmax.f32 %v3012, 0.0
        %v3045 = vmax.f32 %v3013, 0.0
        %v3046 = vmax.f32 %v3014, 0.0
        %v3047 = vmax.f32 %v3015, 0.0
        %v3048 = vmax.f32 %v3016, 0.0
        %v3049 = vmax.f32 %v3017, 0.0
        %v3050 = vmax.f32 %v3018, 0.0
        %v3051 = vmax.f32 %v3019, 0.0
        %v3052 = vmax.f32 %v3020, 0.0
        %v3053 = vmax.f32 %v3021, 0.0
        %v3054 = vmax.f32 %v3022, 0.0
        %v3055 = vmax.f32 %v3023, 0.0
        %v3056 = vmax.f32 %v3024, 0.0
        %v3057 = vmax.f32 %v3025, 0.0
        %v3058 = vmax.f32 %v3026, 0.0
        %v3059 = vmax.f32 %v3027, 0.0
        %v3060 = vmax.f32 %v3028, 0.0
        %v3061 = vmax.f32 %v3029, 0.0
        %v3062 = vmax.f32 %v3030, 0.0
        %v3063 = vmax.f32 %v3031, 0.0
        %v3064 = vmax.f32 %v3032, 0.0
        %v3065 = vmax.f32 %v3033, 0.0
        %v3066 = vmax.f32 %v3034, 0.0
        %3067 = vst [vmem:[#allocation4] sm:$0xff] 0.0
        %3068 = vst [vmem:[#allocation4 + $0x8] sm:$0xff] 0.0
        %3069 = vst [vmem:[#allocation4 + $0x10] sm:$0x3] 0.0
        %s3070 = scalar_lea.vmem [#allocation4], 408
        %3071 = vst [vmem:[%s3070] sm:$0xff] 0.0
        %3072 = vst [vmem:[%s3070 + $0x8] sm:$0xff] 0.0
        %3073 = vst [vmem:[%s3070 + $0x10] sm:$0x3] 0.0
        %3074 = vst [vmem:[#allocation4] sm:$0x1] 0.0
        %3075 = vst [vmem:[#allocation4 + $0x18] sm:$0x1] 0.0
        %3076 = vst [vmem:[#allocation4 + $0x30] sm:$0x1] 0.0
        %3077 = vst [vmem:[#allocation4 + $0x48] sm:$0x1] 0.0
        %3078 = vst [vmem:[#allocation4 + $0x60] sm:$0x1] 0.0
        %3079 = vst [vmem:[#allocation4 + $0x78] sm:$0x1] 0.0
        %3080 = vst [vmem:[#allocation4 + $0x90] sm:$0x1] 0.0
        %3081 = vst [vmem:[#allocation4 + $0xa8] sm:$0x1] 0.0
        %3082 = vst [vmem:[#allocation4 + $0xc0] sm:$0x1] 0.0
        %3083 = vst [vmem:[#allocation4 + $0xd8] sm:$0x1] 0.0
        %3084 = vst [vmem:[#allocation4 + $0xf0] sm:$0x1] 0.0
        %3085 = vst [vmem:[#allocation4 + $0x108] sm:$0x1] 0.0
        %3086 = vst [vmem:[#allocation4 + $0x120] sm:$0x1] 0.0
        %3087 = vst [vmem:[#allocation4 + $0x138] sm:$0x1] 0.0
        %3088 = vst [vmem:[#allocation4 + $0x150] sm:$0x1] 0.0
        %3089 = vst [vmem:[#allocation4 + $0x168] sm:$0x1] 0.0
        %3090 = vst [vmem:[#allocation4 + $0x180] sm:$0x1] 0.0
        %3091 = vst [vmem:[#allocation4 + $0x198] sm:$0x1] 0.0
        %3092 = vst [vmem:[#allocation4 + $0x11] sm:$0x1] 0.0
        %3093 = vst [vmem:[#allocation4 + $0x29] sm:$0x1] 0.0
        %3094 = vst [vmem:[#allocation4 + $0x41] sm:$0x1] 0.0
        %3095 = vst [vmem:[#allocation4 + $0x59] sm:$0x1] 0.0
        %3096 = vst [vmem:[#allocation4 + $0x71] sm:$0x1] 0.0
        %3097 = vst [vmem:[#allocation4 + $0x89] sm:$0x1] 0.0
        %3098 = vst [vmem:[#allocation4 + $0xa1] sm:$0x1] 0.0
        %3099 = vst [vmem:[#allocation4 + $0xb9] sm:$0x1] 0.0
        %3100 = vst [vmem:[#allocation4 + $0xd1] sm:$0x1] 0.0
        %3101 = vst [vmem:[#allocation4 + $0xe9] sm:$0x1] 0.0
        %3102 = vst [vmem:[#allocation4 + $0x101] sm:$0x1] 0.0
        %3103 = vst [vmem:[#allocation4 + $0x119] sm:$0x1] 0.0
        %3104 = vst [vmem:[#allocation4 + $0x131] sm:$0x1] 0.0
        %3105 = vst [vmem:[#allocation4 + $0x149] sm:$0x1] 0.0
        %3106 = vst [vmem:[#allocation4 + $0x161] sm:$0x1] 0.0
        %3107 = vst [vmem:[#allocation4 + $0x179] sm:$0x1] 0.0
        %3108 = vst [vmem:[#allocation4 + $0x191] sm:$0x1] 0.0
        %3109 = vst [vmem:[#allocation4 + $0x1a9] sm:$0x1] 0.0
        %s3110 = scalar_lea.vmem [#allocation4], 24
        %3111 = vst [vmem:[%s3110 + $0x1] sm:$0xff] %v3035
        %3112 = vst [vmem:[%s3110 + $0x9] sm:$0xff] %v3036
        %3113 = vst [vmem:[%s3110 + $0x19] sm:$0xff] %v3037
        %3114 = vst [vmem:[%s3110 + $0x21] sm:$0xff] %v3038
        %3115 = vst [vmem:[%s3110 + $0x31] sm:$0xff] %v3039
        %3116 = vst [vmem:[%s3110 + $0x39] sm:$0xff] %v3040
        %3117 = vst [vmem:[%s3110 + $0x49] sm:$0xff] %v3041
        %3118 = vst [vmem:[%s3110 + $0x51] sm:$0xff] %v3042
        %3119 = vst [vmem:[%s3110 + $0x61] sm:$0xff] %v3043
        %3120 = vst [vmem:[%s3110 + $0x69] sm:$0xff] %v3044
        %3121 = vst [vmem:[%s3110 + $0x79] sm:$0xff] %v3045
        %3122 = vst [vmem:[%s3110 + $0x81] sm:$0xff] %v3046
        %3123 = vst [vmem:[%s3110 + $0x91] sm:$0xff] %v3047
        %3124 = vst [vmem:[%s3110 + $0x99] sm:$0xff] %v3048
        %3125 = vst [vmem:[%s3110 + $0xa9] sm:$0xff] %v3049
        %3126 = vst [vmem:[%s3110 + $0xb1] sm:$0xff] %v3050
        %3127 = vst [vmem:[%s3110 + $0xc1] sm:$0xff] %v3051
        %3128 = vst [vmem:[%s3110 + $0xc9] sm:$0xff] %v3052
        %3129 = vst [vmem:[%s3110 + $0xd9] sm:$0xff] %v3053
        %3130 = vst [vmem:[%s3110 + $0xe1] sm:$0xff] %v3054
        %3131 = vst [vmem:[%s3110 + $0xf1] sm:$0xff] %v3055
        %3132 = vst [vmem:[%s3110 + $0xf9] sm:$0xff] %v3056
        %3133 = vst [vmem:[%s3110 + $0x109] sm:$0xff] %v3057
        %3134 = vst [vmem:[%s3110 + $0x111] sm:$0xff] %v3058
        %3135 = vst [vmem:[%s3110 + $0x121] sm:$0xff] %v3059
        %3136 = vst [vmem:[%s3110 + $0x129] sm:$0xff] %v3060
        %3137 = vst [vmem:[%s3110 + $0x139] sm:$0xff] %v3061
        %3138 = vst [vmem:[%s3110 + $0x141] sm:$0xff] %v3062
        %3139 = vst [vmem:[%s3110 + $0x151] sm:$0xff] %v3063
        %3140 = vst [vmem:[%s3110 + $0x159] sm:$0xff] %v3064
        %3141 = vst [vmem:[%s3110 + $0x169] sm:$0xff] %v3065
        %3142 = vst [vmem:[%s3110 + $0x171] sm:$0xff] %v3066
        %v3143 = vld [vmem:[#allocation4] sm:$0xff]
        %v3144 = vld [vmem:[#allocation4 + $0x8] sm:$0xff]
        %v3145 = vld [vmem:[#allocation4 + $0x18] sm:$0xff]
        %v3146 = vld [vmem:[#allocation4 + $0x20] sm:$0xff]
        %v3147 = vld [vmem:[#allocation4 + $0x30] sm:$0xff]
        %v3148 = vld [vmem:[#allocation4 + $0x38] sm:$0xff]
        %v3149 = vld [vmem:[#allocation4 + $0x48] sm:$0xff]
        %v3150 = vld [vmem:[#allocation4 + $0x50] sm:$0xff]
        %v3151 = vld [vmem:[#allocation4 + $0x60] sm:$0xff]
        %v3152 = vld [vmem:[#allocation4 + $0x68] sm:$0xff]
        %v3153 = vld [vmem:[#allocation4 + $0x78] sm:$0xff]
        %v3154 = vld [vmem:[#allocation4 + $0x80] sm:$0xff]
        %v3155 = vld [vmem:[#allocation4 + $0x90] sm:$0xff]
        %v3156 = vld [vmem:[#allocation4 + $0x98] sm:$0xff]
        %v3157 = vld [vmem:[#allocation4 + $0xa8] sm:$0xff]
        %v3158 = vld [vmem:[#allocation4 + $0xb0] sm:$0xff]
        %v3159 = vld [vmem:[#allocation4 + $0xc0] sm:$0xff]
        %v3160 = vld [vmem:[#allocation4 + $0xc8] sm:$0xff]
        %v3161 = vld [vmem:[#allocation4 + $0xd8] sm:$0xff]
        %v3162 = vld [vmem:[#allocation4 + $0xe0] sm:$0xff]
        %v3163 = vld [vmem:[#allocation4 + $0xf0] sm:$0xff]
        %v3164 = vld [vmem:[#allocation4 + $0xf8] sm:$0xff]
        %v3165 = vld [vmem:[#allocation4 + $0x108] sm:$0xff]
        %v3166 = vld [vmem:[#allocation4 + $0x110] sm:$0xff]
        %v3167 = vld [vmem:[#allocation4 + $0x120] sm:$0xff]
        %v3168 = vld [vmem:[#allocation4 + $0x128] sm:$0xff]
        %v3169 = vld [vmem:[#allocation4 + $0x138] sm:$0xff]
        %v3170 = vld [vmem:[#allocation4 + $0x140] sm:$0xff]
        %v3171 = vld [vmem:[#allocation4 + $0x150] sm:$0xff]
        %v3172 = vld [vmem:[#allocation4 + $0x158] sm:$0xff]
        %v3173 = vld [vmem:[#allocation4 + $0x168] sm:$0xff]
        %v3174 = vld [vmem:[#allocation4 + $0x170] sm:$0xff]
        %v3175 = vld [vmem:[#allocation4 + $0x180] sm:$0xff]
        %v3176 = vld [vmem:[#allocation4 + $0x188] sm:$0xff]
        %v3177 = vld [vmem:[#allocation4 + $0x198] sm:$0xff]
        %v3178 = vld [vmem:[#allocation4 + $0x1a0] sm:$0xff]
        %3179 = vst [vmem:[#allocation5] sm:$0xff] %v3143
        %3180 = vst [vmem:[#allocation5 + $0x18] sm:$0xff] %v3144
        %3181 = vst [vmem:[#allocation5 + $0x30] sm:$0xff] %v3145
        %3182 = vst [vmem:[#allocation5 + $0x48] sm:$0xff] %v3146
        %3183 = vst [vmem:[#allocation5 + $0x60] sm:$0xff] %v3147
        %3184 = vst [vmem:[#allocation5 + $0x78] sm:$0xff] %v3148
        %3185 = vst [vmem:[#allocation5 + $0x90] sm:$0xff] %v3149
        %3186 = vst [vmem:[#allocation5 + $0xa8] sm:$0xff] %v3150
        %3187 = vst [vmem:[#allocation5 + $0xc0] sm:$0xff] %v3151
        %3188 = vst [vmem:[#allocation5 + $0xd8] sm:$0xff] %v3152
        %3189 = vst [vmem:[#allocation5 + $0xf0] sm:$0xff] %v3153
        %3190 = vst [vmem:[#allocation5 + $0x108] sm:$0xff] %v3154
        %3191 = vst [vmem:[#allocation5 + $0x120] sm:$0xff] %v3155
        %3192 = vst [vmem:[#allocation5 + $0x138] sm:$0xff] %v3156
        %3193 = vst [vmem:[#allocation5 + $0x150] sm:$0xff] %v3157
        %3194 = vst [vmem:[#allocation5 + $0x168] sm:$0xff] %v3158
        %3195 = vst [vmem:[#allocation5 + $0x180] sm:$0xff] %v3159
        %3196 = vst [vmem:[#allocation5 + $0x198] sm:$0xff] %v3160
        %3197 = vst [vmem:[#allocation5 + $0x1b0] sm:$0xff] %v3161
        %3198 = vst [vmem:[#allocation5 + $0x1c8] sm:$0xff] %v3162
        %3199 = vst [vmem:[#allocation5 + $0x1e0] sm:$0xff] %v3163
        %3200 = vst [vmem:[#allocation5 + $0x1f8] sm:$0xff] %v3164
        %3201 = vst [vmem:[#allocation5 + $0x210] sm:$0xff] %v3165
        %3202 = vst [vmem:[#allocation5 + $0x228] sm:$0xff] %v3166
        %3203 = vst [vmem:[#allocation5 + $0x240] sm:$0xff] %v3167
        %3204 = vst [vmem:[#allocation5 + $0x258] sm:$0xff] %v3168
        %3205 = vst [vmem:[#allocation5 + $0x270] sm:$0xff] %v3169
        %3206 = vst [vmem:[#allocation5 + $0x288] sm:$0xff] %v3170
        %3207 = vst [vmem:[#allocation5 + $0x2a0] sm:$0xff] %v3171
        %3208 = vst [vmem:[#allocation5 + $0x2b8] sm:$0xff] %v3172
        %3209 = vst [vmem:[#allocation5 + $0x2d0] sm:$0xff] %v3173
        %3210 = vst [vmem:[#allocation5 + $0x2e8] sm:$0xff] %v3174
        %3211 = vst [vmem:[#allocation5 + $0x300] sm:$0xff] %v3175
        %3212 = vst [vmem:[#allocation5 + $0x318] sm:$0xff] %v3176
        %3213 = vst [vmem:[#allocation5 + $0x330] sm:$0xff] %v3177
        %3214 = vst [vmem:[#allocation5 + $0x348] sm:$0xff] %v3178
        %v3215 = vld [vmem:[#allocation4 + $0x1] sm:$0xff]
        %v3216 = vld [vmem:[#allocation4 + $0x9] sm:$0xff]
        %v3217 = vld [vmem:[#allocation4 + $0x19] sm:$0xff]
        %v3218 = vld [vmem:[#allocation4 + $0x21] sm:$0xff]
        %v3219 = vld [vmem:[#allocation4 + $0x31] sm:$0xff]
        %v3220 = vld [vmem:[#allocation4 + $0x39] sm:$0xff]
        %v3221 = vld [vmem:[#allocation4 + $0x49] sm:$0xff]
        %v3222 = vld [vmem:[#allocation4 + $0x51] sm:$0xff]
        %v3223 = vld [vmem:[#allocation4 + $0x61] sm:$0xff]
        %v3224 = vld [vmem:[#allocation4 + $0x69] sm:$0xff]
        %v3225 = vld [vmem:[#allocation4 + $0x79] sm:$0xff]
        %v3226 = vld [vmem:[#allocation4 + $0x81] sm:$0xff]
        %v3227 = vld [vmem:[#allocation4 + $0x91] sm:$0xff]
        %v3228 = vld [vmem:[#allocation4 + $0x99] sm:$0xff]
        %v3229 = vld [vmem:[#allocation4 + $0xa9] sm:$0xff]
        %v3230 = vld [vmem:[#allocation4 + $0xb1] sm:$0xff]
        %v3231 = vld [vmem:[#allocation4 + $0xc1] sm:$0xff]
        %v3232 = vld [vmem:[#allocation4 + $0xc9] sm:$0xff]
        %v3233 = vld [vmem:[#allocation4 + $0xd9] sm:$0xff]
        %v3234 = vld [vmem:[#allocation4 + $0xe1] sm:$0xff]
        %v3235 = vld [vmem:[#allocation4 + $0xf1] sm:$0xff]
        %v3236 = vld [vmem:[#allocation4 + $0xf9] sm:$0xff]
        %v3237 = vld [vmem:[#allocation4 + $0x109] sm:$0xff]
        %v3238 = vld [vmem:[#allocation4 + $0x111] sm:$0xff]
        %v3239 = vld [vmem:[#allocation4 + $0x121] sm:$0xff]
        %v3240 = vld [vmem:[#allocation4 + $0x129] sm:$0xff]
        %v3241 = vld [vmem:[#allocation4 + $0x139] sm:$0xff]
        %v3242 = vld [vmem:[#allocation4 + $0x141] sm:$0xff]
        %v3243 = vld [vmem:[#allocation4 + $0x151] sm:$0xff]
        %v3244 = vld [vmem:[#allocation4 + $0x159] sm:$0xff]
        %v3245 = vld [vmem:[#allocation4 + $0x169] sm:$0xff]
        %v3246 = vld [vmem:[#allocation4 + $0x171] sm:$0xff]
        %v3247 = vld [vmem:[#allocation4 + $0x181] sm:$0xff]
        %v3248 = vld [vmem:[#allocation4 + $0x189] sm:$0xff]
        %v3249 = vld [vmem:[#allocation4 + $0x199] sm:$0xff]
        %v3250 = vld [vmem:[#allocation4 + $0x1a1] sm:$0xff]
        %3251 = vst [vmem:[#allocation5 + $0x8] sm:$0xff] %v3215
        %3252 = vst [vmem:[#allocation5 + $0x20] sm:$0xff] %v3216
        %3253 = vst [vmem:[#allocation5 + $0x38] sm:$0xff] %v3217
        %3254 = vst [vmem:[#allocation5 + $0x50] sm:$0xff] %v3218
        %3255 = vst [vmem:[#allocation5 + $0x68] sm:$0xff] %v3219
        %3256 = vst [vmem:[#allocation5 + $0x80] sm:$0xff] %v3220
        %3257 = vst [vmem:[#allocation5 + $0x98] sm:$0xff] %v3221
        %3258 = vst [vmem:[#allocation5 + $0xb0] sm:$0xff] %v3222
        %3259 = vst [vmem:[#allocation5 + $0xc8] sm:$0xff] %v3223
        %3260 = vst [vmem:[#allocation5 + $0xe0] sm:$0xff] %v3224
        %3261 = vst [vmem:[#allocation5 + $0xf8] sm:$0xff] %v3225
        %3262 = vst [vmem:[#allocation5 + $0x110] sm:$0xff] %v3226
        %3263 = vst [vmem:[#allocation5 + $0x128] sm:$0xff] %v3227
        %3264 = vst [vmem:[#allocation5 + $0x140] sm:$0xff] %v3228
        %3265 = vst [vmem:[#allocation5 + $0x158] sm:$0xff] %v3229
        %3266 = vst [vmem:[#allocation5 + $0x170] sm:$0xff] %v3230
        %3267 = vst [vmem:[#allocation5 + $0x188] sm:$0xff] %v3231
        %3268 = vst [vmem:[#allocation5 + $0x1a0] sm:$0xff] %v3232
        %3269 = vst [vmem:[#allocation5 + $0x1b8] sm:$0xff] %v3233
        %3270 = vst [vmem:[#allocation5 + $0x1d0] sm:$0xff] %v3234
        %3271 = vst [vmem:[#allocation5 + $0x1e8] sm:$0xff] %v3235
        %3272 = vst [vmem:[#allocation5 + $0x200] sm:$0xff] %v3236
        %3273 = vst [vmem:[#allocation5 + $0x218] sm:$0xff] %v3237
        %3274 = vst [vmem:[#allocation5 + $0x230] sm:$0xff] %v3238
        %3275 = vst [vmem:[#allocation5 + $0x248] sm:$0xff] %v3239
        %3276 = vst [vmem:[#allocation5 + $0x260] sm:$0xff] %v3240
        %3277 = vst [vmem:[#allocation5 + $0x278] sm:$0xff] %v3241
        %3278 = vst [vmem:[#allocation5 + $0x290] sm:$0xff] %v3242
        %3279 = vst [vmem:[#allocation5 + $0x2a8] sm:$0xff] %v3243
        %3280 = vst [vmem:[#allocation5 + $0x2c0] sm:$0xff] %v3244
        %3281 = vst [vmem:[#allocation5 + $0x2d8] sm:$0xff] %v3245
        %3282 = vst [vmem:[#allocation5 + $0x2f0] sm:$0xff] %v3246
        %3283 = vst [vmem:[#allocation5 + $0x308] sm:$0xff] %v3247
        %3284 = vst [vmem:[#allocation5 + $0x320] sm:$0xff] %v3248
        %3285 = vst [vmem:[#allocation5 + $0x338] sm:$0xff] %v3249
        %3286 = vst [vmem:[#allocation5 + $0x350] sm:$0xff] %v3250
        %v3287 = vld [vmem:[#allocation4 + $0x2] sm:$0xff]
        %v3288 = vld [vmem:[#allocation4 + $0xa] sm:$0xff]
        %v3289 = vld [vmem:[#allocation4 + $0x1a] sm:$0xff]
        %v3290 = vld [vmem:[#allocation4 + $0x22] sm:$0xff]
        %v3291 = vld [vmem:[#allocation4 + $0x32] sm:$0xff]
        %v3292 = vld [vmem:[#allocation4 + $0x3a] sm:$0xff]
        %v3293 = vld [vmem:[#allocation4 + $0x4a] sm:$0xff]
        %v3294 = vld [vmem:[#allocation4 + $0x52] sm:$0xff]
        %v3295 = vld [vmem:[#allocation4 + $0x62] sm:$0xff]
        %v3296 = vld [vmem:[#allocation4 + $0x6a] sm:$0xff]
        %v3297 = vld [vmem:[#allocation4 + $0x7a] sm:$0xff]
        %v3298 = vld [vmem:[#allocation4 + $0x82] sm:$0xff]
        %v3299 = vld [vmem:[#allocation4 + $0x92] sm:$0xff]
        %v3300 = vld [vmem:[#allocation4 + $0x9a] sm:$0xff]
        %v3301 = vld [vmem:[#allocation4 + $0xaa] sm:$0xff]
        %v3302 = vld [vmem:[#allocation4 + $0xb2] sm:$0xff]
        %v3303 = vld [vmem:[#allocation4 + $0xc2] sm:$0xff]
        %v3304 = vld [vmem:[#allocation4 + $0xca] sm:$0xff]
        %v3305 = vld [vmem:[#allocation4 + $0xda] sm:$0xff]
        %v3306 = vld [vmem:[#allocation4 + $0xe2] sm:$0xff]
        %v3307 = vld [vmem:[#allocation4 + $0xf2] sm:$0xff]
        %v3308 = vld [vmem:[#allocation4 + $0xfa] sm:$0xff]
        %v3309 = vld [vmem:[#allocation4 + $0x10a] sm:$0xff]
        %v3310 = vld [vmem:[#allocation4 + $0x112] sm:$0xff]
        %v3311 = vld [vmem:[#allocation4 + $0x122] sm:$0xff]
        %v3312 = vld [vmem:[#allocation4 + $0x12a] sm:$0xff]
        %v3313 = vld [vmem:[#allocation4 + $0x13a] sm:$0xff]
        %v3314 = vld [vmem:[#allocation4 + $0x142] sm:$0xff]
        %v3315 = vld [vmem:[#allocation4 + $0x152] sm:$0xff]
        %v3316 = vld [vmem:[#allocation4 + $0x15a] sm:$0xff]
        %v3317 = vld [vmem:[#allocation4 + $0x16a] sm:$0xff]
        %v3318 = vld [vmem:[#allocation4 + $0x172] sm:$0xff]
        %v3319 = vld [vmem:[#allocation4 + $0x182] sm:$0xff]
        %v3320 = vld [vmem:[#allocation4 + $0x18a] sm:$0xff]
        %v3321 = vld [vmem:[#allocation4 + $0x19a] sm:$0xff]
        %v3322 = vld [vmem:[#allocation4 + $0x1a2] sm:$0xff]
        %3323 = vst [vmem:[#allocation5 + $0x10] sm:$0xff] %v3287
        %3324 = vst [vmem:[#allocation5 + $0x28] sm:$0xff] %v3288
        %3325 = vst [vmem:[#allocation5 + $0x40] sm:$0xff] %v3289
        %3326 = vst [vmem:[#allocation5 + $0x58] sm:$0xff] %v3290
        %3327 = vst [vmem:[#allocation5 + $0x70] sm:$0xff] %v3291
        %3328 = vst [vmem:[#allocation5 + $0x88] sm:$0xff] %v3292
        %3329 = vst [vmem:[#allocation5 + $0xa0] sm:$0xff] %v3293
        %3330 = vst [vmem:[#allocation5 + $0xb8] sm:$0xff] %v3294
        %3331 = vst [vmem:[#allocation5 + $0xd0] sm:$0xff] %v3295
        %3332 = vst [vmem:[#allocation5 + $0xe8] sm:$0xff] %v3296
        %3333 = vst [vmem:[#allocation5 + $0x100] sm:$0xff] %v3297
        %3334 = vst [vmem:[#allocation5 + $0x118] sm:$0xff] %v3298
        %3335 = vst [vmem:[#allocation5 + $0x130] sm:$0xff] %v3299
        %3336 = vst [vmem:[#allocation5 + $0x148] sm:$0xff] %v3300
        %3337 = vst [vmem:[#allocation5 + $0x160] sm:$0xff] %v3301
        %3338 = vst [vmem:[#allocation5 + $0x178] sm:$0xff] %v3302
        %3339 = vst [vmem:[#allocation5 + $0x190] sm:$0xff] %v3303
        %3340 = vst [vmem:[#allocation5 + $0x1a8] sm:$0xff] %v3304
        %3341 = vst [vmem:[#allocation5 + $0x1c0] sm:$0xff] %v3305
        %3342 = vst [vmem:[#allocation5 + $0x1d8] sm:$0xff] %v3306
        %3343 = vst [vmem:[#allocation5 + $0x1f0] sm:$0xff] %v3307
        %3344 = vst [vmem:[#allocation5 + $0x208] sm:$0xff] %v3308
        %3345 = vst [vmem:[#allocation5 + $0x220] sm:$0xff] %v3309
        %3346 = vst [vmem:[#allocation5 + $0x238] sm:$0xff] %v3310
        %3347 = vst [vmem:[#allocation5 + $0x250] sm:$0xff] %v3311
        %3348 = vst [vmem:[#allocation5 + $0x268] sm:$0xff] %v3312
        %3349 = vst [vmem:[#allocation5 + $0x280] sm:$0xff] %v3313
        %3350 = vst [vmem:[#allocation5 + $0x298] sm:$0xff] %v3314
        %3351 = vst [vmem:[#allocation5 + $0x2b0] sm:$0xff] %v3315
        %3352 = vst [vmem:[#allocation5 + $0x2c8] sm:$0xff] %v3316
        %3353 = vst [vmem:[#allocation5 + $0x2e0] sm:$0xff] %v3317
        %3354 = vst [vmem:[#allocation5 + $0x2f8] sm:$0xff] %v3318
        %3355 = vst [vmem:[#allocation5 + $0x310] sm:$0xff] %v3319
        %3356 = vst [vmem:[#allocation5 + $0x328] sm:$0xff] %v3320
        %3357 = vst [vmem:[#allocation5 + $0x340] sm:$0xff] %v3321
        %3358 = vst [vmem:[#allocation5 + $0x358] sm:$0xff] %v3322
        %3359 = vst [vmem:[#allocation7] sm:$0xff] 0.0
        %3360 = vst [vmem:[#allocation7 + $0x8] sm:$0xff] 0.0
        %3361 = vst [vmem:[#allocation7 + $0x10] sm:$0xff] 0.0
        %3362 = vst [vmem:[#allocation7 + $0x18] sm:$0xff] 0.0
        %3363 = vst [vmem:[#allocation7 + $0x20] sm:$0xff] 0.0
        %3364 = vst [vmem:[#allocation7 + $0x28] sm:$0xff] 0.0
        %3365 = vst [vmem:[#allocation7 + $0x30] sm:$0xff] 0.0
        %3366 = vst [vmem:[#allocation7 + $0x38] sm:$0xff] 0.0
        %3367 = vst [vmem:[#allocation7 + $0x40] sm:$0xff] 0.0
        %3368 = vst [vmem:[#allocation7 + $0x48] sm:$0xff] 0.0
        %3369 = vst [vmem:[#allocation7 + $0x50] sm:$0xff] 0.0
        %3370 = vst [vmem:[#allocation7 + $0x58] sm:$0xff] 0.0
        %3371 = vst [vmem:[#allocation7 + $0x60] sm:$0xff] 0.0
        %3372 = vst [vmem:[#allocation7 + $0x68] sm:$0xff] 0.0
        %3373 = vst [vmem:[#allocation7 + $0x70] sm:$0xff] 0.0
        %3374 = vst [vmem:[#allocation7 + $0x78] sm:$0xff] 0.0
        %3375 = vst [vmem:[#allocation7 + $0x80] sm:$0xff] 0.0
        %3376 = vst [vmem:[#allocation7 + $0x88] sm:$0xff] 0.0
        %3377 = vst [vmem:[#allocation7 + $0x90] sm:$0xff] 0.0
        %3378 = vst [vmem:[#allocation7 + $0x98] sm:$0xff] 0.0
        %3379 = vst [vmem:[#allocation7 + $0xa0] sm:$0xff] 0.0
        %3380 = vst [vmem:[#allocation7 + $0xa8] sm:$0xff] 0.0
        %3381 = vst [vmem:[#allocation7 + $0xb0] sm:$0xff] 0.0
        %3382 = vst [vmem:[#allocation7 + $0xb8] sm:$0xff] 0.0
        %3383 = vst [vmem:[#allocation7 + $0xc0] sm:$0xff] 0.0
        %3384 = vst [vmem:[#allocation7 + $0xc8] sm:$0xff] 0.0
        %3385 = vst [vmem:[#allocation7 + $0xd0] sm:$0xff] 0.0
        %3386 = vst [vmem:[#allocation7 + $0xd8] sm:$0xff] 0.0
        %3387 = vst [vmem:[#allocation7 + $0xe0] sm:$0xff] 0.0
        %3388 = vst [vmem:[#allocation7 + $0xe8] sm:$0xff] 0.0
        %3389 = vst [vmem:[#allocation7 + $0xf0] sm:$0xff] 0.0
        %3390 = vst [vmem:[#allocation7 + $0xf8] sm:$0xff] 0.0
        %v3391 = vld [vmem:[#allocation5] sm:$0xff]
        %v3392 = vld [vmem:[#allocation5 + $0x8] sm:$0xff]
        %v3393 = vld [vmem:[#allocation5 + $0x10] sm:$0xff]
        %v3394 = vld [vmem:[#allocation5 + $0x18] sm:$0xff]
        %v3395 = vld [vmem:[#allocation5 + $0x20] sm:$0xff]
        %v3396 = vld [vmem:[#allocation5 + $0x28] sm:$0xff]
        %v3397 = vld [vmem:[#allocation5 + $0x30] sm:$0xff]
        %v3398 = vld [vmem:[#allocation5 + $0x38] sm:$0xff]
        %v3399 = vld [vmem:[#allocation5 + $0x40] sm:$0xff]
        %v3400 = vld [vmem:[#allocation5 + $0x48] sm:$0xff]
        %v3401 = vld [vmem:[#allocation5 + $0x50] sm:$0xff]
        %v3402 = vld [vmem:[#allocation5 + $0x58] sm:$0xff]
        %v3403 = vld [vmem:[#allocation5 + $0x60] sm:$0xff]
        %v3404 = vld [vmem:[#allocation5 + $0x68] sm:$0xff]
        %v3405 = vld [vmem:[#allocation5 + $0x70] sm:$0xff]
        %v3406 = vld [vmem:[#allocation5 + $0x78] sm:$0xff]
        %v3407 = vld [vmem:[#allocation5 + $0x80] sm:$0xff]
        %v3408 = vld [vmem:[#allocation5 + $0x88] sm:$0xff]
        %v3409 = vld [vmem:[#allocation5 + $0x90] sm:$0xff]
        %v3410 = vld [vmem:[#allocation5 + $0x98] sm:$0xff]
        %v3411 = vld [vmem:[#allocation5 + $0xa0] sm:$0xff]
        %v3412 = vld [vmem:[#allocation5 + $0xa8] sm:$0xff]
        %v3413 = vld [vmem:[#allocation5 + $0xb0] sm:$0xff]
        %v3414 = vld [vmem:[#allocation5 + $0xb8] sm:$0xff]
        %v3415 = vld [vmem:[#allocation5 + $0xc0] sm:$0xff]
        %v3416 = vld [vmem:[#allocation5 + $0xc8] sm:$0xff]
        %v3417 = vld [vmem:[#allocation5 + $0xd0] sm:$0xff]
        %v3418 = vld [vmem:[#allocation5 + $0xd8] sm:$0xff]
        %v3419 = vld [vmem:[#allocation5 + $0xe0] sm:$0xff]
        %v3420 = vld [vmem:[#allocation5 + $0xe8] sm:$0xff]
        %v3421 = vld [vmem:[#allocation5 + $0xf0] sm:$0xff]
        %v3422 = vld [vmem:[#allocation5 + $0xf8] sm:$0xff]
        %v3423 = vld [vmem:[#allocation5 + $0x100] sm:$0xff]
        %v3424 = vld [vmem:[#allocation5 + $0x108] sm:$0xff]
        %v3425 = vld [vmem:[#allocation5 + $0x110] sm:$0xff]
        %v3426 = vld [vmem:[#allocation5 + $0x118] sm:$0xff]
        %v3427 = vld [vmem:[#allocation5 + $0x120] sm:$0xff]
        %v3428 = vld [vmem:[#allocation5 + $0x128] sm:$0xff]
        %v3429 = vld [vmem:[#allocation5 + $0x130] sm:$0xff]
        %v3430 = vld [vmem:[#allocation5 + $0x138] sm:$0xff]
        %v3431 = vld [vmem:[#allocation5 + $0x140] sm:$0xff]
        %v3432 = vld [vmem:[#allocation5 + $0x148] sm:$0xff]
        %v3433 = vld [vmem:[#allocation5 + $0x150] sm:$0xff]
        %v3434 = vld [vmem:[#allocation5 + $0x158] sm:$0xff]
        %v3435 = vld [vmem:[#allocation5 + $0x160] sm:$0xff]
        %v3436 = vld [vmem:[#allocation5 + $0x168] sm:$0xff]
        %v3437 = vld [vmem:[#allocation5 + $0x170] sm:$0xff]
        %v3438 = vld [vmem:[#allocation5 + $0x178] sm:$0xff]
        %v3439 = vld [vmem:[#allocation5 + $0x180] sm:$0xff]
        %v3440 = vld [vmem:[#allocation5 + $0x188] sm:$0xff]
        %v3441 = vld [vmem:[#allocation5 + $0x190] sm:$0xff]
        %v3442 = vld [vmem:[#allocation5 + $0x198] sm:$0xff]
        %v3443 = vld [vmem:[#allocation5 + $0x1a0] sm:$0xff]
        %v3444 = vld [vmem:[#allocation5 + $0x1a8] sm:$0xff]
        %v3445 = vld [vmem:[#allocation5 + $0x1b0] sm:$0xff]
        %v3446 = vld [vmem:[#allocation5 + $0x1b8] sm:$0xff]
        %v3447 = vld [vmem:[#allocation5 + $0x1c0] sm:$0xff]
        %v3448 = vld [vmem:[#allocation5 + $0x1c8] sm:$0xff]
        %v3449 = vld [vmem:[#allocation5 + $0x1d0] sm:$0xff]
        %v3450 = vld [vmem:[#allocation5 + $0x1d8] sm:$0xff]
        %v3451 = vld [vmem:[#allocation5 + $0x1e0] sm:$0xff]
        %v3452 = vld [vmem:[#allocation5 + $0x1e8] sm:$0xff]
        %v3453 = vld [vmem:[#allocation5 + $0x1f0] sm:$0xff]
        %v3454 = vld [vmem:[#allocation5 + $0x1f8] sm:$0xff]
        %v3455 = vld [vmem:[#allocation5 + $0x200] sm:$0xff]
        %v3456 = vld [vmem:[#allocation5 + $0x208] sm:$0xff]
        %v3457 = vld [vmem:[#allocation5 + $0x210] sm:$0xff]
        %v3458 = vld [vmem:[#allocation5 + $0x218] sm:$0xff]
        %v3459 = vld [vmem:[#allocation5 + $0x220] sm:$0xff]
        %v3460 = vld [vmem:[#allocation5 + $0x228] sm:$0xff]
        %v3461 = vld [vmem:[#allocation5 + $0x230] sm:$0xff]
        %v3462 = vld [vmem:[#allocation5 + $0x238] sm:$0xff]
        %v3463 = vld [vmem:[#allocation5 + $0x240] sm:$0xff]
        %v3464 = vld [vmem:[#allocation5 + $0x248] sm:$0xff]
        %v3465 = vld [vmem:[#allocation5 + $0x250] sm:$0xff]
        %v3466 = vld [vmem:[#allocation5 + $0x258] sm:$0xff]
        %v3467 = vld [vmem:[#allocation5 + $0x260] sm:$0xff]
        %v3468 = vld [vmem:[#allocation5 + $0x268] sm:$0xff]
        %v3469 = vld [vmem:[#allocation5 + $0x270] sm:$0xff]
        %v3470 = vld [vmem:[#allocation5 + $0x278] sm:$0xff]
        %v3471 = vld [vmem:[#allocation5 + $0x280] sm:$0xff]
        %v3472 = vld [vmem:[#allocation5 + $0x288] sm:$0xff]
        %v3473 = vld [vmem:[#allocation5 + $0x290] sm:$0xff]
        %v3474 = vld [vmem:[#allocation5 + $0x298] sm:$0xff]
        %v3475 = vld [vmem:[#allocation5 + $0x2a0] sm:$0xff]
        %v3476 = vld [vmem:[#allocation5 + $0x2a8] sm:$0xff]
        %v3477 = vld [vmem:[#allocation5 + $0x2b0] sm:$0xff]
        %v3478 = vld [vmem:[#allocation5 + $0x2b8] sm:$0xff]
        %v3479 = vld [vmem:[#allocation5 + $0x2c0] sm:$0xff]
        %v3480 = vld [vmem:[#allocation5 + $0x2c8] sm:$0xff]
        %v3481 = vld [vmem:[#allocation5 + $0x2d0] sm:$0xff]
        %v3482 = vld [vmem:[#allocation5 + $0x2d8] sm:$0xff]
        %v3483 = vld [vmem:[#allocation5 + $0x2e0] sm:$0xff]
        %v3484 = vld [vmem:[#allocation5 + $0x2e8] sm:$0xff]
        %v3485 = vld [vmem:[#allocation5 + $0x2f0] sm:$0xff]
        %v3486 = vld [vmem:[#allocation5 + $0x2f8] sm:$0xff]
        %v3487 = vld [vmem:[#allocation7] sm:$0xff]
        %v3488 = vld [vmem:[#allocation7 + $0x8] sm:$0xff]
        %v3489 = vld [vmem:[#allocation7 + $0x10] sm:$0xff]
        %v3490 = vld [vmem:[#allocation7 + $0x18] sm:$0xff]
        %v3491 = vld [vmem:[#allocation7 + $0x20] sm:$0xff]
        %v3492 = vld [vmem:[#allocation7 + $0x28] sm:$0xff]
        %v3493 = vld [vmem:[#allocation7 + $0x30] sm:$0xff]
        %v3494 = vld [vmem:[#allocation7 + $0x38] sm:$0xff]
        %v3495 = vld [vmem:[#allocation7 + $0x40] sm:$0xff]
        %v3496 = vld [vmem:[#allocation7 + $0x48] sm:$0xff]
        %v3497 = vld [vmem:[#allocation7 + $0x50] sm:$0xff]
        %v3498 = vld [vmem:[#allocation7 + $0x58] sm:$0xff]
        %v3499 = vld [vmem:[#allocation7 + $0x60] sm:$0xff]
        %v3500 = vld [vmem:[#allocation7 + $0x68] sm:$0xff]
        %v3501 = vld [vmem:[#allocation7 + $0x70] sm:$0xff]
        %v3502 = vld [vmem:[#allocation7 + $0x78] sm:$0xff]
        %v3503 = vld [vmem:[#allocation7 + $0x80] sm:$0xff]
        %v3504 = vld [vmem:[#allocation7 + $0x88] sm:$0xff]
        %v3505 = vld [vmem:[#allocation7 + $0x90] sm:$0xff]
        %v3506 = vld [vmem:[#allocation7 + $0x98] sm:$0xff]
        %v3507 = vld [vmem:[#allocation7 + $0xa0] sm:$0xff]
        %v3508 = vld [vmem:[#allocation7 + $0xa8] sm:$0xff]
        %v3509 = vld [vmem:[#allocation7 + $0xb0] sm:$0xff]
        %v3510 = vld [vmem:[#allocation7 + $0xb8] sm:$0xff]
        %v3511 = vld [vmem:[#allocation7 + $0xc0] sm:$0xff]
        %v3512 = vld [vmem:[#allocation7 + $0xc8] sm:$0xff]
        %v3513 = vld [vmem:[#allocation7 + $0xd0] sm:$0xff]
        %v3514 = vld [vmem:[#allocation7 + $0xd8] sm:$0xff]
        %v3515 = vld [vmem:[#allocation7 + $0xe0] sm:$0xff]
        %v3516 = vld [vmem:[#allocation7 + $0xe8] sm:$0xff]
        %v3517 = vld [vmem:[#allocation7 + $0xf0] sm:$0xff]
        %v3518 = vld [vmem:[#allocation7 + $0xf8] sm:$0xff]
        %v3519 = vpack.c.bf16 %v3394, %v3391
        %v3520 = vpack.c.bf16 %v3395, %v3392
        %v3521 = vpack.c.bf16 %v3396, %v3393
        %v3522 = vpack.c.bf16 %v3400, %v3397
        %v3523 = vpack.c.bf16 %v3401, %v3398
        %v3524 = vpack.c.bf16 %v3402, %v3399
        %v3525 = vpack.c.bf16 %v3406, %v3403
        %v3526 = vpack.c.bf16 %v3407, %v3404
        %v3527 = vpack.c.bf16 %v3408, %v3405
        %v3528 = vpack.c.bf16 %v3412, %v3409
        %v3529 = vpack.c.bf16 %v3413, %v3410
        %v3530 = vpack.c.bf16 %v3414, %v3411
        %v3531 = vpack.c.bf16 %v3418, %v3415
        %v3532 = vpack.c.bf16 %v3419, %v3416
        %v3533 = vpack.c.bf16 %v3420, %v3417
        %v3534 = vpack.c.bf16 %v3424, %v3421
        %v3535 = vpack.c.bf16 %v3425, %v3422
        %v3536 = vpack.c.bf16 %v3426, %v3423
        %v3537 = vpack.c.bf16 %v3430, %v3427
        %v3538 = vpack.c.bf16 %v3431, %v3428
        %v3539 = vpack.c.bf16 %v3432, %v3429
        %v3540 = vpack.c.bf16 %v3436, %v3433
        %v3541 = vpack.c.bf16 %v3437, %v3434
        %v3542 = vpack.c.bf16 %v3438, %v3435
        %v3543 = vpack.c.bf16 %v3442, %v3439
        %v3544 = vpack.c.bf16 %v3443, %v3440
        %v3545 = vpack.c.bf16 %v3444, %v3441
        %v3546 = vpack.c.bf16 %v3448, %v3445
        %v3547 = vpack.c.bf16 %v3449, %v3446
        %v3548 = vpack.c.bf16 %v3450, %v3447
        %v3549 = vpack.c.bf16 %v3454, %v3451
        %v3550 = vpack.c.bf16 %v3455, %v3452
        %v3551 = vpack.c.bf16 %v3456, %v3453
        %v3552 = vpack.c.bf16 %v3460, %v3457
        %v3553 = vpack.c.bf16 %v3461, %v3458
        %v3554 = vpack.c.bf16 %v3462, %v3459
        %v3555 = vpack.c.bf16 %v3466, %v3463
        %v3556 = vpack.c.bf16 %v3467, %v3464
        %v3557 = vpack.c.bf16 %v3468, %v3465
        %v3558 = vpack.c.bf16 %v3472, %v3469
        %v3559 = vpack.c.bf16 %v3473, %v3470
        %v3560 = vpack.c.bf16 %v3474, %v3471
        %v3561 = vpack.c.bf16 %v3478, %v3475
        %v3562 = vpack.c.bf16 %v3479, %v3476
        %v3563 = vpack.c.bf16 %v3480, %v3477
        %v3564 = vpack.c.bf16 %v3484, %v3481
        %v3565 = vpack.c.bf16 %v3485, %v3482
        %v3566 = vpack.c.bf16 %v3486, %v3483
        %v3567 = vld [vmem:[#allocation13] sm:$0xf]
        %v3568 = vld [vmem:[#allocation13 + $0x4] sm:$0xf]
        %v3569 = vld [vmem:[#allocation13 + $0x8] sm:$0xf]
        %v3570 = vld [vmem:[#allocation13 + $0xc] sm:$0xf]
        %v3571 = vld [vmem:[#allocation13 + $0x10] sm:$0xf]
        %v3572 = vld [vmem:[#allocation13 + $0x14] sm:$0xf]
        %v3573 = vld [vmem:[#allocation13 + $0x18] sm:$0xf]
        %v3574 = vld [vmem:[#allocation13 + $0x1c] sm:$0xf]
        %v3575 = vld [vmem:[#allocation13 + $0x20] sm:$0xf]
        %v3576 = vld [vmem:[#allocation13 + $0x24] sm:$0xf]
        %v3577 = vld [vmem:[#allocation13 + $0x28] sm:$0xf]
        %v3578 = vld [vmem:[#allocation13 + $0x2c] sm:$0xf]
        %v3579 = vld [vmem:[#allocation13 + $0x30] sm:$0xf]
        %v3580 = vld [vmem:[#allocation13 + $0x34] sm:$0xf]
        %v3581 = vld [vmem:[#allocation13 + $0x38] sm:$0xf]
        %v3582 = vld [vmem:[#allocation13 + $0x3c] sm:$0xf]
        %v3583 = vld [vmem:[#allocation13 + $0x40] sm:$0xf]
        %v3584 = vld [vmem:[#allocation13 + $0x44] sm:$0xf]
        %v3585 = vld [vmem:[#allocation13 + $0x48] sm:$0xf]
        %v3586 = vld [vmem:[#allocation13 + $0x4c] sm:$0xf]
        %v3587 = vld [vmem:[#allocation13 + $0x50] sm:$0xf]
        %v3588 = vld [vmem:[#allocation13 + $0x54] sm:$0xf]
        %v3589 = vld [vmem:[#allocation13 + $0x58] sm:$0xf]
        %v3590 = vld [vmem:[#allocation13 + $0x5c] sm:$0xf]
        %v3591 = vld [vmem:[#allocation13 + $0x60] sm:$0xf]
        %v3592 = vld [vmem:[#allocation13 + $0x64] sm:$0xf]
        %v3593 = vld [vmem:[#allocation13 + $0x68] sm:$0xf]
        %v3594 = vld [vmem:[#allocation13 + $0x6c] sm:$0xf]
        %v3595 = vld [vmem:[#allocation13 + $0x70] sm:$0xf]
        %v3596 = vld [vmem:[#allocation13 + $0x74] sm:$0xf]
        %v3597 = vld [vmem:[#allocation13 + $0x78] sm:$0xf]
        %v3598 = vld [vmem:[#allocation13 + $0x7c] sm:$0xf]
        %v3599 = vld [vmem:[#allocation13 + $0x80] sm:$0xf]
        %v3600 = vld [vmem:[#allocation13 + $0x84] sm:$0xf]
        %v3601 = vld [vmem:[#allocation13 + $0x88] sm:$0xf]
        %v3602 = vld [vmem:[#allocation13 + $0x8c] sm:$0xf]
        %v3603 = vld [vmem:[#allocation13 + $0x90] sm:$0xf]
        %v3604 = vld [vmem:[#allocation13 + $0x94] sm:$0xf]
        %v3605 = vld [vmem:[#allocation13 + $0x98] sm:$0xf]
        %v3606 = vld [vmem:[#allocation13 + $0x9c] sm:$0xf]
        %v3607 = vld [vmem:[#allocation13 + $0xa0] sm:$0xf]
        %v3608 = vld [vmem:[#allocation13 + $0xa4] sm:$0xf]
        %v3609 = vld [vmem:[#allocation13 + $0xa8] sm:$0xf]
        %v3610 = vld [vmem:[#allocation13 + $0xac] sm:$0xf]
        %v3611 = vld [vmem:[#allocation13 + $0xb0] sm:$0xf]
        %v3612 = vld [vmem:[#allocation13 + $0xb4] sm:$0xf]
        %v3613 = vld [vmem:[#allocation13 + $0xb8] sm:$0xf]
        %v3614 = vld [vmem:[#allocation13 + $0xbc] sm:$0xf]
        %v3663 = vunpack.c.l.b16 %v3567
        %v3664 = vunpack.c.l.b16 %v3568
        %v3665 = vunpack.c.l.b16 %v3569
        %v3666 = vunpack.c.l.b16 %v3570
        %v3667 = vunpack.c.l.b16 %v3571
        %v3668 = vunpack.c.l.b16 %v3572
        %v3669 = vunpack.c.l.b16 %v3573
        %v3670 = vunpack.c.l.b16 %v3574
        %v3671 = vunpack.c.l.b16 %v3575
        %v3672 = vunpack.c.l.b16 %v3576
        %v3673 = vunpack.c.l.b16 %v3577
        %v3674 = vunpack.c.l.b16 %v3578
        %v3675 = vunpack.c.l.b16 %v3579
        %v3676 = vunpack.c.l.b16 %v3580
        %v3677 = vunpack.c.l.b16 %v3581
        %v3678 = vunpack.c.l.b16 %v3582
        %v3679 = vunpack.c.l.b16 %v3583
        %v3680 = vunpack.c.l.b16 %v3584
        %v3681 = vunpack.c.l.b16 %v3585
        %v3682 = vunpack.c.l.b16 %v3586
        %v3683 = vunpack.c.l.b16 %v3587
        %v3684 = vunpack.c.l.b16 %v3588
        %v3685 = vunpack.c.l.b16 %v3589
        %v3686 = vunpack.c.l.b16 %v3590
        %v3687 = vunpack.c.l.b16 %v3591
        %v3688 = vunpack.c.l.b16 %v3592
        %v3689 = vunpack.c.l.b16 %v3593
        %v3690 = vunpack.c.l.b16 %v3594
        %v3691 = vunpack.c.l.b16 %v3595
        %v3692 = vunpack.c.l.b16 %v3596
        %v3693 = vunpack.c.l.b16 %v3597
        %v3694 = vunpack.c.l.b16 %v3598
        %v3695 = vunpack.c.l.b16 %v3599
        %v3696 = vunpack.c.l.b16 %v3600
        %v3697 = vunpack.c.l.b16 %v3601
        %v3698 = vunpack.c.l.b16 %v3602
        %v3699 = vunpack.c.l.b16 %v3603
        %v3700 = vunpack.c.l.b16 %v3604
        %v3701 = vunpack.c.l.b16 %v3605
        %v3702 = vunpack.c.l.b16 %v3606
        %v3703 = vunpack.c.l.b16 %v3607
        %v3704 = vunpack.c.l.b16 %v3608
        %v3705 = vunpack.c.l.b16 %v3609
        %v3706 = vunpack.c.l.b16 %v3610
        %v3707 = vunpack.c.l.b16 %v3611
        %v3708 = vunpack.c.l.b16 %v3612
        %v3709 = vunpack.c.l.b16 %v3613
        %v3710 = vunpack.c.l.b16 %v3614
        %v3711 = vpack.c.b16 %v3664, %v3663
        %v3712 = vpack.c.b16 %v3666, %v3665
        %v3713 = vpack.c.b16 %v3668, %v3667
        %v3714 = vpack.c.b16 %v3670, %v3669
        %v3715 = vpack.c.b16 %v3672, %v3671
        %v3716 = vpack.c.b16 %v3674, %v3673
        %v3717 = vpack.c.b16 %v3676, %v3675
        %v3718 = vpack.c.b16 %v3678, %v3677
        %v3719 = vpack.c.b16 %v3680, %v3679
        %v3720 = vpack.c.b16 %v3682, %v3681
        %v3721 = vpack.c.b16 %v3684, %v3683
        %v3722 = vpack.c.b16 %v3686, %v3685
        %v3723 = vpack.c.b16 %v3688, %v3687
        %v3724 = vpack.c.b16 %v3690, %v3689
        %v3725 = vpack.c.b16 %v3692, %v3691
        %v3726 = vpack.c.b16 %v3694, %v3693
        %v3727 = vpack.c.b16 %v3696, %v3695
        %v3728 = vpack.c.b16 %v3698, %v3697
        %v3729 = vpack.c.b16 %v3700, %v3699
        %v3730 = vpack.c.b16 %v3702, %v3701
        %v3731 = vpack.c.b16 %v3704, %v3703
        %v3732 = vpack.c.b16 %v3706, %v3705
        %v3733 = vpack.c.b16 %v3708, %v3707
        %v3734 = vpack.c.b16 %v3710, %v3709
        %3759 = vmatprep.subr.bf16.mxu0 0
        %3760 = vmatpush1.bf16.msra.mxu0 %v3711
        %3761 = vmatprep.subr.bf16.mxu0 0
        %3762 = vmatpush1.bf16.msra.mxu0 %v3712
        %3763 = vmatprep.subr.bf16.mxu0 0
        %3764 = vmatpush1.bf16.msra.mxu0 %v3713
        %3765 = vmatprep.subr.bf16.mxu0 0
        %3766 = vmatpush1.bf16.msra.mxu0 %v3714
        %3767 = vmatprep.subr.bf16.mxu0 0
        %3768 = vmatpush1.bf16.msra.mxu0 %v3715
        %3769 = vmatprep.subr.bf16.mxu0 0
        %3770 = vmatpush1.bf16.msra.mxu0 %v3716
        %3771 = vmatprep.subr.bf16.mxu0 0
        %3772 = vmatpush1.bf16.msra.mxu0 %v3717
        %3773 = vmatprep.subr.bf16.mxu0 0
        %3774 = vmatpush1.bf16.msra.mxu0 %v3718
        %3775 = vmatprep.subr.bf16.mxu0 0
        %3776 = vmatpush1.bf16.msra.mxu0 %v3719
        %3777 = vmatprep.subr.bf16.mxu0 0
        %3778 = vmatpush1.bf16.msra.mxu0 %v3720
        %3779 = vmatprep.subr.bf16.mxu0 0
        %3780 = vmatpush1.bf16.msra.mxu0 %v3721
        %3781 = vmatprep.subr.bf16.mxu0 0
        %3782 = vmatpush1.bf16.msra.mxu0 %v3722
        %3783 = vmatprep.subr.bf16.mxu0 0
        %3784 = vmatpush1.bf16.msra.mxu0 %v3723
        %3785 = vmatprep.subr.bf16.mxu0 0
        %3786 = vmatpush1.bf16.msra.mxu0 %v3724
        %3787 = vmatprep.subr.bf16.mxu0 0
        %3788 = vmatpush1.bf16.msra.mxu0 %v3725
        %3789 = vmatprep.subr.bf16.mxu0 0
        %3790 = vmatpush1.bf16.msra.mxu0 %v3726
        %3791 = vmatprep.mubr.bf16.mxu0 %v3520
        %3792 = vmatmul.mubr.bf16.gmra.mrb[0].mxu0 %v3519
        %v3793 = vpop.f32.mrb[0].mxu0
        %v3794 = vadd.f32 0.0, %v3793
        %v3795 = vpop.f32.mrb[0].mxu0
        %v3796 = vpop.f32.mrb[0].mxu0
        %v3797 = vadd.f32 0.0, %v3796
        %v3798 = vpop.f32.mrb[0].mxu0
        %3799 = vmatprep.mubr.bf16.mxu0 %v3523
        %3800 = vmatmul.mubr.bf16.gmra.mrb[0].mxu0 %v3522
        %v3801 = vpop.f32.mrb[0].mxu0
        %v3802 = vadd.f32 0.0, %v3801
        %v3803 = vpop.f32.mrb[0].mxu0
        %v3804 = vpop.f32.mrb[0].mxu0
        %v3805 = vadd.f32 0.0, %v3804
        %v3806 = vpop.f32.mrb[0].mxu0
        %3807 = vmatprep.mubr.bf16.mxu0 %v3526
        %3808 = vmatmul.mubr.bf16.gmra.mrb[0].mxu0 %v3525
        %v3809 = vpop.f32.mrb[0].mxu0
        %v3810 = vadd.f32 0.0, %v3809
        %v3811 = vpop.f32.mrb[0].mxu0
        %v3812 = vpop.f32.mrb[0].mxu0
        %v3813 = vadd.f32 0.0, %v3812
        %v3814 = vpop.f32.mrb[0].mxu0
        %3815 = vmatprep.mubr.bf16.mxu0 %v3529
        %3816 = vmatmul.mubr.bf16.gmra.mrb[0].mxu0 %v3528
        %v3817 = vpop.f32.mrb[0].mxu0
        %v3818 = vadd.f32 0.0, %v3817
        %v3819 = vpop.f32.mrb[0].mxu0
        %v3820 = vpop.f32.mrb[0].mxu0
        %v3821 = vadd.f32 0.0, %v3820
        %v3822 = vpop.f32.mrb[0].mxu0
        %3823 = vmatprep.mubr.bf16.mxu0 %v3532
        %3824 = vmatmul.mubr.bf16.gmra.mrb[0].mxu0 %v3531
        %v3825 = vpop.f32.mrb[0].mxu0
        %v3826 = vadd.f32 0.0, %v3825
        %v3827 = vpop.f32.mrb[0].mxu0
        %v3828 = vpop.f32.mrb[0].mxu0
        %v3829 = vadd.f32 0.0, %v3828
        %v3830 = vpop.f32.mrb[0].mxu0
        %3831 = vmatprep.mubr.bf16.mxu0 %v3535
        %3832 = vmatmul.mubr.bf16.gmra.mrb[0].mxu0 %v3534
        %v3833 = vpop.f32.mrb[0].mxu0
        %v3834 = vadd.f32 0.0, %v3833
        %v3835 = vpop.f32.mrb[0].mxu0
        %v3836 = vpop.f32.mrb[0].mxu0
        %v3837 = vadd.f32 0.0, %v3836
        %v3838 = vpop.f32.mrb[0].mxu0
        %3839 = vmatprep.mubr.bf16.mxu0 %v3538
        %3840 = vmatmul.mubr.bf16.gmra.mrb[0].mxu0 %v3537
        %v3841 = vpop.f32.mrb[0].mxu0
        %v3842 = vadd.f32 0.0, %v3841
        %v3843 = vpop.f32.mrb[0].mxu0
        %v3844 = vpop.f32.mrb[0].mxu0
        %v3845 = vadd.f32 0.0, %v3844
        %v3846 = vpop.f32.mrb[0].mxu0
        %3847 = vmatprep.mubr.bf16.mxu0 %v3541
        %3848 = vmatmul.mubr.bf16.gmra.mrb[0].mxu0 %v3540
        %v3849 = vpop.f32.mrb[0].mxu0
        %v3850 = vadd.f32 0.0, %v3849
        %v3851 = vpop.f32.mrb[0].mxu0
        %v3852 = vpop.f32.mrb[0].mxu0
        %v3853 = vadd.f32 0.0, %v3852
        %v3854 = vpop.f32.mrb[0].mxu0
        %3855 = vmatprep.mubr.bf16.mxu0 %v3544
        %3856 = vmatmul.mubr.bf16.gmra.mrb[0].mxu0 %v3543
        %v3857 = vpop.f32.mrb[0].mxu0
        %v3858 = vadd.f32 0.0, %v3857
        %v3859 = vpop.f32.mrb[0].mxu0
        %v3860 = vpop.f32.mrb[0].mxu0
        %v3861 = vadd.f32 0.0, %v3860
        %v3862 = vpop.f32.mrb[0].mxu0
        %3863 = vmatprep.mubr.bf16.mxu0 %v3547
        %3864 = vmatmul.mubr.bf16.gmra.mrb[0].mxu0 %v3546
        %v3865 = vpop.f32.mrb[0].mxu0
        %v3866 = vadd.f32 0.0, %v3865
        %v3867 = vpop.f32.mrb[0].mxu0
        %v3868 = vpop.f32.mrb[0].mxu0
        %v3869 = vadd.f32 0.0, %v3868
        %v3870 = vpop.f32.mrb[0].mxu0
        %3871 = vmatprep.mubr.bf16.mxu0 %v3550
        %3872 = vmatmul.mubr.bf16.gmra.mrb[0].mxu0 %v3549
        %v3873 = vpop.f32.mrb[0].mxu0
        %v3874 = vadd.f32 0.0, %v3873
        %v3875 = vpop.f32.mrb[0].mxu0
        %v3876 = vpop.f32.mrb[0].mxu0
        %v3877 = vadd.f32 0.0, %v3876
        %v3878 = vpop.f32.mrb[0].mxu0
        %3879 = vmatprep.mubr.bf16.mxu0 %v3553
        %3880 = vmatmul.mubr.bf16.gmra.mrb[0].mxu0 %v3552
        %v3881 = vpop.f32.mrb[0].mxu0
        %v3882 = vadd.f32 0.0, %v3881
        %v3883 = vpop.f32.mrb[0].mxu0
        %v3884 = vpop.f32.mrb[0].mxu0
        %v3885 = vadd.f32 0.0, %v3884
        %v3886 = vpop.f32.mrb[0].mxu0
        %3887 = vmatprep.mubr.bf16.mxu0 %v3556
        %3888 = vmatmul.mubr.bf16.gmra.mrb[0].mxu0 %v3555
        %v3889 = vpop.f32.mrb[0].mxu0
        %v3890 = vadd.f32 0.0, %v3889
        %v3891 = vpop.f32.mrb[0].mxu0
        %v3892 = vpop.f32.mrb[0].mxu0
        %v3893 = vadd.f32 0.0, %v3892
        %v3894 = vpop.f32.mrb[0].mxu0
        %3895 = vmatprep.mubr.bf16.mxu0 %v3559
        %3896 = vmatmul.mubr.bf16.gmra.mrb[0].mxu0 %v3558
        %v3897 = vpop.f32.mrb[0].mxu0
        %v3898 = vadd.f32 0.0, %v3897
        %v3899 = vpop.f32.mrb[0].mxu0
        %v3900 = vpop.f32.mrb[0].mxu0
        %v3901 = vadd.f32 0.0, %v3900
        %v3902 = vpop.f32.mrb[0].mxu0
        %3903 = vmatprep.mubr.bf16.mxu0 %v3562
        %3904 = vmatmul.mubr.bf16.gmra.mrb[0].mxu0 %v3561
        %v3905 = vpop.f32.mrb[0].mxu0
        %v3906 = vadd.f32 0.0, %v3905
        %v3907 = vpop.f32.mrb[0].mxu0
        %v3908 = vpop.f32.mrb[0].mxu0
        %v3909 = vadd.f32 0.0, %v3908
        %v3910 = vpop.f32.mrb[0].mxu0
        %3911 = vmatprep.mubr.bf16.mxu0 %v3565
        %3912 = vmatmul.mubr.bf16.gmra.mrb[0].mxu0 %v3564
        %v3913 = vpop.f32.mrb[0].mxu0
        %v3914 = vadd.f32 0.0, %v3913
        %v3915 = vpop.f32.mrb[0].mxu0
        %v3916 = vpop.f32.mrb[0].mxu0
        %v3917 = vadd.f32 0.0, %v3916
        %v3918 = vpop.f32.mrb[0].mxu0
        %3919 = vdwg.mxu0
        %3920 = vmatprep.subr.bf16.mxu0 0
        %3921 = vmatpush1.bf16.msra.mxu0 %v3727
        %3922 = vmatprep.subr.bf16.mxu0 0
        %3923 = vmatpush1.bf16.msra.mxu0 %v3728
        %3924 = vmatprep.subr.bf16.mxu0 0
        %3925 = vmatpush1.bf16.msra.mxu0 %v3729
        %3926 = vmatprep.subr.bf16.mxu0 0
        %3927 = vmatpush1.bf16.msra.mxu0 %v3730
        %3928 = vmatprep.subr.bf16.mxu0 0
        %3929 = vmatpush1.bf16.msra.mxu0 %v3731
        %3930 = vmatprep.subr.bf16.mxu0 0
        %3931 = vmatpush1.bf16.msra.mxu0 %v3732
        %3932 = vmatprep.subr.bf16.mxu0 0
        %3933 = vmatpush1.bf16.msra.mxu0 %v3733
        %3934 = vmatprep.subr.bf16.mxu0 0
        %3935 = vmatpush1.bf16.msra.mxu0 %v3734
        %3936 = vmatprep.subr.bf16.mxu0 0
        %3937 = vmatpush1.bf16.msra.mxu0 0
        %3938 = vmatprep.subr.bf16.mxu0 0
        %3939 = vmatpush1.bf16.msra.mxu0 0
        %3940 = vmatprep.subr.bf16.mxu0 0
        %3941 = vmatpush1.bf16.msra.mxu0 0
        %3942 = vmatprep.subr.bf16.mxu0 0
        %3943 = vmatpush1.bf16.msra.mxu0 0
        %3944 = vmatprep.subr.bf16.mxu0 0
        %3945 = vmatpush1.bf16.msra.mxu0 0
        %3946 = vmatprep.subr.bf16.mxu0 0
        %3947 = vmatpush1.bf16.msra.mxu0 0
        %3948 = vmatprep.subr.bf16.mxu0 0
        %3949 = vmatpush1.bf16.msra.mxu0 0
        %3950 = vmatprep.subr.bf16.mxu0 0
        %3951 = vmatpush1.bf16.msra.mxu0 0
        %3952 = vmatprep.mubr.bf16.mxu0 0
        %3953 = vmatmul.mubr.bf16.gmra.mrb[0].mxu0 %v3521
        %v3954 = vpop.f32.mrb[0].mxu0
        %v3955 = vadd.f32 %v3794, %v3954
        %v3956 = vpop.f32.mrb[0].mxu0
        %v3957 = vpop.f32.mrb[0].mxu0
        %v3958 = vadd.f32 %v3797, %v3957
        %v3959 = vpop.f32.mrb[0].mxu0
        %3960 = vmatprep.mubr.bf16.mxu0 0
        %3961 = vmatmul.mubr.bf16.gmra.mrb[0].mxu0 %v3524
        %v3962 = vpop.f32.mrb[0].mxu0
        %v3963 = vadd.f32 %v3802, %v3962
        %v3964 = vpop.f32.mrb[0].mxu0
        %v3965 = vpop.f32.mrb[0].mxu0
        %v3966 = vadd.f32 %v3805, %v3965
        %v3967 = vpop.f32.mrb[0].mxu0
        %3968 = vmatprep.mubr.bf16.mxu0 0
        %3969 = vmatmul.mubr.bf16.gmra.mrb[0].mxu0 %v3527
        %v3970 = vpop.f32.mrb[0].mxu0
        %v3971 = vadd.f32 %v3810, %v3970
        %v3972 = vpop.f32.mrb[0].mxu0
        %v3973 = vpop.f32.mrb[0].mxu0
        %v3974 = vadd.f32 %v3813, %v3973
        %v3975 = vpop.f32.mrb[0].mxu0
        %3976 = vmatprep.mubr.bf16.mxu0 0
        %3977 = vmatmul.mubr.bf16.gmra.mrb[0].mxu0 %v3530
        %v3978 = vpop.f32.mrb[0].mxu0
        %v3979 = vadd.f32 %v3818, %v3978
        %v3980 = vpop.f32.mrb[0].mxu0
        %v3981 = vpop.f32.mrb[0].mxu0
        %v3982 = vadd.f32 %v3821, %v3981
        %v3983 = vpop.f32.mrb[0].mxu0
        %3984 = vmatprep.mubr.bf16.mxu0 0
        %3985 = vmatmul.mubr.bf16.gmra.mrb[0].mxu0 %v3533
        %v3986 = vpop.f32.mrb[0].mxu0
        %v3987 = vadd.f32 %v3826, %v3986
        %v3988 = vpop.f32.mrb[0].mxu0
        %v3989 = vpop.f32.mrb[0].mxu0
        %v3990 = vadd.f32 %v3829, %v3989
        %v3991 = vpop.f32.mrb[0].mxu0
        %3992 = vmatprep.mubr.bf16.mxu0 0
        %3993 = vmatmul.mubr.bf16.gmra.mrb[0].mxu0 %v3536
        %v3994 = vpop.f32.mrb[0].mxu0
        %v3995 = vadd.f32 %v3834, %v3994
        %v3996 = vpop.f32.mrb[0].mxu0
        %v3997 = vpop.f32.mrb[0].mxu0
        %v3998 = vadd.f32 %v3837, %v3997
        %v3999 = vpop.f32.mrb[0].mxu0
        %4000 = vmatprep.mubr.bf16.mxu0 0
        %4001 = vmatmul.mubr.bf16.gmra.mrb[0].mxu0 %v3539
        %v4002 = vpop.f32.mrb[0].mxu0
        %v4003 = vadd.f32 %v3842, %v4002
        %v4004 = vpop.f32.mrb[0].mxu0
        %v4005 = vpop.f32.mrb[0].mxu0
        %v4006 = vadd.f32 %v3845, %v4005
        %v4007 = vpop.f32.mrb[0].mxu0
        %4008 = vmatprep.mubr.bf16.mxu0 0
        %4009 = vmatmul.mubr.bf16.gmra.mrb[0].mxu0 %v3542
        %v4010 = vpop.f32.mrb[0].mxu0
        %v4011 = vadd.f32 %v3850, %v4010
        %v4012 = vpop.f32.mrb[0].mxu0
        %v4013 = vpop.f32.mrb[0].mxu0
        %v4014 = vadd.f32 %v3853, %v4013
        %v4015 = vpop.f32.mrb[0].mxu0
        %4016 = vmatprep.mubr.bf16.mxu0 0
        %4017 = vmatmul.mubr.bf16.gmra.mrb[0].mxu0 %v3545
        %v4018 = vpop.f32.mrb[0].mxu0
        %v4019 = vadd.f32 %v3858, %v4018
        %v4020 = vpop.f32.mrb[0].mxu0
        %v4021 = vpop.f32.mrb[0].mxu0
        %v4022 = vadd.f32 %v3861, %v4021
        %v4023 = vpop.f32.mrb[0].mxu0
        %4024 = vmatprep.mubr.bf16.mxu0 0
        %4025 = vmatmul.mubr.bf16.gmra.mrb[0].mxu0 %v3548
        %v4026 = vpop.f32.mrb[0].mxu0
        %v4027 = vadd.f32 %v3866, %v4026
        %v4028 = vpop.f32.mrb[0].mxu0
        %v4029 = vpop.f32.mrb[0].mxu0
        %v4030 = vadd.f32 %v3869, %v4029
        %v4031 = vpop.f32.mrb[0].mxu0
        %4032 = vmatprep.mubr.bf16.mxu0 0
        %4033 = vmatmul.mubr.bf16.gmra.mrb[0].mxu0 %v3551
        %v4034 = vpop.f32.mrb[0].mxu0
        %v4035 = vadd.f32 %v3874, %v4034
        %v4036 = vpop.f32.mrb[0].mxu0
        %v4037 = vpop.f32.mrb[0].mxu0
        %v4038 = vadd.f32 %v3877, %v4037
        %v4039 = vpop.f32.mrb[0].mxu0
        %4040 = vmatprep.mubr.bf16.mxu0 0
        %4041 = vmatmul.mubr.bf16.gmra.mrb[0].mxu0 %v3554
        %v4042 = vpop.f32.mrb[0].mxu0
        %v4043 = vadd.f32 %v3882, %v4042
        %v4044 = vpop.f32.mrb[0].mxu0
        %v4045 = vpop.f32.mrb[0].mxu0
        %v4046 = vadd.f32 %v3885, %v4045
        %v4047 = vpop.f32.mrb[0].mxu0
        %4048 = vmatprep.mubr.bf16.mxu0 0
        %4049 = vmatmul.mubr.bf16.gmra.mrb[0].mxu0 %v3557
        %v4050 = vpop.f32.mrb[0].mxu0
        %v4051 = vadd.f32 %v3890, %v4050
        %v4052 = vpop.f32.mrb[0].mxu0
        %v4053 = vpop.f32.mrb[0].mxu0
        %v4054 = vadd.f32 %v3893, %v4053
        %v4055 = vpop.f32.mrb[0].mxu0
        %4056 = vmatprep.mubr.bf16.mxu0 0
        %4057 = vmatmul.mubr.bf16.gmra.mrb[0].mxu0 %v3560
        %v4058 = vpop.f32.mrb[0].mxu0
        %v4059 = vadd.f32 %v3898, %v4058
        %v4060 = vpop.f32.mrb[0].mxu0
        %v4061 = vpop.f32.mrb[0].mxu0
        %v4062 = vadd.f32 %v3901, %v4061
        %v4063 = vpop.f32.mrb[0].mxu0
        %4064 = vmatprep.mubr.bf16.mxu0 0
        %4065 = vmatmul.mubr.bf16.gmra.mrb[0].mxu0 %v3563
        %v4066 = vpop.f32.mrb[0].mxu0
        %v4067 = vadd.f32 %v3906, %v4066
        %v4068 = vpop.f32.mrb[0].mxu0
        %v4069 = vpop.f32.mrb[0].mxu0
        %v4070 = vadd.f32 %v3909, %v4069
        %v4071 = vpop.f32.mrb[0].mxu0
        %4072 = vmatprep.mubr.bf16.mxu0 0
        %4073 = vmatmul.mubr.bf16.gmra.mrb[0].mxu0 %v3566
        %v4074 = vpop.f32.mrb[0].mxu0
        %v4075 = vadd.f32 %v3914, %v4074
        %v4076 = vpop.f32.mrb[0].mxu0
        %v4077 = vpop.f32.mrb[0].mxu0
        %v4078 = vadd.f32 %v3917, %v4077
        %v4079 = vpop.f32.mrb[0].mxu0
        %4080 = vdwg.mxu0
        %v4081 = vadd.f32 %v3487, %v3955
        %v4082 = vadd.f32 %v3488, %v3958
        %v4083 = vadd.f32 %v3489, %v3963
        %v4084 = vadd.f32 %v3490, %v3966
        %v4085 = vadd.f32 %v3491, %v3971
        %v4086 = vadd.f32 %v3492, %v3974
        %v4087 = vadd.f32 %v3493, %v3979
        %v4088 = vadd.f32 %v3494, %v3982
        %v4089 = vadd.f32 %v3495, %v3987
        %v4090 = vadd.f32 %v3496, %v3990
        %v4091 = vadd.f32 %v3497, %v3995
        %v4092 = vadd.f32 %v3498, %v3998
        %v4093 = vadd.f32 %v3499, %v4003
        %v4094 = vadd.f32 %v3500, %v4006
        %v4095 = vadd.f32 %v3501, %v4011
        %v4096 = vadd.f32 %v3502, %v4014
        %v4097 = vadd.f32 %v3503, %v4019
        %v4098 = vadd.f32 %v3504, %v4022
        %v4099 = vadd.f32 %v3505, %v4027
        %v4100 = vadd.f32 %v3506, %v4030
        %v4101 = vadd.f32 %v3507, %v4035
        %v4102 = vadd.f32 %v3508, %v4038
        %v4103 = vadd.f32 %v3509, %v4043
        %v4104 = vadd.f32 %v3510, %v4046
        %v4105 = vadd.f32 %v3511, %v4051
        %v4106 = vadd.f32 %v3512, %v4054
        %v4107 = vadd.f32 %v3513, %v4059
        %v4108 = vadd.f32 %v3514, %v4062
        %v4109 = vadd.f32 %v3515, %v4067
        %v4110 = vadd.f32 %v3516, %v4070
        %v4111 = vadd.f32 %v3517, %v4075
        %v4112 = vadd.f32 %v3518, %v4078
        %4113 = vst [vmem:[#allocation7] sm:$0xff] %v4081
        %4114 = vst [vmem:[#allocation7 + $0x8] sm:$0xff] %v4082
        %4115 = vst [vmem:[#allocation7 + $0x10] sm:$0xff] %v4083
        %4116 = vst [vmem:[#allocation7 + $0x18] sm:$0xff] %v4084
        %4117 = vst [vmem:[#allocation7 + $0x20] sm:$0xff] %v4085
        %4118 = vst [vmem:[#allocation7 + $0x28] sm:$0xff] %v4086
        %4119 = vst [vmem:[#allocation7 + $0x30] sm:$0xff] %v4087
        %4120 = vst [vmem:[#allocation7 + $0x38] sm:$0xff] %v4088
        %4121 = vst [vmem:[#allocation7 + $0x40] sm:$0xff] %v4089
        %4122 = vst [vmem:[#allocation7 + $0x48] sm:$0xff] %v4090
        %4123 = vst [vmem:[#allocation7 + $0x50] sm:$0xff] %v4091
        %4124 = vst [vmem:[#allocation7 + $0x58] sm:$0xff] %v4092
        %4125 = vst [vmem:[#allocation7 + $0x60] sm:$0xff] %v4093
        %4126 = vst [vmem:[#allocation7 + $0x68] sm:$0xff] %v4094
        %4127 = vst [vmem:[#allocation7 + $0x70] sm:$0xff] %v4095
        %4128 = vst [vmem:[#allocation7 + $0x78] sm:$0xff] %v4096
        %4129 = vst [vmem:[#allocation7 + $0x80] sm:$0xff] %v4097
        %4130 = vst [vmem:[#allocation7 + $0x88] sm:$0xff] %v4098
        %4131 = vst [vmem:[#allocation7 + $0x90] sm:$0xff] %v4099
        %4132 = vst [vmem:[#allocation7 + $0x98] sm:$0xff] %v4100
        %4133 = vst [vmem:[#allocation7 + $0xa0] sm:$0xff] %v4101
        %4134 = vst [vmem:[#allocation7 + $0xa8] sm:$0xff] %v4102
        %4135 = vst [vmem:[#allocation7 + $0xb0] sm:$0xff] %v4103
        %4136 = vst [vmem:[#allocation7 + $0xb8] sm:$0xff] %v4104
        %4137 = vst [vmem:[#allocation7 + $0xc0] sm:$0xff] %v4105
        %4138 = vst [vmem:[#allocation7 + $0xc8] sm:$0xff] %v4106
        %4139 = vst [vmem:[#allocation7 + $0xd0] sm:$0xff] %v4107
        %4140 = vst [vmem:[#allocation7 + $0xd8] sm:$0xff] %v4108
        %4141 = vst [vmem:[#allocation7 + $0xe0] sm:$0xff] %v4109
        %4142 = vst [vmem:[#allocation7 + $0xe8] sm:$0xff] %v4110
        %4143 = vst [vmem:[#allocation7 + $0xf0] sm:$0xff] %v4111
        %4144 = vst [vmem:[#allocation7 + $0xf8] sm:$0xff] %v4112
        %s4145 = scalar_lea.vmem [#allocation5], 48
        %v4146 = vld [vmem:[%s4145] sm:$0xff]
        %v4147 = vld [vmem:[%s4145 + $0x8] sm:$0xff]
        %v4148 = vld [vmem:[%s4145 + $0x10] sm:$0xff]
        %v4149 = vld [vmem:[%s4145 + $0x18] sm:$0xff]
        %v4150 = vld [vmem:[%s4145 + $0x20] sm:$0xff]
        %v4151 = vld [vmem:[%s4145 + $0x28] sm:$0xff]
        %v4152 = vld [vmem:[%s4145 + $0x30] sm:$0xff]
        %v4153 = vld [vmem:[%s4145 + $0x38] sm:$0xff]
        %v4154 = vld [vmem:[%s4145 + $0x40] sm:$0xff]
        %v4155 = vld [vmem:[%s4145 + $0x48] sm:$0xff]
        %v4156 = vld [vmem:[%s4145 + $0x50] sm:$0xff]
        %v4157 = vld [vmem:[%s4145 + $0x58] sm:$0xff]
        %v4158 = vld [vmem:[%s4145 + $0x60] sm:$0xff]
        %v4159 = vld [vmem:[%s4145 + $0x68] sm:$0xff]
        %v4160 = vld [vmem:[%s4145 + $0x70] sm:$0xff]
        %v4161 = vld [vmem:[%s4145 + $0x78] sm:$0xff]
        %v4162 = vld [vmem:[%s4145 + $0x80] sm:$0xff]
        %v4163 = vld [vmem:[%s4145 + $0x88] sm:$0xff]
        %v4164 = vld [vmem:[%s4145 + $0x90] sm:$0xff]
        %v4165 = vld [vmem:[%s4145 + $0x98] sm:$0xff]
        %v4166 = vld [vmem:[%s4145 + $0xa0] sm:$0xff]
        %v4167 = vld [vmem:[%s4145 + $0xa8] sm:$0xff]
        %v4168 = vld [vmem:[%s4145 + $0xb0] sm:$0xff]
        %v4169 = vld [vmem:[%s4145 + $0xb8] sm:$0xff]
        %v4170 = vld [vmem:[%s4145 + $0xc0] sm:$0xff]
        %v4171 = vld [vmem:[%s4145 + $0xc8] sm:$0xff]
        %v4172 = vld [vmem:[%s4145 + $0xd0] sm:$0xff]
        %v4173 = vld [vmem:[%s4145 + $0xd8] sm:$0xff]
        %v4174 = vld [vmem:[%s4145 + $0xe0] sm:$0xff]
        %v4175 = vld [vmem:[%s4145 + $0xe8] sm:$0xff]
        %v4176 = vld [vmem:[%s4145 + $0xf0] sm:$0xff]
        %v4177 = vld [vmem:[%s4145 + $0xf8] sm:$0xff]
        %v4178 = vld [vmem:[%s4145 + $0x100] sm:$0xff]
        %v4179 = vld [vmem:[%s4145 + $0x108] sm:$0xff]
        %v4180 = vld [vmem:[%s4145 + $0x110] sm:$0xff]
        %v4181 = vld [vmem:[%s4145 + $0x118] sm:$0xff]
        %v4182 = vld [vmem:[%s4145 + $0x120] sm:$0xff]
        %v4183 = vld [vmem:[%s4145 + $0x128] sm:$0xff]
        %v4184 = vld [vmem:[%s4145 + $0x130] sm:$0xff]
        %v4185 = vld [vmem:[%s4145 + $0x138] sm:$0xff]
        %v4186 = vld [vmem:[%s4145 + $0x140] sm:$0xff]
        %v4187 = vld [vmem:[%s4145 + $0x148] sm:$0xff]
        %v4188 = vld [vmem:[%s4145 + $0x150] sm:$0xff]
        %v4189 = vld [vmem:[%s4145 + $0x158] sm:$0xff]
        %v4190 = vld [vmem:[%s4145 + $0x160] sm:$0xff]
        %v4191 = vld [vmem:[%s4145 + $0x168] sm:$0xff]
        %v4192 = vld [vmem:[%s4145 + $0x170] sm:$0xff]
        %v4193 = vld [vmem:[%s4145 + $0x178] sm:$0xff]
        %v4194 = vld [vmem:[%s4145 + $0x180] sm:$0xff]
        %v4195 = vld [vmem:[%s4145 + $0x188] sm:$0xff]
        %v4196 = vld [vmem:[%s4145 + $0x190] sm:$0xff]
        %v4197 = vld [vmem:[%s4145 + $0x198] sm:$0xff]
        %v4198 = vld [vmem:[%s4145 + $0x1a0] sm:$0xff]
        %v4199 = vld [vmem:[%s4145 + $0x1a8] sm:$0xff]
        %v4200 = vld [vmem:[%s4145 + $0x1b0] sm:$0xff]
        %v4201 = vld [vmem:[%s4145 + $0x1b8] sm:$0xff]
        %v4202 = vld [vmem:[%s4145 + $0x1c0] sm:$0xff]
        %v4203 = vld [vmem:[%s4145 + $0x1c8] sm:$0xff]
        %v4204 = vld [vmem:[%s4145 + $0x1d0] sm:$0xff]
        %v4205 = vld [vmem:[%s4145 + $0x1d8] sm:$0xff]
        %v4206 = vld [vmem:[%s4145 + $0x1e0] sm:$0xff]
        %v4207 = vld [vmem:[%s4145 + $0x1e8] sm:$0xff]
        %v4208 = vld [vmem:[%s4145 + $0x1f0] sm:$0xff]
        %v4209 = vld [vmem:[%s4145 + $0x1f8] sm:$0xff]
        %v4210 = vld [vmem:[%s4145 + $0x200] sm:$0xff]
        %v4211 = vld [vmem:[%s4145 + $0x208] sm:$0xff]
        %v4212 = vld [vmem:[%s4145 + $0x210] sm:$0xff]
        %v4213 = vld [vmem:[%s4145 + $0x218] sm:$0xff]
        %v4214 = vld [vmem:[%s4145 + $0x220] sm:$0xff]
        %v4215 = vld [vmem:[%s4145 + $0x228] sm:$0xff]
        %v4216 = vld [vmem:[%s4145 + $0x230] sm:$0xff]
        %v4217 = vld [vmem:[%s4145 + $0x238] sm:$0xff]
        %v4218 = vld [vmem:[%s4145 + $0x240] sm:$0xff]
        %v4219 = vld [vmem:[%s4145 + $0x248] sm:$0xff]
        %v4220 = vld [vmem:[%s4145 + $0x250] sm:$0xff]
        %v4221 = vld [vmem:[%s4145 + $0x258] sm:$0xff]
        %v4222 = vld [vmem:[%s4145 + $0x260] sm:$0xff]
        %v4223 = vld [vmem:[%s4145 + $0x268] sm:$0xff]
        %v4224 = vld [vmem:[%s4145 + $0x270] sm:$0xff]
        %v4225 = vld [vmem:[%s4145 + $0x278] sm:$0xff]
        %v4226 = vld [vmem:[%s4145 + $0x280] sm:$0xff]
        %v4227 = vld [vmem:[%s4145 + $0x288] sm:$0xff]
        %v4228 = vld [vmem:[%s4145 + $0x290] sm:$0xff]
        %v4229 = vld [vmem:[%s4145 + $0x298] sm:$0xff]
        %v4230 = vld [vmem:[%s4145 + $0x2a0] sm:$0xff]
        %v4231 = vld [vmem:[%s4145 + $0x2a8] sm:$0xff]
        %v4232 = vld [vmem:[%s4145 + $0x2b0] sm:$0xff]
        %v4233 = vld [vmem:[%s4145 + $0x2b8] sm:$0xff]
        %v4234 = vld [vmem:[%s4145 + $0x2c0] sm:$0xff]
        %v4235 = vld [vmem:[%s4145 + $0x2c8] sm:$0xff]
        %v4236 = vld [vmem:[%s4145 + $0x2d0] sm:$0xff]
        %v4237 = vld [vmem:[%s4145 + $0x2d8] sm:$0xff]
        %v4238 = vld [vmem:[%s4145 + $0x2e0] sm:$0xff]
        %v4239 = vld [vmem:[%s4145 + $0x2e8] sm:$0xff]
        %v4240 = vld [vmem:[%s4145 + $0x2f0] sm:$0xff]
        %v4241 = vld [vmem:[%s4145 + $0x2f8] sm:$0xff]
        %v4242 = vld [vmem:[#allocation7] sm:$0xff]
        %v4243 = vld [vmem:[#allocation7 + $0x8] sm:$0xff]
        %v4244 = vld [vmem:[#allocation7 + $0x10] sm:$0xff]
        %v4245 = vld [vmem:[#allocation7 + $0x18] sm:$0xff]
        %v4246 = vld [vmem:[#allocation7 + $0x20] sm:$0xff]
        %v4247 = vld [vmem:[#allocation7 + $0x28] sm:$0xff]
        %v4248 = vld [vmem:[#allocation7 + $0x30] sm:$0xff]
        %v4249 = vld [vmem:[#allocation7 + $0x38] sm:$0xff]
        %v4250 = vld [vmem:[#allocation7 + $0x40] sm:$0xff]
        %v4251 = vld [vmem:[#allocation7 + $0x48] sm:$0xff]
        %v4252 = vld [vmem:[#allocation7 + $0x50] sm:$0xff]
        %v4253 = vld [vmem:[#allocation7 + $0x58] sm:$0xff]
        %v4254 = vld [vmem:[#allocation7 + $0x60] sm:$0xff]
        %v4255 = vld [vmem:[#allocation7 + $0x68] sm:$0xff]
        %v4256 = vld [vmem:[#allocation7 + $0x70] sm:$0xff]
        %v4257 = vld [vmem:[#allocation7 + $0x78] sm:$0xff]
        %v4258 = vld [vmem:[#allocation7 + $0x80] sm:$0xff]
        %v4259 = vld [vmem:[#allocation7 + $0x88] sm:$0xff]
        %v4260 = vld [vmem:[#allocation7 + $0x90] sm:$0xff]
        %v4261 = vld [vmem:[#allocation7 + $0x98] sm:$0xff]
        %v4262 = vld [vmem:[#allocation7 + $0xa0] sm:$0xff]
        %v4263 = vld [vmem:[#allocation7 + $0xa8] sm:$0xff]
        %v4264 = vld [vmem:[#allocation7 + $0xb0] sm:$0xff]
        %v4265 = vld [vmem:[#allocation7 + $0xb8] sm:$0xff]
        %v4266 = vld [vmem:[#allocation7 + $0xc0] sm:$0xff]
        %v4267 = vld [vmem:[#allocation7 + $0xc8] sm:$0xff]
        %v4268 = vld [vmem:[#allocation7 + $0xd0] sm:$0xff]
        %v4269 = vld [vmem:[#allocation7 + $0xd8] sm:$0xff]
        %v4270 = vld [vmem:[#allocation7 + $0xe0] sm:$0xff]
        %v4271 = vld [vmem:[#allocation7 + $0xe8] sm:$0xff]
        %v4272 = vld [vmem:[#allocation7 + $0xf0] sm:$0xff]
        %v4273 = vld [vmem:[#allocation7 + $0xf8] sm:$0xff]
        %v4274 = vpack.c.bf16 %v4149, %v4146
        %v4275 = vpack.c.bf16 %v4150, %v4147
        %v4276 = vpack.c.bf16 %v4151, %v4148
        %v4277 = vpack.c.bf16 %v4155, %v4152
        %v4278 = vpack.c.bf16 %v4156, %v4153
        %v4279 = vpack.c.bf16 %v4157, %v4154
        %v4280 = vpack.c.bf16 %v4161, %v4158
        %v4281 = vpack.c.bf16 %v4162, %v4159
        %v4282 = vpack.c.bf16 %v4163, %v4160
        %v4283 = vpack.c.bf16 %v4167, %v4164
        %v4284 = vpack.c.bf16 %v4168, %v4165
        %v4285 = vpack.c.bf16 %v4169, %v4166
        %v4286 = vpack.c.bf16 %v4173, %v4170
        %v4287 = vpack.c.bf16 %v4174, %v4171
        %v4288 = vpack.c.bf16 %v4175, %v4172
        %v4289 = vpack.c.bf16 %v4179, %v4176
        %v4290 = vpack.c.bf16 %v4180, %v4177
        %v4291 = vpack.c.bf16 %v4181, %v4178
        %v4292 = vpack.c.bf16 %v4185, %v4182
        %v4293 = vpack.c.bf16 %v4186, %v4183
        %v4294 = vpack.c.bf16 %v4187, %v4184
        %v4295 = vpack.c.bf16 %v4191, %v4188
        %v4296 = vpack.c.bf16 %v4192, %v4189
        %v4297 = vpack.c.bf16 %v4193, %v4190
        %v4298 = vpack.c.bf16 %v4197, %v4194
        %v4299 = vpack.c.bf16 %v4198, %v4195
        %v4300 = vpack.c.bf16 %v4199, %v4196
        %v4301 = vpack.c.bf16 %v4203, %v4200
        %v4302 = vpack.c.bf16 %v4204, %v4201
        %v4303 = vpack.c.bf16 %v4205, %v4202
        %v4304 = vpack.c.bf16 %v4209, %v4206
        %v4305 = vpack.c.bf16 %v4210, %v4207
        %v4306 = vpack.c.bf16 %v4211, %v4208
        %v4307 = vpack.c.bf16 %v4215, %v4212
        %v4308 = vpack.c.bf16 %v4216, %v4213
        %v4309 = vpack.c.bf16 %v4217, %v4214
        %v4310 = vpack.c.bf16 %v4221, %v4218
        %v4311 = vpack.c.bf16 %v4222, %v4219
        %v4312 = vpack.c.bf16 %v4223, %v4220
        %v4313 = vpack.c.bf16 %v4227, %v4224
        %v4314 = vpack.c.bf16 %v4228, %v4225
        %v4315 = vpack.c.bf16 %v4229, %v4226
        %v4316 = vpack.c.bf16 %v4233, %v4230
        %v4317 = vpack.c.bf16 %v4234, %v4231
        %v4318 = vpack.c.bf16 %v4235, %v4232
        %v4319 = vpack.c.bf16 %v4239, %v4236
        %v4320 = vpack.c.bf16 %v4240, %v4237
        %v4321 = vpack.c.bf16 %v4241, %v4238
        %s4322 = scalar_lea.vmem [#allocation13], 192
        %v4323 = vld [vmem:[%s4322] sm:$0xf]
        %v4324 = vld [vmem:[%s4322 + $0x4] sm:$0xf]
        %v4325 = vld [vmem:[%s4322 + $0x8] sm:$0xf]
        %v4326 = vld [vmem:[%s4322 + $0xc] sm:$0xf]
        %v4327 = vld [vmem:[%s4322 + $0x10] sm:$0xf]
        %v4328 = vld [vmem:[%s4322 + $0x14] sm:$0xf]
        %v4329 = vld [vmem:[%s4322 + $0x18] sm:$0xf]
        %v4330 = vld [vmem:[%s4322 + $0x1c] sm:$0xf]
        %v4331 = vld [vmem:[%s4322 + $0x20] sm:$0xf]
        %v4332 = vld [vmem:[%s4322 + $0x24] sm:$0xf]
        %v4333 = vld [vmem:[%s4322 + $0x28] sm:$0xf]
        %v4334 = vld [vmem:[%s4322 + $0x2c] sm:$0xf]
        %v4335 = vld [vmem:[%s4322 + $0x30] sm:$0xf]
        %v4336 = vld [vmem:[%s4322 + $0x34] sm:$0xf]
        %v4337 = vld [vmem:[%s4322 + $0x38] sm:$0xf]
        %v4338 = vld [vmem:[%s4322 + $0x3c] sm:$0xf]
        %v4339 = vld [vmem:[%s4322 + $0x40] sm:$0xf]
        %v4340 = vld [vmem:[%s4322 + $0x44] sm:$0xf]
        %v4341 = vld [vmem:[%s4322 + $0x48] sm:$0xf]
        %v4342 = vld [vmem:[%s4322 + $0x4c] sm:$0xf]
        %v4343 = vld [vmem:[%s4322 + $0x50] sm:$0xf]
        %v4344 = vld [vmem:[%s4322 + $0x54] sm:$0xf]
        %v4345 = vld [vmem:[%s4322 + $0x58] sm:$0xf]
        %v4346 = vld [vmem:[%s4322 + $0x5c] sm:$0xf]
        %v4347 = vld [vmem:[%s4322 + $0x60] sm:$0xf]
        %v4348 = vld [vmem:[%s4322 + $0x64] sm:$0xf]
        %v4349 = vld [vmem:[%s4322 + $0x68] sm:$0xf]
        %v4350 = vld [vmem:[%s4322 + $0x6c] sm:$0xf]
        %v4351 = vld [vmem:[%s4322 + $0x70] sm:$0xf]
        %v4352 = vld [vmem:[%s4322 + $0x74] sm:$0xf]
        %v4353 = vld [vmem:[%s4322 + $0x78] sm:$0xf]
        %v4354 = vld [vmem:[%s4322 + $0x7c] sm:$0xf]
        %v4355 = vld [vmem:[%s4322 + $0x80] sm:$0xf]
        %v4356 = vld [vmem:[%s4322 + $0x84] sm:$0xf]
        %v4357 = vld [vmem:[%s4322 + $0x88] sm:$0xf]
        %v4358 = vld [vmem:[%s4322 + $0x8c] sm:$0xf]
        %v4359 = vld [vmem:[%s4322 + $0x90] sm:$0xf]
        %v4360 = vld [vmem:[%s4322 + $0x94] sm:$0xf]
        %v4361 = vld [vmem:[%s4322 + $0x98] sm:$0xf]
        %v4362 = vld [vmem:[%s4322 + $0x9c] sm:$0xf]
        %v4363 = vld [vmem:[%s4322 + $0xa0] sm:$0xf]
        %v4364 = vld [vmem:[%s4322 + $0xa4] sm:$0xf]
        %v4365 = vld [vmem:[%s4322 + $0xa8] sm:$0xf]
        %v4366 = vld [vmem:[%s4322 + $0xac] sm:$0xf]
        %v4367 = vld [vmem:[%s4322 + $0xb0] sm:$0xf]
        %v4368 = vld [vmem:[%s4322 + $0xb4] sm:$0xf]
        %v4369 = vld [vmem:[%s4322 + $0xb8] sm:$0xf]
        %v4370 = vld [vmem:[%s4322 + $0xbc] sm:$0xf]
        %v4419 = vunpack.c.l.b16 %v4323
        %v4420 = vunpack.c.l.b16 %v4324
        %v4421 = vunpack.c.l.b16 %v4325
        %v4422 = vunpack.c.l.b16 %v4326
        %v4423 = vunpack.c.l.b16 %v4327
        %v4424 = vunpack.c.l.b16 %v4328
        %v4425 = vunpack.c.l.b16 %v4329
        %v4426 = vunpack.c.l.b16 %v4330
        %v4427 = vunpack.c.l.b16 %v4331
        %v4428 = vunpack.c.l.b16 %v4332
        %v4429 = vunpack.c.l.b16 %v4333
        %v4430 = vunpack.c.l.b16 %v4334
        %v4431 = vunpack.c.l.b16 %v4335
        %v4432 = vunpack.c.l.b16 %v4336
        %v4433 = vunpack.c.l.b16 %v4337
        %v4434 = vunpack.c.l.b16 %v4338
        %v4435 = vunpack.c.l.b16 %v4339
        %v4436 = vunpack.c.l.b16 %v4340
        %v4437 = vunpack.c.l.b16 %v4341
        %v4438 = vunpack.c.l.b16 %v4342
        %v4439 = vunpack.c.l.b16 %v4343
        %v4440 = vunpack.c.l.b16 %v4344
        %v4441 = vunpack.c.l.b16 %v4345
        %v4442 = vunpack.c.l.b16 %v4346
        %v4443 = vunpack.c.l.b16 %v4347
        %v4444 = vunpack.c.l.b16 %v4348
        %v4445 = vunpack.c.l.b16 %v4349
        %v4446 = vunpack.c.l.b16 %v4350
        %v4447 = vunpack.c.l.b16 %v4351
        %v4448 = vunpack.c.l.b16 %v4352
        %v4449 = vunpack.c.l.b16 %v4353
        %v4450 = vunpack.c.l.b16 %v4354
        %v4451 = vunpack.c.l.b16 %v4355
        %v4452 = vunpack.c.l.b16 %v4356
        %v4453 = vunpack.c.l.b16 %v4357
        %v4454 = vunpack.c.l.b16 %v4358
        %v4455 = vunpack.c.l.b16 %v4359
        %v4456 = vunpack.c.l.b16 %v4360
        %v4457 = vunpack.c.l.b16 %v4361
        %v4458 = vunpack.c.l.b16 %v4362
        %v4459 = vunpack.c.l.b16 %v4363
        %v4460 = vunpack.c.l.b16 %v4364
        %v4461 = vunpack.c.l.b16 %v4365
        %v4462 = vunpack.c.l.b16 %v4366
        %v4463 = vunpack.c.l.b16 %v4367
        %v4464 = vunpack.c.l.b16 %v4368
        %v4465 = vunpack.c.l.b16 %v4369
        %v4466 = vunpack.c.l.b16 %v4370
        %v4467 = vpack.c.b16 %v4420, %v4419
        %v4468 = vpack.c.b16 %v4422, %v4421
        %v4469 = vpack.c.b16 %v4424, %v4423
        %v4470 = vpack.c.b16 %v4426, %v4425
        %v4471 = vpack.c.b16 %v4428, %v4427
        %v4472 = vpack.c.b16 %v4430, %v4429
        %v4473 = vpack.c.b16 %v4432, %v4431
        %v4474 = vpack.c.b16 %v4434, %v4433
        %v4475 = vpack.c.b16 %v4436, %v4435
        %v4476 = vpack.c.b16 %v4438, %v4437
        %v4477 = vpack.c.b16 %v4440, %v4439
        %v4478 = vpack.c.b16 %v4442, %v4441
        %v4479 = vpack.c.b16 %v4444, %v4443
        %v4480 = vpack.c.b16 %v4446, %v4445
        %v4481 = vpack.c.b16 %v4448, %v4447
        %v4482 = vpack.c.b16 %v4450, %v4449
        %v4483 = vpack.c.b16 %v4452, %v4451
        %v4484 = vpack.c.b16 %v4454, %v4453
        %v4485 = vpack.c.b16 %v4456, %v4455
        %v4486 = vpack.c.b16 %v4458, %v4457
        %v4487 = vpack.c.b16 %v4460, %v4459
        %v4488 = vpack.c.b16 %v4462, %v4461
        %v4489 = vpack.c.b16 %v4464, %v4463
        %v4490 = vpack.c.b16 %v4466, %v4465
        %4515 = vmatprep.subr.bf16.mxu0 0
        %4516 = vmatpush1.bf16.msra.mxu0 %v4467
        %4517 = vmatprep.subr.bf16.mxu0 0
        %4518 = vmatpush1.bf16.msra.mxu0 %v4468
        %4519 = vmatprep.subr.bf16.mxu0 0
        %4520 = vmatpush1.bf16.msra.mxu0 %v4469
        %4521 = vmatprep.subr.bf16.mxu0 0
        %4522 = vmatpush1.bf16.msra.mxu0 %v4470
        %4523 = vmatprep.subr.bf16.mxu0 0
        %4524 = vmatpush1.bf16.msra.mxu0 %v4471
        %4525 = vmatprep.subr.bf16.mxu0 0
        %4526 = vmatpush1.bf16.msra.mxu0 %v4472
        %4527 = vmatprep.subr.bf16.mxu0 0
        %4528 = vmatpush1.bf16.msra.mxu0 %v4473
        %4529 = vmatprep.subr.bf16.mxu0 0
        %4530 = vmatpush1.bf16.msra.mxu0 %v4474
        %4531 = vmatprep.subr.bf16.mxu0 0
        %4532 = vmatpush1.bf16.msra.mxu0 %v4475
        %4533 = vmatprep.subr.bf16.mxu0 0
        %4534 = vmatpush1.bf16.msra.mxu0 %v4476
        %4535 = vmatprep.subr.bf16.mxu0 0
        %4536 = vmatpush1.bf16.msra.mxu0 %v4477
        %4537 = vmatprep.subr.bf16.mxu0 0
        %4538 = vmatpush1.bf16.msra.mxu0 %v4478
        %4539 = vmatprep.subr.bf16.mxu0 0
        %4540 = vmatpush1.bf16.msra.mxu0 %v4479
        %4541 = vmatprep.subr.bf16.mxu0 0
        %4542 = vmatpush1.bf16.msra.mxu0 %v4480
        %4543 = vmatprep.subr.bf16.mxu0 0
        %4544 = vmatpush1.bf16.msra.mxu0 %v4481
        %4545 = vmatprep.subr.bf16.mxu0 0
        %4546 = vmatpush1.bf16.msra.mxu0 %v4482
        %4547 = vmatprep.mubr.bf16.mxu0 %v4275
        %4548 = vmatmul.mubr.bf16.gmra.mrb[0].mxu0 %v4274
        %v4549 = vpop.f32.mrb[0].mxu0
        %v4550 = vadd.f32 0.0, %v4549
        %v4551 = vpop.f32.mrb[0].mxu0
        %v4552 = vpop.f32.mrb[0].mxu0
        %v4553 = vadd.f32 0.0, %v4552
        %v4554 = vpop.f32.mrb[0].mxu0
        %4555 = vmatprep.mubr.bf16.mxu0 %v4278
        %4556 = vmatmul.mubr.bf16.gmra.mrb[0].mxu0 %v4277
        %v4557 = vpop.f32.mrb[0].mxu0
        %v4558 = vadd.f32 0.0, %v4557
        %v4559 = vpop.f32.mrb[0].mxu0
        %v4560 = vpop.f32.mrb[0].mxu0
        %v4561 = vadd.f32 0.0, %v4560
        %v4562 = vpop.f32.mrb[0].mxu0
        %4563 = vmatprep.mubr.bf16.mxu0 %v4281
        %4564 = vmatmul.mubr.bf16.gmra.mrb[0].mxu0 %v4280
        %v4565 = vpop.f32.mrb[0].mxu0
        %v4566 = vadd.f32 0.0, %v4565
        %v4567 = vpop.f32.mrb[0].mxu0
        %v4568 = vpop.f32.mrb[0].mxu0
        %v4569 = vadd.f32 0.0, %v4568
        %v4570 = vpop.f32.mrb[0].mxu0
        %4571 = vmatprep.mubr.bf16.mxu0 %v4284
        %4572 = vmatmul.mubr.bf16.gmra.mrb[0].mxu0 %v4283
        %v4573 = vpop.f32.mrb[0].mxu0
        %v4574 = vadd.f32 0.0, %v4573
        %v4575 = vpop.f32.mrb[0].mxu0
        %v4576 = vpop.f32.mrb[0].mxu0
        %v4577 = vadd.f32 0.0, %v4576
        %v4578 = vpop.f32.mrb[0].mxu0
        %4579 = vmatprep.mubr.bf16.mxu0 %v4287
        %4580 = vmatmul.mubr.bf16.gmra.mrb[0].mxu0 %v4286
        %v4581 = vpop.f32.mrb[0].mxu0
        %v4582 = vadd.f32 0.0, %v4581
        %v4583 = vpop.f32.mrb[0].mxu0
        %v4584 = vpop.f32.mrb[0].mxu0
        %v4585 = vadd.f32 0.0, %v4584
        %v4586 = vpop.f32.mrb[0].mxu0
        %4587 = vmatprep.mubr.bf16.mxu0 %v4290
        %4588 = vmatmul.mubr.bf16.gmra.mrb[0].mxu0 %v4289
        %v4589 = vpop.f32.mrb[0].mxu0
        %v4590 = vadd.f32 0.0, %v4589
        %v4591 = vpop.f32.mrb[0].mxu0
        %v4592 = vpop.f32.mrb[0].mxu0
        %v4593 = vadd.f32 0.0, %v4592
        %v4594 = vpop.f32.mrb[0].mxu0
        %4595 = vmatprep.mubr.bf16.mxu0 %v4293
        %4596 = vmatmul.mubr.bf16.gmra.mrb[0].mxu0 %v4292
        %v4597 = vpop.f32.mrb[0].mxu0
        %v4598 = vadd.f32 0.0, %v4597
        %v4599 = vpop.f32.mrb[0].mxu0
        %v4600 = vpop.f32.mrb[0].mxu0
        %v4601 = vadd.f32 0.0, %v4600
        %v4602 = vpop.f32.mrb[0].mxu0
        %4603 = vmatprep.mubr.bf16.mxu0 %v4296
        %4604 = vmatmul.mubr.bf16.gmra.mrb[0].mxu0 %v4295
        %v4605 = vpop.f32.mrb[0].mxu0
        %v4606 = vadd.f32 0.0, %v4605
        %v4607 = vpop.f32.mrb[0].mxu0
        %v4608 = vpop.f32.mrb[0].mxu0
        %v4609 = vadd.f32 0.0, %v4608
        %v4610 = vpop.f32.mrb[0].mxu0
        %4611 = vmatprep.mubr.bf16.mxu0 %v4299
        %4612 = vmatmul.mubr.bf16.gmra.mrb[0].mxu0 %v4298
        %v4613 = vpop.f32.mrb[0].mxu0
        %v4614 = vadd.f32 0.0, %v4613
        %v4615 = vpop.f32.mrb[0].mxu0
        %v4616 = vpop.f32.mrb[0].mxu0
        %v4617 = vadd.f32 0.0, %v4616
        %v4618 = vpop.f32.mrb[0].mxu0
        %4619 = vmatprep.mubr.bf16.mxu0 %v4302
        %4620 = vmatmul.mubr.bf16.gmra.mrb[0].mxu0 %v4301
        %v4621 = vpop.f32.mrb[0].mxu0
        %v4622 = vadd.f32 0.0, %v4621
        %v4623 = vpop.f32.mrb[0].mxu0
        %v4624 = vpop.f32.mrb[0].mxu0
        %v4625 = vadd.f32 0.0, %v4624
        %v4626 = vpop.f32.mrb[0].mxu0
        %4627 = vmatprep.mubr.bf16.mxu0 %v4305
        %4628 = vmatmul.mubr.bf16.gmra.mrb[0].mxu0 %v4304
        %v4629 = vpop.f32.mrb[0].mxu0
        %v4630 = vadd.f32 0.0, %v4629
        %v4631 = vpop.f32.mrb[0].mxu0
        %v4632 = vpop.f32.mrb[0].mxu0
        %v4633 = vadd.f32 0.0, %v4632
        %v4634 = vpop.f32.mrb[0].mxu0
        %4635 = vmatprep.mubr.bf16.mxu0 %v4308
        %4636 = vmatmul.mubr.bf16.gmra.mrb[0].mxu0 %v4307
        %v4637 = vpop.f32.mrb[0].mxu0
        %v4638 = vadd.f32 0.0, %v4637
        %v4639 = vpop.f32.mrb[0].mxu0
        %v4640 = vpop.f32.mrb[0].mxu0
        %v4641 = vadd.f32 0.0, %v4640
        %v4642 = vpop.f32.mrb[0].mxu0
        %4643 = vmatprep.mubr.bf16.mxu0 %v4311
        %4644 = vmatmul.mubr.bf16.gmra.mrb[0].mxu0 %v4310
        %v4645 = vpop.f32.mrb[0].mxu0
        %v4646 = vadd.f32 0.0, %v4645
        %v4647 = vpop.f32.mrb[0].mxu0
        %v4648 = vpop.f32.mrb[0].mxu0
        %v4649 = vadd.f32 0.0, %v4648
        %v4650 = vpop.f32.mrb[0].mxu0
        %4651 = vmatprep.mubr.bf16.mxu0 %v4314
        %4652 = vmatmul.mubr.bf16.gmra.mrb[0].mxu0 %v4313
        %v4653 = vpop.f32.mrb[0].mxu0
        %v4654 = vadd.f32 0.0, %v4653
        %v4655 = vpop.f32.mrb[0].mxu0
        %v4656 = vpop.f32.mrb[0].mxu0
        %v4657 = vadd.f32 0.0, %v4656
        %v4658 = vpop.f32.mrb[0].mxu0
        %4659 = vmatprep.mubr.bf16.mxu0 %v4317
        %4660 = vmatmul.mubr.bf16.gmra.mrb[0].mxu0 %v4316
        %v4661 = vpop.f32.mrb[0].mxu0
        %v4662 = vadd.f32 0.0, %v4661
        %v4663 = vpop.f32.mrb[0].mxu0
        %v4664 = vpop.f32.mrb[0].mxu0
        %v4665 = vadd.f32 0.0, %v4664
        %v4666 = vpop.f32.mrb[0].mxu0
        %4667 = vmatprep.mubr.bf16.mxu0 %v4320
        %4668 = vmatmul.mubr.bf16.gmra.mrb[0].mxu0 %v4319
        %v4669 = vpop.f32.mrb[0].mxu0
        %v4670 = vadd.f32 0.0, %v4669
        %v4671 = vpop.f32.mrb[0].mxu0
        %v4672 = vpop.f32.mrb[0].mxu0
        %v4673 = vadd.f32 0.0, %v4672
        %v4674 = vpop.f32.mrb[0].mxu0
        %4675 = vdwg.mxu0
        %4676 = vmatprep.subr.bf16.mxu0 0
        %4677 = vmatpush1.bf16.msra.mxu0 %v4483
        %4678 = vmatprep.subr.bf16.mxu0 0
        %4679 = vmatpush1.bf16.msra.mxu0 %v4484
        %4680 = vmatprep.subr.bf16.mxu0 0
        %4681 = vmatpush1.bf16.msra.mxu0 %v4485
        %4682 = vmatprep.subr.bf16.mxu0 0
        %4683 = vmatpush1.bf16.msra.mxu0 %v4486
        %4684 = vmatprep.subr.bf16.mxu0 0
        %4685 = vmatpush1.bf16.msra.mxu0 %v4487
        %4686 = vmatprep.subr.bf16.mxu0 0
        %4687 = vmatpush1.bf16.msra.mxu0 %v4488
        %4688 = vmatprep.subr.bf16.mxu0 0
        %4689 = vmatpush1.bf16.msra.mxu0 %v4489
        %4690 = vmatprep.subr.bf16.mxu0 0
        %4691 = vmatpush1.bf16.msra.mxu0 %v4490
        %4692 = vmatprep.subr.bf16.mxu0 0
        %4693 = vmatpush1.bf16.msra.mxu0 0
        %4694 = vmatprep.subr.bf16.mxu0 0
        %4695 = vmatpush1.bf16.msra.mxu0 0
        %4696 = vmatprep.subr.bf16.mxu0 0
        %4697 = vmatpush1.bf16.msra.mxu0 0
        %4698 = vmatprep.subr.bf16.mxu0 0
        %4699 = vmatpush1.bf16.msra.mxu0 0
        %4700 = vmatprep.subr.bf16.mxu0 0
        %4701 = vmatpush1.bf16.msra.mxu0 0
        %4702 = vmatprep.subr.bf16.mxu0 0
        %4703 = vmatpush1.bf16.msra.mxu0 0
        %4704 = vmatprep.subr.bf16.mxu0 0
        %4705 = vmatpush1.bf16.msra.mxu0 0
        %4706 = vmatprep.subr.bf16.mxu0 0
        %4707 = vmatpush1.bf16.msra.mxu0 0
        %4708 = vmatprep.mubr.bf16.mxu0 0
        %4709 = vmatmul.mubr.bf16.gmra.mrb[0].mxu0 %v4276
        %v4710 = vpop.f32.mrb[0].mxu0
        %v4711 = vadd.f32 %v4550, %v4710
        %v4712 = vpop.f32.mrb[0].mxu0
        %v4713 = vpop.f32.mrb[0].mxu0
        %v4714 = vadd.f32 %v4553, %v4713
        %v4715 = vpop.f32.mrb[0].mxu0
        %4716 = vmatprep.mubr.bf16.mxu0 0
        %4717 = vmatmul.mubr.bf16.gmra.mrb[0].mxu0 %v4279
        %v4718 = vpop.f32.mrb[0].mxu0
        %v4719 = vadd.f32 %v4558, %v4718
        %v4720 = vpop.f32.mrb[0].mxu0
        %v4721 = vpop.f32.mrb[0].mxu0
        %v4722 = vadd.f32 %v4561, %v4721
        %v4723 = vpop.f32.mrb[0].mxu0
        %4724 = vmatprep.mubr.bf16.mxu0 0
        %4725 = vmatmul.mubr.bf16.gmra.mrb[0].mxu0 %v4282
        %v4726 = vpop.f32.mrb[0].mxu0
        %v4727 = vadd.f32 %v4566, %v4726
        %v4728 = vpop.f32.mrb[0].mxu0
        %v4729 = vpop.f32.mrb[0].mxu0
        %v4730 = vadd.f32 %v4569, %v4729
        %v4731 = vpop.f32.mrb[0].mxu0
        %4732 = vmatprep.mubr.bf16.mxu0 0
        %4733 = vmatmul.mubr.bf16.gmra.mrb[0].mxu0 %v4285
        %v4734 = vpop.f32.mrb[0].mxu0
        %v4735 = vadd.f32 %v4574, %v4734
        %v4736 = vpop.f32.mrb[0].mxu0
        %v4737 = vpop.f32.mrb[0].mxu0
        %v4738 = vadd.f32 %v4577, %v4737
        %v4739 = vpop.f32.mrb[0].mxu0
        %4740 = vmatprep.mubr.bf16.mxu0 0
        %4741 = vmatmul.mubr.bf16.gmra.mrb[0].mxu0 %v4288
        %v4742 = vpop.f32.mrb[0].mxu0
        %v4743 = vadd.f32 %v4582, %v4742
        %v4744 = vpop.f32.mrb[0].mxu0
        %v4745 = vpop.f32.mrb[0].mxu0
        %v4746 = vadd.f32 %v4585, %v4745
        %v4747 = vpop.f32.mrb[0].mxu0
        %4748 = vmatprep.mubr.bf16.mxu0 0
        %4749 = vmatmul.mubr.bf16.gmra.mrb[0].mxu0 %v4291
        %v4750 = vpop.f32.mrb[0].mxu0
        %v4751 = vadd.f32 %v4590, %v4750
        %v4752 = vpop.f32.mrb[0].mxu0
        %v4753 = vpop.f32.mrb[0].mxu0
        %v4754 = vadd.f32 %v4593, %v4753
        %v4755 = vpop.f32.mrb[0].mxu0
        %4756 = vmatprep.mubr.bf16.mxu0 0
        %4757 = vmatmul.mubr.bf16.gmra.mrb[0].mxu0 %v4294
        %v4758 = vpop.f32.mrb[0].mxu0
        %v4759 = vadd.f32 %v4598, %v4758
        %v4760 = vpop.f32.mrb[0].mxu0
        %v4761 = vpop.f32.mrb[0].mxu0
        %v4762 = vadd.f32 %v4601, %v4761
        %v4763 = vpop.f32.mrb[0].mxu0
        %4764 = vmatprep.mubr.bf16.mxu0 0
        %4765 = vmatmul.mubr.bf16.gmra.mrb[0].mxu0 %v4297
        %v4766 = vpop.f32.mrb[0].mxu0
        %v4767 = vadd.f32 %v4606, %v4766
        %v4768 = vpop.f32.mrb[0].mxu0
        %v4769 = vpop.f32.mrb[0].mxu0
        %v4770 = vadd.f32 %v4609, %v4769
        %v4771 = vpop.f32.mrb[0].mxu0
        %4772 = vmatprep.mubr.bf16.mxu0 0
        %4773 = vmatmul.mubr.bf16.gmra.mrb[0].mxu0 %v4300
        %v4774 = vpop.f32.mrb[0].mxu0
        %v4775 = vadd.f32 %v4614, %v4774
        %v4776 = vpop.f32.mrb[0].mxu0
        %v4777 = vpop.f32.mrb[0].mxu0
        %v4778 = vadd.f32 %v4617, %v4777
        %v4779 = vpop.f32.mrb[0].mxu0
        %4780 = vmatprep.mubr.bf16.mxu0 0
        %4781 = vmatmul.mubr.bf16.gmra.mrb[0].mxu0 %v4303
        %v4782 = vpop.f32.mrb[0].mxu0
        %v4783 = vadd.f32 %v4622, %v4782
        %v4784 = vpop.f32.mrb[0].mxu0
        %v4785 = vpop.f32.mrb[0].mxu0
        %v4786 = vadd.f32 %v4625, %v4785
        %v4787 = vpop.f32.mrb[0].mxu0
        %4788 = vmatprep.mubr.bf16.mxu0 0
        %4789 = vmatmul.mubr.bf16.gmra.mrb[0].mxu0 %v4306
        %v4790 = vpop.f32.mrb[0].mxu0
        %v4791 = vadd.f32 %v4630, %v4790
        %v4792 = vpop.f32.mrb[0].mxu0
        %v4793 = vpop.f32.mrb[0].mxu0
        %v4794 = vadd.f32 %v4633, %v4793
        %v4795 = vpop.f32.mrb[0].mxu0
        %4796 = vmatprep.mubr.bf16.mxu0 0
        %4797 = vmatmul.mubr.bf16.gmra.mrb[0].mxu0 %v4309
        %v4798 = vpop.f32.mrb[0].mxu0
        %v4799 = vadd.f32 %v4638, %v4798
        %v4800 = vpop.f32.mrb[0].mxu0
        %v4801 = vpop.f32.mrb[0].mxu0
        %v4802 = vadd.f32 %v4641, %v4801
        %v4803 = vpop.f32.mrb[0].mxu0
        %4804 = vmatprep.mubr.bf16.mxu0 0
        %4805 = vmatmul.mubr.bf16.gmra.mrb[0].mxu0 %v4312
        %v4806 = vpop.f32.mrb[0].mxu0
        %v4807 = vadd.f32 %v4646, %v4806
        %v4808 = vpop.f32.mrb[0].mxu0
        %v4809 = vpop.f32.mrb[0].mxu0
        %v4810 = vadd.f32 %v4649, %v4809
        %v4811 = vpop.f32.mrb[0].mxu0
        %4812 = vmatprep.mubr.bf16.mxu0 0
        %4813 = vmatmul.mubr.bf16.gmra.mrb[0].mxu0 %v4315
        %v4814 = vpop.f32.mrb[0].mxu0
        %v4815 = vadd.f32 %v4654, %v4814
        %v4816 = vpop.f32.mrb[0].mxu0
        %v4817 = vpop.f32.mrb[0].mxu0
        %v4818 = vadd.f32 %v4657, %v4817
        %v4819 = vpop.f32.mrb[0].mxu0
        %4820 = vmatprep.mubr.bf16.mxu0 0
        %4821 = vmatmul.mubr.bf16.gmra.mrb[0].mxu0 %v4318
        %v4822 = vpop.f32.mrb[0].mxu0
        %v4823 = vadd.f32 %v4662, %v4822
        %v4824 = vpop.f32.mrb[0].mxu0
        %v4825 = vpop.f32.mrb[0].mxu0
        %v4826 = vadd.f32 %v4665, %v4825
        %v4827 = vpop.f32.mrb[0].mxu0
        %4828 = vmatprep.mubr.bf16.mxu0 0
        %4829 = vmatmul.mubr.bf16.gmra.mrb[0].mxu0 %v4321
        %v4830 = vpop.f32.mrb[0].mxu0
        %v4831 = vadd.f32 %v4670, %v4830
        %v4832 = vpop.f32.mrb[0].mxu0
        %v4833 = vpop.f32.mrb[0].mxu0
        %v4834 = vadd.f32 %v4673, %v4833
        %v4835 = vpop.f32.mrb[0].mxu0
        %4836 = vdwg.mxu0
        %v4837 = vadd.f32 %v4242, %v4711
        %v4838 = vadd.f32 %v4243, %v4714
        %v4839 = vadd.f32 %v4244, %v4719
        %v4840 = vadd.f32 %v4245, %v4722
        %v4841 = vadd.f32 %v4246, %v4727
        %v4842 = vadd.f32 %v4247, %v4730
        %v4843 = vadd.f32 %v4248, %v4735
        %v4844 = vadd.f32 %v4249, %v4738
        %v4845 = vadd.f32 %v4250, %v4743
        %v4846 = vadd.f32 %v4251, %v4746
        %v4847 = vadd.f32 %v4252, %v4751
        %v4848 = vadd.f32 %v4253, %v4754
        %v4849 = vadd.f32 %v4254, %v4759
        %v4850 = vadd.f32 %v4255, %v4762
        %v4851 = vadd.f32 %v4256, %v4767
        %v4852 = vadd.f32 %v4257, %v4770
        %v4853 = vadd.f32 %v4258, %v4775
        %v4854 = vadd.f32 %v4259, %v4778
        %v4855 = vadd.f32 %v4260, %v4783
        %v4856 = vadd.f32 %v4261, %v4786
        %v4857 = vadd.f32 %v4262, %v4791
        %v4858 = vadd.f32 %v4263, %v4794
        %v4859 = vadd.f32 %v4264, %v4799
        %v4860 = vadd.f32 %v4265, %v4802
        %v4861 = vadd.f32 %v4266, %v4807
        %v4862 = vadd.f32 %v4267, %v4810
        %v4863 = vadd.f32 %v4268, %v4815
        %v4864 = vadd.f32 %v4269, %v4818
        %v4865 = vadd.f32 %v4270, %v4823
        %v4866 = vadd.f32 %v4271, %v4826
        %v4867 = vadd.f32 %v4272, %v4831
        %v4868 = vadd.f32 %v4273, %v4834
        %4869 = vst [vmem:[#allocation7] sm:$0xff] %v4837
        %4870 = vst [vmem:[#allocation7 + $0x8] sm:$0xff] %v4838
        %4871 = vst [vmem:[#allocation7 + $0x10] sm:$0xff] %v4839
        %4872 = vst [vmem:[#allocation7 + $0x18] sm:$0xff] %v4840
        %4873 = vst [vmem:[#allocation7 + $0x20] sm:$0xff] %v4841
        %4874 = vst [vmem:[#allocation7 + $0x28] sm:$0xff] %v4842
        %4875 = vst [vmem:[#allocation7 + $0x30] sm:$0xff] %v4843
        %4876 = vst [vmem:[#allocation7 + $0x38] sm:$0xff] %v4844
        %4877 = vst [vmem:[#allocation7 + $0x40] sm:$0xff] %v4845
        %4878 = vst [vmem:[#allocation7 + $0x48] sm:$0xff] %v4846
        %4879 = vst [vmem:[#allocation7 + $0x50] sm:$0xff] %v4847
        %4880 = vst [vmem:[#allocation7 + $0x58] sm:$0xff] %v4848
        %4881 = vst [vmem:[#allocation7 + $0x60] sm:$0xff] %v4849
        %4882 = vst [vmem:[#allocation7 + $0x68] sm:$0xff] %v4850
        %4883 = vst [vmem:[#allocation7 + $0x70] sm:$0xff] %v4851
        %4884 = vst [vmem:[#allocation7 + $0x78] sm:$0xff] %v4852
        %4885 = vst [vmem:[#allocation7 + $0x80] sm:$0xff] %v4853
        %4886 = vst [vmem:[#allocation7 + $0x88] sm:$0xff] %v4854
        %4887 = vst [vmem:[#allocation7 + $0x90] sm:$0xff] %v4855
        %4888 = vst [vmem:[#allocation7 + $0x98] sm:$0xff] %v4856
        %4889 = vst [vmem:[#allocation7 + $0xa0] sm:$0xff] %v4857
        %4890 = vst [vmem:[#allocation7 + $0xa8] sm:$0xff] %v4858
        %4891 = vst [vmem:[#allocation7 + $0xb0] sm:$0xff] %v4859
        %4892 = vst [vmem:[#allocation7 + $0xb8] sm:$0xff] %v4860
        %4893 = vst [vmem:[#allocation7 + $0xc0] sm:$0xff] %v4861
        %4894 = vst [vmem:[#allocation7 + $0xc8] sm:$0xff] %v4862
        %4895 = vst [vmem:[#allocation7 + $0xd0] sm:$0xff] %v4863
        %4896 = vst [vmem:[#allocation7 + $0xd8] sm:$0xff] %v4864
        %4897 = vst [vmem:[#allocation7 + $0xe0] sm:$0xff] %v4865
        %4898 = vst [vmem:[#allocation7 + $0xe8] sm:$0xff] %v4866
        %4899 = vst [vmem:[#allocation7 + $0xf0] sm:$0xff] %v4867
        %4900 = vst [vmem:[#allocation7 + $0xf8] sm:$0xff] %v4868
        %s4901 = scalar_lea.vmem [#allocation5], 96
        %v4902 = vld [vmem:[%s4901] sm:$0xff]
        %v4903 = vld [vmem:[%s4901 + $0x8] sm:$0xff]
        %v4904 = vld [vmem:[%s4901 + $0x10] sm:$0xff]
        %v4905 = vld [vmem:[%s4901 + $0x18] sm:$0xff]
        %v4906 = vld [vmem:[%s4901 + $0x20] sm:$0xff]
        %v4907 = vld [vmem:[%s4901 + $0x28] sm:$0xff]
        %v4908 = vld [vmem:[%s4901 + $0x30] sm:$0xff]
        %v4909 = vld [vmem:[%s4901 + $0x38] sm:$0xff]
        %v4910 = vld [vmem:[%s4901 + $0x40] sm:$0xff]
        %v4911 = vld [vmem:[%s4901 + $0x48] sm:$0xff]
        %v4912 = vld [vmem:[%s4901 + $0x50] sm:$0xff]
        %v4913 = vld [vmem:[%s4901 + $0x58] sm:$0xff]
        %v4914 = vld [vmem:[%s4901 + $0x60] sm:$0xff]
        %v4915 = vld [vmem:[%s4901 + $0x68] sm:$0xff]
        %v4916 = vld [vmem:[%s4901 + $0x70] sm:$0xff]
        %v4917 = vld [vmem:[%s4901 + $0x78] sm:$0xff]
        %v4918 = vld [vmem:[%s4901 + $0x80] sm:$0xff]
        %v4919 = vld [vmem:[%s4901 + $0x88] sm:$0xff]
        %v4920 = vld [vmem:[%s4901 + $0x90] sm:$0xff]
        %v4921 = vld [vmem:[%s4901 + $0x98] sm:$0xff]
        %v4922 = vld [vmem:[%s4901 + $0xa0] sm:$0xff]
        %v4923 = vld [vmem:[%s4901 + $0xa8] sm:$0xff]
        %v4924 = vld [vmem:[%s4901 + $0xb0] sm:$0xff]
        %v4925 = vld [vmem:[%s4901 + $0xb8] sm:$0xff]
        %v4926 = vld [vmem:[%s4901 + $0xc0] sm:$0xff]
        %v4927 = vld [vmem:[%s4901 + $0xc8] sm:$0xff]
        %v4928 = vld [vmem:[%s4901 + $0xd0] sm:$0xff]
        %v4929 = vld [vmem:[%s4901 + $0xd8] sm:$0xff]
        %v4930 = vld [vmem:[%s4901 + $0xe0] sm:$0xff]
        %v4931 = vld [vmem:[%s4901 + $0xe8] sm:$0xff]
        %v4932 = vld [vmem:[%s4901 + $0xf0] sm:$0xff]
        %v4933 = vld [vmem:[%s4901 + $0xf8] sm:$0xff]
        %v4934 = vld [vmem:[%s4901 + $0x100] sm:$0xff]
        %v4935 = vld [vmem:[%s4901 + $0x108] sm:$0xff]
        %v4936 = vld [vmem:[%s4901 + $0x110] sm:$0xff]
        %v4937 = vld [vmem:[%s4901 + $0x118] sm:$0xff]
        %v4938 = vld [vmem:[%s4901 + $0x120] sm:$0xff]
        %v4939 = vld [vmem:[%s4901 + $0x128] sm:$0xff]
        %v4940 = vld [vmem:[%s4901 + $0x130] sm:$0xff]
        %v4941 = vld [vmem:[%s4901 + $0x138] sm:$0xff]
        %v4942 = vld [vmem:[%s4901 + $0x140] sm:$0xff]
        %v4943 = vld [vmem:[%s4901 + $0x148] sm:$0xff]
        %v4944 = vld [vmem:[%s4901 + $0x150] sm:$0xff]
        %v4945 = vld [vmem:[%s4901 + $0x158] sm:$0xff]
        %v4946 = vld [vmem:[%s4901 + $0x160] sm:$0xff]
        %v4947 = vld [vmem:[%s4901 + $0x168] sm:$0xff]
        %v4948 = vld [vmem:[%s4901 + $0x170] sm:$0xff]
        %v4949 = vld [vmem:[%s4901 + $0x178] sm:$0xff]
        %v4950 = vld [vmem:[%s4901 + $0x180] sm:$0xff]
        %v4951 = vld [vmem:[%s4901 + $0x188] sm:$0xff]
        %v4952 = vld [vmem:[%s4901 + $0x190] sm:$0xff]
        %v4953 = vld [vmem:[%s4901 + $0x198] sm:$0xff]
        %v4954 = vld [vmem:[%s4901 + $0x1a0] sm:$0xff]
        %v4955 = vld [vmem:[%s4901 + $0x1a8] sm:$0xff]
        %v4956 = vld [vmem:[%s4901 + $0x1b0] sm:$0xff]
        %v4957 = vld [vmem:[%s4901 + $0x1b8] sm:$0xff]
        %v4958 = vld [vmem:[%s4901 + $0x1c0] sm:$0xff]
        %v4959 = vld [vmem:[%s4901 + $0x1c8] sm:$0xff]
        %v4960 = vld [vmem:[%s4901 + $0x1d0] sm:$0xff]
        %v4961 = vld [vmem:[%s4901 + $0x1d8] sm:$0xff]
        %v4962 = vld [vmem:[%s4901 + $0x1e0] sm:$0xff]
        %v4963 = vld [vmem:[%s4901 + $0x1e8] sm:$0xff]
        %v4964 = vld [vmem:[%s4901 + $0x1f0] sm:$0xff]
        %v4965 = vld [vmem:[%s4901 + $0x1f8] sm:$0xff]
        %v4966 = vld [vmem:[%s4901 + $0x200] sm:$0xff]
        %v4967 = vld [vmem:[%s4901 + $0x208] sm:$0xff]
        %v4968 = vld [vmem:[%s4901 + $0x210] sm:$0xff]
        %v4969 = vld [vmem:[%s4901 + $0x218] sm:$0xff]
        %v4970 = vld [vmem:[%s4901 + $0x220] sm:$0xff]
        %v4971 = vld [vmem:[%s4901 + $0x228] sm:$0xff]
        %v4972 = vld [vmem:[%s4901 + $0x230] sm:$0xff]
        %v4973 = vld [vmem:[%s4901 + $0x238] sm:$0xff]
        %v4974 = vld [vmem:[%s4901 + $0x240] sm:$0xff]
        %v4975 = vld [vmem:[%s4901 + $0x248] sm:$0xff]
        %v4976 = vld [vmem:[%s4901 + $0x250] sm:$0xff]
        %v4977 = vld [vmem:[%s4901 + $0x258] sm:$0xff]
        %v4978 = vld [vmem:[%s4901 + $0x260] sm:$0xff]
        %v4979 = vld [vmem:[%s4901 + $0x268] sm:$0xff]
        %v4980 = vld [vmem:[%s4901 + $0x270] sm:$0xff]
        %v4981 = vld [vmem:[%s4901 + $0x278] sm:$0xff]
        %v4982 = vld [vmem:[%s4901 + $0x280] sm:$0xff]
        %v4983 = vld [vmem:[%s4901 + $0x288] sm:$0xff]
        %v4984 = vld [vmem:[%s4901 + $0x290] sm:$0xff]
        %v4985 = vld [vmem:[%s4901 + $0x298] sm:$0xff]
        %v4986 = vld [vmem:[%s4901 + $0x2a0] sm:$0xff]
        %v4987 = vld [vmem:[%s4901 + $0x2a8] sm:$0xff]
        %v4988 = vld [vmem:[%s4901 + $0x2b0] sm:$0xff]
        %v4989 = vld [vmem:[%s4901 + $0x2b8] sm:$0xff]
        %v4990 = vld [vmem:[%s4901 + $0x2c0] sm:$0xff]
        %v4991 = vld [vmem:[%s4901 + $0x2c8] sm:$0xff]
        %v4992 = vld [vmem:[%s4901 + $0x2d0] sm:$0xff]
        %v4993 = vld [vmem:[%s4901 + $0x2d8] sm:$0xff]
        %v4994 = vld [vmem:[%s4901 + $0x2e0] sm:$0xff]
        %v4995 = vld [vmem:[%s4901 + $0x2e8] sm:$0xff]
        %v4996 = vld [vmem:[%s4901 + $0x2f0] sm:$0xff]
        %v4997 = vld [vmem:[%s4901 + $0x2f8] sm:$0xff]
        %v4998 = vld [vmem:[#allocation7] sm:$0xff]
        %v4999 = vld [vmem:[#allocation7 + $0x8] sm:$0xff]
        %v5000 = vld [vmem:[#allocation7 + $0x10] sm:$0xff]
        %v5001 = vld [vmem:[#allocation7 + $0x18] sm:$0xff]
        %v5002 = vld [vmem:[#allocation7 + $0x20] sm:$0xff]
        %v5003 = vld [vmem:[#allocation7 + $0x28] sm:$0xff]
        %v5004 = vld [vmem:[#allocation7 + $0x30] sm:$0xff]
        %v5005 = vld [vmem:[#allocation7 + $0x38] sm:$0xff]
        %v5006 = vld [vmem:[#allocation7 + $0x40] sm:$0xff]
        %v5007 = vld [vmem:[#allocation7 + $0x48] sm:$0xff]
        %v5008 = vld [vmem:[#allocation7 + $0x50] sm:$0xff]
        %v5009 = vld [vmem:[#allocation7 + $0x58] sm:$0xff]
        %v5010 = vld [vmem:[#allocation7 + $0x60] sm:$0xff]
        %v5011 = vld [vmem:[#allocation7 + $0x68] sm:$0xff]
        %v5012 = vld [vmem:[#allocation7 + $0x70] sm:$0xff]
        %v5013 = vld [vmem:[#allocation7 + $0x78] sm:$0xff]
        %v5014 = vld [vmem:[#allocation7 + $0x80] sm:$0xff]
        %v5015 = vld [vmem:[#allocation7 + $0x88] sm:$0xff]
        %v5016 = vld [vmem:[#allocation7 + $0x90] sm:$0xff]
        %v5017 = vld [vmem:[#allocation7 + $0x98] sm:$0xff]
        %v5018 = vld [vmem:[#allocation7 + $0xa0] sm:$0xff]
        %v5019 = vld [vmem:[#allocation7 + $0xa8] sm:$0xff]
        %v5020 = vld [vmem:[#allocation7 + $0xb0] sm:$0xff]
        %v5021 = vld [vmem:[#allocation7 + $0xb8] sm:$0xff]
        %v5022 = vld [vmem:[#allocation7 + $0xc0] sm:$0xff]
        %v5023 = vld [vmem:[#allocation7 + $0xc8] sm:$0xff]
        %v5024 = vld [vmem:[#allocation7 + $0xd0] sm:$0xff]
        %v5025 = vld [vmem:[#allocation7 + $0xd8] sm:$0xff]
        %v5026 = vld [vmem:[#allocation7 + $0xe0] sm:$0xff]
        %v5027 = vld [vmem:[#allocation7 + $0xe8] sm:$0xff]
        %v5028 = vld [vmem:[#allocation7 + $0xf0] sm:$0xff]
        %v5029 = vld [vmem:[#allocation7 + $0xf8] sm:$0xff]
        %v5030 = vpack.c.bf16 %v4905, %v4902
        %v5031 = vpack.c.bf16 %v4906, %v4903
        %v5032 = vpack.c.bf16 %v4907, %v4904
        %v5033 = vpack.c.bf16 %v4911, %v4908
        %v5034 = vpack.c.bf16 %v4912, %v4909
        %v5035 = vpack.c.bf16 %v4913, %v4910
        %v5036 = vpack.c.bf16 %v4917, %v4914
        %v5037 = vpack.c.bf16 %v4918, %v4915
        %v5038 = vpack.c.bf16 %v4919, %v4916
        %v5039 = vpack.c.bf16 %v4923, %v4920
        %v5040 = vpack.c.bf16 %v4924, %v4921
        %v5041 = vpack.c.bf16 %v4925, %v4922
        %v5042 = vpack.c.bf16 %v4929, %v4926
        %v5043 = vpack.c.bf16 %v4930, %v4927
        %v5044 = vpack.c.bf16 %v4931, %v4928
        %v5045 = vpack.c.bf16 %v4935, %v4932
        %v5046 = vpack.c.bf16 %v4936, %v4933
        %v5047 = vpack.c.bf16 %v4937, %v4934
        %v5048 = vpack.c.bf16 %v4941, %v4938
        %v5049 = vpack.c.bf16 %v4942, %v4939
        %v5050 = vpack.c.bf16 %v4943, %v4940
        %v5051 = vpack.c.bf16 %v4947, %v4944
        %v5052 = vpack.c.bf16 %v4948, %v4945
        %v5053 = vpack.c.bf16 %v4949, %v4946
        %v5054 = vpack.c.bf16 %v4953, %v4950
        %v5055 = vpack.c.bf16 %v4954, %v4951
        %v5056 = vpack.c.bf16 %v4955, %v4952
        %v5057 = vpack.c.bf16 %v4959, %v4956
        %v5058 = vpack.c.bf16 %v4960, %v4957
        %v5059 = vpack.c.bf16 %v4961, %v4958
        %v5060 = vpack.c.bf16 %v4965, %v4962
        %v5061 = vpack.c.bf16 %v4966, %v4963
        %v5062 = vpack.c.bf16 %v4967, %v4964
        %v5063 = vpack.c.bf16 %v4971, %v4968
        %v5064 = vpack.c.bf16 %v4972, %v4969
        %v5065 = vpack.c.bf16 %v4973, %v4970
        %v5066 = vpack.c.bf16 %v4977, %v4974
        %v5067 = vpack.c.bf16 %v4978, %v4975
        %v5068 = vpack.c.bf16 %v4979, %v4976
        %v5069 = vpack.c.bf16 %v4983, %v4980
        %v5070 = vpack.c.bf16 %v4984, %v4981
        %v5071 = vpack.c.bf16 %v4985, %v4982
        %v5072 = vpack.c.bf16 %v4989, %v4986
        %v5073 = vpack.c.bf16 %v4990, %v4987
        %v5074 = vpack.c.bf16 %v4991, %v4988
        %v5075 = vpack.c.bf16 %v4995, %v4992
        %v5076 = vpack.c.bf16 %v4996, %v4993
        %v5077 = vpack.c.bf16 %v4997, %v4994
        %s5078 = scalar_lea.vmem [#allocation13], 384
        %v5079 = vld [vmem:[%s5078] sm:$0xf]
        %v5080 = vld [vmem:[%s5078 + $0x4] sm:$0xf]
        %v5081 = vld [vmem:[%s5078 + $0x8] sm:$0xf]
        %v5082 = vld [vmem:[%s5078 + $0xc] sm:$0xf]
        %v5083 = vld [vmem:[%s5078 + $0x10] sm:$0xf]
        %v5084 = vld [vmem:[%s5078 + $0x14] sm:$0xf]
        %v5085 = vld [vmem:[%s5078 + $0x18] sm:$0xf]
        %v5086 = vld [vmem:[%s5078 + $0x1c] sm:$0xf]
        %v5087 = vld [vmem:[%s5078 + $0x20] sm:$0xf]
        %v5088 = vld [vmem:[%s5078 + $0x24] sm:$0xf]
        %v5089 = vld [vmem:[%s5078 + $0x28] sm:$0xf]
        %v5090 = vld [vmem:[%s5078 + $0x2c] sm:$0xf]
        %v5091 = vld [vmem:[%s5078 + $0x30] sm:$0xf]
        %v5092 = vld [vmem:[%s5078 + $0x34] sm:$0xf]
        %v5093 = vld [vmem:[%s5078 + $0x38] sm:$0xf]
        %v5094 = vld [vmem:[%s5078 + $0x3c] sm:$0xf]
        %v5095 = vld [vmem:[%s5078 + $0x40] sm:$0xf]
        %v5096 = vld [vmem:[%s5078 + $0x44] sm:$0xf]
        %v5097 = vld [vmem:[%s5078 + $0x48] sm:$0xf]
        %v5098 = vld [vmem:[%s5078 + $0x4c] sm:$0xf]
        %v5099 = vld [vmem:[%s5078 + $0x50] sm:$0xf]
        %v5100 = vld [vmem:[%s5078 + $0x54] sm:$0xf]
        %v5101 = vld [vmem:[%s5078 + $0x58] sm:$0xf]
        %v5102 = vld [vmem:[%s5078 + $0x5c] sm:$0xf]
        %v5103 = vld [vmem:[%s5078 + $0x60] sm:$0xf]
        %v5104 = vld [vmem:[%s5078 + $0x64] sm:$0xf]
        %v5105 = vld [vmem:[%s5078 + $0x68] sm:$0xf]
        %v5106 = vld [vmem:[%s5078 + $0x6c] sm:$0xf]
        %v5107 = vld [vmem:[%s5078 + $0x70] sm:$0xf]
        %v5108 = vld [vmem:[%s5078 + $0x74] sm:$0xf]
        %v5109 = vld [vmem:[%s5078 + $0x78] sm:$0xf]
        %v5110 = vld [vmem:[%s5078 + $0x7c] sm:$0xf]
        %v5111 = vld [vmem:[%s5078 + $0x80] sm:$0xf]
        %v5112 = vld [vmem:[%s5078 + $0x84] sm:$0xf]
        %v5113 = vld [vmem:[%s5078 + $0x88] sm:$0xf]
        %v5114 = vld [vmem:[%s5078 + $0x8c] sm:$0xf]
        %v5115 = vld [vmem:[%s5078 + $0x90] sm:$0xf]
        %v5116 = vld [vmem:[%s5078 + $0x94] sm:$0xf]
        %v5117 = vld [vmem:[%s5078 + $0x98] sm:$0xf]
        %v5118 = vld [vmem:[%s5078 + $0x9c] sm:$0xf]
        %v5119 = vld [vmem:[%s5078 + $0xa0] sm:$0xf]
        %v5120 = vld [vmem:[%s5078 + $0xa4] sm:$0xf]
        %v5121 = vld [vmem:[%s5078 + $0xa8] sm:$0xf]
        %v5122 = vld [vmem:[%s5078 + $0xac] sm:$0xf]
        %v5123 = vld [vmem:[%s5078 + $0xb0] sm:$0xf]
        %v5124 = vld [vmem:[%s5078 + $0xb4] sm:$0xf]
        %v5125 = vld [vmem:[%s5078 + $0xb8] sm:$0xf]
        %v5126 = vld [vmem:[%s5078 + $0xbc] sm:$0xf]
        %v5175 = vunpack.c.l.b16 %v5079
        %v5176 = vunpack.c.l.b16 %v5080
        %v5177 = vunpack.c.l.b16 %v5081
        %v5178 = vunpack.c.l.b16 %v5082
        %v5179 = vunpack.c.l.b16 %v5083
        %v5180 = vunpack.c.l.b16 %v5084
        %v5181 = vunpack.c.l.b16 %v5085
        %v5182 = vunpack.c.l.b16 %v5086
        %v5183 = vunpack.c.l.b16 %v5087
        %v5184 = vunpack.c.l.b16 %v5088
        %v5185 = vunpack.c.l.b16 %v5089
        %v5186 = vunpack.c.l.b16 %v5090
        %v5187 = vunpack.c.l.b16 %v5091
        %v5188 = vunpack.c.l.b16 %v5092
        %v5189 = vunpack.c.l.b16 %v5093
        %v5190 = vunpack.c.l.b16 %v5094
        %v5191 = vunpack.c.l.b16 %v5095
        %v5192 = vunpack.c.l.b16 %v5096
        %v5193 = vunpack.c.l.b16 %v5097
        %v5194 = vunpack.c.l.b16 %v5098
        %v5195 = vunpack.c.l.b16 %v5099
        %v5196 = vunpack.c.l.b16 %v5100
        %v5197 = vunpack.c.l.b16 %v5101
        %v5198 = vunpack.c.l.b16 %v5102
        %v5199 = vunpack.c.l.b16 %v5103
        %v5200 = vunpack.c.l.b16 %v5104
        %v5201 = vunpack.c.l.b16 %v5105
        %v5202 = vunpack.c.l.b16 %v5106
        %v5203 = vunpack.c.l.b16 %v5107
        %v5204 = vunpack.c.l.b16 %v5108
        %v5205 = vunpack.c.l.b16 %v5109
        %v5206 = vunpack.c.l.b16 %v5110
        %v5207 = vunpack.c.l.b16 %v5111
        %v5208 = vunpack.c.l.b16 %v5112
        %v5209 = vunpack.c.l.b16 %v5113
        %v5210 = vunpack.c.l.b16 %v5114
        %v5211 = vunpack.c.l.b16 %v5115
        %v5212 = vunpack.c.l.b16 %v5116
        %v5213 = vunpack.c.l.b16 %v5117
        %v5214 = vunpack.c.l.b16 %v5118
        %v5215 = vunpack.c.l.b16 %v5119
        %v5216 = vunpack.c.l.b16 %v5120
        %v5217 = vunpack.c.l.b16 %v5121
        %v5218 = vunpack.c.l.b16 %v5122
        %v5219 = vunpack.c.l.b16 %v5123
        %v5220 = vunpack.c.l.b16 %v5124
        %v5221 = vunpack.c.l.b16 %v5125
        %v5222 = vunpack.c.l.b16 %v5126
        %v5223 = vpack.c.b16 %v5176, %v5175
        %v5224 = vpack.c.b16 %v5178, %v5177
        %v5225 = vpack.c.b16 %v5180, %v5179
        %v5226 = vpack.c.b16 %v5182, %v5181
        %v5227 = vpack.c.b16 %v5184, %v5183
        %v5228 = vpack.c.b16 %v5186, %v5185
        %v5229 = vpack.c.b16 %v5188, %v5187
        %v5230 = vpack.c.b16 %v5190, %v5189
        %v5231 = vpack.c.b16 %v5192, %v5191
        %v5232 = vpack.c.b16 %v5194, %v5193
        %v5233 = vpack.c.b16 %v5196, %v5195
        %v5234 = vpack.c.b16 %v5198, %v5197
        %v5235 = vpack.c.b16 %v5200, %v5199
        %v5236 = vpack.c.b16 %v5202, %v5201
        %v5237 = vpack.c.b16 %v5204, %v5203
        %v5238 = vpack.c.b16 %v5206, %v5205
        %v5239 = vpack.c.b16 %v5208, %v5207
        %v5240 = vpack.c.b16 %v5210, %v5209
        %v5241 = vpack.c.b16 %v5212, %v5211
        %v5242 = vpack.c.b16 %v5214, %v5213
        %v5243 = vpack.c.b16 %v5216, %v5215
        %v5244 = vpack.c.b16 %v5218, %v5217
        %v5245 = vpack.c.b16 %v5220, %v5219
        %v5246 = vpack.c.b16 %v5222, %v5221
        %5271 = vmatprep.subr.bf16.mxu0 0
        %5272 = vmatpush1.bf16.msra.mxu0 %v5223
        %5273 = vmatprep.subr.bf16.mxu0 0
        %5274 = vmatpush1.bf16.msra.mxu0 %v5224
        %5275 = vmatprep.subr.bf16.mxu0 0
        %5276 = vmatpush1.bf16.msra.mxu0 %v5225
        %5277 = vmatprep.subr.bf16.mxu0 0
        %5278 = vmatpush1.bf16.msra.mxu0 %v5226
        %5279 = vmatprep.subr.bf16.mxu0 0
        %5280 = vmatpush1.bf16.msra.mxu0 %v5227
        %5281 = vmatprep.subr.bf16.mxu0 0
        %5282 = vmatpush1.bf16.msra.mxu0 %v5228
        %5283 = vmatprep.subr.bf16.mxu0 0
        %5284 = vmatpush1.bf16.msra.mxu0 %v5229
        %5285 = vmatprep.subr.bf16.mxu0 0
        %5286 = vmatpush1.bf16.msra.mxu0 %v5230
        %5287 = vmatprep.subr.bf16.mxu0 0
        %5288 = vmatpush1.bf16.msra.mxu0 %v5231
        %5289 = vmatprep.subr.bf16.mxu0 0
        %5290 = vmatpush1.bf16.msra.mxu0 %v5232
        %5291 = vmatprep.subr.bf16.mxu0 0
        %5292 = vmatpush1.bf16.msra.mxu0 %v5233
        %5293 = vmatprep.subr.bf16.mxu0 0
        %5294 = vmatpush1.bf16.msra.mxu0 %v5234
        %5295 = vmatprep.subr.bf16.mxu0 0
        %5296 = vmatpush1.bf16.msra.mxu0 %v5235
        %5297 = vmatprep.subr.bf16.mxu0 0
        %5298 = vmatpush1.bf16.msra.mxu0 %v5236
        %5299 = vmatprep.subr.bf16.mxu0 0
        %5300 = vmatpush1.bf16.msra.mxu0 %v5237
        %5301 = vmatprep.subr.bf16.mxu0 0
        %5302 = vmatpush1.bf16.msra.mxu0 %v5238
        %5303 = vmatprep.mubr.bf16.mxu0 %v5031
        %5304 = vmatmul.mubr.bf16.gmra.mrb[0].mxu0 %v5030
        %v5305 = vpop.f32.mrb[0].mxu0
        %v5306 = vadd.f32 0.0, %v5305
        %v5307 = vpop.f32.mrb[0].mxu0
        %v5308 = vpop.f32.mrb[0].mxu0
        %v5309 = vadd.f32 0.0, %v5308
        %v5310 = vpop.f32.mrb[0].mxu0
        %5311 = vmatprep.mubr.bf16.mxu0 %v5034
        %5312 = vmatmul.mubr.bf16.gmra.mrb[0].mxu0 %v5033
        %v5313 = vpop.f32.mrb[0].mxu0
        %v5314 = vadd.f32 0.0, %v5313
        %v5315 = vpop.f32.mrb[0].mxu0
        %v5316 = vpop.f32.mrb[0].mxu0
        %v5317 = vadd.f32 0.0, %v5316
        %v5318 = vpop.f32.mrb[0].mxu0
        %5319 = vmatprep.mubr.bf16.mxu0 %v5037
        %5320 = vmatmul.mubr.bf16.gmra.mrb[0].mxu0 %v5036
        %v5321 = vpop.f32.mrb[0].mxu0
        %v5322 = vadd.f32 0.0, %v5321
        %v5323 = vpop.f32.mrb[0].mxu0
        %v5324 = vpop.f32.mrb[0].mxu0
        %v5325 = vadd.f32 0.0, %v5324
        %v5326 = vpop.f32.mrb[0].mxu0
        %5327 = vmatprep.mubr.bf16.mxu0 %v5040
        %5328 = vmatmul.mubr.bf16.gmra.mrb[0].mxu0 %v5039
        %v5329 = vpop.f32.mrb[0].mxu0
        %v5330 = vadd.f32 0.0, %v5329
        %v5331 = vpop.f32.mrb[0].mxu0
        %v5332 = vpop.f32.mrb[0].mxu0
        %v5333 = vadd.f32 0.0, %v5332
        %v5334 = vpop.f32.mrb[0].mxu0
        %5335 = vmatprep.mubr.bf16.mxu0 %v5043
        %5336 = vmatmul.mubr.bf16.gmra.mrb[0].mxu0 %v5042
        %v5337 = vpop.f32.mrb[0].mxu0
        %v5338 = vadd.f32 0.0, %v5337
        %v5339 = vpop.f32.mrb[0].mxu0
        %v5340 = vpop.f32.mrb[0].mxu0
        %v5341 = vadd.f32 0.0, %v5340
        %v5342 = vpop.f32.mrb[0].mxu0
        %5343 = vmatprep.mubr.bf16.mxu0 %v5046
        %5344 = vmatmul.mubr.bf16.gmra.mrb[0].mxu0 %v5045
        %v5345 = vpop.f32.mrb[0].mxu0
        %v5346 = vadd.f32 0.0, %v5345
        %v5347 = vpop.f32.mrb[0].mxu0
        %v5348 = vpop.f32.mrb[0].mxu0
        %v5349 = vadd.f32 0.0, %v5348
        %v5350 = vpop.f32.mrb[0].mxu0
        %5351 = vmatprep.mubr.bf16.mxu0 %v5049
        %5352 = vmatmul.mubr.bf16.gmra.mrb[0].mxu0 %v5048
        %v5353 = vpop.f32.mrb[0].mxu0
        %v5354 = vadd.f32 0.0, %v5353
        %v5355 = vpop.f32.mrb[0].mxu0
        %v5356 = vpop.f32.mrb[0].mxu0
        %v5357 = vadd.f32 0.0, %v5356
        %v5358 = vpop.f32.mrb[0].mxu0
        %5359 = vmatprep.mubr.bf16.mxu0 %v5052
        %5360 = vmatmul.mubr.bf16.gmra.mrb[0].mxu0 %v5051
        %v5361 = vpop.f32.mrb[0].mxu0
        %v5362 = vadd.f32 0.0, %v5361
        %v5363 = vpop.f32.mrb[0].mxu0
        %v5364 = vpop.f32.mrb[0].mxu0
        %v5365 = vadd.f32 0.0, %v5364
        %v5366 = vpop.f32.mrb[0].mxu0
        %5367 = vmatprep.mubr.bf16.mxu0 %v5055
        %5368 = vmatmul.mubr.bf16.gmra.mrb[0].mxu0 %v5054
        %v5369 = vpop.f32.mrb[0].mxu0
        %v5370 = vadd.f32 0.0, %v5369
        %v5371 = vpop.f32.mrb[0].mxu0
        %v5372 = vpop.f32.mrb[0].mxu0
        %v5373 = vadd.f32 0.0, %v5372
        %v5374 = vpop.f32.mrb[0].mxu0
        %5375 = vmatprep.mubr.bf16.mxu0 %v5058
        %5376 = vmatmul.mubr.bf16.gmra.mrb[0].mxu0 %v5057
        %v5377 = vpop.f32.mrb[0].mxu0
        %v5378 = vadd.f32 0.0, %v5377
        %v5379 = vpop.f32.mrb[0].mxu0
        %v5380 = vpop.f32.mrb[0].mxu0
        %v5381 = vadd.f32 0.0, %v5380
        %v5382 = vpop.f32.mrb[0].mxu0
        %5383 = vmatprep.mubr.bf16.mxu0 %v5061
        %5384 = vmatmul.mubr.bf16.gmra.mrb[0].mxu0 %v5060
        %v5385 = vpop.f32.mrb[0].mxu0
        %v5386 = vadd.f32 0.0, %v5385
        %v5387 = vpop.f32.mrb[0].mxu0
        %v5388 = vpop.f32.mrb[0].mxu0
        %v5389 = vadd.f32 0.0, %v5388
        %v5390 = vpop.f32.mrb[0].mxu0
        %5391 = vmatprep.mubr.bf16.mxu0 %v5064
        %5392 = vmatmul.mubr.bf16.gmra.mrb[0].mxu0 %v5063
        %v5393 = vpop.f32.mrb[0].mxu0
        %v5394 = vadd.f32 0.0, %v5393
        %v5395 = vpop.f32.mrb[0].mxu0
        %v5396 = vpop.f32.mrb[0].mxu0
        %v5397 = vadd.f32 0.0, %v5396
        %v5398 = vpop.f32.mrb[0].mxu0
        %5399 = vmatprep.mubr.bf16.mxu0 %v5067
        %5400 = vmatmul.mubr.bf16.gmra.mrb[0].mxu0 %v5066
        %v5401 = vpop.f32.mrb[0].mxu0
        %v5402 = vadd.f32 0.0, %v5401
        %v5403 = vpop.f32.mrb[0].mxu0
        %v5404 = vpop.f32.mrb[0].mxu0
        %v5405 = vadd.f32 0.0, %v5404
        %v5406 = vpop.f32.mrb[0].mxu0
        %5407 = vmatprep.mubr.bf16.mxu0 %v5070
        %5408 = vmatmul.mubr.bf16.gmra.mrb[0].mxu0 %v5069
        %v5409 = vpop.f32.mrb[0].mxu0
        %v5410 = vadd.f32 0.0, %v5409
        %v5411 = vpop.f32.mrb[0].mxu0
        %v5412 = vpop.f32.mrb[0].mxu0
        %v5413 = vadd.f32 0.0, %v5412
        %v5414 = vpop.f32.mrb[0].mxu0
        %5415 = vmatprep.mubr.bf16.mxu0 %v5073
        %5416 = vmatmul.mubr.bf16.gmra.mrb[0].mxu0 %v5072
        %v5417 = vpop.f32.mrb[0].mxu0
        %v5418 = vadd.f32 0.0, %v5417
        %v5419 = vpop.f32.mrb[0].mxu0
        %v5420 = vpop.f32.mrb[0].mxu0
        %v5421 = vadd.f32 0.0, %v5420
        %v5422 = vpop.f32.mrb[0].mxu0
        %5423 = vmatprep.mubr.bf16.mxu0 %v5076
        %5424 = vmatmul.mubr.bf16.gmra.mrb[0].mxu0 %v5075
        %v5425 = vpop.f32.mrb[0].mxu0
        %v5426 = vadd.f32 0.0, %v5425
        %v5427 = vpop.f32.mrb[0].mxu0
        %v5428 = vpop.f32.mrb[0].mxu0
        %v5429 = vadd.f32 0.0, %v5428
        %v5430 = vpop.f32.mrb[0].mxu0
        %5431 = vdwg.mxu0
        %5432 = vmatprep.subr.bf16.mxu0 0
        %5433 = vmatpush1.bf16.msra.mxu0 %v5239
        %5434 = vmatprep.subr.bf16.mxu0 0
        %5435 = vmatpush1.bf16.msra.mxu0 %v5240
        %5436 = vmatprep.subr.bf16.mxu0 0
        %5437 = vmatpush1.bf16.msra.mxu0 %v5241
        %5438 = vmatprep.subr.bf16.mxu0 0
        %5439 = vmatpush1.bf16.msra.mxu0 %v5242
        %5440 = vmatprep.subr.bf16.mxu0 0
        %5441 = vmatpush1.bf16.msra.mxu0 %v5243
        %5442 = vmatprep.subr.bf16.mxu0 0
        %5443 = vmatpush1.bf16.msra.mxu0 %v5244
        %5444 = vmatprep.subr.bf16.mxu0 0
        %5445 = vmatpush1.bf16.msra.mxu0 %v5245
        %5446 = vmatprep.subr.bf16.mxu0 0
        %5447 = vmatpush1.bf16.msra.mxu0 %v5246
        %5448 = vmatprep.subr.bf16.mxu0 0
        %5449 = vmatpush1.bf16.msra.mxu0 0
        %5450 = vmatprep.subr.bf16.mxu0 0
        %5451 = vmatpush1.bf16.msra.mxu0 0
        %5452 = vmatprep.subr.bf16.mxu0 0
        %5453 = vmatpush1.bf16.msra.mxu0 0
        %5454 = vmatprep.subr.bf16.mxu0 0
        %5455 = vmatpush1.bf16.msra.mxu0 0
        %5456 = vmatprep.subr.bf16.mxu0 0
        %5457 = vmatpush1.bf16.msra.mxu0 0
        %5458 = vmatprep.subr.bf16.mxu0 0
        %5459 = vmatpush1.bf16.msra.mxu0 0
        %5460 = vmatprep.subr.bf16.mxu0 0
        %5461 = vmatpush1.bf16.msra.mxu0 0
        %5462 = vmatprep.subr.bf16.mxu0 0
        %5463 = vmatpush1.bf16.msra.mxu0 0
        %5464 = vmatprep.mubr.bf16.mxu0 0
        %5465 = vmatmul.mubr.bf16.gmra.mrb[0].mxu0 %v5032
        %v5466 = vpop.f32.mrb[0].mxu0
        %v5467 = vadd.f32 %v5306, %v5466
        %v5468 = vpop.f32.mrb[0].mxu0
        %v5469 = vpop.f32.mrb[0].mxu0
        %v5470 = vadd.f32 %v5309, %v5469
        %v5471 = vpop.f32.mrb[0].mxu0
        %5472 = vmatprep.mubr.bf16.mxu0 0
        %5473 = vmatmul.mubr.bf16.gmra.mrb[0].mxu0 %v5035
        %v5474 = vpop.f32.mrb[0].mxu0
        %v5475 = vadd.f32 %v5314, %v5474
        %v5476 = vpop.f32.mrb[0].mxu0
        %v5477 = vpop.f32.mrb[0].mxu0
        %v5478 = vadd.f32 %v5317, %v5477
        %v5479 = vpop.f32.mrb[0].mxu0
        %5480 = vmatprep.mubr.bf16.mxu0 0
        %5481 = vmatmul.mubr.bf16.gmra.mrb[0].mxu0 %v5038
        %v5482 = vpop.f32.mrb[0].mxu0
        %v5483 = vadd.f32 %v5322, %v5482
        %v5484 = vpop.f32.mrb[0].mxu0
        %v5485 = vpop.f32.mrb[0].mxu0
        %v5486 = vadd.f32 %v5325, %v5485
        %v5487 = vpop.f32.mrb[0].mxu0
        %5488 = vmatprep.mubr.bf16.mxu0 0
        %5489 = vmatmul.mubr.bf16.gmra.mrb[0].mxu0 %v5041
        %v5490 = vpop.f32.mrb[0].mxu0
        %v5491 = vadd.f32 %v5330, %v5490
        %v5492 = vpop.f32.mrb[0].mxu0
        %v5493 = vpop.f32.mrb[0].mxu0
        %v5494 = vadd.f32 %v5333, %v5493
        %v5495 = vpop.f32.mrb[0].mxu0
        %5496 = vmatprep.mubr.bf16.mxu0 0
        %5497 = vmatmul.mubr.bf16.gmra.mrb[0].mxu0 %v5044
        %v5498 = vpop.f32.mrb[0].mxu0
        %v5499 = vadd.f32 %v5338, %v5498
        %v5500 = vpop.f32.mrb[0].mxu0
        %v5501 = vpop.f32.mrb[0].mxu0
        %v5502 = vadd.f32 %v5341, %v5501
        %v5503 = vpop.f32.mrb[0].mxu0
        %5504 = vmatprep.mubr.bf16.mxu0 0
        %5505 = vmatmul.mubr.bf16.gmra.mrb[0].mxu0 %v5047
        %v5506 = vpop.f32.mrb[0].mxu0
        %v5507 = vadd.f32 %v5346, %v5506
        %v5508 = vpop.f32.mrb[0].mxu0
        %v5509 = vpop.f32.mrb[0].mxu0
        %v5510 = vadd.f32 %v5349, %v5509
        %v5511 = vpop.f32.mrb[0].mxu0
        %5512 = vmatprep.mubr.bf16.mxu0 0
        %5513 = vmatmul.mubr.bf16.gmra.mrb[0].mxu0 %v5050
        %v5514 = vpop.f32.mrb[0].mxu0
        %v5515 = vadd.f32 %v5354, %v5514
        %v5516 = vpop.f32.mrb[0].mxu0
        %v5517 = vpop.f32.mrb[0].mxu0
        %v5518 = vadd.f32 %v5357, %v5517
        %v5519 = vpop.f32.mrb[0].mxu0
        %5520 = vmatprep.mubr.bf16.mxu0 0
        %5521 = vmatmul.mubr.bf16.gmra.mrb[0].mxu0 %v5053
        %v5522 = vpop.f32.mrb[0].mxu0
        %v5523 = vadd.f32 %v5362, %v5522
        %v5524 = vpop.f32.mrb[0].mxu0
        %v5525 = vpop.f32.mrb[0].mxu0
        %v5526 = vadd.f32 %v5365, %v5525
        %v5527 = vpop.f32.mrb[0].mxu0
        %5528 = vmatprep.mubr.bf16.mxu0 0
        %5529 = vmatmul.mubr.bf16.gmra.mrb[0].mxu0 %v5056
        %v5530 = vpop.f32.mrb[0].mxu0
        %v5531 = vadd.f32 %v5370, %v5530
        %v5532 = vpop.f32.mrb[0].mxu0
        %v5533 = vpop.f32.mrb[0].mxu0
        %v5534 = vadd.f32 %v5373, %v5533
        %v5535 = vpop.f32.mrb[0].mxu0
        %5536 = vmatprep.mubr.bf16.mxu0 0
        %5537 = vmatmul.mubr.bf16.gmra.mrb[0].mxu0 %v5059
        %v5538 = vpop.f32.mrb[0].mxu0
        %v5539 = vadd.f32 %v5378, %v5538
        %v5540 = vpop.f32.mrb[0].mxu0
        %v5541 = vpop.f32.mrb[0].mxu0
        %v5542 = vadd.f32 %v5381, %v5541
        %v5543 = vpop.f32.mrb[0].mxu0
        %5544 = vmatprep.mubr.bf16.mxu0 0
        %5545 = vmatmul.mubr.bf16.gmra.mrb[0].mxu0 %v5062
        %v5546 = vpop.f32.mrb[0].mxu0
        %v5547 = vadd.f32 %v5386, %v5546
        %v5548 = vpop.f32.mrb[0].mxu0
        %v5549 = vpop.f32.mrb[0].mxu0
        %v5550 = vadd.f32 %v5389, %v5549
        %v5551 = vpop.f32.mrb[0].mxu0
        %5552 = vmatprep.mubr.bf16.mxu0 0
        %5553 = vmatmul.mubr.bf16.gmra.mrb[0].mxu0 %v5065
        %v5554 = vpop.f32.mrb[0].mxu0
        %v5555 = vadd.f32 %v5394, %v5554
        %v5556 = vpop.f32.mrb[0].mxu0
        %v5557 = vpop.f32.mrb[0].mxu0
        %v5558 = vadd.f32 %v5397, %v5557
        %v5559 = vpop.f32.mrb[0].mxu0
        %5560 = vmatprep.mubr.bf16.mxu0 0
        %5561 = vmatmul.mubr.bf16.gmra.mrb[0].mxu0 %v5068
        %v5562 = vpop.f32.mrb[0].mxu0
        %v5563 = vadd.f32 %v5402, %v5562
        %v5564 = vpop.f32.mrb[0].mxu0
        %v5565 = vpop.f32.mrb[0].mxu0
        %v5566 = vadd.f32 %v5405, %v5565
        %v5567 = vpop.f32.mrb[0].mxu0
        %5568 = vmatprep.mubr.bf16.mxu0 0
        %5569 = vmatmul.mubr.bf16.gmra.mrb[0].mxu0 %v5071
        %v5570 = vpop.f32.mrb[0].mxu0
        %v5571 = vadd.f32 %v5410, %v5570
        %v5572 = vpop.f32.mrb[0].mxu0
        %v5573 = vpop.f32.mrb[0].mxu0
        %v5574 = vadd.f32 %v5413, %v5573
        %v5575 = vpop.f32.mrb[0].mxu0
        %5576 = vmatprep.mubr.bf16.mxu0 0
        %5577 = vmatmul.mubr.bf16.gmra.mrb[0].mxu0 %v5074
        %v5578 = vpop.f32.mrb[0].mxu0
        %v5579 = vadd.f32 %v5418, %v5578
        %v5580 = vpop.f32.mrb[0].mxu0
        %v5581 = vpop.f32.mrb[0].mxu0
        %v5582 = vadd.f32 %v5421, %v5581
        %v5583 = vpop.f32.mrb[0].mxu0
        %5584 = vmatprep.mubr.bf16.mxu0 0
        %5585 = vmatmul.mubr.bf16.gmra.mrb[0].mxu0 %v5077
        %v5586 = vpop.f32.mrb[0].mxu0
        %v5587 = vadd.f32 %v5426, %v5586
        %v5588 = vpop.f32.mrb[0].mxu0
        %v5589 = vpop.f32.mrb[0].mxu0
        %v5590 = vadd.f32 %v5429, %v5589
        %v5591 = vpop.f32.mrb[0].mxu0
        %5592 = vdwg.mxu0
        %v5593 = vadd.f32 %v4998, %v5467
        %v5594 = vadd.f32 %v4999, %v5470
        %v5595 = vadd.f32 %v5000, %v5475
        %v5596 = vadd.f32 %v5001, %v5478
        %v5597 = vadd.f32 %v5002, %v5483
        %v5598 = vadd.f32 %v5003, %v5486
        %v5599 = vadd.f32 %v5004, %v5491
        %v5600 = vadd.f32 %v5005, %v5494
        %v5601 = vadd.f32 %v5006, %v5499
        %v5602 = vadd.f32 %v5007, %v5502
        %v5603 = vadd.f32 %v5008, %v5507
        %v5604 = vadd.f32 %v5009, %v5510
        %v5605 = vadd.f32 %v5010, %v5515
        %v5606 = vadd.f32 %v5011, %v5518
        %v5607 = vadd.f32 %v5012, %v5523
        %v5608 = vadd.f32 %v5013, %v5526
        %v5609 = vadd.f32 %v5014, %v5531
        %v5610 = vadd.f32 %v5015, %v5534
        %v5611 = vadd.f32 %v5016, %v5539
        %v5612 = vadd.f32 %v5017, %v5542
        %v5613 = vadd.f32 %v5018, %v5547
        %v5614 = vadd.f32 %v5019, %v5550
        %v5615 = vadd.f32 %v5020, %v5555
        %v5616 = vadd.f32 %v5021, %v5558
        %v5617 = vadd.f32 %v5022, %v5563
        %v5618 = vadd.f32 %v5023, %v5566
        %v5619 = vadd.f32 %v5024, %v5571
        %v5620 = vadd.f32 %v5025, %v5574
        %v5621 = vadd.f32 %v5026, %v5579
        %v5622 = vadd.f32 %v5027, %v5582
        %v5623 = vadd.f32 %v5028, %v5587
        %v5624 = vadd.f32 %v5029, %v5590
        %5625 = vst [vmem:[#allocation7] sm:$0xff] %v5593
        %5626 = vst [vmem:[#allocation7 + $0x8] sm:$0xff] %v5594
        %5627 = vst [vmem:[#allocation7 + $0x10] sm:$0xff] %v5595
        %5628 = vst [vmem:[#allocation7 + $0x18] sm:$0xff] %v5596
        %5629 = vst [vmem:[#allocation7 + $0x20] sm:$0xff] %v5597
        %5630 = vst [vmem:[#allocation7 + $0x28] sm:$0xff] %v5598
        %5631 = vst [vmem:[#allocation7 + $0x30] sm:$0xff] %v5599
        %5632 = vst [vmem:[#allocation7 + $0x38] sm:$0xff] %v5600
        %5633 = vst [vmem:[#allocation7 + $0x40] sm:$0xff] %v5601
        %5634 = vst [vmem:[#allocation7 + $0x48] sm:$0xff] %v5602
        %5635 = vst [vmem:[#allocation7 + $0x50] sm:$0xff] %v5603
        %5636 = vst [vmem:[#allocation7 + $0x58] sm:$0xff] %v5604
        %5637 = vst [vmem:[#allocation7 + $0x60] sm:$0xff] %v5605
        %5638 = vst [vmem:[#allocation7 + $0x68] sm:$0xff] %v5606
        %5639 = vst [vmem:[#allocation7 + $0x70] sm:$0xff] %v5607
        %5640 = vst [vmem:[#allocation7 + $0x78] sm:$0xff] %v5608
        %5641 = vst [vmem:[#allocation7 + $0x80] sm:$0xff] %v5609
        %5642 = vst [vmem:[#allocation7 + $0x88] sm:$0xff] %v5610
        %5643 = vst [vmem:[#allocation7 + $0x90] sm:$0xff] %v5611
        %5644 = vst [vmem:[#allocation7 + $0x98] sm:$0xff] %v5612
        %5645 = vst [vmem:[#allocation7 + $0xa0] sm:$0xff] %v5613
        %5646 = vst [vmem:[#allocation7 + $0xa8] sm:$0xff] %v5614
        %5647 = vst [vmem:[#allocation7 + $0xb0] sm:$0xff] %v5615
        %5648 = vst [vmem:[#allocation7 + $0xb8] sm:$0xff] %v5616
        %5649 = vst [vmem:[#allocation7 + $0xc0] sm:$0xff] %v5617
        %5650 = vst [vmem:[#allocation7 + $0xc8] sm:$0xff] %v5618
        %5651 = vst [vmem:[#allocation7 + $0xd0] sm:$0xff] %v5619
        %5652 = vst [vmem:[#allocation7 + $0xd8] sm:$0xff] %v5620
        %5653 = vst [vmem:[#allocation7 + $0xe0] sm:$0xff] %v5621
        %5654 = vst [vmem:[#allocation7 + $0xe8] sm:$0xff] %v5622
        %5655 = vst [vmem:[#allocation7 + $0xf0] sm:$0xff] %v5623
        %5656 = vst [vmem:[#allocation7 + $0xf8] sm:$0xff] %v5624
        %v5657 = vld [vmem:[#allocation7] sm:$0xff]
        %v5658 = vld [vmem:[#allocation7 + $0x8] sm:$0xff]
        %v5659 = vld [vmem:[#allocation7 + $0x10] sm:$0xff]
        %v5660 = vld [vmem:[#allocation7 + $0x18] sm:$0xff]
        %v5661 = vld [vmem:[#allocation7 + $0x20] sm:$0xff]
        %v5662 = vld [vmem:[#allocation7 + $0x28] sm:$0xff]
        %v5663 = vld [vmem:[#allocation7 + $0x30] sm:$0xff]
        %v5664 = vld [vmem:[#allocation7 + $0x38] sm:$0xff]
        %v5665 = vld [vmem:[#allocation7 + $0x40] sm:$0xff]
        %v5666 = vld [vmem:[#allocation7 + $0x48] sm:$0xff]
        %v5667 = vld [vmem:[#allocation7 + $0x50] sm:$0xff]
        %v5668 = vld [vmem:[#allocation7 + $0x58] sm:$0xff]
        %v5669 = vld [vmem:[#allocation7 + $0x60] sm:$0xff]
        %v5670 = vld [vmem:[#allocation7 + $0x68] sm:$0xff]
        %v5671 = vld [vmem:[#allocation7 + $0x70] sm:$0xff]
        %v5672 = vld [vmem:[#allocation7 + $0x78] sm:$0xff]
        %v5673 = vld [vmem:[#allocation7 + $0x80] sm:$0xff]
        %v5674 = vld [vmem:[#allocation7 + $0x88] sm:$0xff]
        %v5675 = vld [vmem:[#allocation7 + $0x90] sm:$0xff]
        %v5676 = vld [vmem:[#allocation7 + $0x98] sm:$0xff]
        %v5677 = vld [vmem:[#allocation7 + $0xa0] sm:$0xff]
        %v5678 = vld [vmem:[#allocation7 + $0xa8] sm:$0xff]
        %v5679 = vld [vmem:[#allocation7 + $0xb0] sm:$0xff]
        %v5680 = vld [vmem:[#allocation7 + $0xb8] sm:$0xff]
        %v5681 = vld [vmem:[#allocation7 + $0xc0] sm:$0xff]
        %v5682 = vld [vmem:[#allocation7 + $0xc8] sm:$0xff]
        %v5683 = vld [vmem:[#allocation7 + $0xd0] sm:$0xff]
        %v5684 = vld [vmem:[#allocation7 + $0xd8] sm:$0xff]
        %v5685 = vld [vmem:[#allocation7 + $0xe0] sm:$0xff]
        %v5686 = vld [vmem:[#allocation7 + $0xe8] sm:$0xff]
        %v5687 = vld [vmem:[#allocation7 + $0xf0] sm:$0xff]
        %v5688 = vld [vmem:[#allocation7 + $0xf8] sm:$0xff]
        %v5689 = vld [vmem:[%s4] sm:$0x1]
        %v5691 = vlaneseq
        %v5692 = vshrl.u32 %v5691, 7
        %v5693 = vsub.s32 0, %v5692
        %v5694 = vrot.slane %v5689, %v5693
        %v5696 = vadd.f32 %v5657, %v5694
        %v5697 = vadd.f32 %v5658, %v5694
        %v5698 = vadd.f32 %v5659, %v5694
        %v5699 = vadd.f32 %v5660, %v5694
        %v5700 = vadd.f32 %v5661, %v5694
        %v5701 = vadd.f32 %v5662, %v5694
        %v5702 = vadd.f32 %v5663, %v5694
        %v5703 = vadd.f32 %v5664, %v5694
        %v5704 = vadd.f32 %v5665, %v5694
        %v5705 = vadd.f32 %v5666, %v5694
        %v5706 = vadd.f32 %v5667, %v5694
        %v5707 = vadd.f32 %v5668, %v5694
        %v5708 = vadd.f32 %v5669, %v5694
        %v5709 = vadd.f32 %v5670, %v5694
        %v5710 = vadd.f32 %v5671, %v5694
        %v5711 = vadd.f32 %v5672, %v5694
        %v5712 = vadd.f32 %v5673, %v5694
        %v5713 = vadd.f32 %v5674, %v5694
        %v5714 = vadd.f32 %v5675, %v5694
        %v5715 = vadd.f32 %v5676, %v5694
        %v5716 = vadd.f32 %v5677, %v5694
        %v5717 = vadd.f32 %v5678, %v5694
        %v5718 = vadd.f32 %v5679, %v5694
        %v5719 = vadd.f32 %v5680, %v5694
        %v5720 = vadd.f32 %v5681, %v5694
        %v5721 = vadd.f32 %v5682, %v5694
        %v5722 = vadd.f32 %v5683, %v5694
        %v5723 = vadd.f32 %v5684, %v5694
        %v5724 = vadd.f32 %v5685, %v5694
        %v5725 = vadd.f32 %v5686, %v5694
        %v5726 = vadd.f32 %v5687, %v5694
        %v5727 = vadd.f32 %v5688, %v5694
        %v5728 = vld [vmem:[%s1452 + $0x8] sm:$0xff]
        %v5729 = vld [vmem:[%s1452 + $0x20] sm:$0xff]
        %v5730 = vld [vmem:[%s1452 + $0x38] sm:$0xff]
        %v5731 = vld [vmem:[%s1452 + $0x50] sm:$0xff]
        %v5732 = vld [vmem:[%s1452 + $0x68] sm:$0xff]
        %v5733 = vld [vmem:[%s1452 + $0x80] sm:$0xff]
        %v5734 = vld [vmem:[%s1452 + $0x98] sm:$0xff]
        %v5735 = vld [vmem:[%s1452 + $0xb0] sm:$0xff]
        %v5736 = vld [vmem:[%s1452 + $0xc8] sm:$0xff]
        %v5737 = vld [vmem:[%s1452 + $0xe0] sm:$0xff]
        %v5738 = vld [vmem:[%s1452 + $0xf8] sm:$0xff]
        %v5739 = vld [vmem:[%s1452 + $0x110] sm:$0xff]
        %v5740 = vld [vmem:[%s1452 + $0x128] sm:$0xff]
        %v5741 = vld [vmem:[%s1452 + $0x140] sm:$0xff]
        %v5742 = vld [vmem:[%s1452 + $0x158] sm:$0xff]
        %v5743 = vld [vmem:[%s1452 + $0x170] sm:$0xff]
        %v5744 = vld [vmem:[%s1452 + $0x188] sm:$0xff]
        %v5745 = vld [vmem:[%s1452 + $0x1a0] sm:$0xff]
        %v5746 = vld [vmem:[%s1452 + $0x1b8] sm:$0xff]
        %v5747 = vld [vmem:[%s1452 + $0x1d0] sm:$0xff]
        %v5748 = vld [vmem:[%s1452 + $0x1e8] sm:$0xff]
        %v5749 = vld [vmem:[%s1452 + $0x200] sm:$0xff]
        %v5750 = vld [vmem:[%s1452 + $0x218] sm:$0xff]
        %v5751 = vld [vmem:[%s1452 + $0x230] sm:$0xff]
        %v5752 = vld [vmem:[%s1452 + $0x248] sm:$0xff]
        %v5753 = vld [vmem:[%s1452 + $0x260] sm:$0xff]
        %v5754 = vld [vmem:[%s1452 + $0x278] sm:$0xff]
        %v5755 = vld [vmem:[%s1452 + $0x290] sm:$0xff]
        %v5756 = vld [vmem:[%s1452 + $0x2a8] sm:$0xff]
        %v5757 = vld [vmem:[%s1452 + $0x2c0] sm:$0xff]
        %v5758 = vld [vmem:[%s1452 + $0x2d8] sm:$0xff]
        %v5759 = vld [vmem:[%s1452 + $0x2f0] sm:$0xff]
        %v5760 = vpack.c.bf16 %v5729, %v5728
        %v5761 = vpack.c.bf16 %v5731, %v5730
        %v5762 = vpack.c.bf16 %v5733, %v5732
        %v5763 = vpack.c.bf16 %v5735, %v5734
        %v5764 = vpack.c.bf16 %v5737, %v5736
        %v5765 = vpack.c.bf16 %v5739, %v5738
        %v5766 = vpack.c.bf16 %v5741, %v5740
        %v5767 = vpack.c.bf16 %v5743, %v5742
        %v5768 = vpack.c.bf16 %v5745, %v5744
        %v5769 = vpack.c.bf16 %v5747, %v5746
        %v5770 = vpack.c.bf16 %v5749, %v5748
        %v5771 = vpack.c.bf16 %v5751, %v5750
        %v5772 = vpack.c.bf16 %v5753, %v5752
        %v5773 = vpack.c.bf16 %v5755, %v5754
        %v5774 = vpack.c.bf16 %v5757, %v5756
        %v5775 = vpack.c.bf16 %v5759, %v5758
        %v5776 = vld [vmem:[#allocation14] sm:$0xf]
        %v5777 = vld [vmem:[#allocation14 + $0x4] sm:$0xf]
        %v5778 = vld [vmem:[#allocation14 + $0x8] sm:$0xf]
        %v5779 = vld [vmem:[#allocation14 + $0xc] sm:$0xf]
        %v5780 = vld [vmem:[#allocation14 + $0x10] sm:$0xf]
        %v5781 = vld [vmem:[#allocation14 + $0x14] sm:$0xf]
        %v5782 = vld [vmem:[#allocation14 + $0x18] sm:$0xf]
        %v5783 = vld [vmem:[#allocation14 + $0x1c] sm:$0xf]
        %v5784 = vld [vmem:[#allocation14 + $0x20] sm:$0xf]
        %v5785 = vld [vmem:[#allocation14 + $0x24] sm:$0xf]
        %v5786 = vld [vmem:[#allocation14 + $0x28] sm:$0xf]
        %v5787 = vld [vmem:[#allocation14 + $0x2c] sm:$0xf]
        %v5788 = vld [vmem:[#allocation14 + $0x30] sm:$0xf]
        %v5789 = vld [vmem:[#allocation14 + $0x34] sm:$0xf]
        %v5790 = vld [vmem:[#allocation14 + $0x38] sm:$0xf]
        %v5791 = vld [vmem:[#allocation14 + $0x3c] sm:$0xf]
        %v5792 = vld [vmem:[%s6] sm:$0x1]
        %v5794 = vlaneseq
        %v5795 = vshrl.u32 %v5794, 7
        %v5796 = vsub.s32 0, %v5795
        %v5797 = vrot.slane %v5792, %v5796
        %v5815 = vunpack.c.l.b16 %v5776
        %v5816 = vunpack.c.l.b16 %v5777
        %v5817 = vunpack.c.l.b16 %v5778
        %v5818 = vunpack.c.l.b16 %v5779
        %v5819 = vunpack.c.l.b16 %v5780
        %v5820 = vunpack.c.l.b16 %v5781
        %v5821 = vunpack.c.l.b16 %v5782
        %v5822 = vunpack.c.l.b16 %v5783
        %v5823 = vunpack.c.l.b16 %v5784
        %v5824 = vunpack.c.l.b16 %v5785
        %v5825 = vunpack.c.l.b16 %v5786
        %v5826 = vunpack.c.l.b16 %v5787
        %v5827 = vunpack.c.l.b16 %v5788
        %v5828 = vunpack.c.l.b16 %v5789
        %v5829 = vunpack.c.l.b16 %v5790
        %v5830 = vunpack.c.l.b16 %v5791
        %v5831 = vpack.c.b16 %v5816, %v5815
        %v5832 = vpack.c.b16 %v5818, %v5817
        %v5833 = vpack.c.b16 %v5820, %v5819
        %v5834 = vpack.c.b16 %v5822, %v5821
        %v5835 = vpack.c.b16 %v5824, %v5823
        %v5836 = vpack.c.b16 %v5826, %v5825
        %v5837 = vpack.c.b16 %v5828, %v5827
        %v5838 = vpack.c.b16 %v5830, %v5829
        %5847 = vmatprep.subr.bf16.mxu0 0
        %5848 = vmatpush1.bf16.msra.mxu0 %v5831
        %5849 = vmatprep.subr.bf16.mxu0 0
        %5850 = vmatpush1.bf16.msra.mxu0 %v5832
        %5851 = vmatprep.subr.bf16.mxu0 0
        %5852 = vmatpush1.bf16.msra.mxu0 %v5833
        %5853 = vmatprep.subr.bf16.mxu0 0
        %5854 = vmatpush1.bf16.msra.mxu0 %v5834
        %5855 = vmatprep.subr.bf16.mxu0 0
        %5856 = vmatpush1.bf16.msra.mxu0 %v5835
        %5857 = vmatprep.subr.bf16.mxu0 0
        %5858 = vmatpush1.bf16.msra.mxu0 %v5836
        %5859 = vmatprep.subr.bf16.mxu0 0
        %5860 = vmatpush1.bf16.msra.mxu0 %v5837
        %5861 = vmatprep.subr.bf16.mxu0 0
        %5862 = vmatpush1.bf16.msra.mxu0 %v5838
        %5863 = vmatprep.subr.bf16.mxu0 0
        %5864 = vmatpush1.bf16.msra.mxu0 0
        %5865 = vmatprep.subr.bf16.mxu0 0
        %5866 = vmatpush1.bf16.msra.mxu0 0
        %5867 = vmatprep.subr.bf16.mxu0 0
        %5868 = vmatpush1.bf16.msra.mxu0 0
        %5869 = vmatprep.subr.bf16.mxu0 0
        %5870 = vmatpush1.bf16.msra.mxu0 0
        %5871 = vmatprep.subr.bf16.mxu0 0
        %5872 = vmatpush1.bf16.msra.mxu0 0
        %5873 = vmatprep.subr.bf16.mxu0 0
        %5874 = vmatpush1.bf16.msra.mxu0 0
        %5875 = vmatprep.subr.bf16.mxu0 0
        %5876 = vmatpush1.bf16.msra.mxu0 0
        %5877 = vmatprep.subr.bf16.mxu0 0
        %5878 = vmatpush1.bf16.msra.mxu0 0
        %5879 = vmatprep.mubr.bf16.mxu0 0
        %5880 = vmatmul.mubr.bf16.gmra.mrb[0].mxu0 %v5760
        %v5881 = vpop.f32.mrb[0].mxu0
        %v5882 = vadd.f32 %v5797, %v5881
        %v5883 = vpop.f32.mrb[0].mxu0
        %v5884 = vpop.f32.mrb[0].mxu0
        %v5885 = vadd.f32 %v5797, %v5884
        %v5886 = vpop.f32.mrb[0].mxu0
        %5887 = vmatprep.mubr.bf16.mxu0 0
        %5888 = vmatmul.mubr.bf16.gmra.mrb[0].mxu0 %v5761
        %v5889 = vpop.f32.mrb[0].mxu0
        %v5890 = vadd.f32 %v5797, %v5889
        %v5891 = vpop.f32.mrb[0].mxu0
        %v5892 = vpop.f32.mrb[0].mxu0
        %v5893 = vadd.f32 %v5797, %v5892
        %v5894 = vpop.f32.mrb[0].mxu0
        %5895 = vmatprep.mubr.bf16.mxu0 0
        %5896 = vmatmul.mubr.bf16.gmra.mrb[0].mxu0 %v5762
        %v5897 = vpop.f32.mrb[0].mxu0
        %v5898 = vadd.f32 %v5797, %v5897
        %v5899 = vpop.f32.mrb[0].mxu0
        %v5900 = vpop.f32.mrb[0].mxu0
        %v5901 = vadd.f32 %v5797, %v5900
        %v5902 = vpop.f32.mrb[0].mxu0
        %5903 = vmatprep.mubr.bf16.mxu0 0
        %5904 = vmatmul.mubr.bf16.gmra.mrb[0].mxu0 %v5763
        %v5905 = vpop.f32.mrb[0].mxu0
        %v5906 = vadd.f32 %v5797, %v5905
        %v5907 = vpop.f32.mrb[0].mxu0
        %v5908 = vpop.f32.mrb[0].mxu0
        %v5909 = vadd.f32 %v5797, %v5908
        %v5910 = vpop.f32.mrb[0].mxu0
        %5911 = vmatprep.mubr.bf16.mxu0 0
        %5912 = vmatmul.mubr.bf16.gmra.mrb[0].mxu0 %v5764
        %v5913 = vpop.f32.mrb[0].mxu0
        %v5914 = vadd.f32 %v5797, %v5913
        %v5915 = vpop.f32.mrb[0].mxu0
        %v5916 = vpop.f32.mrb[0].mxu0
        %v5917 = vadd.f32 %v5797, %v5916
        %v5918 = vpop.f32.mrb[0].mxu0
        %5919 = vmatprep.mubr.bf16.mxu0 0
        %5920 = vmatmul.mubr.bf16.gmra.mrb[0].mxu0 %v5765
        %v5921 = vpop.f32.mrb[0].mxu0
        %v5922 = vadd.f32 %v5797, %v5921
        %v5923 = vpop.f32.mrb[0].mxu0
        %v5924 = vpop.f32.mrb[0].mxu0
        %v5925 = vadd.f32 %v5797, %v5924
        %v5926 = vpop.f32.mrb[0].mxu0
        %5927 = vmatprep.mubr.bf16.mxu0 0
        %5928 = vmatmul.mubr.bf16.gmra.mrb[0].mxu0 %v5766
        %v5929 = vpop.f32.mrb[0].mxu0
        %v5930 = vadd.f32 %v5797, %v5929
        %v5931 = vpop.f32.mrb[0].mxu0
        %v5932 = vpop.f32.mrb[0].mxu0
        %v5933 = vadd.f32 %v5797, %v5932
        %v5934 = vpop.f32.mrb[0].mxu0
        %5935 = vmatprep.mubr.bf16.mxu0 0
        %5936 = vmatmul.mubr.bf16.gmra.mrb[0].mxu0 %v5767
        %v5937 = vpop.f32.mrb[0].mxu0
        %v5938 = vadd.f32 %v5797, %v5937
        %v5939 = vpop.f32.mrb[0].mxu0
        %v5940 = vpop.f32.mrb[0].mxu0
        %v5941 = vadd.f32 %v5797, %v5940
        %v5942 = vpop.f32.mrb[0].mxu0
        %5943 = vmatprep.mubr.bf16.mxu0 0
        %5944 = vmatmul.mubr.bf16.gmra.mrb[0].mxu0 %v5768
        %v5945 = vpop.f32.mrb[0].mxu0
        %v5946 = vadd.f32 %v5797, %v5945
        %v5947 = vpop.f32.mrb[0].mxu0
        %v5948 = vpop.f32.mrb[0].mxu0
        %v5949 = vadd.f32 %v5797, %v5948
        %v5950 = vpop.f32.mrb[0].mxu0
        %5951 = vmatprep.mubr.bf16.mxu0 0
        %5952 = vmatmul.mubr.bf16.gmra.mrb[0].mxu0 %v5769
        %v5953 = vpop.f32.mrb[0].mxu0
        %v5954 = vadd.f32 %v5797, %v5953
        %v5955 = vpop.f32.mrb[0].mxu0
        %v5956 = vpop.f32.mrb[0].mxu0
        %v5957 = vadd.f32 %v5797, %v5956
        %v5958 = vpop.f32.mrb[0].mxu0
        %5959 = vmatprep.mubr.bf16.mxu0 0
        %5960 = vmatmul.mubr.bf16.gmra.mrb[0].mxu0 %v5770
        %v5961 = vpop.f32.mrb[0].mxu0
        %v5962 = vadd.f32 %v5797, %v5961
        %v5963 = vpop.f32.mrb[0].mxu0
        %v5964 = vpop.f32.mrb[0].mxu0
        %v5965 = vadd.f32 %v5797, %v5964
        %v5966 = vpop.f32.mrb[0].mxu0
        %5967 = vmatprep.mubr.bf16.mxu0 0
        %5968 = vmatmul.mubr.bf16.gmra.mrb[0].mxu0 %v5771
        %v5969 = vpop.f32.mrb[0].mxu0
        %v5970 = vadd.f32 %v5797, %v5969
        %v5971 = vpop.f32.mrb[0].mxu0
        %v5972 = vpop.f32.mrb[0].mxu0
        %v5973 = vadd.f32 %v5797, %v5972
        %v5974 = vpop.f32.mrb[0].mxu0
        %5975 = vmatprep.mubr.bf16.mxu0 0
        %5976 = vmatmul.mubr.bf16.gmra.mrb[0].mxu0 %v5772
        %v5977 = vpop.f32.mrb[0].mxu0
        %v5978 = vadd.f32 %v5797, %v5977
        %v5979 = vpop.f32.mrb[0].mxu0
        %v5980 = vpop.f32.mrb[0].mxu0
        %v5981 = vadd.f32 %v5797, %v5980
        %v5982 = vpop.f32.mrb[0].mxu0
        %5983 = vmatprep.mubr.bf16.mxu0 0
        %5984 = vmatmul.mubr.bf16.gmra.mrb[0].mxu0 %v5773
        %v5985 = vpop.f32.mrb[0].mxu0
        %v5986 = vadd.f32 %v5797, %v5985
        %v5987 = vpop.f32.mrb[0].mxu0
        %v5988 = vpop.f32.mrb[0].mxu0
        %v5989 = vadd.f32 %v5797, %v5988
        %v5990 = vpop.f32.mrb[0].mxu0
        %5991 = vmatprep.mubr.bf16.mxu0 0
        %5992 = vmatmul.mubr.bf16.gmra.mrb[0].mxu0 %v5774
        %v5993 = vpop.f32.mrb[0].mxu0
        %v5994 = vadd.f32 %v5797, %v5993
        %v5995 = vpop.f32.mrb[0].mxu0
        %v5996 = vpop.f32.mrb[0].mxu0
        %v5997 = vadd.f32 %v5797, %v5996
        %v5998 = vpop.f32.mrb[0].mxu0
        %5999 = vmatprep.mubr.bf16.mxu0 0
        %6000 = vmatmul.mubr.bf16.gmra.mrb[0].mxu0 %v5775
        %v6001 = vpop.f32.mrb[0].mxu0
        %v6002 = vadd.f32 %v5797, %v6001
        %v6003 = vpop.f32.mrb[0].mxu0
        %v6004 = vpop.f32.mrb[0].mxu0
        %v6005 = vadd.f32 %v5797, %v6004
        %v6006 = vpop.f32.mrb[0].mxu0
        %6007 = vdwg.mxu0
        %v6008 = vadd.f32 %v5696, %v5882
        %v6009 = vadd.f32 %v5697, %v5885
        %v6010 = vadd.f32 %v5698, %v5890
        %v6011 = vadd.f32 %v5699, %v5893
        %v6012 = vadd.f32 %v5700, %v5898
        %v6013 = vadd.f32 %v5701, %v5901
        %v6014 = vadd.f32 %v5702, %v5906
        %v6015 = vadd.f32 %v5703, %v5909
        %v6016 = vadd.f32 %v5704, %v5914
        %v6017 = vadd.f32 %v5705, %v5917
        %v6018 = vadd.f32 %v5706, %v5922
        %v6019 = vadd.f32 %v5707, %v5925
        %v6020 = vadd.f32 %v5708, %v5930
        %v6021 = vadd.f32 %v5709, %v5933
        %v6022 = vadd.f32 %v5710, %v5938
        %v6023 = vadd.f32 %v5711, %v5941
        %v6024 = vadd.f32 %v5712, %v5946
        %v6025 = vadd.f32 %v5713, %v5949
        %v6026 = vadd.f32 %v5714, %v5954
        %v6027 = vadd.f32 %v5715, %v5957
        %v6028 = vadd.f32 %v5716, %v5962
        %v6029 = vadd.f32 %v5717, %v5965
        %v6030 = vadd.f32 %v5718, %v5970
        %v6031 = vadd.f32 %v5719, %v5973
        %v6032 = vadd.f32 %v5720, %v5978
        %v6033 = vadd.f32 %v5721, %v5981
        %v6034 = vadd.f32 %v5722, %v5986
        %v6035 = vadd.f32 %v5723, %v5989
        %v6036 = vadd.f32 %v5724, %v5994
        %v6037 = vadd.f32 %v5725, %v5997
        %v6038 = vadd.f32 %v5726, %v6002
        %v6039 = vadd.f32 %v5727, %v6005
        %v6040 = vmax.f32 %v6008, 0.0
        %v6041 = vmax.f32 %v6009, 0.0
        %v6042 = vmax.f32 %v6010, 0.0
        %v6043 = vmax.f32 %v6011, 0.0
        %v6044 = vmax.f32 %v6012, 0.0
        %v6045 = vmax.f32 %v6013, 0.0
        %v6046 = vmax.f32 %v6014, 0.0
        %v6047 = vmax.f32 %v6015, 0.0
        %v6048 = vmax.f32 %v6016, 0.0
        %v6049 = vmax.f32 %v6017, 0.0
        %v6050 = vmax.f32 %v6018, 0.0
        %v6051 = vmax.f32 %v6019, 0.0
        %v6052 = vmax.f32 %v6020, 0.0
        %v6053 = vmax.f32 %v6021, 0.0
        %v6054 = vmax.f32 %v6022, 0.0
        %v6055 = vmax.f32 %v6023, 0.0
        %v6056 = vmax.f32 %v6024, 0.0
        %v6057 = vmax.f32 %v6025, 0.0
        %v6058 = vmax.f32 %v6026, 0.0
        %v6059 = vmax.f32 %v6027, 0.0
        %v6060 = vmax.f32 %v6028, 0.0
        %v6061 = vmax.f32 %v6029, 0.0
        %v6062 = vmax.f32 %v6030, 0.0
        %v6063 = vmax.f32 %v6031, 0.0
        %v6064 = vmax.f32 %v6032, 0.0
        %v6065 = vmax.f32 %v6033, 0.0
        %v6066 = vmax.f32 %v6034, 0.0
        %v6067 = vmax.f32 %v6035, 0.0
        %v6068 = vmax.f32 %v6036, 0.0
        %v6069 = vmax.f32 %v6037, 0.0
        %v6070 = vmax.f32 %v6038, 0.0
        %v6071 = vmax.f32 %v6039, 0.0
        %6072 = vst [vmem:[%s340] sm:$0xff] %v6040
        %6073 = vst [vmem:[%s340 + $0x8] sm:$0xff] %v6041
        %6074 = vst [vmem:[%s340 + $0x10] sm:$0xff] %v6042
        %6075 = vst [vmem:[%s340 + $0x18] sm:$0xff] %v6043
        %6076 = vst [vmem:[%s340 + $0x20] sm:$0xff] %v6044
        %6077 = vst [vmem:[%s340 + $0x28] sm:$0xff] %v6045
        %6078 = vst [vmem:[%s340 + $0x30] sm:$0xff] %v6046
        %6079 = vst [vmem:[%s340 + $0x38] sm:$0xff] %v6047
        %6080 = vst [vmem:[%s340 + $0x40] sm:$0xff] %v6048
        %6081 = vst [vmem:[%s340 + $0x48] sm:$0xff] %v6049
        %6082 = vst [vmem:[%s340 + $0x50] sm:$0xff] %v6050
        %6083 = vst [vmem:[%s340 + $0x58] sm:$0xff] %v6051
        %6084 = vst [vmem:[%s340 + $0x60] sm:$0xff] %v6052
        %6085 = vst [vmem:[%s340 + $0x68] sm:$0xff] %v6053
        %6086 = vst [vmem:[%s340 + $0x70] sm:$0xff] %v6054
        %6087 = vst [vmem:[%s340 + $0x78] sm:$0xff] %v6055
        %6088 = vst [vmem:[%s340 + $0x80] sm:$0xff] %v6056
        %6089 = vst [vmem:[%s340 + $0x88] sm:$0xff] %v6057
        %6090 = vst [vmem:[%s340 + $0x90] sm:$0xff] %v6058
        %6091 = vst [vmem:[%s340 + $0x98] sm:$0xff] %v6059
        %6092 = vst [vmem:[%s340 + $0xa0] sm:$0xff] %v6060
        %6093 = vst [vmem:[%s340 + $0xa8] sm:$0xff] %v6061
        %6094 = vst [vmem:[%s340 + $0xb0] sm:$0xff] %v6062
        %6095 = vst [vmem:[%s340 + $0xb8] sm:$0xff] %v6063
        %6096 = vst [vmem:[%s340 + $0xc0] sm:$0xff] %v6064
        %6097 = vst [vmem:[%s340 + $0xc8] sm:$0xff] %v6065
        %6098 = vst [vmem:[%s340 + $0xd0] sm:$0xff] %v6066
        %6099 = vst [vmem:[%s340 + $0xd8] sm:$0xff] %v6067
        %6100 = vst [vmem:[%s340 + $0xe0] sm:$0xff] %v6068
        %6101 = vst [vmem:[%s340 + $0xe8] sm:$0xff] %v6069
        %6102 = vst [vmem:[%s340 + $0xf0] sm:$0xff] %v6070
        %6103 = vst [vmem:[%s340 + $0xf8] sm:$0xff] %v6071
        %s6104 = sand.u32 %s186, 1
        %s6105 = scalar_lea.sflag [#allocation10], %s6104
        %s6106 = sand.u32 %s186, 1
        %s6107 = smul.addr %s6106, 256
        %s6108 = scalar_lea.vmem [#allocation16], %s6107
        // Predicated region
        $region65: #{tpu_custom_call.1} parent=47 // pred_check
          %p6109 = pneg %p196
        $region66: #{tpu_custom_call.1} parent=47 // pred_check_branch
          %6111 = sbr.rel (%p6109) target = $region68
        $region67: #{tpu_custom_call.1} parent=47 // pred_region
          %s6113 = ssub.s32 4096, 4096
          %6114 = vsyncadd %s6105, %s6113
          %s6115 = smul.addr %s26, 32
          %s6116 = smul.addr %s6115, 128
          %s6117 = scalar_lea.hbm %s7, %s6116
          %s6118 = sshll.u32 %s6108, 4
          %s6119 = int_to_ptr.vmem [resolvable:$true] %s6118
          %6124 = dma.vmem_to_hbm [thread:$0]  %s6119, 4096, %s6117, %s6105, 128, 128, 8
        $region68: #{tpu_custom_call.1} parent=47 // pred_fallthru
          _
      $region48: #{tpu_custom_call.1} parent=5 // pred_fallthru
        _
      %p6125 = scmp.le.s32.totalorder 2, %s21
      // Predicated region
      $region69: #{tpu_custom_call.1} parent=5 // pred_check
        %p6126 = pneg %p6125
      $region70: #{tpu_custom_call.1} parent=5 // pred_check_branch
        %6128 = sbr.rel (%p6126) target = $region72
      $region71: #{tpu_custom_call.1} parent=5 // pred_region
        %s6129 = ssub.s32 %s21, 2
        // Predicated region
        $region73: #{tpu_custom_call.1} parent=71 // pred_check
          %p6130 = pneg %p202
        $region74: #{tpu_custom_call.1} parent=71 // pred_check_branch
          %6132 = sbr.rel (%p6130) target = $region76
        $region75: #{tpu_custom_call.1} parent=71 // pred_region
          %s6133 = sand.u32 %s187, 1
          %s6134 = scalar_lea.sflag [#allocation10], %s6133
          %s6135 = sand.u32 %s187, 1
          %s6136 = smul.addr %s6135, 256
          %s6137 = scalar_lea.vmem [#allocation16], %s6136
          %6138 = dma.done %s6134, 4096
        $region76: #{tpu_custom_call.1} parent=71 // pred_fallthru
          _
      $region72: #{tpu_custom_call.1} parent=5 // pred_fallthru
        _
    $region6: #{tpu_custom_call.1} parent=1 // loop_footer
      %s25 = sadd.s32 1, %s21
    $region7: #{tpu_custom_call.1} parent=1 // loop_footer_branch
      %20 = sbr.rel target = $region3
    $region8: #{tpu_custom_call.1} parent=1 // loop_exit
      _
    %6139 = vsyncpa [#allocation9], 1
    %s6140 = scalar_lea.sflag [#allocation9], 1
    %6141 = vsyncpa %s6140, 1
    %6142 = vsyncpa [#allocation12], 1
    %6143 = vsyncpa [#allocation15], 1
    %6144 = vsyncpa [#allocation10], 1
    %s6145 = scalar_lea.sflag [#allocation10], 1
    %6146 = vsyncpa %s6145, 1

</llo_original>
